<compile_context>
chip_gen: v5e
topology: v5e:2x2
jax: 0.10.0
libtpu: 0.0.40
codegen_flags: <defaults>
</compile_context>

<pallas_src>
import jax
import jax.numpy as jnp
from jax.experimental import pallas as pl
from jax.experimental.pallas import tpu as pltpu

# TODO(synk): CNSN implementations differ on the instance-std eps (1e-12 inside
# SelfNorm.forward vs 1e-5 default of calc_ins_mean_std); 1e-12 is used here.
_SN_EPS = 1e-12
_BN_EPS = 1e-5
_COUT = 32


def _round_up(x, m):
    return ((x + m - 1) // m) * m


def _pick_block_b(batch, max_bb=64):
    """Images per grid step: amortize the ~0.35us/step overhead and grow matmul M,
    while keeping the grid >= 4 steps (both v7x TCs busy, >=2 pipelined steps each)
    whenever the batch allows.  max_bb=64 keeps the live block footprint a few MiB,
    well under the 32 MiB default scoped VMEM limit (and v7x's 64 MiB physical)."""
    divisors = [d for d in range(1, min(batch, max_bb) + 1) if batch % d == 0]
    for min_grid in (4, 2, 1):
        cands = [d for d in divisors if batch // d >= min_grid]
        if cands:
            return max(cands)
    return 1


def _make_kernel(bb, stripe, gw, cout):
    """Build the fused kernel.

    Activations are kept as 'full-width flat' maps of shape (bb*stripe, cout):
    image b owns rows [b*stripe, (b+1)*stripe); the layer-l grid is H_l x gw,
    row-major, with only columns < W_l valid (junk elsewhere, never read by any
    valid output).  With a fixed width every 3x3 tap of a stride-1 conv is a
    single contiguous sublane shift of the whole block, so each conv layer is 9
    accumulated (M, 32)x(32, 32) MXU matmuls with no im2col reshape/concat.
    """
    M = bb * stripe
    pad_rows = _round_up(2 * gw + 2, 8)                 # >= largest tap offset
    dims = [(gw - 2 * l, gw - 2 * l) for l in range(4)]  # (H_l, W_l) per layer

    def selfnorm_relu(y2d, snl, li):
        # y2d: (M, cout) f32 pre-activation (conv + bias).
        hl, wl = dims[li]
        n = float(hl * wl)
        y = y2d.reshape(bb, stripe, cout)                # aligned split (stripe % 8 == 0)

        # Valid-position mask of the full-width layout (per-image, same for all images).
        pos = jax.lax.broadcasted_iota(jnp.int32, (1, stripe, cout), 1).astype(jnp.float32)
        col = pos - jnp.floor((pos + 0.5) * (1.0 / gw)) * gw     # pos % gw, VPU-only
        valid = (pos < hl * gw - 0.5) & (col < wl - 0.5)

        # Per-image instance statistics over the valid H_l x W_l window only.
        ym = jnp.where(valid, y, 0.0)
        mean = jnp.sum(ym, axis=1, keepdims=True) * (1.0 / n)            # (bb, 1, cout)
        d = jnp.where(valid, y - mean, 0.0)
        var = jnp.sum(d * d, axis=1, keepdims=True) * (1.0 / (n - 1.0))  # unbiased, as torch .var
        std = jnp.sqrt(var + _SN_EPS)

        # SelfNorm gate: grouped 1x2 conv with eval-mode BatchNorm1d folded in.
        g = (snl[0:1, :].reshape(1, 1, cout) * mean
             + snl[1:2, :].reshape(1, 1, cout) * std
             + snl[2:3, :].reshape(1, 1, cout))
        gate = jax.nn.sigmoid(g)                                          # (bb, 1, cout)
        return jnp.maximum(y * gate, 0.0).reshape(M, cout)                # gate + ReLU

    def kernel(col_ref, w1_ref, wt_ref, b_ref, sn_ref, o_ref):
        # ---- layer 1: stride-2 conv as ONE matmul (im2col built in the wrapper) ----
        y = jnp.dot(col_ref[...], w1_ref[...], preferred_element_type=jnp.float32)
        a = selfnorm_relu(y + b_ref[0:1, :], sn_ref[0], 0)

        # ---- layers 2..4: 3x3 stride-1 convs, 9 tap-accumulated matmuls each ----
        zpad = jnp.zeros((pad_rows, cout), jnp.float32)
        for li in range(1, 4):
            ap = jnp.concatenate([a, zpad], axis=0)       # room for the largest shift
            y = None
            for kh in range(3):
                for kw in range(3):
                    s = kh * gw + kw
                    tap = jax.lax.slice(ap, (s, 0), (s + M, cout))
                    part = jnp.dot(tap.astype(jnp.bfloat16),
                                   wt_ref[li - 1, kh * 3 + kw],
                                   preferred_element_type=jnp.float32)
                    y = part if y is None else y + part
            a = selfnorm_relu(y + b_ref[li:li + 1, :], sn_ref[li], li)

        # Store in the kernel's natural layout: no in-kernel transpose and no
        # narrow masked partial stores; the crop + NCHW flatten happen in XLA.
        o_ref[...] = a.reshape(bb, stripe, cout)

    return kernel


def encoder_cnsn_forward(obs_nchw, packed_params, block_b=None):
    """Eval-mode forward of Encoder_cnsn: obs (B, C, H, W) f32 -> (B, 32*Ho*Wo)."""
    w1, wt, bias, sn = packed_params
    B, C, H, W = obs_nchw.shape
    assert H == W and H >= 15, "square input with >= 15 pixels expected"
    cout = w1.shape[-1]
    gw = (H - 3) // 2 + 1                  # layer-1 output extent (stride-2 conv)
    p1 = gw * gw
    stripe = _round_up(p1, 8)              # per-image flat-spatial rows (8-aligned)
    ho = gw - 6                            # final spatial extent
    assert ho >= 1

    bb = block_b if block_b is not None else _pick_block_b(B)
    assert B % bb == 0

    # Layer-1 im2col in the wrapper (cheap XLA): rows in (kh, kw, cin) order,
    # padded to `stripe` rows per image, pre-cast to bf16 -> dense input DMA and
    # a single in-kernel matmul for layer 1 with zero in-kernel relayout.
    x = jnp.transpose(obs_nchw, (0, 2, 3, 1))                               # NHWC
    taps = [x[:, kh:kh + 2 * gw - 1:2, kw:kw + 2 * gw - 1:2, :]
            for kh in range(3) for kw in range(3)]
    col = jnp.concatenate(taps, axis=-1).reshape(B, p1, 9 * C)
    col = jnp.pad(col, ((0, 0), (0, stripe - p1), (0, 0)))
    col = col.reshape(B * stripe, 9 * C).astype(jnp.bfloat16)

    kernel = _make_kernel(bb, stripe, gw, cout)

    flops = 2 * B * stripe * cout * (9 * C + 3 * 9 * cout)
    bytes_accessed = (col.size * 2 + B * stripe * cout * 4
                      + w1.size * 2 + wt.size * 2 + (bias.size + sn.size) * 4)

    out = pl.pallas_call(
        kernel,
        out_shape=jax.ShapeDtypeStruct((B, stripe, cout), jnp.float32),
        grid_spec=pltpu.PrefetchScalarGridSpec(
            num_scalar_prefetch=0,
            grid=(B // bb,),
            in_specs=[
                pl.BlockSpec((bb * stripe, 9 * C), lambda i: (i, 0)),
                pl.BlockSpec(w1.shape, lambda i: (0, 0)),          # weights resident
                pl.BlockSpec(wt.shape, lambda i: (0, 0, 0, 0)),
                pl.BlockSpec(bias.shape, lambda i: (0, 0)),
                pl.BlockSpec(sn.shape, lambda i: (0, 0, 0)),
            ],
            out_specs=pl.BlockSpec((bb, stripe, cout), lambda i: (i, 0, 0)),
        ),
        compiler_params=pltpu.CompilerParams(dimension_semantics=("parallel",)),
        # bb <= 64 keeps the block footprint well under the 32 MiB default scoped
        # VMEM limit on all generations (and under v7x's 64 MiB physical VMEM),
        # so vmem_limit_bytes is intentionally left at its default.
        cost_estimate=pl.CostEstimate(flops=flops, transcendentals=B * 8 * cout,
                                      bytes_accessed=bytes_accessed),
    )(col, w1, wt, bias, sn)

    # Crop the valid ho x ho window out of the full-width layout and flatten in
    # torch NCHW order (h.view(B, -1)); tiny, layout-only XLA work.
    h = out[:, :ho * gw, :].reshape(B, ho, gw, cout)[:, :, :ho, :]     # (B, ho, ho, 32)
    return jnp.transpose(h, (0, 3, 1, 2)).reshape(B, -1)


def init_encoder_params(key, obs_channels, cout=_COUT):
    """Deterministic synthetic parameters.

    Returns (packed, raw): `packed` is what the fused kernel consumes; `raw` is a
    per-layer list of full-precision tensors used by the pure-JAX reference.

    Per layer the PyTorch module has Conv2d(cin, 32, 3) (OIHW weight + bias),
    SelfNorm.g_fc = grouped Conv1d(32, 32, k=2, groups=32, bias=False) and
    SelfNorm.g_bn = BatchNorm1d(32).  The eval-mode BN is folded into g_fc:
        gate = sigmoid(s*gw_mean*mean + s*gw_std*std + (beta - s*running_mean)),
        s = gamma / sqrt(running_var + 1e-5).
    """
    chans = [obs_channels] + [cout] * 4
    w1_packed, wt, biases, sns, raw = None, [], [], [], []
    for i in range(4):
        key, kw_, kb, kg, kgam, kbet, krm, krv = jax.random.split(key, 8)
        cin = chans[i]
        w = jax.random.normal(kw_, (3, 3, cin, cout), jnp.float32) / jnp.sqrt(9.0 * cin)
        b = 0.05 * jax.random.normal(kb, (cout,), jnp.float32)
        gw_ = 0.5 * jax.random.normal(kg, (2, cout), jnp.float32)
        gamma = 1.0 + 0.1 * jax.random.normal(kgam, (cout,), jnp.float32)
        beta = 0.1 * jax.random.normal(kbet, (cout,), jnp.float32)
        rmean = 0.1 * jax.random.normal(krm, (cout,), jnp.float32)
        rvar = 1.0 + 0.1 * jnp.abs(jax.random.normal(krv, (cout,), jnp.float32))
        # TODO(synk): training-mode BatchNorm1d (batch statistics over the per-image
        # stats) and the stochastic CrossNorm branch are not modeled (eval forward).
        s = gamma / jnp.sqrt(rvar + _BN_EPS)
        if i == 0:
            w1_packed = w.reshape(9 * cin, cout).astype(jnp.bfloat16)   # (9*C, 32)
        else:
            wt.append(w.reshape(9, cin, cout))                           # tap-major
        biases.append(b)
        sns.append(jnp.stack([gw_[0] * s, gw_[1] * s, beta - s * rmean], axis=0))
        raw.append(dict(w=w, b=b, gw=gw_, gamma=gamma, beta=beta, rmean=rmean, rvar=rvar))
    packed = (w1_packed,
              jnp.stack(wt, axis=0).astype(jnp.bfloat16),   # (3, 9, 32, 32)
              jnp.stack(biases, axis=0),                     # (4, 32)
              jnp.stack(sns, axis=0))                        # (4, 3, 32)
    return packed, raw


def _reference_forward(obs_nchw, raw):
    """Pure-JAX/XLA eval-mode reference: Conv2d -> SelfNorm(+folded BN) -> ReLU, x4."""
    x = obs_nchw
    for i, p in enumerate(raw):
        stride = 2 if i == 0 else 1
        x = jax.lax.conv_general_dilated(
            x, p["w"], (stride, stride), "VALID",
            dimension_numbers=("NCHW", "HWIO", "NCHW"))
        x = x + p["b"][None, :, None, None]
        n, c = x.shape[0], x.shape[1]
        xf = x.reshape(n, c, -1)
        mean = jnp.mean(xf, axis=2)
        std = jnp.sqrt(jnp.var(xf, axis=2, ddof=1) + _SN_EPS)
        pre = p["gw"][0] * mean + p["gw"][1] * std            # grouped conv1d, k=2
        s = p["gamma"] / jnp.sqrt(p["rvar"] + _BN_EPS)
        gate = jax.nn.sigmoid(s * (pre - p["rmean"]) + p["beta"])
        x = jnp.maximum(x * gate[:, :, None, None], 0.0)
    return x.reshape(x.shape[0], -1)


if __name__ == "__main__":
    key = jax.random.PRNGKey(0)
    kobs, kparam = jax.random.split(key)

    # Small shapes consistent with the module: obs (8, 4, 24, 24) ->
    # 24 --conv s2--> 11 --> 9 --> 7 --> 5 ; per-image features = 32*5*5 = 800.
    # B=8 exercises batch blocking (bb=2) with a grid of 4 steps.
    B, C, H, W = 8, 4, 24, 24
    obs = jax.random.normal(kobs, (B, C, H, W), jnp.float32)
    params, raw = init_encoder_params(kparam, C)

    fwd = jax.jit(encoder_cnsn_forward)
    out = jax.block_until_ready(fwd(obs, params))

    assert out.shape == (B, 32 * 5 * 5), out.shape
    assert bool(jnp.all(jnp.isfinite(out)))

    ref = _reference_forward(obs, raw)
    err = float(jnp.max(jnp.abs(out - ref)))
    assert err < 0.1, f"max abs err vs reference = {err}"
    print("KERNEL_OK")
</pallas_src>

<mosaic_0001>
module attributes {stable_mosaic.version = 11 : i64} {
  func.func @kernel(%arg0: i32, %arg1: memref<256x36xbf16, #tpu.memory_space<vmem>>, %arg2: memref<36x32xbf16, #tpu.memory_space<vmem>>, %arg3: memref<3x9x32x32xbf16, #tpu.memory_space<vmem>>, %arg4: memref<4x32xf32, #tpu.memory_space<vmem>>, %arg5: memref<4x3x32xf32, #tpu.memory_space<vmem>>, %arg6: memref<2x128x32xf32, #tpu.memory_space<vmem>>) attributes {dimension_semantics = [#tpu.dimension_semantics<parallel>], iteration_bounds = array<i64: 4>, scalar_prefetch = 0 : i64, scratch_operands = 0 : i64, tpu.core_type = #tpu.core_type<tc>, window_params = [{transform_indices = @transform_0, window_bounds = array<i64: 256, 36>}, {pipeline_mode = #tpu.pipeline_mode<synchronous>, transform_indices = @transform_1, window_bounds = array<i64: 36, 32>}, {pipeline_mode = #tpu.pipeline_mode<synchronous>, transform_indices = @transform_2, window_bounds = array<i64: 3, 9, 32, 32>}, {pipeline_mode = #tpu.pipeline_mode<synchronous>, transform_indices = @transform_3, window_bounds = array<i64: 4, 32>}, {pipeline_mode = #tpu.pipeline_mode<synchronous>, transform_indices = @transform_4, window_bounds = array<i64: 4, 3, 32>}, {transform_indices = @transform_5, window_bounds = array<i64: 2, 128, 32>}]} {
    %c0 = arith.constant 0 : index
    %c0_0 = arith.constant 0 : index
    %0 = vector.load %arg1[%c0, %c0_0] : memref<256x36xbf16, #tpu.memory_space<vmem>>, vector<256x36xbf16>
    %c0_1 = arith.constant 0 : index
    %c0_2 = arith.constant 0 : index
    %1 = vector.load %arg2[%c0_1, %c0_2] : memref<36x32xbf16, #tpu.memory_space<vmem>>, vector<36x32xbf16>
    %cst = arith.constant dense<0.000000e+00> : vector<256x32xf32>
    %2 = tpu.matmul %0, %1, %cst {dimension_numbers = #tpu.dot_dimension_numbers<[1], [0], [0], [1], [0, 0, 1, 1], [], []>} : vector<256x36xbf16>, vector<36x32xbf16>, vector<256x32xf32> -> vector<256x32xf32>
    %c0_3 = arith.constant 0 : index
    %c0_4 = arith.constant 0 : index
    %3 = vector.load %arg4[%c0_3, %c0_4] : memref<4x32xf32, #tpu.memory_space<vmem>>, vector<1x32xf32>
    %4 = vector.broadcast %3 : vector<1x32xf32> to vector<256x32xf32>
    %5 = arith.addf %2, %4 : vector<256x32xf32>
    %c0_5 = arith.constant 0 : index
    %c0_6 = arith.constant 0 : index
    %c0_7 = arith.constant 0 : index
    %6 = vector.load %arg5[%c0_5, %c0_6, %c0_7] : memref<4x3x32xf32, #tpu.memory_space<vmem>>, vector<1x3x32xf32>
    %7 = vector.shape_cast %6 : vector<1x3x32xf32> to vector<3x32xf32>
    %8 = vector.shape_cast %5 : vector<256x32xf32> to vector<2x128x32xf32>
    %9 = tpu.iota {dimensions = array<i32: 1>} : vector<1x128x32xi32>
    %10 = arith.sitofp %9 : vector<1x128x32xi32> to vector<1x128x32xf32>
    %cst_8 = arith.constant 5.000000e-01 : f32
    %11 = vector.broadcast %cst_8 : f32 to vector<1x128x32xf32>
    %12 = arith.addf %10, %11 : vector<1x128x32xf32>
    %cst_9 = arith.constant 0.0909090936 : f32
    %13 = vector.broadcast %cst_9 : f32 to vector<1x128x32xf32>
    %14 = arith.mulf %12, %13 : vector<1x128x32xf32>
    %15 = math.floor %14 : vector<1x128x32xf32>
    %cst_10 = arith.constant 1.100000e+01 : f32
    %16 = vector.broadcast %cst_10 : f32 to vector<1x128x32xf32>
    %17 = arith.mulf %15, %16 : vector<1x128x32xf32>
    %18 = arith.subf %10, %17 : vector<1x128x32xf32>
    %cst_11 = arith.constant 1.205000e+02 : f32
    %19 = vector.broadcast %cst_11 : f32 to vector<1x128x32xf32>
    %20 = arith.cmpf olt, %10, %19 : vector<1x128x32xf32>
    %cst_12 = arith.constant 1.050000e+01 : f32
    %21 = vector.broadcast %cst_12 : f32 to vector<1x128x32xf32>
    %22 = arith.cmpf olt, %18, %21 : vector<1x128x32xf32>
    %23 = arith.andi %20, %22 : vector<1x128x32xi1>
    %cst_13 = arith.constant 0.000000e+00 : f32
    %24 = vector.shape_cast %23 : vector<1x128x32xi1> to vector<1x128x32xi1>
    %25 = vector.broadcast %24 : vector<1x128x32xi1> to vector<2x128x32xi1>
    %26 = vector.broadcast %cst_13 : f32 to vector<2x128x32xf32>
    %27 = arith.select %25, %8, %26 : vector<2x128x32xi1>, vector<2x128x32xf32>
    %cst_14 = arith.constant dense<0.000000e+00> : vector<2x32xf32>
    %28 = vector.multi_reduction <add>, %27, %cst_14 [1] : vector<2x128x32xf32> to vector<2x32xf32>
    %29 = vector.shape_cast %28 : vector<2x32xf32> to vector<2x1x32xf32>
    %cst_15 = arith.constant 0.00826446246 : f32
    %30 = vector.broadcast %cst_15 : f32 to vector<2x1x32xf32>
    %31 = arith.mulf %29, %30 : vector<2x1x32xf32>
    %32 = vector.broadcast %31 : vector<2x1x32xf32> to vector<2x128x32xf32>
    %33 = arith.subf %8, %32 : vector<2x128x32xf32>
    %cst_16 = arith.constant 0.000000e+00 : f32
    %34 = vector.shape_cast %23 : vector<1x128x32xi1> to vector<1x128x32xi1>
    %35 = vector.broadcast %34 : vector<1x128x32xi1> to vector<2x128x32xi1>
    %36 = vector.broadcast %cst_16 : f32 to vector<2x128x32xf32>
    %37 = arith.select %35, %33, %36 : vector<2x128x32xi1>, vector<2x128x32xf32>
    %38 = arith.mulf %37, %37 : vector<2x128x32xf32>
    %cst_17 = arith.constant dense<0.000000e+00> : vector<2x32xf32>
    %39 = vector.multi_reduction <add>, %38, %cst_17 [1] : vector<2x128x32xf32> to vector<2x32xf32>
    %40 = vector.shape_cast %39 : vector<2x32xf32> to vector<2x1x32xf32>
    %cst_18 = arith.constant 0.00833333377 : f32
    %41 = vector.broadcast %cst_18 : f32 to vector<2x1x32xf32>
    %42 = arith.mulf %40, %41 : vector<2x1x32xf32>
    %cst_19 = arith.constant 9.99999996E-13 : f32
    %43 = vector.broadcast %cst_19 : f32 to vector<2x1x32xf32>
    %44 = arith.addf %42, %43 : vector<2x1x32xf32>
    %45 = math.sqrt %44 : vector<2x1x32xf32>
    %46 = vector.extract_strided_slice %7 {offsets = [0, 0], sizes = [1, 32], strides = [1, 1]} : vector<3x32xf32> to vector<1x32xf32>
    %47 = vector.shape_cast %46 : vector<1x32xf32> to vector<1x1x32xf32>
    %48 = vector.broadcast %47 : vector<1x1x32xf32> to vector<2x1x32xf32>
    %49 = arith.mulf %48, %31 : vector<2x1x32xf32>
    %50 = vector.extract_strided_slice %7 {offsets = [1, 0], sizes = [1, 32], strides = [1, 1]} : vector<3x32xf32> to vector<1x32xf32>
    %51 = vector.shape_cast %50 : vector<1x32xf32> to vector<1x1x32xf32>
    %52 = vector.broadcast %51 : vector<1x1x32xf32> to vector<2x1x32xf32>
    %53 = arith.mulf %52, %45 : vector<2x1x32xf32>
    %54 = arith.addf %49, %53 : vector<2x1x32xf32>
    %55 = vector.extract_strided_slice %7 {offsets = [2, 0], sizes = [1, 32], strides = [1, 1]} : vector<3x32xf32> to vector<1x32xf32>
    %56 = vector.shape_cast %55 : vector<1x32xf32> to vector<1x1x32xf32>
    %57 = vector.broadcast %56 : vector<1x1x32xf32> to vector<2x1x32xf32>
    %58 = arith.addf %54, %57 : vector<2x1x32xf32>
    %59 = arith.negf %58 : vector<2x1x32xf32>
    %60 = math.exp %59 : vector<2x1x32xf32>
    %cst_20 = arith.constant 1.000000e+00 : f32
    %61 = vector.broadcast %cst_20 : f32 to vector<2x1x32xf32>
    %62 = arith.addf %61, %60 : vector<2x1x32xf32>
    %63 = arith.divf %61, %62 : vector<2x1x32xf32>
    %64 = vector.broadcast %63 : vector<2x1x32xf32> to vector<2x128x32xf32>
    %65 = arith.mulf %8, %64 : vector<2x128x32xf32>
    %cst_21 = arith.constant 0.000000e+00 : f32
    %66 = vector.broadcast %cst_21 : f32 to vector<2x128x32xf32>
    %67 = arith.maximumf %65, %66 : vector<2x128x32xf32>
    %68 = vector.shape_cast %67 : vector<2x128x32xf32> to vector<256x32xf32>
    %cst_22 = arith.constant 0.000000e+00 : f32
    %69 = vector.broadcast %cst_22 : f32 to vector<24x32xf32>
    %70 = tpu.concatenate %68, %69 in 0 : vector<256x32xf32>, vector<24x32xf32> -> vector<280x32xf32>
    %71 = vector.extract_strided_slice %70 {offsets = [0, 0], sizes = [256, 32], strides = [1, 1]} : vector<280x32xf32> to vector<256x32xf32>
    %72 = arith.truncf %71 : vector<256x32xf32> to vector<256x32xbf16>
    %c0_23 = arith.constant 0 : index
    %c0_24 = arith.constant 0 : index
    %c0_25 = arith.constant 0 : index
    %c0_26 = arith.constant 0 : index
    %73 = vector.load %arg3[%c0_23, %c0_24, %c0_25, %c0_26] : memref<3x9x32x32xbf16, #tpu.memory_space<vmem>>, vector<1x1x32x32xbf16>
    %74 = vector.shape_cast %73 : vector<1x1x32x32xbf16> to vector<32x32xbf16>
    %cst_27 = arith.constant dense<0.000000e+00> : vector<256x32xf32>
    %75 = tpu.matmul %72, %74, %cst_27 {dimension_numbers = #tpu.dot_dimension_numbers<[1], [0], [0], [1], [0, 0, 1, 1], [], []>} : vector<256x32xbf16>, vector<32x32xbf16>, vector<256x32xf32> -> vector<256x32xf32>
    %76 = vector.extract_strided_slice %70 {offsets = [1, 0], sizes = [256, 32], strides = [1, 1]} : vector<280x32xf32> to vector<256x32xf32>
    %77 = arith.truncf %76 : vector<256x32xf32> to vector<256x32xbf16>
    %c0_28 = arith.constant 0 : index
    %c1 = arith.constant 1 : index
    %c0_29 = arith.constant 0 : index
    %c0_30 = arith.constant 0 : index
    %78 = vector.load %arg3[%c0_28, %c1, %c0_29, %c0_30] : memref<3x9x32x32xbf16, #tpu.memory_space<vmem>>, vector<1x1x32x32xbf16>
    %79 = vector.shape_cast %78 : vector<1x1x32x32xbf16> to vector<32x32xbf16>
    %cst_31 = arith.constant dense<0.000000e+00> : vector<256x32xf32>
    %80 = tpu.matmul %77, %79, %cst_31 {dimension_numbers = #tpu.dot_dimension_numbers<[1], [0], [0], [1], [0, 0, 1, 1], [], []>} : vector<256x32xbf16>, vector<32x32xbf16>, vector<256x32xf32> -> vector<256x32xf32>
    %81 = arith.addf %75, %80 : vector<256x32xf32>
    %82 = vector.extract_strided_slice %70 {offsets = [2, 0], sizes = [256, 32], strides = [1, 1]} : vector<280x32xf32> to vector<256x32xf32>
    %83 = arith.truncf %82 : vector<256x32xf32> to vector<256x32xbf16>
    %c0_32 = arith.constant 0 : index
    %c2 = arith.constant 2 : index
    %c0_33 = arith.constant 0 : index
    %c0_34 = arith.constant 0 : index
    %84 = vector.load %arg3[%c0_32, %c2, %c0_33, %c0_34] : memref<3x9x32x32xbf16, #tpu.memory_space<vmem>>, vector<1x1x32x32xbf16>
    %85 = vector.shape_cast %84 : vector<1x1x32x32xbf16> to vector<32x32xbf16>
    %cst_35 = arith.constant dense<0.000000e+00> : vector<256x32xf32>
    %86 = tpu.matmul %83, %85, %cst_35 {dimension_numbers = #tpu.dot_dimension_numbers<[1], [0], [0], [1], [0, 0, 1, 1], [], []>} : vector<256x32xbf16>, vector<32x32xbf16>, vector<256x32xf32> -> vector<256x32xf32>
    %87 = arith.addf %81, %86 : vector<256x32xf32>
    %88 = vector.extract_strided_slice %70 {offsets = [11, 0], sizes = [256, 32], strides = [1, 1]} : vector<280x32xf32> to vector<256x32xf32>
    %89 = arith.truncf %88 : vector<256x32xf32> to vector<256x32xbf16>
    %c0_36 = arith.constant 0 : index
    %c3 = arith.constant 3 : index
    %c0_37 = arith.constant 0 : index
    %c0_38 = arith.constant 0 : index
    %90 = vector.load %arg3[%c0_36, %c3, %c0_37, %c0_38] : memref<3x9x32x32xbf16, #tpu.memory_space<vmem>>, vector<1x1x32x32xbf16>
    %91 = vector.shape_cast %90 : vector<1x1x32x32xbf16> to vector<32x32xbf16>
    %cst_39 = arith.constant dense<0.000000e+00> : vector<256x32xf32>
    %92 = tpu.matmul %89, %91, %cst_39 {dimension_numbers = #tpu.dot_dimension_numbers<[1], [0], [0], [1], [0, 0, 1, 1], [], []>} : vector<256x32xbf16>, vector<32x32xbf16>, vector<256x32xf32> -> vector<256x32xf32>
    %93 = arith.addf %87, %92 : vector<256x32xf32>
    %94 = vector.extract_strided_slice %70 {offsets = [12, 0], sizes = [256, 32], strides = [1, 1]} : vector<280x32xf32> to vector<256x32xf32>
    %95 = arith.truncf %94 : vector<256x32xf32> to vector<256x32xbf16>
    %c0_40 = arith.constant 0 : index
    %c4 = arith.constant 4 : index
    %c0_41 = arith.constant 0 : index
    %c0_42 = arith.constant 0 : index
    %96 = vector.load %arg3[%c0_40, %c4, %c0_41, %c0_42] : memref<3x9x32x32xbf16, #tpu.memory_space<vmem>>, vector<1x1x32x32xbf16>
    %97 = vector.shape_cast %96 : vector<1x1x32x32xbf16> to vector<32x32xbf16>
    %cst_43 = arith.constant dense<0.000000e+00> : vector<256x32xf32>
    %98 = tpu.matmul %95, %97, %cst_43 {dimension_numbers = #tpu.dot_dimension_numbers<[1], [0], [0], [1], [0, 0, 1, 1], [], []>} : vector<256x32xbf16>, vector<32x32xbf16>, vector<256x32xf32> -> vector<256x32xf32>
    %99 = arith.addf %93, %98 : vector<256x32xf32>
    %100 = vector.extract_strided_slice %70 {offsets = [13, 0], sizes = [256, 32], strides = [1, 1]} : vector<280x32xf32> to vector<256x32xf32>
    %101 = arith.truncf %100 : vector<256x32xf32> to vector<256x32xbf16>
    %c0_44 = arith.constant 0 : index
    %c5 = arith.constant 5 : index
    %c0_45 = arith.constant 0 : index
    %c0_46 = arith.constant 0 : index
    %102 = vector.load %arg3[%c0_44, %c5, %c0_45, %c0_46] : memref<3x9x32x32xbf16, #tpu.memory_space<vmem>>, vector<1x1x32x32xbf16>
    %103 = vector.shape_cast %102 : vector<1x1x32x32xbf16> to vector<32x32xbf16>
    %cst_47 = arith.constant dense<0.000000e+00> : vector<256x32xf32>
    %104 = tpu.matmul %101, %103, %cst_47 {dimension_numbers = #tpu.dot_dimension_numbers<[1], [0], [0], [1], [0, 0, 1, 1], [], []>} : vector<256x32xbf16>, vector<32x32xbf16>, vector<256x32xf32> -> vector<256x32xf32>
    %105 = arith.addf %99, %104 : vector<256x32xf32>
    %106 = vector.extract_strided_slice %70 {offsets = [22, 0], sizes = [256, 32], strides = [1, 1]} : vector<280x32xf32> to vector<256x32xf32>
    %107 = arith.truncf %106 : vector<256x32xf32> to vector<256x32xbf16>
    %c0_48 = arith.constant 0 : index
    %c6 = arith.constant 6 : index
    %c0_49 = arith.constant 0 : index
    %c0_50 = arith.constant 0 : index
    %108 = vector.load %arg3[%c0_48, %c6, %c0_49, %c0_50] : memref<3x9x32x32xbf16, #tpu.memory_space<vmem>>, vector<1x1x32x32xbf16>
    %109 = vector.shape_cast %108 : vector<1x1x32x32xbf16> to vector<32x32xbf16>
    %cst_51 = arith.constant dense<0.000000e+00> : vector<256x32xf32>
    %110 = tpu.matmul %107, %109, %cst_51 {dimension_numbers = #tpu.dot_dimension_numbers<[1], [0], [0], [1], [0, 0, 1, 1], [], []>} : vector<256x32xbf16>, vector<32x32xbf16>, vector<256x32xf32> -> vector<256x32xf32>
    %111 = arith.addf %105, %110 : vector<256x32xf32>
    %112 = vector.extract_strided_slice %70 {offsets = [23, 0], sizes = [256, 32], strides = [1, 1]} : vector<280x32xf32> to vector<256x32xf32>
    %113 = arith.truncf %112 : vector<256x32xf32> to vector<256x32xbf16>
    %c0_52 = arith.constant 0 : index
    %c7 = arith.constant 7 : index
    %c0_53 = arith.constant 0 : index
    %c0_54 = arith.constant 0 : index
    %114 = vector.load %arg3[%c0_52, %c7, %c0_53, %c0_54] : memref<3x9x32x32xbf16, #tpu.memory_space<vmem>>, vector<1x1x32x32xbf16>
    %115 = vector.shape_cast %114 : vector<1x1x32x32xbf16> to vector<32x32xbf16>
    %cst_55 = arith.constant dense<0.000000e+00> : vector<256x32xf32>
    %116 = tpu.matmul %113, %115, %cst_55 {dimension_numbers = #tpu.dot_dimension_numbers<[1], [0], [0], [1], [0, 0, 1, 1], [], []>} : vector<256x32xbf16>, vector<32x32xbf16>, vector<256x32xf32> -> vector<256x32xf32>
    %117 = arith.addf %111, %116 : vector<256x32xf32>
    %118 = vector.extract_strided_slice %70 {offsets = [24, 0], sizes = [256, 32], strides = [1, 1]} : vector<280x32xf32> to vector<256x32xf32>
    %119 = arith.truncf %118 : vector<256x32xf32> to vector<256x32xbf16>
    %c0_56 = arith.constant 0 : index
    %c8 = arith.constant 8 : index
    %c0_57 = arith.constant 0 : index
    %c0_58 = arith.constant 0 : index
    %120 = vector.load %arg3[%c0_56, %c8, %c0_57, %c0_58] : memref<3x9x32x32xbf16, #tpu.memory_space<vmem>>, vector<1x1x32x32xbf16>
    %121 = vector.shape_cast %120 : vector<1x1x32x32xbf16> to vector<32x32xbf16>
    %cst_59 = arith.constant dense<0.000000e+00> : vector<256x32xf32>
    %122 = tpu.matmul %119, %121, %cst_59 {dimension_numbers = #tpu.dot_dimension_numbers<[1], [0], [0], [1], [0, 0, 1, 1], [], []>} : vector<256x32xbf16>, vector<32x32xbf16>, vector<256x32xf32> -> vector<256x32xf32>
    %123 = arith.addf %117, %122 : vector<256x32xf32>
    %c1_60 = arith.constant 1 : index
    %c0_61 = arith.constant 0 : index
    %124 = vector.load %arg4[%c1_60, %c0_61] : memref<4x32xf32, #tpu.memory_space<vmem>>, vector<1x32xf32>
    %125 = vector.broadcast %124 : vector<1x32xf32> to vector<256x32xf32>
    %126 = arith.addf %123, %125 : vector<256x32xf32>
    %c1_62 = arith.constant 1 : index
    %c0_63 = arith.constant 0 : index
    %c0_64 = arith.constant 0 : index
    %127 = vector.load %arg5[%c1_62, %c0_63, %c0_64] : memref<4x3x32xf32, #tpu.memory_space<vmem>>, vector<1x3x32xf32>
    %128 = vector.shape_cast %127 : vector<1x3x32xf32> to vector<3x32xf32>
    %129 = vector.shape_cast %126 : vector<256x32xf32> to vector<2x128x32xf32>
    %130 = tpu.iota {dimensions = array<i32: 1>} : vector<1x128x32xi32>
    %131 = arith.sitofp %130 : vector<1x128x32xi32> to vector<1x128x32xf32>
    %cst_65 = arith.constant 5.000000e-01 : f32
    %132 = vector.broadcast %cst_65 : f32 to vector<1x128x32xf32>
    %133 = arith.addf %131, %132 : vector<1x128x32xf32>
    %cst_66 = arith.constant 0.0909090936 : f32
    %134 = vector.broadcast %cst_66 : f32 to vector<1x128x32xf32>
    %135 = arith.mulf %133, %134 : vector<1x128x32xf32>
    %136 = math.floor %135 : vector<1x128x32xf32>
    %cst_67 = arith.constant 1.100000e+01 : f32
    %137 = vector.broadcast %cst_67 : f32 to vector<1x128x32xf32>
    %138 = arith.mulf %136, %137 : vector<1x128x32xf32>
    %139 = arith.subf %131, %138 : vector<1x128x32xf32>
    %cst_68 = arith.constant 9.850000e+01 : f32
    %140 = vector.broadcast %cst_68 : f32 to vector<1x128x32xf32>
    %141 = arith.cmpf olt, %131, %140 : vector<1x128x32xf32>
    %cst_69 = arith.constant 8.500000e+00 : f32
    %142 = vector.broadcast %cst_69 : f32 to vector<1x128x32xf32>
    %143 = arith.cmpf olt, %139, %142 : vector<1x128x32xf32>
    %144 = arith.andi %141, %143 : vector<1x128x32xi1>
    %cst_70 = arith.constant 0.000000e+00 : f32
    %145 = vector.shape_cast %144 : vector<1x128x32xi1> to vector<1x128x32xi1>
    %146 = vector.broadcast %145 : vector<1x128x32xi1> to vector<2x128x32xi1>
    %147 = vector.broadcast %cst_70 : f32 to vector<2x128x32xf32>
    %148 = arith.select %146, %129, %147 : vector<2x128x32xi1>, vector<2x128x32xf32>
    %cst_71 = arith.constant dense<0.000000e+00> : vector<2x32xf32>
    %149 = vector.multi_reduction <add>, %148, %cst_71 [1] : vector<2x128x32xf32> to vector<2x32xf32>
    %150 = vector.shape_cast %149 : vector<2x32xf32> to vector<2x1x32xf32>
    %cst_72 = arith.constant 0.0123456791 : f32
    %151 = vector.broadcast %cst_72 : f32 to vector<2x1x32xf32>
    %152 = arith.mulf %150, %151 : vector<2x1x32xf32>
    %153 = vector.broadcast %152 : vector<2x1x32xf32> to vector<2x128x32xf32>
    %154 = arith.subf %129, %153 : vector<2x128x32xf32>
    %cst_73 = arith.constant 0.000000e+00 : f32
    %155 = vector.shape_cast %144 : vector<1x128x32xi1> to vector<1x128x32xi1>
    %156 = vector.broadcast %155 : vector<1x128x32xi1> to vector<2x128x32xi1>
    %157 = vector.broadcast %cst_73 : f32 to vector<2x128x32xf32>
    %158 = arith.select %156, %154, %157 : vector<2x128x32xi1>, vector<2x128x32xf32>
    %159 = arith.mulf %158, %158 : vector<2x128x32xf32>
    %cst_74 = arith.constant dense<0.000000e+00> : vector<2x32xf32>
    %160 = vector.multi_reduction <add>, %159, %cst_74 [1] : vector<2x128x32xf32> to vector<2x32xf32>
    %161 = vector.shape_cast %160 : vector<2x32xf32> to vector<2x1x32xf32>
    %cst_75 = arith.constant 1.250000e-02 : f32
    %162 = vector.broadcast %cst_75 : f32 to vector<2x1x32xf32>
    %163 = arith.mulf %161, %162 : vector<2x1x32xf32>
    %cst_76 = arith.constant 9.99999996E-13 : f32
    %164 = vector.broadcast %cst_76 : f32 to vector<2x1x32xf32>
    %165 = arith.addf %163, %164 : vector<2x1x32xf32>
    %166 = math.sqrt %165 : vector<2x1x32xf32>
    %167 = vector.extract_strided_slice %128 {offsets = [0, 0], sizes = [1, 32], strides = [1, 1]} : vector<3x32xf32> to vector<1x32xf32>
    %168 = vector.shape_cast %167 : vector<1x32xf32> to vector<1x1x32xf32>
    %169 = vector.broadcast %168 : vector<1x1x32xf32> to vector<2x1x32xf32>
    %170 = arith.mulf %169, %152 : vector<2x1x32xf32>
    %171 = vector.extract_strided_slice %128 {offsets = [1, 0], sizes = [1, 32], strides = [1, 1]} : vector<3x32xf32> to vector<1x32xf32>
    %172 = vector.shape_cast %171 : vector<1x32xf32> to vector<1x1x32xf32>
    %173 = vector.broadcast %172 : vector<1x1x32xf32> to vector<2x1x32xf32>
    %174 = arith.mulf %173, %166 : vector<2x1x32xf32>
    %175 = arith.addf %170, %174 : vector<2x1x32xf32>
    %176 = vector.extract_strided_slice %128 {offsets = [2, 0], sizes = [1, 32], strides = [1, 1]} : vector<3x32xf32> to vector<1x32xf32>
    %177 = vector.shape_cast %176 : vector<1x32xf32> to vector<1x1x32xf32>
    %178 = vector.broadcast %177 : vector<1x1x32xf32> to vector<2x1x32xf32>
    %179 = arith.addf %175, %178 : vector<2x1x32xf32>
    %180 = arith.negf %179 : vector<2x1x32xf32>
    %181 = math.exp %180 : vector<2x1x32xf32>
    %cst_77 = arith.constant 1.000000e+00 : f32
    %182 = vector.broadcast %cst_77 : f32 to vector<2x1x32xf32>
    %183 = arith.addf %182, %181 : vector<2x1x32xf32>
    %184 = arith.divf %182, %183 : vector<2x1x32xf32>
    %185 = vector.broadcast %184 : vector<2x1x32xf32> to vector<2x128x32xf32>
    %186 = arith.mulf %129, %185 : vector<2x128x32xf32>
    %cst_78 = arith.constant 0.000000e+00 : f32
    %187 = vector.broadcast %cst_78 : f32 to vector<2x128x32xf32>
    %188 = arith.maximumf %186, %187 : vector<2x128x32xf32>
    %189 = vector.shape_cast %188 : vector<2x128x32xf32> to vector<256x32xf32>
    %190 = tpu.concatenate %189, %69 in 0 : vector<256x32xf32>, vector<24x32xf32> -> vector<280x32xf32>
    %191 = vector.extract_strided_slice %190 {offsets = [0, 0], sizes = [256, 32], strides = [1, 1]} : vector<280x32xf32> to vector<256x32xf32>
    %192 = arith.truncf %191 : vector<256x32xf32> to vector<256x32xbf16>
    %c1_79 = arith.constant 1 : index
    %c0_80 = arith.constant 0 : index
    %c0_81 = arith.constant 0 : index
    %c0_82 = arith.constant 0 : index
    %193 = vector.load %arg3[%c1_79, %c0_80, %c0_81, %c0_82] : memref<3x9x32x32xbf16, #tpu.memory_space<vmem>>, vector<1x1x32x32xbf16>
    %194 = vector.shape_cast %193 : vector<1x1x32x32xbf16> to vector<32x32xbf16>
    %cst_83 = arith.constant dense<0.000000e+00> : vector<256x32xf32>
    %195 = tpu.matmul %192, %194, %cst_83 {dimension_numbers = #tpu.dot_dimension_numbers<[1], [0], [0], [1], [0, 0, 1, 1], [], []>} : vector<256x32xbf16>, vector<32x32xbf16>, vector<256x32xf32> -> vector<256x32xf32>
    %196 = vector.extract_strided_slice %190 {offsets = [1, 0], sizes = [256, 32], strides = [1, 1]} : vector<280x32xf32> to vector<256x32xf32>
    %197 = arith.truncf %196 : vector<256x32xf32> to vector<256x32xbf16>
    %c1_84 = arith.constant 1 : index
    %c1_85 = arith.constant 1 : index
    %c0_86 = arith.constant 0 : index
    %c0_87 = arith.constant 0 : index
    %198 = vector.load %arg3[%c1_84, %c1_85, %c0_86, %c0_87] : memref<3x9x32x32xbf16, #tpu.memory_space<vmem>>, vector<1x1x32x32xbf16>
    %199 = vector.shape_cast %198 : vector<1x1x32x32xbf16> to vector<32x32xbf16>
    %cst_88 = arith.constant dense<0.000000e+00> : vector<256x32xf32>
    %200 = tpu.matmul %197, %199, %cst_88 {dimension_numbers = #tpu.dot_dimension_numbers<[1], [0], [0], [1], [0, 0, 1, 1], [], []>} : vector<256x32xbf16>, vector<32x32xbf16>, vector<256x32xf32> -> vector<256x32xf32>
    %201 = arith.addf %195, %200 : vector<256x32xf32>
    %202 = vector.extract_strided_slice %190 {offsets = [2, 0], sizes = [256, 32], strides = [1, 1]} : vector<280x32xf32> to vector<256x32xf32>
    %203 = arith.truncf %202 : vector<256x32xf32> to vector<256x32xbf16>
    %c1_89 = arith.constant 1 : index
    %c2_90 = arith.constant 2 : index
    %c0_91 = arith.constant 0 : index
    %c0_92 = arith.constant 0 : index
    %204 = vector.load %arg3[%c1_89, %c2_90, %c0_91, %c0_92] : memref<3x9x32x32xbf16, #tpu.memory_space<vmem>>, vector<1x1x32x32xbf16>
    %205 = vector.shape_cast %204 : vector<1x1x32x32xbf16> to vector<32x32xbf16>
    %cst_93 = arith.constant dense<0.000000e+00> : vector<256x32xf32>
    %206 = tpu.matmul %203, %205, %cst_93 {dimension_numbers = #tpu.dot_dimension_numbers<[1], [0], [0], [1], [0, 0, 1, 1], [], []>} : vector<256x32xbf16>, vector<32x32xbf16>, vector<256x32xf32> -> vector<256x32xf32>
    %207 = arith.addf %201, %206 : vector<256x32xf32>
    %208 = vector.extract_strided_slice %190 {offsets = [11, 0], sizes = [256, 32], strides = [1, 1]} : vector<280x32xf32> to vector<256x32xf32>
    %209 = arith.truncf %208 : vector<256x32xf32> to vector<256x32xbf16>
    %c1_94 = arith.constant 1 : index
    %c3_95 = arith.constant 3 : index
    %c0_96 = arith.constant 0 : index
    %c0_97 = arith.constant 0 : index
    %210 = vector.load %arg3[%c1_94, %c3_95, %c0_96, %c0_97] : memref<3x9x32x32xbf16, #tpu.memory_space<vmem>>, vector<1x1x32x32xbf16>
    %211 = vector.shape_cast %210 : vector<1x1x32x32xbf16> to vector<32x32xbf16>
    %cst_98 = arith.constant dense<0.000000e+00> : vector<256x32xf32>
    %212 = tpu.matmul %209, %211, %cst_98 {dimension_numbers = #tpu.dot_dimension_numbers<[1], [0], [0], [1], [0, 0, 1, 1], [], []>} : vector<256x32xbf16>, vector<32x32xbf16>, vector<256x32xf32> -> vector<256x32xf32>
    %213 = arith.addf %207, %212 : vector<256x32xf32>
    %214 = vector.extract_strided_slice %190 {offsets = [12, 0], sizes = [256, 32], strides = [1, 1]} : vector<280x32xf32> to vector<256x32xf32>
    %215 = arith.truncf %214 : vector<256x32xf32> to vector<256x32xbf16>
    %c1_99 = arith.constant 1 : index
    %c4_100 = arith.constant 4 : index
    %c0_101 = arith.constant 0 : index
    %c0_102 = arith.constant 0 : index
    %216 = vector.load %arg3[%c1_99, %c4_100, %c0_101, %c0_102] : memref<3x9x32x32xbf16, #tpu.memory_space<vmem>>, vector<1x1x32x32xbf16>
    %217 = vector.shape_cast %216 : vector<1x1x32x32xbf16> to vector<32x32xbf16>
    %cst_103 = arith.constant dense<0.000000e+00> : vector<256x32xf32>
    %218 = tpu.matmul %215, %217, %cst_103 {dimension_numbers = #tpu.dot_dimension_numbers<[1], [0], [0], [1], [0, 0, 1, 1], [], []>} : vector<256x32xbf16>, vector<32x32xbf16>, vector<256x32xf32> -> vector<256x32xf32>
    %219 = arith.addf %213, %218 : vector<256x32xf32>
    %220 = vector.extract_strided_slice %190 {offsets = [13, 0], sizes = [256, 32], strides = [1, 1]} : vector<280x32xf32> to vector<256x32xf32>
    %221 = arith.truncf %220 : vector<256x32xf32> to vector<256x32xbf16>
    %c1_104 = arith.constant 1 : index
    %c5_105 = arith.constant 5 : index
    %c0_106 = arith.constant 0 : index
    %c0_107 = arith.constant 0 : index
    %222 = vector.load %arg3[%c1_104, %c5_105, %c0_106, %c0_107] : memref<3x9x32x32xbf16, #tpu.memory_space<vmem>>, vector<1x1x32x32xbf16>
    %223 = vector.shape_cast %222 : vector<1x1x32x32xbf16> to vector<32x32xbf16>
    %cst_108 = arith.constant dense<0.000000e+00> : vector<256x32xf32>
    %224 = tpu.matmul %221, %223, %cst_108 {dimension_numbers = #tpu.dot_dimension_numbers<[1], [0], [0], [1], [0, 0, 1, 1], [], []>} : vector<256x32xbf16>, vector<32x32xbf16>, vector<256x32xf32> -> vector<256x32xf32>
    %225 = arith.addf %219, %224 : vector<256x32xf32>
    %226 = vector.extract_strided_slice %190 {offsets = [22, 0], sizes = [256, 32], strides = [1, 1]} : vector<280x32xf32> to vector<256x32xf32>
    %227 = arith.truncf %226 : vector<256x32xf32> to vector<256x32xbf16>
    %c1_109 = arith.constant 1 : index
    %c6_110 = arith.constant 6 : index
    %c0_111 = arith.constant 0 : index
    %c0_112 = arith.constant 0 : index
    %228 = vector.load %arg3[%c1_109, %c6_110, %c0_111, %c0_112] : memref<3x9x32x32xbf16, #tpu.memory_space<vmem>>, vector<1x1x32x32xbf16>
    %229 = vector.shape_cast %228 : vector<1x1x32x32xbf16> to vector<32x32xbf16>
    %cst_113 = arith.constant dense<0.000000e+00> : vector<256x32xf32>
    %230 = tpu.matmul %227, %229, %cst_113 {dimension_numbers = #tpu.dot_dimension_numbers<[1], [0], [0], [1], [0, 0, 1, 1], [], []>} : vector<256x32xbf16>, vector<32x32xbf16>, vector<256x32xf32> -> vector<256x32xf32>
    %231 = arith.addf %225, %230 : vector<256x32xf32>
    %232 = vector.extract_strided_slice %190 {offsets = [23, 0], sizes = [256, 32], strides = [1, 1]} : vector<280x32xf32> to vector<256x32xf32>
    %233 = arith.truncf %232 : vector<256x32xf32> to vector<256x32xbf16>
    %c1_114 = arith.constant 1 : index
    %c7_115 = arith.constant 7 : index
    %c0_116 = arith.constant 0 : index
    %c0_117 = arith.constant 0 : index
    %234 = vector.load %arg3[%c1_114, %c7_115, %c0_116, %c0_117] : memref<3x9x32x32xbf16, #tpu.memory_space<vmem>>, vector<1x1x32x32xbf16>
    %235 = vector.shape_cast %234 : vector<1x1x32x32xbf16> to vector<32x32xbf16>
    %cst_118 = arith.constant dense<0.000000e+00> : vector<256x32xf32>
    %236 = tpu.matmul %233, %235, %cst_118 {dimension_numbers = #tpu.dot_dimension_numbers<[1], [0], [0], [1], [0, 0, 1, 1], [], []>} : vector<256x32xbf16>, vector<32x32xbf16>, vector<256x32xf32> -> vector<256x32xf32>
    %237 = arith.addf %231, %236 : vector<256x32xf32>
    %238 = vector.extract_strided_slice %190 {offsets = [24, 0], sizes = [256, 32], strides = [1, 1]} : vector<280x32xf32> to vector<256x32xf32>
    %239 = arith.truncf %238 : vector<256x32xf32> to vector<256x32xbf16>
    %c1_119 = arith.constant 1 : index
    %c8_120 = arith.constant 8 : index
    %c0_121 = arith.constant 0 : index
    %c0_122 = arith.constant 0 : index
    %240 = vector.load %arg3[%c1_119, %c8_120, %c0_121, %c0_122] : memref<3x9x32x32xbf16, #tpu.memory_space<vmem>>, vector<1x1x32x32xbf16>
    %241 = vector.shape_cast %240 : vector<1x1x32x32xbf16> to vector<32x32xbf16>
    %cst_123 = arith.constant dense<0.000000e+00> : vector<256x32xf32>
    %242 = tpu.matmul %239, %241, %cst_123 {dimension_numbers = #tpu.dot_dimension_numbers<[1], [0], [0], [1], [0, 0, 1, 1], [], []>} : vector<256x32xbf16>, vector<32x32xbf16>, vector<256x32xf32> -> vector<256x32xf32>
    %243 = arith.addf %237, %242 : vector<256x32xf32>
    %c2_124 = arith.constant 2 : index
    %c0_125 = arith.constant 0 : index
    %244 = vector.load %arg4[%c2_124, %c0_125] : memref<4x32xf32, #tpu.memory_space<vmem>>, vector<1x32xf32>
    %245 = vector.broadcast %244 : vector<1x32xf32> to vector<256x32xf32>
    %246 = arith.addf %243, %245 : vector<256x32xf32>
    %c2_126 = arith.constant 2 : index
    %c0_127 = arith.constant 0 : index
    %c0_128 = arith.constant 0 : index
    %247 = vector.load %arg5[%c2_126, %c0_127, %c0_128] : memref<4x3x32xf32, #tpu.memory_space<vmem>>, vector<1x3x32xf32>
    %248 = vector.shape_cast %247 : vector<1x3x32xf32> to vector<3x32xf32>
    %249 = vector.shape_cast %246 : vector<256x32xf32> to vector<2x128x32xf32>
    %250 = tpu.iota {dimensions = array<i32: 1>} : vector<1x128x32xi32>
    %251 = arith.sitofp %250 : vector<1x128x32xi32> to vector<1x128x32xf32>
    %cst_129 = arith.constant 5.000000e-01 : f32
    %252 = vector.broadcast %cst_129 : f32 to vector<1x128x32xf32>
    %253 = arith.addf %251, %252 : vector<1x128x32xf32>
    %cst_130 = arith.constant 0.0909090936 : f32
    %254 = vector.broadcast %cst_130 : f32 to vector<1x128x32xf32>
    %255 = arith.mulf %253, %254 : vector<1x128x32xf32>
    %256 = math.floor %255 : vector<1x128x32xf32>
    %cst_131 = arith.constant 1.100000e+01 : f32
    %257 = vector.broadcast %cst_131 : f32 to vector<1x128x32xf32>
    %258 = arith.mulf %256, %257 : vector<1x128x32xf32>
    %259 = arith.subf %251, %258 : vector<1x128x32xf32>
    %cst_132 = arith.constant 7.650000e+01 : f32
    %260 = vector.broadcast %cst_132 : f32 to vector<1x128x32xf32>
    %261 = arith.cmpf olt, %251, %260 : vector<1x128x32xf32>
    %cst_133 = arith.constant 6.500000e+00 : f32
    %262 = vector.broadcast %cst_133 : f32 to vector<1x128x32xf32>
    %263 = arith.cmpf olt, %259, %262 : vector<1x128x32xf32>
    %264 = arith.andi %261, %263 : vector<1x128x32xi1>
    %cst_134 = arith.constant 0.000000e+00 : f32
    %265 = vector.shape_cast %264 : vector<1x128x32xi1> to vector<1x128x32xi1>
    %266 = vector.broadcast %265 : vector<1x128x32xi1> to vector<2x128x32xi1>
    %267 = vector.broadcast %cst_134 : f32 to vector<2x128x32xf32>
    %268 = arith.select %266, %249, %267 : vector<2x128x32xi1>, vector<2x128x32xf32>
    %cst_135 = arith.constant dense<0.000000e+00> : vector<2x32xf32>
    %269 = vector.multi_reduction <add>, %268, %cst_135 [1] : vector<2x128x32xf32> to vector<2x32xf32>
    %270 = vector.shape_cast %269 : vector<2x32xf32> to vector<2x1x32xf32>
    %cst_136 = arith.constant 0.0204081628 : f32
    %271 = vector.broadcast %cst_136 : f32 to vector<2x1x32xf32>
    %272 = arith.mulf %270, %271 : vector<2x1x32xf32>
    %273 = vector.broadcast %272 : vector<2x1x32xf32> to vector<2x128x32xf32>
    %274 = arith.subf %249, %273 : vector<2x128x32xf32>
    %cst_137 = arith.constant 0.000000e+00 : f32
    %275 = vector.shape_cast %264 : vector<1x128x32xi1> to vector<1x128x32xi1>
    %276 = vector.broadcast %275 : vector<1x128x32xi1> to vector<2x128x32xi1>
    %277 = vector.broadcast %cst_137 : f32 to vector<2x128x32xf32>
    %278 = arith.select %276, %274, %277 : vector<2x128x32xi1>, vector<2x128x32xf32>
    %279 = arith.mulf %278, %278 : vector<2x128x32xf32>
    %cst_138 = arith.constant dense<0.000000e+00> : vector<2x32xf32>
    %280 = vector.multi_reduction <add>, %279, %cst_138 [1] : vector<2x128x32xf32> to vector<2x32xf32>
    %281 = vector.shape_cast %280 : vector<2x32xf32> to vector<2x1x32xf32>
    %cst_139 = arith.constant 0.020833334 : f32
    %282 = vector.broadcast %cst_139 : f32 to vector<2x1x32xf32>
    %283 = arith.mulf %281, %282 : vector<2x1x32xf32>
    %cst_140 = arith.constant 9.99999996E-13 : f32
    %284 = vector.broadcast %cst_140 : f32 to vector<2x1x32xf32>
    %285 = arith.addf %283, %284 : vector<2x1x32xf32>
    %286 = math.sqrt %285 : vector<2x1x32xf32>
    %287 = vector.extract_strided_slice %248 {offsets = [0, 0], sizes = [1, 32], strides = [1, 1]} : vector<3x32xf32> to vector<1x32xf32>
    %288 = vector.shape_cast %287 : vector<1x32xf32> to vector<1x1x32xf32>
    %289 = vector.broadcast %288 : vector<1x1x32xf32> to vector<2x1x32xf32>
    %290 = arith.mulf %289, %272 : vector<2x1x32xf32>
    %291 = vector.extract_strided_slice %248 {offsets = [1, 0], sizes = [1, 32], strides = [1, 1]} : vector<3x32xf32> to vector<1x32xf32>
    %292 = vector.shape_cast %291 : vector<1x32xf32> to vector<1x1x32xf32>
    %293 = vector.broadcast %292 : vector<1x1x32xf32> to vector<2x1x32xf32>
    %294 = arith.mulf %293, %286 : vector<2x1x32xf32>
    %295 = arith.addf %290, %294 : vector<2x1x32xf32>
    %296 = vector.extract_strided_slice %248 {offsets = [2, 0], sizes = [1, 32], strides = [1, 1]} : vector<3x32xf32> to vector<1x32xf32>
    %297 = vector.shape_cast %296 : vector<1x32xf32> to vector<1x1x32xf32>
    %298 = vector.broadcast %297 : vector<1x1x32xf32> to vector<2x1x32xf32>
    %299 = arith.addf %295, %298 : vector<2x1x32xf32>
    %300 = arith.negf %299 : vector<2x1x32xf32>
    %301 = math.exp %300 : vector<2x1x32xf32>
    %cst_141 = arith.constant 1.000000e+00 : f32
    %302 = vector.broadcast %cst_141 : f32 to vector<2x1x32xf32>
    %303 = arith.addf %302, %301 : vector<2x1x32xf32>
    %304 = arith.divf %302, %303 : vector<2x1x32xf32>
    %305 = vector.broadcast %304 : vector<2x1x32xf32> to vector<2x128x32xf32>
    %306 = arith.mulf %249, %305 : vector<2x128x32xf32>
    %cst_142 = arith.constant 0.000000e+00 : f32
    %307 = vector.broadcast %cst_142 : f32 to vector<2x128x32xf32>
    %308 = arith.maximumf %306, %307 : vector<2x128x32xf32>
    %309 = vector.shape_cast %308 : vector<2x128x32xf32> to vector<256x32xf32>
    %310 = tpu.concatenate %309, %69 in 0 : vector<256x32xf32>, vector<24x32xf32> -> vector<280x32xf32>
    %311 = vector.extract_strided_slice %310 {offsets = [0, 0], sizes = [256, 32], strides = [1, 1]} : vector<280x32xf32> to vector<256x32xf32>
    %312 = arith.truncf %311 : vector<256x32xf32> to vector<256x32xbf16>
    %c2_143 = arith.constant 2 : index
    %c0_144 = arith.constant 0 : index
    %c0_145 = arith.constant 0 : index
    %c0_146 = arith.constant 0 : index
    %313 = vector.load %arg3[%c2_143, %c0_144, %c0_145, %c0_146] : memref<3x9x32x32xbf16, #tpu.memory_space<vmem>>, vector<1x1x32x32xbf16>
    %314 = vector.shape_cast %313 : vector<1x1x32x32xbf16> to vector<32x32xbf16>
    %cst_147 = arith.constant dense<0.000000e+00> : vector<256x32xf32>
    %315 = tpu.matmul %312, %314, %cst_147 {dimension_numbers = #tpu.dot_dimension_numbers<[1], [0], [0], [1], [0, 0, 1, 1], [], []>} : vector<256x32xbf16>, vector<32x32xbf16>, vector<256x32xf32> -> vector<256x32xf32>
    %316 = vector.extract_strided_slice %310 {offsets = [1, 0], sizes = [256, 32], strides = [1, 1]} : vector<280x32xf32> to vector<256x32xf32>
    %317 = arith.truncf %316 : vector<256x32xf32> to vector<256x32xbf16>
    %c2_148 = arith.constant 2 : index
    %c1_149 = arith.constant 1 : index
    %c0_150 = arith.constant 0 : index
    %c0_151 = arith.constant 0 : index
    %318 = vector.load %arg3[%c2_148, %c1_149, %c0_150, %c0_151] : memref<3x9x32x32xbf16, #tpu.memory_space<vmem>>, vector<1x1x32x32xbf16>
    %319 = vector.shape_cast %318 : vector<1x1x32x32xbf16> to vector<32x32xbf16>
    %cst_152 = arith.constant dense<0.000000e+00> : vector<256x32xf32>
    %320 = tpu.matmul %317, %319, %cst_152 {dimension_numbers = #tpu.dot_dimension_numbers<[1], [0], [0], [1], [0, 0, 1, 1], [], []>} : vector<256x32xbf16>, vector<32x32xbf16>, vector<256x32xf32> -> vector<256x32xf32>
    %321 = arith.addf %315, %320 : vector<256x32xf32>
    %322 = vector.extract_strided_slice %310 {offsets = [2, 0], sizes = [256, 32], strides = [1, 1]} : vector<280x32xf32> to vector<256x32xf32>
    %323 = arith.truncf %322 : vector<256x32xf32> to vector<256x32xbf16>
    %c2_153 = arith.constant 2 : index
    %c2_154 = arith.constant 2 : index
    %c0_155 = arith.constant 0 : index
    %c0_156 = arith.constant 0 : index
    %324 = vector.load %arg3[%c2_153, %c2_154, %c0_155, %c0_156] : memref<3x9x32x32xbf16, #tpu.memory_space<vmem>>, vector<1x1x32x32xbf16>
    %325 = vector.shape_cast %324 : vector<1x1x32x32xbf16> to vector<32x32xbf16>
    %cst_157 = arith.constant dense<0.000000e+00> : vector<256x32xf32>
    %326 = tpu.matmul %323, %325, %cst_157 {dimension_numbers = #tpu.dot_dimension_numbers<[1], [0], [0], [1], [0, 0, 1, 1], [], []>} : vector<256x32xbf16>, vector<32x32xbf16>, vector<256x32xf32> -> vector<256x32xf32>
    %327 = arith.addf %321, %326 : vector<256x32xf32>
    %328 = vector.extract_strided_slice %310 {offsets = [11, 0], sizes = [256, 32], strides = [1, 1]} : vector<280x32xf32> to vector<256x32xf32>
    %329 = arith.truncf %328 : vector<256x32xf32> to vector<256x32xbf16>
    %c2_158 = arith.constant 2 : index
    %c3_159 = arith.constant 3 : index
    %c0_160 = arith.constant 0 : index
    %c0_161 = arith.constant 0 : index
    %330 = vector.load %arg3[%c2_158, %c3_159, %c0_160, %c0_161] : memref<3x9x32x32xbf16, #tpu.memory_space<vmem>>, vector<1x1x32x32xbf16>
    %331 = vector.shape_cast %330 : vector<1x1x32x32xbf16> to vector<32x32xbf16>
    %cst_162 = arith.constant dense<0.000000e+00> : vector<256x32xf32>
    %332 = tpu.matmul %329, %331, %cst_162 {dimension_numbers = #tpu.dot_dimension_numbers<[1], [0], [0], [1], [0, 0, 1, 1], [], []>} : vector<256x32xbf16>, vector<32x32xbf16>, vector<256x32xf32> -> vector<256x32xf32>
    %333 = arith.addf %327, %332 : vector<256x32xf32>
    %334 = vector.extract_strided_slice %310 {offsets = [12, 0], sizes = [256, 32], strides = [1, 1]} : vector<280x32xf32> to vector<256x32xf32>
    %335 = arith.truncf %334 : vector<256x32xf32> to vector<256x32xbf16>
    %c2_163 = arith.constant 2 : index
    %c4_164 = arith.constant 4 : index
    %c0_165 = arith.constant 0 : index
    %c0_166 = arith.constant 0 : index
    %336 = vector.load %arg3[%c2_163, %c4_164, %c0_165, %c0_166] : memref<3x9x32x32xbf16, #tpu.memory_space<vmem>>, vector<1x1x32x32xbf16>
    %337 = vector.shape_cast %336 : vector<1x1x32x32xbf16> to vector<32x32xbf16>
    %cst_167 = arith.constant dense<0.000000e+00> : vector<256x32xf32>
    %338 = tpu.matmul %335, %337, %cst_167 {dimension_numbers = #tpu.dot_dimension_numbers<[1], [0], [0], [1], [0, 0, 1, 1], [], []>} : vector<256x32xbf16>, vector<32x32xbf16>, vector<256x32xf32> -> vector<256x32xf32>
    %339 = arith.addf %333, %338 : vector<256x32xf32>
    %340 = vector.extract_strided_slice %310 {offsets = [13, 0], sizes = [256, 32], strides = [1, 1]} : vector<280x32xf32> to vector<256x32xf32>
    %341 = arith.truncf %340 : vector<256x32xf32> to vector<256x32xbf16>
    %c2_168 = arith.constant 2 : index
    %c5_169 = arith.constant 5 : index
    %c0_170 = arith.constant 0 : index
    %c0_171 = arith.constant 0 : index
    %342 = vector.load %arg3[%c2_168, %c5_169, %c0_170, %c0_171] : memref<3x9x32x32xbf16, #tpu.memory_space<vmem>>, vector<1x1x32x32xbf16>
    %343 = vector.shape_cast %342 : vector<1x1x32x32xbf16> to vector<32x32xbf16>
    %cst_172 = arith.constant dense<0.000000e+00> : vector<256x32xf32>
    %344 = tpu.matmul %341, %343, %cst_172 {dimension_numbers = #tpu.dot_dimension_numbers<[1], [0], [0], [1], [0, 0, 1, 1], [], []>} : vector<256x32xbf16>, vector<32x32xbf16>, vector<256x32xf32> -> vector<256x32xf32>
    %345 = arith.addf %339, %344 : vector<256x32xf32>
    %346 = vector.extract_strided_slice %310 {offsets = [22, 0], sizes = [256, 32], strides = [1, 1]} : vector<280x32xf32> to vector<256x32xf32>
    %347 = arith.truncf %346 : vector<256x32xf32> to vector<256x32xbf16>
    %c2_173 = arith.constant 2 : index
    %c6_174 = arith.constant 6 : index
    %c0_175 = arith.constant 0 : index
    %c0_176 = arith.constant 0 : index
    %348 = vector.load %arg3[%c2_173, %c6_174, %c0_175, %c0_176] : memref<3x9x32x32xbf16, #tpu.memory_space<vmem>>, vector<1x1x32x32xbf16>
    %349 = vector.shape_cast %348 : vector<1x1x32x32xbf16> to vector<32x32xbf16>
    %cst_177 = arith.constant dense<0.000000e+00> : vector<256x32xf32>
    %350 = tpu.matmul %347, %349, %cst_177 {dimension_numbers = #tpu.dot_dimension_numbers<[1], [0], [0], [1], [0, 0, 1, 1], [], []>} : vector<256x32xbf16>, vector<32x32xbf16>, vector<256x32xf32> -> vector<256x32xf32>
    %351 = arith.addf %345, %350 : vector<256x32xf32>
    %352 = vector.extract_strided_slice %310 {offsets = [23, 0], sizes = [256, 32], strides = [1, 1]} : vector<280x32xf32> to vector<256x32xf32>
    %353 = arith.truncf %352 : vector<256x32xf32> to vector<256x32xbf16>
    %c2_178 = arith.constant 2 : index
    %c7_179 = arith.constant 7 : index
    %c0_180 = arith.constant 0 : index
    %c0_181 = arith.constant 0 : index
    %354 = vector.load %arg3[%c2_178, %c7_179, %c0_180, %c0_181] : memref<3x9x32x32xbf16, #tpu.memory_space<vmem>>, vector<1x1x32x32xbf16>
    %355 = vector.shape_cast %354 : vector<1x1x32x32xbf16> to vector<32x32xbf16>
    %cst_182 = arith.constant dense<0.000000e+00> : vector<256x32xf32>
    %356 = tpu.matmul %353, %355, %cst_182 {dimension_numbers = #tpu.dot_dimension_numbers<[1], [0], [0], [1], [0, 0, 1, 1], [], []>} : vector<256x32xbf16>, vector<32x32xbf16>, vector<256x32xf32> -> vector<256x32xf32>
    %357 = arith.addf %351, %356 : vector<256x32xf32>
    %358 = vector.extract_strided_slice %310 {offsets = [24, 0], sizes = [256, 32], strides = [1, 1]} : vector<280x32xf32> to vector<256x32xf32>
    %359 = arith.truncf %358 : vector<256x32xf32> to vector<256x32xbf16>
    %c2_183 = arith.constant 2 : index
    %c8_184 = arith.constant 8 : index
    %c0_185 = arith.constant 0 : index
    %c0_186 = arith.constant 0 : index
    %360 = vector.load %arg3[%c2_183, %c8_184, %c0_185, %c0_186] : memref<3x9x32x32xbf16, #tpu.memory_space<vmem>>, vector<1x1x32x32xbf16>
    %361 = vector.shape_cast %360 : vector<1x1x32x32xbf16> to vector<32x32xbf16>
    %cst_187 = arith.constant dense<0.000000e+00> : vector<256x32xf32>
    %362 = tpu.matmul %359, %361, %cst_187 {dimension_numbers = #tpu.dot_dimension_numbers<[1], [0], [0], [1], [0, 0, 1, 1], [], []>} : vector<256x32xbf16>, vector<32x32xbf16>, vector<256x32xf32> -> vector<256x32xf32>
    %363 = arith.addf %357, %362 : vector<256x32xf32>
    %c3_188 = arith.constant 3 : index
    %c0_189 = arith.constant 0 : index
    %364 = vector.load %arg4[%c3_188, %c0_189] : memref<4x32xf32, #tpu.memory_space<vmem>>, vector<1x32xf32>
    %365 = vector.broadcast %364 : vector<1x32xf32> to vector<256x32xf32>
    %366 = arith.addf %363, %365 : vector<256x32xf32>
    %c3_190 = arith.constant 3 : index
    %c0_191 = arith.constant 0 : index
    %c0_192 = arith.constant 0 : index
    %367 = vector.load %arg5[%c3_190, %c0_191, %c0_192] : memref<4x3x32xf32, #tpu.memory_space<vmem>>, vector<1x3x32xf32>
    %368 = vector.shape_cast %367 : vector<1x3x32xf32> to vector<3x32xf32>
    %369 = vector.shape_cast %366 : vector<256x32xf32> to vector<2x128x32xf32>
    %370 = tpu.iota {dimensions = array<i32: 1>} : vector<1x128x32xi32>
    %371 = arith.sitofp %370 : vector<1x128x32xi32> to vector<1x128x32xf32>
    %cst_193 = arith.constant 5.000000e-01 : f32
    %372 = vector.broadcast %cst_193 : f32 to vector<1x128x32xf32>
    %373 = arith.addf %371, %372 : vector<1x128x32xf32>
    %cst_194 = arith.constant 0.0909090936 : f32
    %374 = vector.broadcast %cst_194 : f32 to vector<1x128x32xf32>
    %375 = arith.mulf %373, %374 : vector<1x128x32xf32>
    %376 = math.floor %375 : vector<1x128x32xf32>
    %cst_195 = arith.constant 1.100000e+01 : f32
    %377 = vector.broadcast %cst_195 : f32 to vector<1x128x32xf32>
    %378 = arith.mulf %376, %377 : vector<1x128x32xf32>
    %379 = arith.subf %371, %378 : vector<1x128x32xf32>
    %cst_196 = arith.constant 5.450000e+01 : f32
    %380 = vector.broadcast %cst_196 : f32 to vector<1x128x32xf32>
    %381 = arith.cmpf olt, %371, %380 : vector<1x128x32xf32>
    %cst_197 = arith.constant 4.500000e+00 : f32
    %382 = vector.broadcast %cst_197 : f32 to vector<1x128x32xf32>
    %383 = arith.cmpf olt, %379, %382 : vector<1x128x32xf32>
    %384 = arith.andi %381, %383 : vector<1x128x32xi1>
    %cst_198 = arith.constant 0.000000e+00 : f32
    %385 = vector.shape_cast %384 : vector<1x128x32xi1> to vector<1x128x32xi1>
    %386 = vector.broadcast %385 : vector<1x128x32xi1> to vector<2x128x32xi1>
    %387 = vector.broadcast %cst_198 : f32 to vector<2x128x32xf32>
    %388 = arith.select %386, %369, %387 : vector<2x128x32xi1>, vector<2x128x32xf32>
    %cst_199 = arith.constant dense<0.000000e+00> : vector<2x32xf32>
    %389 = vector.multi_reduction <add>, %388, %cst_199 [1] : vector<2x128x32xf32> to vector<2x32xf32>
    %390 = vector.shape_cast %389 : vector<2x32xf32> to vector<2x1x32xf32>
    %cst_200 = arith.constant 4.000000e-02 : f32
    %391 = vector.broadcast %cst_200 : f32 to vector<2x1x32xf32>
    %392 = arith.mulf %390, %391 : vector<2x1x32xf32>
    %393 = vector.broadcast %392 : vector<2x1x32xf32> to vector<2x128x32xf32>
    %394 = arith.subf %369, %393 : vector<2x128x32xf32>
    %cst_201 = arith.constant 0.000000e+00 : f32
    %395 = vector.shape_cast %384 : vector<1x128x32xi1> to vector<1x128x32xi1>
    %396 = vector.broadcast %395 : vector<1x128x32xi1> to vector<2x128x32xi1>
    %397 = vector.broadcast %cst_201 : f32 to vector<2x128x32xf32>
    %398 = arith.select %396, %394, %397 : vector<2x128x32xi1>, vector<2x128x32xf32>
    %399 = arith.mulf %398, %398 : vector<2x128x32xf32>
    %cst_202 = arith.constant dense<0.000000e+00> : vector<2x32xf32>
    %400 = vector.multi_reduction <add>, %399, %cst_202 [1] : vector<2x128x32xf32> to vector<2x32xf32>
    %401 = vector.shape_cast %400 : vector<2x32xf32> to vector<2x1x32xf32>
    %cst_203 = arith.constant 0.0416666679 : f32
    %402 = vector.broadcast %cst_203 : f32 to vector<2x1x32xf32>
    %403 = arith.mulf %401, %402 : vector<2x1x32xf32>
    %cst_204 = arith.constant 9.99999996E-13 : f32
    %404 = vector.broadcast %cst_204 : f32 to vector<2x1x32xf32>
    %405 = arith.addf %403, %404 : vector<2x1x32xf32>
    %406 = math.sqrt %405 : vector<2x1x32xf32>
    %407 = vector.extract_strided_slice %368 {offsets = [0, 0], sizes = [1, 32], strides = [1, 1]} : vector<3x32xf32> to vector<1x32xf32>
    %408 = vector.shape_cast %407 : vector<1x32xf32> to vector<1x1x32xf32>
    %409 = vector.broadcast %408 : vector<1x1x32xf32> to vector<2x1x32xf32>
    %410 = arith.mulf %409, %392 : vector<2x1x32xf32>
    %411 = vector.extract_strided_slice %368 {offsets = [1, 0], sizes = [1, 32], strides = [1, 1]} : vector<3x32xf32> to vector<1x32xf32>
    %412 = vector.shape_cast %411 : vector<1x32xf32> to vector<1x1x32xf32>
    %413 = vector.broadcast %412 : vector<1x1x32xf32> to vector<2x1x32xf32>
    %414 = arith.mulf %413, %406 : vector<2x1x32xf32>
    %415 = arith.addf %410, %414 : vector<2x1x32xf32>
    %416 = vector.extract_strided_slice %368 {offsets = [2, 0], sizes = [1, 32], strides = [1, 1]} : vector<3x32xf32> to vector<1x32xf32>
    %417 = vector.shape_cast %416 : vector<1x32xf32> to vector<1x1x32xf32>
    %418 = vector.broadcast %417 : vector<1x1x32xf32> to vector<2x1x32xf32>
    %419 = arith.addf %415, %418 : vector<2x1x32xf32>
    %420 = arith.negf %419 : vector<2x1x32xf32>
    %421 = math.exp %420 : vector<2x1x32xf32>
    %cst_205 = arith.constant 1.000000e+00 : f32
    %422 = vector.broadcast %cst_205 : f32 to vector<2x1x32xf32>
    %423 = arith.addf %422, %421 : vector<2x1x32xf32>
    %424 = arith.divf %422, %423 : vector<2x1x32xf32>
    %425 = vector.broadcast %424 : vector<2x1x32xf32> to vector<2x128x32xf32>
    %426 = arith.mulf %369, %425 : vector<2x128x32xf32>
    %cst_206 = arith.constant 0.000000e+00 : f32
    %427 = vector.broadcast %cst_206 : f32 to vector<2x128x32xf32>
    %428 = arith.maximumf %426, %427 : vector<2x128x32xf32>
    %429 = vector.shape_cast %428 : vector<2x128x32xf32> to vector<256x32xf32>
    %430 = vector.shape_cast %429 : vector<256x32xf32> to vector<2x128x32xf32>
    %c0_207 = arith.constant 0 : index
    %c0_208 = arith.constant 0 : index
    %c0_209 = arith.constant 0 : index
    %431 = vector.load %arg6[%c0_207, %c0_208, %c0_209] : memref<2x128x32xf32, #tpu.memory_space<vmem>>, vector<2x128x32xf32>
    tpu.vector_store %arg6[%c0_207, %c0_208, %c0_209], %430 {strides = array<i32>} : memref<2x128x32xf32, #tpu.memory_space<vmem>>, vector<2x128x32xf32>,
    return
  }
  func.func @transform_0(%arg0: i32) -> (i32, i32) {
    %c0_i32 = arith.constant 0 : i32
    %c0_i32_0 = arith.constant 0 : i32
    return %arg0, %c0_i32 : i32, i32
  }
  func.func @transform_1(%arg0: i32) -> (i32, i32) {
    %c0_i32 = arith.constant 0 : i32
    %c0_i32_0 = arith.constant 0 : i32
    %c0_i32_1 = arith.constant 0 : i32
    return %c0_i32, %c0_i32_0 : i32, i32
  }
  func.func @transform_2(%arg0: i32) -> (i32, i32, i32, i32) {
    %c0_i32 = arith.constant 0 : i32
    %c0_i32_0 = arith.constant 0 : i32
    %c0_i32_1 = arith.constant 0 : i32
    %c0_i32_2 = arith.constant 0 : i32
    %c0_i32_3 = arith.constant 0 : i32
    return %c0_i32, %c0_i32_0, %c0_i32_1, %c0_i32_2 : i32, i32, i32, i32
  }
  func.func @transform_3(%arg0: i32) -> (i32, i32) {
    %c0_i32 = arith.constant 0 : i32
    %c0_i32_0 = arith.constant 0 : i32
    %c0_i32_1 = arith.constant 0 : i32
    return %c0_i32, %c0_i32_0 : i32, i32
  }
  func.func @transform_4(%arg0: i32) -> (i32, i32, i32) {
    %c0_i32 = arith.constant 0 : i32
    %c0_i32_0 = arith.constant 0 : i32
    %c0_i32_1 = arith.constant 0 : i32
    %c0_i32_2 = arith.constant 0 : i32
    return %c0_i32, %c0_i32_0, %c0_i32_1 : i32, i32, i32
  }
  func.func @transform_5(%arg0: i32) -> (i32, i32, i32) {
    %c0_i32 = arith.constant 0 : i32
    %c0_i32_0 = arith.constant 0 : i32
    %c0_i32_1 = arith.constant 0 : i32
    return %arg0, %c0_i32, %c0_i32_0 : i32, i32, i32
  }
}

</mosaic_0001>

<llo_original>
// kernel: encoder_cnsn_forward.1
$region0: #{encoder_cnsn_forward.1}
  #allocation0 [shape = 'u32[]', space=smem, size = 0x4, offset = 0x4, fixed_abs, tag = 'smem constant byte address 0x4 - core index']
  #allocation1 [shape = 'u32[72,128]{1,0:T(1,128)}', space=vmem, size = 0x9000, scoped, tag = 'internal scratch']
  %s0 = inlined_call_operand.vmem [shape: bf16[1024,36], index: 0, kind: input, shape index: {}]
  %s1 = inlined_call_operand.vmem [shape: bf16[36,32], index: 1, kind: input, shape index: {}]
  %s2 = inlined_call_operand.vmem [shape: bf16[3,9,32,32], index: 2, kind: input, shape index: {}]
  %s3 = inlined_call_operand.vmem [shape: f32[4,32], index: 3, kind: input, shape index: {}]
  %s4 = inlined_call_operand.vmem [shape: f32[4,3,32], index: 4, kind: input, shape index: {}]
  %s5 = inlined_call_operand.vmem [shape: f32[8,128,32], index: 5, kind: output, shape index: {}]
  %s6 = sld [smem:[#allocation0]]
  $region53: #{encoder_cnsn_forward.1} parent=0
    _
  %s8 = ssub.s32 1, %s6
  %s9 = scalar_select 0, %s8, %s6
  loop: start=0, step=1, limit=6
  $region2: #{encoder_cnsn_forward.1} parent=0 // loop_pre_header
    _
  $region3: #{encoder_cnsn_forward.1} parent=0 // loop_header
    %s11 = sphi 0, %s15
    %p12 = scmp.ge.s32.totalorder %s11, 6
    %s21 = sphi 0, %s23
    %s24 = sphi 0, %s21
    %s25 = sphi 0, %s24
    %s41 = sphi 0, %s25
    %s45 = sphi 0, %s45
    %s47 = sphi 0, %s45
    %s48 = sphi 0, %s47
    %s62 = sphi 0, %s48
    %s66 = sphi 0, %s66
    %s68 = sphi 0, %s66
    %s69 = sphi 0, %s68
    %s83 = sphi 0, %s69
    %s87 = sphi 0, %s87
    %s89 = sphi 0, %s87
    %s90 = sphi 0, %s89
    %s104 = sphi 0, %s90
    %s108 = sphi 0, %s108
    %s110 = sphi 0, %s108
    %s111 = sphi 0, %s110
    %s125 = sphi 0, %s111
    %s131 = sphi 0, %s133
    %s134 = sphi 0, %s131
    %s135 = sphi 0, %s134
    %s151 = sphi 0, %s135
  $region4: #{encoder_cnsn_forward.1} parent=0 // loop_header_branch
    %14 = sbr.rel (%p12) target = $region8
  $region5: #{encoder_cnsn_forward.1} parent=0 // loop_body
    %s16 = ssub.s32 %s11, 1
    %s17 = ssub.s32 %s11, 2
    %s18 = sadd.s32 %s11, 1
    %s19 = ssub.s32 %s11, %s18
    %p20 = scmp.eq.s32.totalorder %s19, 0
    %s22 = sadd.s32 %s21, 1
    %s23 = scalar_select %p20, %s21, %s22
    %p26 = pneg %p20
    %p27 = scmp.eq.s32.totalorder %s11, 3
    %p28 = por %p26, %p27
    %p29 = scmp.ne.s32.totalorder %s21, %s24
    %p30 = scmp.eq.s32.totalorder %s11, 0
    %p31 = por %p29, %p30
    %p32 = scmp.ne.s32.totalorder %s21, %s24
    %p33 = scmp.eq.s32.totalorder %s16, 3
    %p34 = por %p32, %p33
    %p35 = scmp.ne.s32.totalorder %s24, %s25
    %p36 = scmp.eq.s32.totalorder %s16, 0
    %p37 = por %p35, %p36
    %p38 = scmp.ne.s32.totalorder %s24, %s25
    %p39 = scmp.eq.s32.totalorder %s17, 3
    %p40 = por %p38, %p39
    %p42 = scmp.ne.s32.totalorder %s25, %s41
    %p43 = scmp.eq.s32.totalorder %s17, 0
    %p44 = por %p42, %p43
    %s46 = sadd.s32 %s45, 1
    %p49 = scmp.eq.s32.totalorder %s11, 3
    %p50 = scmp.ne.s32.totalorder %s45, %s47
    %p51 = scmp.eq.s32.totalorder %s11, 0
    %p52 = por %p50, %p51
    %p53 = scmp.ne.s32.totalorder %s45, %s47
    %p54 = scmp.eq.s32.totalorder %s16, 3
    %p55 = por %p53, %p54
    %p56 = scmp.ne.s32.totalorder %s47, %s48
    %p57 = scmp.eq.s32.totalorder %s16, 0
    %p58 = por %p56, %p57
    %p59 = scmp.ne.s32.totalorder %s47, %s48
    %p60 = scmp.eq.s32.totalorder %s17, 3
    %p61 = por %p59, %p60
    %p63 = scmp.ne.s32.totalorder %s48, %s62
    %p64 = scmp.eq.s32.totalorder %s17, 0
    %p65 = por %p63, %p64
    %s67 = sadd.s32 %s66, 1
    %p70 = scmp.eq.s32.totalorder %s11, 3
    %p71 = scmp.ne.s32.totalorder %s66, %s68
    %p72 = scmp.eq.s32.totalorder %s11, 0
    %p73 = por %p71, %p72
    %p74 = scmp.ne.s32.totalorder %s66, %s68
    %p75 = scmp.eq.s32.totalorder %s16, 3
    %p76 = por %p74, %p75
    %p77 = scmp.ne.s32.totalorder %s68, %s69
    %p78 = scmp.eq.s32.totalorder %s16, 0
    %p79 = por %p77, %p78
    %p80 = scmp.ne.s32.totalorder %s68, %s69
    %p81 = scmp.eq.s32.totalorder %s17, 3
    %p82 = por %p80, %p81
    %p84 = scmp.ne.s32.totalorder %s69, %s83
    %p85 = scmp.eq.s32.totalorder %s17, 0
    %p86 = por %p84, %p85
    %s88 = sadd.s32 %s87, 1
    %p91 = scmp.eq.s32.totalorder %s11, 3
    %p92 = scmp.ne.s32.totalorder %s87, %s89
    %p93 = scmp.eq.s32.totalorder %s11, 0
    %p94 = por %p92, %p93
    %p95 = scmp.ne.s32.totalorder %s87, %s89
    %p96 = scmp.eq.s32.totalorder %s16, 3
    %p97 = por %p95, %p96
    %p98 = scmp.ne.s32.totalorder %s89, %s90
    %p99 = scmp.eq.s32.totalorder %s16, 0
    %p100 = por %p98, %p99
    %p101 = scmp.ne.s32.totalorder %s89, %s90
    %p102 = scmp.eq.s32.totalorder %s17, 3
    %p103 = por %p101, %p102
    %p105 = scmp.ne.s32.totalorder %s90, %s104
    %p106 = scmp.eq.s32.totalorder %s17, 0
    %p107 = por %p105, %p106
    %s109 = sadd.s32 %s108, 1
    %p112 = scmp.eq.s32.totalorder %s11, 3
    %p113 = scmp.ne.s32.totalorder %s108, %s110
    %p114 = scmp.eq.s32.totalorder %s11, 0
    %p115 = por %p113, %p114
    %p116 = scmp.ne.s32.totalorder %s108, %s110
    %p117 = scmp.eq.s32.totalorder %s16, 3
    %p118 = por %p116, %p117
    %p119 = scmp.ne.s32.totalorder %s110, %s111
    %p120 = scmp.eq.s32.totalorder %s16, 0
    %p121 = por %p119, %p120
    %p122 = scmp.ne.s32.totalorder %s110, %s111
    %p123 = scmp.eq.s32.totalorder %s17, 3
    %p124 = por %p122, %p123
    %p126 = scmp.ne.s32.totalorder %s111, %s125
    %p127 = scmp.eq.s32.totalorder %s17, 0
    %p128 = por %p126, %p127
    %s129 = ssub.s32 %s11, %s18
    %p130 = scmp.eq.s32.totalorder %s129, 0
    %s132 = sadd.s32 %s131, 1
    %s133 = scalar_select %p130, %s131, %s132
    %p136 = pneg %p130
    %p137 = scmp.eq.s32.totalorder %s11, 3
    %p138 = por %p136, %p137
    %p139 = scmp.ne.s32.totalorder %s131, %s134
    %p140 = scmp.eq.s32.totalorder %s11, 0
    %p141 = por %p139, %p140
    %p142 = scmp.ne.s32.totalorder %s131, %s134
    %p143 = scmp.eq.s32.totalorder %s16, 3
    %p144 = por %p142, %p143
    %p145 = scmp.ne.s32.totalorder %s134, %s135
    %p146 = scmp.eq.s32.totalorder %s16, 0
    %p147 = por %p145, %p146
    %p148 = scmp.ne.s32.totalorder %s134, %s135
    %p149 = scmp.eq.s32.totalorder %s17, 3
    %p150 = por %p148, %p149
    %p152 = scmp.ne.s32.totalorder %s135, %s151
    %p153 = scmp.eq.s32.totalorder %s17, 0
    %p154 = por %p152, %p153
    %p155 = scmp.le.s32.totalorder 1, %s11
    %p156 = scmp.lt.s32.totalorder %s11, 5
    %p157 = pnand %p155, %p156
    %p158 = pneg %p157
    // Predicated region
    $region9: #{encoder_cnsn_forward.1} parent=5 // pred_check
      _
    $region10: #{encoder_cnsn_forward.1} parent=5 // pred_check_branch
      %160 = sbr.rel (%p157) target = $region12
    $region11: #{encoder_cnsn_forward.1} parent=5 // pred_region
      %s161 = ssub.s32 %s11, 1
      // Predicated region
      $region13: #{encoder_cnsn_forward.1} parent=11 // pred_check
        %p162 = pneg %p58
      $region14: #{encoder_cnsn_forward.1} parent=11 // pred_check_branch
        %164 = sbr.rel (%p162) target = $region16
      $region15: #{encoder_cnsn_forward.1} parent=11 // pred_region
        _
      $region16: #{encoder_cnsn_forward.1} parent=11 // pred_fallthru
        _
      // Predicated region
      $region17: #{encoder_cnsn_forward.1} parent=11 // pred_check
        %p165 = pneg %p79
      $region18: #{encoder_cnsn_forward.1} parent=11 // pred_check_branch
        %167 = sbr.rel (%p165) target = $region20
      $region19: #{encoder_cnsn_forward.1} parent=11 // pred_region
        _
      $region20: #{encoder_cnsn_forward.1} parent=11 // pred_fallthru
        _
      // Predicated region
      $region21: #{encoder_cnsn_forward.1} parent=11 // pred_check
        %p168 = pneg %p100
      $region22: #{encoder_cnsn_forward.1} parent=11 // pred_check_branch
        %170 = sbr.rel (%p168) target = $region24
      $region23: #{encoder_cnsn_forward.1} parent=11 // pred_region
        _
      $region24: #{encoder_cnsn_forward.1} parent=11 // pred_fallthru
        _
      // Predicated region
      $region25: #{encoder_cnsn_forward.1} parent=11 // pred_check
        %p171 = pneg %p121
      $region26: #{encoder_cnsn_forward.1} parent=11 // pred_check_branch
        %173 = sbr.rel (%p171) target = $region28
      $region27: #{encoder_cnsn_forward.1} parent=11 // pred_region
        _
      $region28: #{encoder_cnsn_forward.1} parent=11 // pred_fallthru
        _
    $region12: #{encoder_cnsn_forward.1} parent=5 // pred_fallthru
      _
    %p174 = scmp.lt.s32.totalorder %s11, 4
    // Predicated region
    $region29: #{encoder_cnsn_forward.1} parent=5 // pred_check
      %p175 = pneg %p174
    $region30: #{encoder_cnsn_forward.1} parent=5 // pred_check_branch
      %177 = sbr.rel (%p175) target = $region32
    $region31: #{encoder_cnsn_forward.1} parent=5 // pred_region
      // Predicated region
      $region33: #{encoder_cnsn_forward.1} parent=31 // pred_check
        %p178 = pneg %p31
      $region34: #{encoder_cnsn_forward.1} parent=31 // pred_check_branch
        %180 = sbr.rel (%p178) target = $region36
      $region35: #{encoder_cnsn_forward.1} parent=31 // pred_region
        %s181 = smul.u32 32, %s11
        %p182 = scmp.lt.s32.totalorder %s181, 127
        %s183 = scalar_select %p182, %s181, 127
        %s184 = smul.addr %s183, 4
        %s185 = scalar_lea.vmem %s0, %s184
        %s186 = smul.u32 32, %s11
      $region36: #{encoder_cnsn_forward.1} parent=31 // pred_fallthru
        _
    $region32: #{encoder_cnsn_forward.1} parent=5 // pred_fallthru
      _
    %p187 = scmp.le.s32.totalorder 1, %s11
    %p188 = scmp.lt.s32.totalorder %s11, 5
    %p189 = pnand %p187, %p188
    %p190 = pneg %p189
    // Predicated region
    $region37: #{encoder_cnsn_forward.1} parent=5 // pred_check
      _
    $region38: #{encoder_cnsn_forward.1} parent=5 // pred_check_branch
      %192 = sbr.rel (%p189) target = $region40
    $region39: #{encoder_cnsn_forward.1} parent=5 // pred_region
      %s193 = ssub.s32 %s11, 1
      %s194 = smul.u32 32, %s16
      %p195 = scmp.lt.s32.totalorder %s194, 127
      %s196 = scalar_select %p195, %s194, 127
      %s197 = smul.addr %s196, 4
      %s198 = scalar_lea.vmem %s0, %s197
      %p199 = pneg %p37
      %p200 = pneg %p34
      %p201 = pneg %p58
      %p202 = pneg %p55
      %p203 = pneg %p79
      %p204 = pneg %p76
      %p205 = pneg %p100
      %p206 = pneg %p97
      %p207 = pneg %p121
      %p208 = pneg %p118
      %p209 = pneg %p147
      %p210 = pneg %p144
      %s211 = smul.u32 2, %s16
      %p212 = scmp.lt.s32.totalorder %s211, 7
      %s213 = scalar_select %p212, %s211, 7
      %s214 = smul.addr %s213, 16
      %s215 = smul.addr %s214, 8
      %s216 = scalar_lea.vmem %s5, %s215
      %s217 = smul.u32 32, %s16
      %p218 = scmp.lt.s32.totalorder %s217, 127
      %s219 = scalar_select %p218, %s217, 127
      %s220 = smul.addr %s219, 4
      %s221 = scalar_lea.vmem %s0, %s220
      %s222 = smul.u32 32, %s16
      %s223 = smul.u32 2, %s16
      %p224 = scmp.lt.s32.totalorder %s223, 7
      %s225 = scalar_select %p224, %s223, 7
      %s226 = smul.addr %s225, 16
      %s227 = smul.addr %s226, 8
      %s228 = scalar_lea.vmem %s5, %s227
      %s229 = smul.u32 2, %s16
      %v231 = vld [vmem:[%s221] sm:$0xf]
      %v232 = vld [vmem:[%s221 + $0x4] sm:$0xf]
      %v233 = vld [vmem:[%s221 + $0x8] sm:$0xf]
      %v234 = vld [vmem:[%s221 + $0xc] sm:$0xf]
      %v235 = vld [vmem:[%s221 + $0x10] sm:$0xf]
      %v236 = vld [vmem:[%s221 + $0x14] sm:$0xf]
      %v237 = vld [vmem:[%s221 + $0x18] sm:$0xf]
      %v238 = vld [vmem:[%s221 + $0x1c] sm:$0xf]
      %v239 = vld [vmem:[%s221 + $0x20] sm:$0xf]
      %v240 = vld [vmem:[%s221 + $0x24] sm:$0xf]
      %v241 = vld [vmem:[%s221 + $0x28] sm:$0xf]
      %v242 = vld [vmem:[%s221 + $0x2c] sm:$0xf]
      %v243 = vld [vmem:[%s221 + $0x30] sm:$0xf]
      %v244 = vld [vmem:[%s221 + $0x34] sm:$0xf]
      %v245 = vld [vmem:[%s221 + $0x38] sm:$0xf]
      %v246 = vld [vmem:[%s221 + $0x3c] sm:$0xf]
      %v247 = vld [vmem:[%s221 + $0x40] sm:$0xf]
      %v248 = vld [vmem:[%s221 + $0x44] sm:$0xf]
      %v249 = vld [vmem:[%s221 + $0x48] sm:$0xf]
      %v250 = vld [vmem:[%s221 + $0x4c] sm:$0xf]
      %v251 = vld [vmem:[%s221 + $0x50] sm:$0xf]
      %v252 = vld [vmem:[%s221 + $0x54] sm:$0xf]
      %v253 = vld [vmem:[%s221 + $0x58] sm:$0xf]
      %v254 = vld [vmem:[%s221 + $0x5c] sm:$0xf]
      %v255 = vld [vmem:[%s221 + $0x60] sm:$0xf]
      %v256 = vld [vmem:[%s221 + $0x64] sm:$0xf]
      %v257 = vld [vmem:[%s221 + $0x68] sm:$0xf]
      %v258 = vld [vmem:[%s221 + $0x6c] sm:$0xf]
      %v259 = vld [vmem:[%s221 + $0x70] sm:$0xf]
      %v260 = vld [vmem:[%s221 + $0x74] sm:$0xf]
      %v261 = vld [vmem:[%s221 + $0x78] sm:$0xf]
      %v262 = vld [vmem:[%s221 + $0x7c] sm:$0xf]
      %v263 = vld [vmem:[%s1] sm:$0xf]
      %v264 = vld [vmem:[%s1 + $0x4] sm:$0xf]
      %v265 = vld [vmem:[%s1 + $0x8] sm:$0xf]
      %v266 = vld [vmem:[%s1 + $0xc] sm:$0xf]
      %v267 = vld [vmem:[%s1 + $0x10] sm:$0x3]
      %v268 = vld [vmem:[%s3] sm:$0x1]
      %v269 = vperm.slane %v268, 0
      %v302 = vunpack.c.l.b16 %v231
      %v303 = vunpack.c.l.b16 %v232
      %v304 = vunpack.c.l.b16 %v233
      %v305 = vunpack.c.l.b16 %v234
      %v306 = vunpack.c.l.b16 %v235
      %v307 = vunpack.c.l.b16 %v236
      %v308 = vunpack.c.l.b16 %v237
      %v309 = vunpack.c.l.b16 %v238
      %v310 = vunpack.c.l.b16 %v239
      %v311 = vunpack.c.l.b16 %v240
      %v312 = vunpack.c.l.b16 %v241
      %v313 = vunpack.c.l.b16 %v242
      %v314 = vunpack.c.l.b16 %v243
      %v315 = vunpack.c.l.b16 %v244
      %v316 = vunpack.c.l.b16 %v245
      %v317 = vunpack.c.l.b16 %v246
      %v318 = vunpack.c.l.b16 %v247
      %v319 = vunpack.c.l.b16 %v248
      %v320 = vunpack.c.l.b16 %v249
      %v321 = vunpack.c.l.b16 %v250
      %v322 = vunpack.c.l.b16 %v251
      %v323 = vunpack.c.l.b16 %v252
      %v324 = vunpack.c.l.b16 %v253
      %v325 = vunpack.c.l.b16 %v254
      %v326 = vunpack.c.l.b16 %v255
      %v327 = vunpack.c.l.b16 %v256
      %v328 = vunpack.c.l.b16 %v257
      %v329 = vunpack.c.l.b16 %v258
      %v330 = vunpack.c.l.b16 %v259
      %v331 = vunpack.c.l.b16 %v260
      %v332 = vunpack.c.l.b16 %v261
      %v333 = vunpack.c.l.b16 %v262
      %v334 = vpack.c.b16 %v303, %v302
      %v335 = vpack.c.b16 %v305, %v304
      %v336 = vpack.c.b16 %v307, %v306
      %v337 = vpack.c.b16 %v309, %v308
      %v338 = vpack.c.b16 %v311, %v310
      %v339 = vpack.c.b16 %v313, %v312
      %v340 = vpack.c.b16 %v315, %v314
      %v341 = vpack.c.b16 %v317, %v316
      %v342 = vpack.c.b16 %v319, %v318
      %v343 = vpack.c.b16 %v321, %v320
      %v344 = vpack.c.b16 %v323, %v322
      %v345 = vpack.c.b16 %v325, %v324
      %v346 = vpack.c.b16 %v327, %v326
      %v347 = vpack.c.b16 %v329, %v328
      %v348 = vpack.c.b16 %v331, %v330
      %v349 = vpack.c.b16 %v333, %v332
      %v355 = vunpack.c.l.b16 %v263
      %v356 = vunpack.c.l.b16 %v264
      %v357 = vunpack.c.l.b16 %v265
      %v358 = vunpack.c.l.b16 %v266
      %v359 = vunpack.c.l.b16 %v267
      %v360 = vpack.c.b16 %v356, %v355
      %v361 = vpack.c.b16 %v358, %v357
      %v362 = vpack.c.b16 %v359, %v359
      %vm365 = vcmask 293888
      %v367 = vsel %vm365, %v334, 0
      %v370 = vsel %vm365, %v335, 0
      %v373 = vsel %vm365, %v336, 0
      %v376 = vsel %vm365, %v337, 0
      %v379 = vsel %vm365, %v338, 0
      %v382 = vsel %vm365, %v339, 0
      %v385 = vsel %vm365, %v340, 0
      %v388 = vsel %vm365, %v341, 0
      %v391 = vsel %vm365, %v342, 0
      %v394 = vsel %vm365, %v343, 0
      %v397 = vsel %vm365, %v344, 0
      %v400 = vsel %vm365, %v345, 0
      %v403 = vsel %vm365, %v346, 0
      %v406 = vsel %vm365, %v347, 0
      %v409 = vsel %vm365, %v348, 0
      %v412 = vsel %vm365, %v349, 0
      %vm414 = vcmask 1041408
      %v416 = vsel %vm414, %v362, 0
      %418 = vmatpush.bf16.msra.mxu0 0
      %419 = vmatpush.bf16.msra.mxu0 0
      %420 = vmatpush.bf16.msra.mxu0 0
      %421 = vmatpush.bf16.msra.mxu0 0
      %422 = vmatpush.bf16.msra.mxu0 0
      %423 = vmatpush.bf16.msra.mxu0 %v416
      %424 = vmatpush.bf16.msra.mxu0 %v361
      %425 = vmatpush.bf16.msra.mxu0 %v360
      %426 = vmatmul.bf16.gmra.mxu0 %v367
      %v427 = vpop.f32.mrf.mxu0
      %v428 = vadd.f32 %v269, %v427
      %v429 = vpop.f32.mrf.mxu0
      %v430 = vadd.f32 %v269, %v429
      %431 = vmatmul.bf16.gmra.mxu0 %v370
      %v432 = vpop.f32.mrf.mxu0
      %v433 = vadd.f32 %v269, %v432
      %v434 = vpop.f32.mrf.mxu0
      %v435 = vadd.f32 %v269, %v434
      %436 = vmatmul.bf16.gmra.mxu0 %v373
      %v437 = vpop.f32.mrf.mxu0
      %v438 = vadd.f32 %v269, %v437
      %v439 = vpop.f32.mrf.mxu0
      %v440 = vadd.f32 %v269, %v439
      %441 = vmatmul.bf16.gmra.mxu0 %v376
      %v442 = vpop.f32.mrf.mxu0
      %v443 = vadd.f32 %v269, %v442
      %v444 = vpop.f32.mrf.mxu0
      %v445 = vadd.f32 %v269, %v444
      %446 = vmatmul.bf16.gmra.mxu0 %v379
      %v447 = vpop.f32.mrf.mxu0
      %v448 = vadd.f32 %v269, %v447
      %v449 = vpop.f32.mrf.mxu0
      %v450 = vadd.f32 %v269, %v449
      %451 = vmatmul.bf16.gmra.mxu0 %v382
      %v452 = vpop.f32.mrf.mxu0
      %v453 = vadd.f32 %v269, %v452
      %v454 = vpop.f32.mrf.mxu0
      %v455 = vadd.f32 %v269, %v454
      %456 = vmatmul.bf16.gmra.mxu0 %v385
      %v457 = vpop.f32.mrf.mxu0
      %v458 = vadd.f32 %v269, %v457
      %v459 = vpop.f32.mrf.mxu0
      %v460 = vadd.f32 %v269, %v459
      %461 = vmatmul.bf16.gmra.mxu0 %v388
      %v462 = vpop.f32.mrf.mxu0
      %v463 = vadd.f32 %v269, %v462
      %v464 = vpop.f32.mrf.mxu0
      %v465 = vadd.f32 %v269, %v464
      %466 = vmatmul.bf16.gmra.mxu0 %v391
      %v467 = vpop.f32.mrf.mxu0
      %v468 = vadd.f32 %v269, %v467
      %v469 = vpop.f32.mrf.mxu0
      %v470 = vadd.f32 %v269, %v469
      %471 = vmatmul.bf16.gmra.mxu0 %v394
      %v472 = vpop.f32.mrf.mxu0
      %v473 = vadd.f32 %v269, %v472
      %v474 = vpop.f32.mrf.mxu0
      %v475 = vadd.f32 %v269, %v474
      %476 = vmatmul.bf16.gmra.mxu0 %v397
      %v477 = vpop.f32.mrf.mxu0
      %v478 = vadd.f32 %v269, %v477
      %v479 = vpop.f32.mrf.mxu0
      %v480 = vadd.f32 %v269, %v479
      %481 = vmatmul.bf16.gmra.mxu0 %v400
      %v482 = vpop.f32.mrf.mxu0
      %v483 = vadd.f32 %v269, %v482
      %v484 = vpop.f32.mrf.mxu0
      %v485 = vadd.f32 %v269, %v484
      %486 = vmatmul.bf16.gmra.mxu0 %v403
      %v487 = vpop.f32.mrf.mxu0
      %v488 = vadd.f32 %v269, %v487
      %v489 = vpop.f32.mrf.mxu0
      %v490 = vadd.f32 %v269, %v489
      %491 = vmatmul.bf16.gmra.mxu0 %v406
      %v492 = vpop.f32.mrf.mxu0
      %v493 = vadd.f32 %v269, %v492
      %v494 = vpop.f32.mrf.mxu0
      %v495 = vadd.f32 %v269, %v494
      %496 = vmatmul.bf16.gmra.mxu0 %v409
      %v497 = vpop.f32.mrf.mxu0
      %v498 = vadd.f32 %v269, %v497
      %v499 = vpop.f32.mrf.mxu0
      %v500 = vadd.f32 %v269, %v499
      %501 = vmatmul.bf16.gmra.mxu0 %v412
      %v502 = vpop.f32.mrf.mxu0
      %v503 = vadd.f32 %v269, %v502
      %v504 = vpop.f32.mrf.mxu0
      %v505 = vadd.f32 %v269, %v504
      %506 = vdwg.mxu0
      %v507 = vld [vmem:[%s4] sm:$0x7]
      %v508 = vlaneseq
      %v509 = vshrl.u32 %v508, 7
      %v510 = vadd.s32 %v509, 8
      %v511 = vadd.s32 %v509, 16
      %v512 = vadd.s32 %v509, 24
      %v513 = vadd.s32 %v509, 32
      %v514 = vadd.s32 %v509, 40
      %v515 = vadd.s32 %v509, 48
      %v516 = vadd.s32 %v509, 56
      %v517 = vadd.s32 %v509, 64
      %v518 = vadd.s32 %v509, 72
      %v519 = vadd.s32 %v509, 80
      %v520 = vadd.s32 %v509, 88
      %v521 = vadd.s32 %v509, 96
      %v522 = vadd.s32 %v509, 104
      %v523 = vadd.s32 %v509, 112
      %v524 = vadd.s32 %v509, 120
      %v525 = vcvt.s32.f32 %v509
      %v526 = vcvt.s32.f32 %v510
      %v527 = vcvt.s32.f32 %v511
      %v528 = vcvt.s32.f32 %v512
      %v529 = vcvt.s32.f32 %v513
      %v530 = vcvt.s32.f32 %v514
      %v531 = vcvt.s32.f32 %v515
      %v532 = vcvt.s32.f32 %v516
      %v533 = vcvt.s32.f32 %v517
      %v534 = vcvt.s32.f32 %v518
      %v535 = vcvt.s32.f32 %v519
      %v536 = vcvt.s32.f32 %v520
      %v537 = vcvt.s32.f32 %v521
      %v538 = vcvt.s32.f32 %v522
      %v539 = vcvt.s32.f32 %v523
      %v540 = vcvt.s32.f32 %v524
      %v541 = vadd.f32 %v525, 0.5
      %v542 = vadd.f32 %v526, 0.5
      %v543 = vadd.f32 %v527, 0.5
      %v544 = vadd.f32 %v528, 0.5
      %v545 = vadd.f32 %v529, 0.5
      %v546 = vadd.f32 %v530, 0.5
      %v547 = vadd.f32 %v531, 0.5
      %v548 = vadd.f32 %v532, 0.5
      %v549 = vadd.f32 %v533, 0.5
      %v550 = vadd.f32 %v534, 0.5
      %v551 = vadd.f32 %v535, 0.5
      %v552 = vadd.f32 %v536, 0.5
      %v553 = vadd.f32 %v537, 0.5
      %v554 = vadd.f32 %v538, 0.5
      %v555 = vadd.f32 %v539, 0.5
      %v556 = vadd.f32 %v540, 0.5
      %v557 = vmul.f32 %v541, 0.09090909
      %v558 = vmul.f32 %v542, 0.09090909
      %v559 = vmul.f32 %v543, 0.09090909
      %v560 = vmul.f32 %v544, 0.09090909
      %v561 = vmul.f32 %v545, 0.09090909
      %v562 = vmul.f32 %v546, 0.09090909
      %v563 = vmul.f32 %v547, 0.09090909
      %v564 = vmul.f32 %v548, 0.09090909
      %v565 = vmul.f32 %v549, 0.09090909
      %v566 = vmul.f32 %v550, 0.09090909
      %v567 = vmul.f32 %v551, 0.09090909
      %v568 = vmul.f32 %v552, 0.09090909
      %v569 = vmul.f32 %v553, 0.09090909
      %v570 = vmul.f32 %v554, 0.09090909
      %v571 = vmul.f32 %v555, 0.09090909
      %v572 = vmul.f32 %v556, 0.09090909
      %v573 = vfloor.f32 %v557
      %v574 = vfloor.f32 %v558
      %v575 = vfloor.f32 %v559
      %v576 = vfloor.f32 %v560
      %v577 = vfloor.f32 %v561
      %v578 = vfloor.f32 %v562
      %v579 = vfloor.f32 %v563
      %v580 = vfloor.f32 %v564
      %v581 = vfloor.f32 %v565
      %v582 = vfloor.f32 %v566
      %v583 = vfloor.f32 %v567
      %v584 = vfloor.f32 %v568
      %v585 = vfloor.f32 %v569
      %v586 = vfloor.f32 %v570
      %v587 = vfloor.f32 %v571
      %v588 = vfloor.f32 %v572
      %v589 = vmul.f32 %v573, 11.0
      %v590 = vmul.f32 %v574, 11.0
      %v591 = vmul.f32 %v575, 11.0
      %v592 = vmul.f32 %v576, 11.0
      %v593 = vmul.f32 %v577, 11.0
      %v594 = vmul.f32 %v578, 11.0
      %v595 = vmul.f32 %v579, 11.0
      %v596 = vmul.f32 %v580, 11.0
      %v597 = vmul.f32 %v581, 11.0
      %v598 = vmul.f32 %v582, 11.0
      %v599 = vmul.f32 %v583, 11.0
      %v600 = vmul.f32 %v584, 11.0
      %v601 = vmul.f32 %v585, 11.0
      %v602 = vmul.f32 %v586, 11.0
      %v603 = vmul.f32 %v587, 11.0
      %v604 = vmul.f32 %v588, 11.0
      %v605 = vsub.f32 %v525, %v589
      %v606 = vsub.f32 %v526, %v590
      %v607 = vsub.f32 %v527, %v591
      %v608 = vsub.f32 %v528, %v592
      %v609 = vsub.f32 %v529, %v593
      %v610 = vsub.f32 %v530, %v594
      %v611 = vsub.f32 %v531, %v595
      %v612 = vsub.f32 %v532, %v596
      %v613 = vsub.f32 %v533, %v597
      %v614 = vsub.f32 %v534, %v598
      %v615 = vsub.f32 %v535, %v599
      %v616 = vsub.f32 %v536, %v600
      %v617 = vsub.f32 %v537, %v601
      %v618 = vsub.f32 %v538, %v602
      %v619 = vsub.f32 %v539, %v603
      %v620 = vsub.f32 %v540, %v604
      %vm621 = vcmp.lt.f32.partialorder %v525, 120.5
      %vm622 = vcmp.lt.f32.partialorder %v526, 120.5
      %vm623 = vcmp.lt.f32.partialorder %v527, 120.5
      %vm624 = vcmp.lt.f32.partialorder %v528, 120.5
      %vm625 = vcmp.lt.f32.partialorder %v529, 120.5
      %vm626 = vcmp.lt.f32.partialorder %v530, 120.5
      %vm627 = vcmp.lt.f32.partialorder %v531, 120.5
      %vm628 = vcmp.lt.f32.partialorder %v532, 120.5
      %vm629 = vcmp.lt.f32.partialorder %v533, 120.5
      %vm630 = vcmp.lt.f32.partialorder %v534, 120.5
      %vm631 = vcmp.lt.f32.partialorder %v535, 120.5
      %vm632 = vcmp.lt.f32.partialorder %v536, 120.5
      %vm633 = vcmp.lt.f32.partialorder %v537, 120.5
      %vm634 = vcmp.lt.f32.partialorder %v538, 120.5
      %vm635 = vcmp.lt.f32.partialorder %v539, 120.5
      %vm636 = vcmp.lt.f32.partialorder %v540, 120.5
      %vm637 = vcmp.lt.f32.partialorder %v605, 10.5
      %vm638 = vcmp.lt.f32.partialorder %v606, 10.5
      %vm639 = vcmp.lt.f32.partialorder %v607, 10.5
      %vm640 = vcmp.lt.f32.partialorder %v608, 10.5
      %vm641 = vcmp.lt.f32.partialorder %v609, 10.5
      %vm642 = vcmp.lt.f32.partialorder %v610, 10.5
      %vm643 = vcmp.lt.f32.partialorder %v611, 10.5
      %vm644 = vcmp.lt.f32.partialorder %v612, 10.5
      %vm645 = vcmp.lt.f32.partialorder %v613, 10.5
      %vm646 = vcmp.lt.f32.partialorder %v614, 10.5
      %vm647 = vcmp.lt.f32.partialorder %v615, 10.5
      %vm648 = vcmp.lt.f32.partialorder %v616, 10.5
      %vm649 = vcmp.lt.f32.partialorder %v617, 10.5
      %vm650 = vcmp.lt.f32.partialorder %v618, 10.5
      %vm651 = vcmp.lt.f32.partialorder %v619, 10.5
      %vm652 = vcmp.lt.f32.partialorder %v620, 10.5
      %vm653 = vmand %vm621, %vm637
      %vm654 = vmand %vm622, %vm638
      %vm655 = vmand %vm623, %vm639
      %vm656 = vmand %vm624, %vm640
      %vm657 = vmand %vm625, %vm641
      %vm658 = vmand %vm626, %vm642
      %vm659 = vmand %vm627, %vm643
      %vm660 = vmand %vm628, %vm644
      %vm661 = vmand %vm629, %vm645
      %vm662 = vmand %vm630, %vm646
      %vm663 = vmand %vm631, %vm647
      %vm664 = vmand %vm632, %vm648
      %vm665 = vmand %vm633, %vm649
      %vm666 = vmand %vm634, %vm650
      %vm667 = vmand %vm635, %vm651
      %vm668 = vmand %vm636, %vm652
      %v669 = vsel %vm653, 1, 0
      %v670 = vsel %vm654, 1, 0
      %v671 = vsel %vm655, 1, 0
      %v672 = vsel %vm656, 1, 0
      %v673 = vsel %vm657, 1, 0
      %v674 = vsel %vm658, 1, 0
      %v675 = vsel %vm659, 1, 0
      %v676 = vsel %vm660, 1, 0
      %v677 = vsel %vm661, 1, 0
      %v678 = vsel %vm662, 1, 0
      %v679 = vsel %vm663, 1, 0
      %v680 = vsel %vm664, 1, 0
      %v681 = vsel %vm665, 1, 0
      %v682 = vsel %vm666, 1, 0
      %v683 = vsel %vm667, 1, 0
      %v684 = vsel %vm668, 1, 0
      %vm685 = vcmp.eq.s32.totalorder %v669, 1
      %vm686 = vcmp.eq.s32.totalorder %v670, 1
      %vm687 = vcmp.eq.s32.totalorder %v671, 1
      %vm688 = vcmp.eq.s32.totalorder %v672, 1
      %vm689 = vcmp.eq.s32.totalorder %v673, 1
      %vm690 = vcmp.eq.s32.totalorder %v674, 1
      %vm691 = vcmp.eq.s32.totalorder %v675, 1
      %vm692 = vcmp.eq.s32.totalorder %v676, 1
      %vm693 = vcmp.eq.s32.totalorder %v677, 1
      %vm694 = vcmp.eq.s32.totalorder %v678, 1
      %vm695 = vcmp.eq.s32.totalorder %v679, 1
      %vm696 = vcmp.eq.s32.totalorder %v680, 1
      %vm697 = vcmp.eq.s32.totalorder %v681, 1
      %vm698 = vcmp.eq.s32.totalorder %v682, 1
      %vm699 = vcmp.eq.s32.totalorder %v683, 1
      %vm700 = vcmp.eq.s32.totalorder %v684, 1
      %v701 = vsel %vm685, %v428, 0.0
      %v702 = vsel %vm686, %v430, 0.0
      %v703 = vsel %vm687, %v433, 0.0
      %v704 = vsel %vm688, %v435, 0.0
      %v705 = vsel %vm689, %v438, 0.0
      %v706 = vsel %vm690, %v440, 0.0
      %v707 = vsel %vm691, %v443, 0.0
      %v708 = vsel %vm692, %v445, 0.0
      %v709 = vsel %vm693, %v448, 0.0
      %v710 = vsel %vm694, %v450, 0.0
      %v711 = vsel %vm695, %v453, 0.0
      %v712 = vsel %vm696, %v455, 0.0
      %v713 = vsel %vm697, %v458, 0.0
      %v714 = vsel %vm698, %v460, 0.0
      %v715 = vsel %vm699, %v463, 0.0
      %v716 = vsel %vm700, %v465, 0.0
      %v717 = vsel %vm685, %v468, 0.0
      %v718 = vsel %vm686, %v470, 0.0
      %v719 = vsel %vm687, %v473, 0.0
      %v720 = vsel %vm688, %v475, 0.0
      %v721 = vsel %vm689, %v478, 0.0
      %v722 = vsel %vm690, %v480, 0.0
      %v723 = vsel %vm691, %v483, 0.0
      %v724 = vsel %vm692, %v485, 0.0
      %v725 = vsel %vm693, %v488, 0.0
      %v726 = vsel %vm694, %v490, 0.0
      %v727 = vsel %vm695, %v493, 0.0
      %v728 = vsel %vm696, %v495, 0.0
      %v729 = vsel %vm697, %v498, 0.0
      %v730 = vsel %vm698, %v500, 0.0
      %v731 = vsel %vm699, %v503, 0.0
      %v732 = vsel %vm700, %v505, 0.0
      %vm733 = vcmask 261120
      %v734 = vsel %vm733, %v701, 0.0
      %v735 = vsel %vm733, %v702, 0.0
      %v736 = vadd.f32 %v734, %v735
      %v737 = vsel %vm733, %v703, 0.0
      %v738 = vadd.f32 %v736, %v737
      %v739 = vsel %vm733, %v704, 0.0
      %v740 = vadd.f32 %v738, %v739
      %v741 = vsel %vm733, %v705, 0.0
      %v742 = vadd.f32 %v740, %v741
      %v743 = vsel %vm733, %v706, 0.0
      %v744 = vadd.f32 %v742, %v743
      %v745 = vsel %vm733, %v707, 0.0
      %v746 = vadd.f32 %v744, %v745
      %v747 = vsel %vm733, %v708, 0.0
      %v748 = vadd.f32 %v746, %v747
      %v749 = vsel %vm733, %v709, 0.0
      %v750 = vadd.f32 %v748, %v749
      %v751 = vsel %vm733, %v710, 0.0
      %v752 = vadd.f32 %v750, %v751
      %v753 = vsel %vm733, %v711, 0.0
      %v754 = vadd.f32 %v752, %v753
      %v755 = vsel %vm733, %v712, 0.0
      %v756 = vadd.f32 %v754, %v755
      %v757 = vsel %vm733, %v713, 0.0
      %v758 = vadd.f32 %v756, %v757
      %v759 = vsel %vm733, %v714, 0.0
      %v760 = vadd.f32 %v758, %v759
      %v761 = vsel %vm733, %v715, 0.0
      %v762 = vadd.f32 %v760, %v761
      %v763 = vsel %vm733, %v716, 0.0
      %v764 = vadd.f32 %v762, %v763
      %v765 = vrot.slane %v764, 4
      %v766 = vadd.f32 %v764, %v765
      %v767 = vrot.slane %v766, 2
      %v768 = vadd.f32 %v766, %v767
      %v769 = vrot.slane %v768, 1
      %v770 = vadd.f32 %v768, %v769
      %v771 = vsel %vm733, %v717, 0.0
      %v772 = vsel %vm733, %v718, 0.0
      %v773 = vadd.f32 %v771, %v772
      %v774 = vsel %vm733, %v719, 0.0
      %v775 = vadd.f32 %v773, %v774
      %v776 = vsel %vm733, %v720, 0.0
      %v777 = vadd.f32 %v775, %v776
      %v778 = vsel %vm733, %v721, 0.0
      %v779 = vadd.f32 %v777, %v778
      %v780 = vsel %vm733, %v722, 0.0
      %v781 = vadd.f32 %v779, %v780
      %v782 = vsel %vm733, %v723, 0.0
      %v783 = vadd.f32 %v781, %v782
      %v784 = vsel %vm733, %v724, 0.0
      %v785 = vadd.f32 %v783, %v784
      %v786 = vsel %vm733, %v725, 0.0
      %v787 = vadd.f32 %v785, %v786
      %v788 = vsel %vm733, %v726, 0.0
      %v789 = vadd.f32 %v787, %v788
      %v790 = vsel %vm733, %v727, 0.0
      %v791 = vadd.f32 %v789, %v790
      %v792 = vsel %vm733, %v728, 0.0
      %v793 = vadd.f32 %v791, %v792
      %v794 = vsel %vm733, %v729, 0.0
      %v795 = vadd.f32 %v793, %v794
      %v796 = vsel %vm733, %v730, 0.0
      %v797 = vadd.f32 %v795, %v796
      %v798 = vsel %vm733, %v731, 0.0
      %v799 = vadd.f32 %v797, %v798
      %v800 = vsel %vm733, %v732, 0.0
      %v801 = vadd.f32 %v799, %v800
      %v802 = vrot.slane %v801, 4
      %v803 = vadd.f32 %v801, %v802
      %v804 = vrot.slane %v803, 2
      %v805 = vadd.f32 %v803, %v804
      %v806 = vrot.slane %v805, 1
      %v807 = vadd.f32 %v805, %v806
      %v808 = vmul.f32 %v770, 0.008264462
      %v809 = vmul.f32 %v807, 0.008264462
      %v810 = vsub.f32 %v428, %v808
      %v811 = vsub.f32 %v430, %v808
      %v812 = vsub.f32 %v433, %v808
      %v813 = vsub.f32 %v435, %v808
      %v814 = vsub.f32 %v438, %v808
      %v815 = vsub.f32 %v440, %v808
      %v816 = vsub.f32 %v443, %v808
      %v817 = vsub.f32 %v445, %v808
      %v818 = vsub.f32 %v448, %v808
      %v819 = vsub.f32 %v450, %v808
      %v820 = vsub.f32 %v453, %v808
      %v821 = vsub.f32 %v455, %v808
      %v822 = vsub.f32 %v458, %v808
      %v823 = vsub.f32 %v460, %v808
      %v824 = vsub.f32 %v463, %v808
      %v825 = vsub.f32 %v465, %v808
      %v826 = vsub.f32 %v468, %v809
      %v827 = vsub.f32 %v470, %v809
      %v828 = vsub.f32 %v473, %v809
      %v829 = vsub.f32 %v475, %v809
      %v830 = vsub.f32 %v478, %v809
      %v831 = vsub.f32 %v480, %v809
      %v832 = vsub.f32 %v483, %v809
      %v833 = vsub.f32 %v485, %v809
      %v834 = vsub.f32 %v488, %v809
      %v835 = vsub.f32 %v490, %v809
      %v836 = vsub.f32 %v493, %v809
      %v837 = vsub.f32 %v495, %v809
      %v838 = vsub.f32 %v498, %v809
      %v839 = vsub.f32 %v500, %v809
      %v840 = vsub.f32 %v503, %v809
      %v841 = vsub.f32 %v505, %v809
      %v842 = vsel %vm685, %v810, 0.0
      %v843 = vsel %vm686, %v811, 0.0
      %v844 = vsel %vm687, %v812, 0.0
      %v845 = vsel %vm688, %v813, 0.0
      %v846 = vsel %vm689, %v814, 0.0
      %v847 = vsel %vm690, %v815, 0.0
      %v848 = vsel %vm691, %v816, 0.0
      %v849 = vsel %vm692, %v817, 0.0
      %v850 = vsel %vm693, %v818, 0.0
      %v851 = vsel %vm694, %v819, 0.0
      %v852 = vsel %vm695, %v820, 0.0
      %v853 = vsel %vm696, %v821, 0.0
      %v854 = vsel %vm697, %v822, 0.0
      %v855 = vsel %vm698, %v823, 0.0
      %v856 = vsel %vm699, %v824, 0.0
      %v857 = vsel %vm700, %v825, 0.0
      %v858 = vsel %vm685, %v826, 0.0
      %v859 = vsel %vm686, %v827, 0.0
      %v860 = vsel %vm687, %v828, 0.0
      %v861 = vsel %vm688, %v829, 0.0
      %v862 = vsel %vm689, %v830, 0.0
      %v863 = vsel %vm690, %v831, 0.0
      %v864 = vsel %vm691, %v832, 0.0
      %v865 = vsel %vm692, %v833, 0.0
      %v866 = vsel %vm693, %v834, 0.0
      %v867 = vsel %vm694, %v835, 0.0
      %v868 = vsel %vm695, %v836, 0.0
      %v869 = vsel %vm696, %v837, 0.0
      %v870 = vsel %vm697, %v838, 0.0
      %v871 = vsel %vm698, %v839, 0.0
      %v872 = vsel %vm699, %v840, 0.0
      %v873 = vsel %vm700, %v841, 0.0
      %v874 = vmul.f32 %v842, %v842
      %v875 = vmul.f32 %v843, %v843
      %v876 = vmul.f32 %v844, %v844
      %v877 = vmul.f32 %v845, %v845
      %v878 = vmul.f32 %v846, %v846
      %v879 = vmul.f32 %v847, %v847
      %v880 = vmul.f32 %v848, %v848
      %v881 = vmul.f32 %v849, %v849
      %v882 = vmul.f32 %v850, %v850
      %v883 = vmul.f32 %v851, %v851
      %v884 = vmul.f32 %v852, %v852
      %v885 = vmul.f32 %v853, %v853
      %v886 = vmul.f32 %v854, %v854
      %v887 = vmul.f32 %v855, %v855
      %v888 = vmul.f32 %v856, %v856
      %v889 = vmul.f32 %v857, %v857
      %v890 = vmul.f32 %v858, %v858
      %v891 = vmul.f32 %v859, %v859
      %v892 = vmul.f32 %v860, %v860
      %v893 = vmul.f32 %v861, %v861
      %v894 = vmul.f32 %v862, %v862
      %v895 = vmul.f32 %v863, %v863
      %v896 = vmul.f32 %v864, %v864
      %v897 = vmul.f32 %v865, %v865
      %v898 = vmul.f32 %v866, %v866
      %v899 = vmul.f32 %v867, %v867
      %v900 = vmul.f32 %v868, %v868
      %v901 = vmul.f32 %v869, %v869
      %v902 = vmul.f32 %v870, %v870
      %v903 = vmul.f32 %v871, %v871
      %v904 = vmul.f32 %v872, %v872
      %v905 = vmul.f32 %v873, %v873
      %v906 = vsel %vm733, %v874, 0.0
      %v907 = vsel %vm733, %v875, 0.0
      %v908 = vadd.f32 %v906, %v907
      %v909 = vsel %vm733, %v876, 0.0
      %v910 = vadd.f32 %v908, %v909
      %v911 = vsel %vm733, %v877, 0.0
      %v912 = vadd.f32 %v910, %v911
      %v913 = vsel %vm733, %v878, 0.0
      %v914 = vadd.f32 %v912, %v913
      %v915 = vsel %vm733, %v879, 0.0
      %v916 = vadd.f32 %v914, %v915
      %v917 = vsel %vm733, %v880, 0.0
      %v918 = vadd.f32 %v916, %v917
      %v919 = vsel %vm733, %v881, 0.0
      %v920 = vadd.f32 %v918, %v919
      %v921 = vsel %vm733, %v882, 0.0
      %v922 = vadd.f32 %v920, %v921
      %v923 = vsel %vm733, %v883, 0.0
      %v924 = vadd.f32 %v922, %v923
      %v925 = vsel %vm733, %v884, 0.0
      %v926 = vadd.f32 %v924, %v925
      %v927 = vsel %vm733, %v885, 0.0
      %v928 = vadd.f32 %v926, %v927
      %v929 = vsel %vm733, %v886, 0.0
      %v930 = vadd.f32 %v928, %v929
      %v931 = vsel %vm733, %v887, 0.0
      %v932 = vadd.f32 %v930, %v931
      %v933 = vsel %vm733, %v888, 0.0
      %v934 = vadd.f32 %v932, %v933
      %v935 = vsel %vm733, %v889, 0.0
      %v936 = vadd.f32 %v934, %v935
      %v937 = vrot.slane %v936, 4
      %v938 = vadd.f32 %v936, %v937
      %v939 = vrot.slane %v938, 2
      %v940 = vadd.f32 %v938, %v939
      %v941 = vrot.slane %v940, 1
      %v942 = vadd.f32 %v940, %v941
      %v943 = vsel %vm733, %v890, 0.0
      %v944 = vsel %vm733, %v891, 0.0
      %v945 = vadd.f32 %v943, %v944
      %v946 = vsel %vm733, %v892, 0.0
      %v947 = vadd.f32 %v945, %v946
      %v948 = vsel %vm733, %v893, 0.0
      %v949 = vadd.f32 %v947, %v948
      %v950 = vsel %vm733, %v894, 0.0
      %v951 = vadd.f32 %v949, %v950
      %v952 = vsel %vm733, %v895, 0.0
      %v953 = vadd.f32 %v951, %v952
      %v954 = vsel %vm733, %v896, 0.0
      %v955 = vadd.f32 %v953, %v954
      %v956 = vsel %vm733, %v897, 0.0
      %v957 = vadd.f32 %v955, %v956
      %v958 = vsel %vm733, %v898, 0.0
      %v959 = vadd.f32 %v957, %v958
      %v960 = vsel %vm733, %v899, 0.0
      %v961 = vadd.f32 %v959, %v960
      %v962 = vsel %vm733, %v900, 0.0
      %v963 = vadd.f32 %v961, %v962
      %v964 = vsel %vm733, %v901, 0.0
      %v965 = vadd.f32 %v963, %v964
      %v966 = vsel %vm733, %v902, 0.0
      %v967 = vadd.f32 %v965, %v966
      %v968 = vsel %vm733, %v903, 0.0
      %v969 = vadd.f32 %v967, %v968
      %v970 = vsel %vm733, %v904, 0.0
      %v971 = vadd.f32 %v969, %v970
      %v972 = vsel %vm733, %v905, 0.0
      %v973 = vadd.f32 %v971, %v972
      %v974 = vrot.slane %v973, 4
      %v975 = vadd.f32 %v973, %v974
      %v976 = vrot.slane %v975, 2
      %v977 = vadd.f32 %v975, %v976
      %v978 = vrot.slane %v977, 1
      %v979 = vadd.f32 %v977, %v978
      %v980 = vmul.f32 %v942, 0.008333334
      %v981 = vmul.f32 %v979, 0.008333334
      %v982 = vadd.f32 %v980, 1e-12
      %v983 = vadd.f32 %v981, 1e-12
      %v984 = vrsqrt.pop %v982
      %v985 = vmul.f32 %v984, %v982
      %v986 = vmul.f32 %v985, %v984
      %v987 = vmul.f32 0.5, %v986
      %v988 = vsub.f32 1.5, %v987
      %v989 = vmul.f32 %v984, %v988
      %v990 = vmul.f32 %v982, %v989
      %vm991 = vcmp.eq.f32.partialorder %v982, inf
      %v992 = vsel %vm991, %v982, %v990
      %vm993 = vcmp.eq.f32.partialorder %v982, 0.0
      %v994 = vand.u32 %v982, 2147483648
      %v995 = vsel %vm993, %v994, %v992
      %v996 = vrsqrt.pop %v983
      %v997 = vmul.f32 %v996, %v983
      %v998 = vmul.f32 %v997, %v996
      %v999 = vmul.f32 0.5, %v998
      %v1000 = vsub.f32 1.5, %v999
      %v1001 = vmul.f32 %v996, %v1000
      %v1002 = vmul.f32 %v983, %v1001
      %vm1003 = vcmp.eq.f32.partialorder %v983, inf
      %v1004 = vsel %vm1003, %v983, %v1002
      %vm1005 = vcmp.eq.f32.partialorder %v983, 0.0
      %v1006 = vand.u32 %v983, 2147483648
      %v1007 = vsel %vm1005, %v1006, %v1004
      %v1008 = vmul.f32 %v507, %v808
      %v1009 = vmul.f32 %v507, %v809
      %v1010 = vmul.f32 %v507, %v995
      %v1011 = vmul.f32 %v507, %v1007
      %v1014 = vrot.slane %v1010, 1
      %v1015 = vrot.slane %v1011, 1
      %v1018 = vadd.f32 %v1008, %v1014
      %v1019 = vadd.f32 %v1009, %v1015
      %v1021 = vrot.slane %v507, 2
      %v1023 = vadd.f32 %v1018, %v1021
      %v1024 = vadd.f32 %v1019, %v1021
      %v1025 = vxor.u32 %v1023, 2147483648
      %v1026 = vxor.u32 %v1024, 2147483648
      %v1027 = vmul.f32 %v1025, 1.442695
      %v1028 = vpow.pop %v1027
      %v1029 = vmul.f32 %v1026, 1.442695
      %v1030 = vpow.pop %v1029
      %v1031 = vadd.f32 %v1028, 1.0
      %v1032 = vadd.f32 %v1030, 1.0
      %v1033 = vrcp.pop %v1031
      %v1034 = vmul.f32 %v1031, %v1033
      %v1035 = vsub.f32 1.0, %v1034
      %v1036 = vmul.f32 %v1033, %v1035
      %v1037 = vadd.f32 %v1033, %v1036
      %vm1038 = vweird.f32 %v1031
      %vm1039 = vweird.f32 %v1033
      %vm1040 = vmor %vm1038, %vm1039
      %v1041 = vsel %vm1040, %v1033, %v1037
      %v1042 = vand.u32 2147483647, %v1031
      %vm1043 = vcmp.eq.f32.partialorder %v1042, 8.507059e+37
      %v1044 = vand.u32 %v1031, 2147483648
      %v1045 = vor.u32 1.1754944e-38, %v1044
      %v1046 = vsel %vm1043, %v1045, %v1041
      %v1047 = vmul.f32 1.0, %v1046
      %v1048 = vrcp.pop %v1032
      %v1049 = vmul.f32 %v1032, %v1048
      %v1050 = vsub.f32 1.0, %v1049
      %v1051 = vmul.f32 %v1048, %v1050
      %v1052 = vadd.f32 %v1048, %v1051
      %vm1053 = vweird.f32 %v1032
      %vm1054 = vweird.f32 %v1048
      %vm1055 = vmor %vm1053, %vm1054
      %v1056 = vsel %vm1055, %v1048, %v1052
      %v1057 = vand.u32 2147483647, %v1032
      %vm1058 = vcmp.eq.f32.partialorder %v1057, 8.507059e+37
      %v1059 = vand.u32 %v1032, 2147483648
      %v1060 = vor.u32 1.1754944e-38, %v1059
      %v1061 = vsel %vm1058, %v1060, %v1056
      %v1062 = vmul.f32 1.0, %v1061
      %v1063 = vperm.slane %v1047, 0
      %v1064 = vperm.slane %v1062, 0
      %v1065 = vmul.f32 %v428, %v1063
      %v1066 = vmul.f32 %v430, %v1063
      %v1067 = vmul.f32 %v433, %v1063
      %v1068 = vmul.f32 %v435, %v1063
      %v1069 = vmul.f32 %v438, %v1063
      %v1070 = vmul.f32 %v440, %v1063
      %v1071 = vmul.f32 %v443, %v1063
      %v1072 = vmul.f32 %v445, %v1063
      %v1073 = vmul.f32 %v448, %v1063
      %v1074 = vmul.f32 %v450, %v1063
      %v1075 = vmul.f32 %v453, %v1063
      %v1076 = vmul.f32 %v455, %v1063
      %v1077 = vmul.f32 %v458, %v1063
      %v1078 = vmul.f32 %v460, %v1063
      %v1079 = vmul.f32 %v463, %v1063
      %v1080 = vmul.f32 %v465, %v1063
      %v1081 = vmul.f32 %v468, %v1064
      %v1082 = vmul.f32 %v470, %v1064
      %v1083 = vmul.f32 %v473, %v1064
      %v1084 = vmul.f32 %v475, %v1064
      %v1085 = vmul.f32 %v478, %v1064
      %v1086 = vmul.f32 %v480, %v1064
      %v1087 = vmul.f32 %v483, %v1064
      %v1088 = vmul.f32 %v485, %v1064
      %v1089 = vmul.f32 %v488, %v1064
      %v1090 = vmul.f32 %v490, %v1064
      %v1091 = vmul.f32 %v493, %v1064
      %v1092 = vmul.f32 %v495, %v1064
      %v1093 = vmul.f32 %v498, %v1064
      %v1094 = vmul.f32 %v500, %v1064
      %v1095 = vmul.f32 %v503, %v1064
      %v1096 = vmul.f32 %v505, %v1064
      %v1097 = vmax.f32 %v1065, 0.0
      %v1098 = vmax.f32 %v1066, 0.0
      %v1099 = vmax.f32 %v1067, 0.0
      %v1100 = vmax.f32 %v1068, 0.0
      %v1101 = vmax.f32 %v1069, 0.0
      %v1102 = vmax.f32 %v1070, 0.0
      %v1103 = vmax.f32 %v1071, 0.0
      %v1104 = vmax.f32 %v1072, 0.0
      %v1105 = vmax.f32 %v1073, 0.0
      %v1106 = vmax.f32 %v1074, 0.0
      %v1107 = vmax.f32 %v1075, 0.0
      %v1108 = vmax.f32 %v1076, 0.0
      %v1109 = vmax.f32 %v1077, 0.0
      %v1110 = vmax.f32 %v1078, 0.0
      %v1111 = vmax.f32 %v1079, 0.0
      %v1112 = vmax.f32 %v1080, 0.0
      %v1113 = vmax.f32 %v1081, 0.0
      %v1114 = vmax.f32 %v1082, 0.0
      %v1115 = vmax.f32 %v1083, 0.0
      %v1116 = vmax.f32 %v1084, 0.0
      %v1117 = vmax.f32 %v1085, 0.0
      %v1118 = vmax.f32 %v1086, 0.0
      %v1119 = vmax.f32 %v1087, 0.0
      %v1120 = vmax.f32 %v1088, 0.0
      %v1121 = vmax.f32 %v1089, 0.0
      %v1122 = vmax.f32 %v1090, 0.0
      %v1123 = vmax.f32 %v1091, 0.0
      %v1124 = vmax.f32 %v1092, 0.0
      %v1125 = vmax.f32 %v1093, 0.0
      %v1126 = vmax.f32 %v1094, 0.0
      %v1127 = vmax.f32 %v1095, 0.0
      %v1128 = vmax.f32 %v1096, 0.0
      %v1129 = vpack.c.bf16 %v1098, %v1097
      %v1130 = vpack.c.bf16 %v1100, %v1099
      %v1131 = vpack.c.bf16 %v1102, %v1101
      %v1132 = vpack.c.bf16 %v1104, %v1103
      %v1133 = vpack.c.bf16 %v1106, %v1105
      %v1134 = vpack.c.bf16 %v1108, %v1107
      %v1135 = vpack.c.bf16 %v1110, %v1109
      %v1136 = vpack.c.bf16 %v1112, %v1111
      %v1137 = vpack.c.bf16 %v1114, %v1113
      %v1138 = vpack.c.bf16 %v1116, %v1115
      %v1139 = vpack.c.bf16 %v1118, %v1117
      %v1140 = vpack.c.bf16 %v1120, %v1119
      %v1141 = vpack.c.bf16 %v1122, %v1121
      %v1142 = vpack.c.bf16 %v1124, %v1123
      %v1143 = vpack.c.bf16 %v1126, %v1125
      %v1144 = vpack.c.bf16 %v1128, %v1127
      %v1145 = vld [vmem:[%s2] sm:$0xf]
      %v1146 = vld [vmem:[%s2 + $0x4] sm:$0xf]
      %v1147 = vld [vmem:[%s2 + $0x8] sm:$0xf]
      %v1148 = vld [vmem:[%s2 + $0xc] sm:$0xf]
      %v1149 = vpack.c.bf16 0.0, 0.0
      %s1150 = scalar_lea.vmem %s2, 16
      %v1151 = vld [vmem:[%s1150] sm:$0xf]
      %v1152 = vld [vmem:[%s1150 + $0x4] sm:$0xf]
      %v1153 = vld [vmem:[%s1150 + $0x8] sm:$0xf]
      %v1154 = vld [vmem:[%s1150 + $0xc] sm:$0xf]
      %vm1155 = vsmask.f32 7424
      %v1157 = vshrl.u32 %v1129, 16
      %v1159 = vshll.u32 %v1129, 16
      %v1161 = vrot.slane %v1159, 1
      %v1162 = vor.u32 %v1157, %v1161
      %v1164 = vshll.u32 %v1130, 16
      %v1166 = vrot.slane %v1164, 1
      %v1167 = vsel %vm1155, %v1162, %v1166
      %v1168 = vshrl.u32 %v1130, 16
      %v1170 = vor.u32 %v1168, %v1166
      %v1172 = vshll.u32 %v1131, 16
      %v1174 = vrot.slane %v1172, 1
      %v1175 = vsel %vm1155, %v1170, %v1174
      %v1176 = vshrl.u32 %v1131, 16
      %v1178 = vor.u32 %v1176, %v1174
      %v1180 = vshll.u32 %v1132, 16
      %v1182 = vrot.slane %v1180, 1
      %v1183 = vsel %vm1155, %v1178, %v1182
      %v1184 = vshrl.u32 %v1132, 16
      %v1186 = vor.u32 %v1184, %v1182
      %v1188 = vshll.u32 %v1133, 16
      %v1190 = vrot.slane %v1188, 1
      %v1191 = vsel %vm1155, %v1186, %v1190
      %v1192 = vshrl.u32 %v1133, 16
      %v1194 = vor.u32 %v1192, %v1190
      %v1196 = vshll.u32 %v1134, 16
      %v1198 = vrot.slane %v1196, 1
      %v1199 = vsel %vm1155, %v1194, %v1198
      %v1200 = vshrl.u32 %v1134, 16
      %v1202 = vor.u32 %v1200, %v1198
      %v1204 = vshll.u32 %v1135, 16
      %v1206 = vrot.slane %v1204, 1
      %v1207 = vsel %vm1155, %v1202, %v1206
      %v1208 = vshrl.u32 %v1135, 16
      %v1210 = vor.u32 %v1208, %v1206
      %v1212 = vshll.u32 %v1136, 16
      %v1214 = vrot.slane %v1212, 1
      %v1215 = vsel %vm1155, %v1210, %v1214
      %v1216 = vshrl.u32 %v1136, 16
      %v1218 = vor.u32 %v1216, %v1214
      %v1220 = vshll.u32 %v1137, 16
      %v1222 = vrot.slane %v1220, 1
      %v1223 = vsel %vm1155, %v1218, %v1222
      %v1224 = vshrl.u32 %v1137, 16
      %v1226 = vor.u32 %v1224, %v1222
      %v1228 = vshll.u32 %v1138, 16
      %v1230 = vrot.slane %v1228, 1
      %v1231 = vsel %vm1155, %v1226, %v1230
      %v1232 = vshrl.u32 %v1138, 16
      %v1234 = vor.u32 %v1232, %v1230
      %v1236 = vshll.u32 %v1139, 16
      %v1238 = vrot.slane %v1236, 1
      %v1239 = vsel %vm1155, %v1234, %v1238
      %v1240 = vshrl.u32 %v1139, 16
      %v1242 = vor.u32 %v1240, %v1238
      %v1244 = vshll.u32 %v1140, 16
      %v1246 = vrot.slane %v1244, 1
      %v1247 = vsel %vm1155, %v1242, %v1246
      %v1248 = vshrl.u32 %v1140, 16
      %v1250 = vor.u32 %v1248, %v1246
      %v1252 = vshll.u32 %v1141, 16
      %v1254 = vrot.slane %v1252, 1
      %v1255 = vsel %vm1155, %v1250, %v1254
      %v1256 = vshrl.u32 %v1141, 16
      %v1258 = vor.u32 %v1256, %v1254
      %v1260 = vshll.u32 %v1142, 16
      %v1262 = vrot.slane %v1260, 1
      %v1263 = vsel %vm1155, %v1258, %v1262
      %v1264 = vshrl.u32 %v1142, 16
      %v1266 = vor.u32 %v1264, %v1262
      %v1268 = vshll.u32 %v1143, 16
      %v1270 = vrot.slane %v1268, 1
      %v1271 = vsel %vm1155, %v1266, %v1270
      %v1272 = vshrl.u32 %v1143, 16
      %v1274 = vor.u32 %v1272, %v1270
      %v1276 = vshll.u32 %v1144, 16
      %v1278 = vrot.slane %v1276, 1
      %v1279 = vsel %vm1155, %v1274, %v1278
      %v1280 = vshrl.u32 %v1144, 16
      %v1282 = vor.u32 %v1280, %v1278
      %v1284 = vshll.u32 %v1149, 16
      %v1286 = vrot.slane %v1284, 1
      %v1287 = vsel %vm1155, %v1282, %v1286
      %v1292 = vunpack.c.l.b16 %v1151
      %v1293 = vunpack.c.l.b16 %v1152
      %v1294 = vunpack.c.l.b16 %v1153
      %v1295 = vunpack.c.l.b16 %v1154
      %v1296 = vpack.c.b16 %v1293, %v1292
      %v1297 = vpack.c.b16 %v1295, %v1294
      %v1301 = vsel %vm733, %v1167, 0
      %v1304 = vsel %vm733, %v1175, 0
      %v1307 = vsel %vm733, %v1183, 0
      %v1310 = vsel %vm733, %v1191, 0
      %v1313 = vsel %vm733, %v1199, 0
      %v1316 = vsel %vm733, %v1207, 0
      %v1319 = vsel %vm733, %v1215, 0
      %v1322 = vsel %vm733, %v1223, 0
      %v1325 = vsel %vm733, %v1231, 0
      %v1328 = vsel %vm733, %v1239, 0
      %v1331 = vsel %vm733, %v1247, 0
      %v1334 = vsel %vm733, %v1255, 0
      %v1337 = vsel %vm733, %v1263, 0
      %v1340 = vsel %vm733, %v1271, 0
      %v1343 = vsel %vm733, %v1279, 0
      %v1346 = vsel %vm733, %v1287, 0
      %1348 = vmatpush.bf16.msra.mxu0 0
      %1349 = vmatpush.bf16.msra.mxu0 0
      %1350 = vmatpush.bf16.msra.mxu0 0
      %1351 = vmatpush.bf16.msra.mxu0 0
      %1352 = vmatpush.bf16.msra.mxu0 0
      %1353 = vmatpush.bf16.msra.mxu0 0
      %1354 = vmatpush.bf16.msra.mxu0 %v1297
      %1355 = vmatpush.bf16.msra.mxu0 %v1296
      %1356 = vmatmul.bf16.gmra.mxu0 %v1301
      %v1357 = vpop.f32.mrf.mxu0
      %v1358 = vadd.f32 0.0, %v1357
      %v1359 = vpop.f32.mrf.mxu0
      %v1360 = vadd.f32 0.0, %v1359
      %1361 = vmatmul.bf16.gmra.mxu0 %v1304
      %v1362 = vpop.f32.mrf.mxu0
      %v1363 = vadd.f32 0.0, %v1362
      %v1364 = vpop.f32.mrf.mxu0
      %v1365 = vadd.f32 0.0, %v1364
      %1366 = vmatmul.bf16.gmra.mxu0 %v1307
      %v1367 = vpop.f32.mrf.mxu0
      %v1368 = vadd.f32 0.0, %v1367
      %v1369 = vpop.f32.mrf.mxu0
      %v1370 = vadd.f32 0.0, %v1369
      %1371 = vmatmul.bf16.gmra.mxu0 %v1310
      %v1372 = vpop.f32.mrf.mxu0
      %v1373 = vadd.f32 0.0, %v1372
      %v1374 = vpop.f32.mrf.mxu0
      %v1375 = vadd.f32 0.0, %v1374
      %1376 = vmatmul.bf16.gmra.mxu0 %v1313
      %v1377 = vpop.f32.mrf.mxu0
      %v1378 = vadd.f32 0.0, %v1377
      %v1379 = vpop.f32.mrf.mxu0
      %v1380 = vadd.f32 0.0, %v1379
      %1381 = vmatmul.bf16.gmra.mxu0 %v1316
      %v1382 = vpop.f32.mrf.mxu0
      %v1383 = vadd.f32 0.0, %v1382
      %v1384 = vpop.f32.mrf.mxu0
      %v1385 = vadd.f32 0.0, %v1384
      %1386 = vmatmul.bf16.gmra.mxu0 %v1319
      %v1387 = vpop.f32.mrf.mxu0
      %v1388 = vadd.f32 0.0, %v1387
      %v1389 = vpop.f32.mrf.mxu0
      %v1390 = vadd.f32 0.0, %v1389
      %1391 = vmatmul.bf16.gmra.mxu0 %v1322
      %v1392 = vpop.f32.mrf.mxu0
      %v1393 = vadd.f32 0.0, %v1392
      %v1394 = vpop.f32.mrf.mxu0
      %v1395 = vadd.f32 0.0, %v1394
      %1396 = vmatmul.bf16.gmra.mxu0 %v1325
      %v1397 = vpop.f32.mrf.mxu0
      %v1398 = vadd.f32 0.0, %v1397
      %v1399 = vpop.f32.mrf.mxu0
      %v1400 = vadd.f32 0.0, %v1399
      %1401 = vmatmul.bf16.gmra.mxu0 %v1328
      %v1402 = vpop.f32.mrf.mxu0
      %v1403 = vadd.f32 0.0, %v1402
      %v1404 = vpop.f32.mrf.mxu0
      %v1405 = vadd.f32 0.0, %v1404
      %1406 = vmatmul.bf16.gmra.mxu0 %v1331
      %v1407 = vpop.f32.mrf.mxu0
      %v1408 = vadd.f32 0.0, %v1407
      %v1409 = vpop.f32.mrf.mxu0
      %v1410 = vadd.f32 0.0, %v1409
      %1411 = vmatmul.bf16.gmra.mxu0 %v1334
      %v1412 = vpop.f32.mrf.mxu0
      %v1413 = vadd.f32 0.0, %v1412
      %v1414 = vpop.f32.mrf.mxu0
      %v1415 = vadd.f32 0.0, %v1414
      %1416 = vmatmul.bf16.gmra.mxu0 %v1337
      %v1417 = vpop.f32.mrf.mxu0
      %v1418 = vadd.f32 0.0, %v1417
      %v1419 = vpop.f32.mrf.mxu0
      %v1420 = vadd.f32 0.0, %v1419
      %1421 = vmatmul.bf16.gmra.mxu0 %v1340
      %v1422 = vpop.f32.mrf.mxu0
      %v1423 = vadd.f32 0.0, %v1422
      %v1424 = vpop.f32.mrf.mxu0
      %v1425 = vadd.f32 0.0, %v1424
      %1426 = vmatmul.bf16.gmra.mxu0 %v1343
      %v1427 = vpop.f32.mrf.mxu0
      %v1428 = vadd.f32 0.0, %v1427
      %v1429 = vpop.f32.mrf.mxu0
      %v1430 = vadd.f32 0.0, %v1429
      %1431 = vmatmul.bf16.gmra.mxu0 %v1346
      %v1432 = vpop.f32.mrf.mxu0
      %v1433 = vadd.f32 0.0, %v1432
      %v1434 = vpop.f32.mrf.mxu0
      %v1435 = vadd.f32 0.0, %v1434
      %1436 = vdwg.mxu0
      %v1441 = vunpack.c.l.b16 %v1145
      %v1442 = vunpack.c.l.b16 %v1146
      %v1443 = vunpack.c.l.b16 %v1147
      %v1444 = vunpack.c.l.b16 %v1148
      %v1445 = vpack.c.b16 %v1442, %v1441
      %v1446 = vpack.c.b16 %v1444, %v1443
      %v1449 = vsel %vm733, %v1129, 0
      %v1451 = vsel %vm733, %v1130, 0
      %v1453 = vsel %vm733, %v1131, 0
      %v1455 = vsel %vm733, %v1132, 0
      %v1457 = vsel %vm733, %v1133, 0
      %v1459 = vsel %vm733, %v1134, 0
      %v1461 = vsel %vm733, %v1135, 0
      %v1463 = vsel %vm733, %v1136, 0
      %v1465 = vsel %vm733, %v1137, 0
      %v1467 = vsel %vm733, %v1138, 0
      %v1469 = vsel %vm733, %v1139, 0
      %v1471 = vsel %vm733, %v1140, 0
      %v1473 = vsel %vm733, %v1141, 0
      %v1475 = vsel %vm733, %v1142, 0
      %v1477 = vsel %vm733, %v1143, 0
      %v1479 = vsel %vm733, %v1144, 0
      %1481 = vmatpush.bf16.msra.mxu0 0
      %1482 = vmatpush.bf16.msra.mxu0 0
      %1483 = vmatpush.bf16.msra.mxu0 0
      %1484 = vmatpush.bf16.msra.mxu0 0
      %1485 = vmatpush.bf16.msra.mxu0 0
      %1486 = vmatpush.bf16.msra.mxu0 0
      %1487 = vmatpush.bf16.msra.mxu0 %v1446
      %1488 = vmatpush.bf16.msra.mxu0 %v1445
      %1489 = vmatmul.bf16.gmra.mxu0 %v1449
      %v1490 = vpop.f32.mrf.mxu0
      %v1491 = vadd.f32 %v1358, %v1490
      %v1492 = vpop.f32.mrf.mxu0
      %v1493 = vadd.f32 %v1360, %v1492
      %1494 = vmatmul.bf16.gmra.mxu0 %v1451
      %v1495 = vpop.f32.mrf.mxu0
      %v1496 = vadd.f32 %v1363, %v1495
      %v1497 = vpop.f32.mrf.mxu0
      %v1498 = vadd.f32 %v1365, %v1497
      %1499 = vmatmul.bf16.gmra.mxu0 %v1453
      %v1500 = vpop.f32.mrf.mxu0
      %v1501 = vadd.f32 %v1368, %v1500
      %v1502 = vpop.f32.mrf.mxu0
      %v1503 = vadd.f32 %v1370, %v1502
      %1504 = vmatmul.bf16.gmra.mxu0 %v1455
      %v1505 = vpop.f32.mrf.mxu0
      %v1506 = vadd.f32 %v1373, %v1505
      %v1507 = vpop.f32.mrf.mxu0
      %v1508 = vadd.f32 %v1375, %v1507
      %1509 = vmatmul.bf16.gmra.mxu0 %v1457
      %v1510 = vpop.f32.mrf.mxu0
      %v1511 = vadd.f32 %v1378, %v1510
      %v1512 = vpop.f32.mrf.mxu0
      %v1513 = vadd.f32 %v1380, %v1512
      %1514 = vmatmul.bf16.gmra.mxu0 %v1459
      %v1515 = vpop.f32.mrf.mxu0
      %v1516 = vadd.f32 %v1383, %v1515
      %v1517 = vpop.f32.mrf.mxu0
      %v1518 = vadd.f32 %v1385, %v1517
      %1519 = vmatmul.bf16.gmra.mxu0 %v1461
      %v1520 = vpop.f32.mrf.mxu0
      %v1521 = vadd.f32 %v1388, %v1520
      %v1522 = vpop.f32.mrf.mxu0
      %v1523 = vadd.f32 %v1390, %v1522
      %1524 = vmatmul.bf16.gmra.mxu0 %v1463
      %v1525 = vpop.f32.mrf.mxu0
      %v1526 = vadd.f32 %v1393, %v1525
      %v1527 = vpop.f32.mrf.mxu0
      %v1528 = vadd.f32 %v1395, %v1527
      %1529 = vmatmul.bf16.gmra.mxu0 %v1465
      %v1530 = vpop.f32.mrf.mxu0
      %v1531 = vadd.f32 %v1398, %v1530
      %v1532 = vpop.f32.mrf.mxu0
      %v1533 = vadd.f32 %v1400, %v1532
      %1534 = vmatmul.bf16.gmra.mxu0 %v1467
      %v1535 = vpop.f32.mrf.mxu0
      %v1536 = vadd.f32 %v1403, %v1535
      %v1537 = vpop.f32.mrf.mxu0
      %v1538 = vadd.f32 %v1405, %v1537
      %1539 = vmatmul.bf16.gmra.mxu0 %v1469
      %v1540 = vpop.f32.mrf.mxu0
      %v1541 = vadd.f32 %v1408, %v1540
      %v1542 = vpop.f32.mrf.mxu0
      %v1543 = vadd.f32 %v1410, %v1542
      %1544 = vmatmul.bf16.gmra.mxu0 %v1471
      %v1545 = vpop.f32.mrf.mxu0
      %v1546 = vadd.f32 %v1413, %v1545
      %v1547 = vpop.f32.mrf.mxu0
      %v1548 = vadd.f32 %v1415, %v1547
      %1549 = vmatmul.bf16.gmra.mxu0 %v1473
      %v1550 = vpop.f32.mrf.mxu0
      %v1551 = vadd.f32 %v1418, %v1550
      %v1552 = vpop.f32.mrf.mxu0
      %v1553 = vadd.f32 %v1420, %v1552
      %1554 = vmatmul.bf16.gmra.mxu0 %v1475
      %v1555 = vpop.f32.mrf.mxu0
      %v1556 = vadd.f32 %v1423, %v1555
      %v1557 = vpop.f32.mrf.mxu0
      %v1558 = vadd.f32 %v1425, %v1557
      %1559 = vmatmul.bf16.gmra.mxu0 %v1477
      %v1560 = vpop.f32.mrf.mxu0
      %v1561 = vadd.f32 %v1428, %v1560
      %v1562 = vpop.f32.mrf.mxu0
      %v1563 = vadd.f32 %v1430, %v1562
      %1564 = vmatmul.bf16.gmra.mxu0 %v1479
      %v1565 = vpop.f32.mrf.mxu0
      %v1566 = vadd.f32 %v1433, %v1565
      %v1567 = vpop.f32.mrf.mxu0
      %v1568 = vadd.f32 %v1435, %v1567
      %1569 = vdwg.mxu0
      %s1570 = scalar_lea.vmem %s2, 32
      %v1571 = vld [vmem:[%s1570] sm:$0xf]
      %v1572 = vld [vmem:[%s1570 + $0x4] sm:$0xf]
      %v1573 = vld [vmem:[%s1570 + $0x8] sm:$0xf]
      %v1574 = vld [vmem:[%s1570 + $0xc] sm:$0xf]
      %vm1592 = vcmask 1046528
      %v1593 = vrot.slane %v1129, 1
      %v1594 = vrot.slane %v1130, 1
      %v1595 = vsel %vm1592, %v1593, %v1594
      %v1596 = vrot.slane %v1131, 1
      %v1597 = vsel %vm1592, %v1594, %v1596
      %v1598 = vrot.slane %v1132, 1
      %v1599 = vsel %vm1592, %v1596, %v1598
      %v1600 = vrot.slane %v1133, 1
      %v1601 = vsel %vm1592, %v1598, %v1600
      %v1602 = vrot.slane %v1134, 1
      %v1603 = vsel %vm1592, %v1600, %v1602
      %v1604 = vrot.slane %v1135, 1
      %v1605 = vsel %vm1592, %v1602, %v1604
      %v1606 = vrot.slane %v1136, 1
      %v1607 = vsel %vm1592, %v1604, %v1606
      %v1608 = vrot.slane %v1137, 1
      %v1609 = vsel %vm1592, %v1606, %v1608
      %v1610 = vrot.slane %v1138, 1
      %v1611 = vsel %vm1592, %v1608, %v1610
      %v1612 = vrot.slane %v1139, 1
      %v1613 = vsel %vm1592, %v1610, %v1612
      %v1614 = vrot.slane %v1140, 1
      %v1615 = vsel %vm1592, %v1612, %v1614
      %v1616 = vrot.slane %v1141, 1
      %v1617 = vsel %vm1592, %v1614, %v1616
      %v1618 = vrot.slane %v1142, 1
      %v1619 = vsel %vm1592, %v1616, %v1618
      %v1620 = vrot.slane %v1143, 1
      %v1621 = vsel %vm1592, %v1618, %v1620
      %v1622 = vrot.slane %v1144, 1
      %v1623 = vsel %vm1592, %v1620, %v1622
      %v1624 = vrot.slane %v1149, 1
      %v1625 = vsel %vm1592, %v1622, %v1624
      %v1630 = vunpack.c.l.b16 %v1571
      %v1631 = vunpack.c.l.b16 %v1572
      %v1632 = vunpack.c.l.b16 %v1573
      %v1633 = vunpack.c.l.b16 %v1574
      %v1634 = vpack.c.b16 %v1631, %v1630
      %v1635 = vpack.c.b16 %v1633, %v1632
      %v1639 = vsel %vm733, %v1595, 0
      %v1642 = vsel %vm733, %v1597, 0
      %v1645 = vsel %vm733, %v1599, 0
      %v1648 = vsel %vm733, %v1601, 0
      %v1651 = vsel %vm733, %v1603, 0
      %v1654 = vsel %vm733, %v1605, 0
      %v1657 = vsel %vm733, %v1607, 0
      %v1660 = vsel %vm733, %v1609, 0
      %v1663 = vsel %vm733, %v1611, 0
      %v1666 = vsel %vm733, %v1613, 0
      %v1669 = vsel %vm733, %v1615, 0
      %v1672 = vsel %vm733, %v1617, 0
      %v1675 = vsel %vm733, %v1619, 0
      %v1678 = vsel %vm733, %v1621, 0
      %v1681 = vsel %vm733, %v1623, 0
      %v1684 = vsel %vm733, %v1625, 0
      %1686 = vmatpush.bf16.msra.mxu0 0
      %1687 = vmatpush.bf16.msra.mxu0 0
      %1688 = vmatpush.bf16.msra.mxu0 0
      %1689 = vmatpush.bf16.msra.mxu0 0
      %1690 = vmatpush.bf16.msra.mxu0 0
      %1691 = vmatpush.bf16.msra.mxu0 0
      %1692 = vmatpush.bf16.msra.mxu0 %v1635
      %1693 = vmatpush.bf16.msra.mxu0 %v1634
      %1694 = vmatmul.bf16.gmra.mxu0 %v1639
      %v1695 = vpop.f32.mrf.mxu0
      %v1696 = vadd.f32 0.0, %v1695
      %v1697 = vpop.f32.mrf.mxu0
      %v1698 = vadd.f32 0.0, %v1697
      %1699 = vmatmul.bf16.gmra.mxu0 %v1642
      %v1700 = vpop.f32.mrf.mxu0
      %v1701 = vadd.f32 0.0, %v1700
      %v1702 = vpop.f32.mrf.mxu0
      %v1703 = vadd.f32 0.0, %v1702
      %1704 = vmatmul.bf16.gmra.mxu0 %v1645
      %v1705 = vpop.f32.mrf.mxu0
      %v1706 = vadd.f32 0.0, %v1705
      %v1707 = vpop.f32.mrf.mxu0
      %v1708 = vadd.f32 0.0, %v1707
      %1709 = vmatmul.bf16.gmra.mxu0 %v1648
      %v1710 = vpop.f32.mrf.mxu0
      %v1711 = vadd.f32 0.0, %v1710
      %v1712 = vpop.f32.mrf.mxu0
      %v1713 = vadd.f32 0.0, %v1712
      %1714 = vmatmul.bf16.gmra.mxu0 %v1651
      %v1715 = vpop.f32.mrf.mxu0
      %v1716 = vadd.f32 0.0, %v1715
      %v1717 = vpop.f32.mrf.mxu0
      %v1718 = vadd.f32 0.0, %v1717
      %1719 = vmatmul.bf16.gmra.mxu0 %v1654
      %v1720 = vpop.f32.mrf.mxu0
      %v1721 = vadd.f32 0.0, %v1720
      %v1722 = vpop.f32.mrf.mxu0
      %v1723 = vadd.f32 0.0, %v1722
      %1724 = vmatmul.bf16.gmra.mxu0 %v1657
      %v1725 = vpop.f32.mrf.mxu0
      %v1726 = vadd.f32 0.0, %v1725
      %v1727 = vpop.f32.mrf.mxu0
      %v1728 = vadd.f32 0.0, %v1727
      %1729 = vmatmul.bf16.gmra.mxu0 %v1660
      %v1730 = vpop.f32.mrf.mxu0
      %v1731 = vadd.f32 0.0, %v1730
      %v1732 = vpop.f32.mrf.mxu0
      %v1733 = vadd.f32 0.0, %v1732
      %1734 = vmatmul.bf16.gmra.mxu0 %v1663
      %v1735 = vpop.f32.mrf.mxu0
      %v1736 = vadd.f32 0.0, %v1735
      %v1737 = vpop.f32.mrf.mxu0
      %v1738 = vadd.f32 0.0, %v1737
      %1739 = vmatmul.bf16.gmra.mxu0 %v1666
      %v1740 = vpop.f32.mrf.mxu0
      %v1741 = vadd.f32 0.0, %v1740
      %v1742 = vpop.f32.mrf.mxu0
      %v1743 = vadd.f32 0.0, %v1742
      %1744 = vmatmul.bf16.gmra.mxu0 %v1669
      %v1745 = vpop.f32.mrf.mxu0
      %v1746 = vadd.f32 0.0, %v1745
      %v1747 = vpop.f32.mrf.mxu0
      %v1748 = vadd.f32 0.0, %v1747
      %1749 = vmatmul.bf16.gmra.mxu0 %v1672
      %v1750 = vpop.f32.mrf.mxu0
      %v1751 = vadd.f32 0.0, %v1750
      %v1752 = vpop.f32.mrf.mxu0
      %v1753 = vadd.f32 0.0, %v1752
      %1754 = vmatmul.bf16.gmra.mxu0 %v1675
      %v1755 = vpop.f32.mrf.mxu0
      %v1756 = vadd.f32 0.0, %v1755
      %v1757 = vpop.f32.mrf.mxu0
      %v1758 = vadd.f32 0.0, %v1757
      %1759 = vmatmul.bf16.gmra.mxu0 %v1678
      %v1760 = vpop.f32.mrf.mxu0
      %v1761 = vadd.f32 0.0, %v1760
      %v1762 = vpop.f32.mrf.mxu0
      %v1763 = vadd.f32 0.0, %v1762
      %1764 = vmatmul.bf16.gmra.mxu0 %v1681
      %v1765 = vpop.f32.mrf.mxu0
      %v1766 = vadd.f32 0.0, %v1765
      %v1767 = vpop.f32.mrf.mxu0
      %v1768 = vadd.f32 0.0, %v1767
      %1769 = vmatmul.bf16.gmra.mxu0 %v1684
      %v1770 = vpop.f32.mrf.mxu0
      %v1771 = vadd.f32 0.0, %v1770
      %v1772 = vpop.f32.mrf.mxu0
      %v1773 = vadd.f32 0.0, %v1772
      %1774 = vdwg.mxu0
      %v1775 = vadd.f32 %v1491, %v1696
      %v1776 = vadd.f32 %v1493, %v1698
      %v1777 = vadd.f32 %v1496, %v1701
      %v1778 = vadd.f32 %v1498, %v1703
      %v1779 = vadd.f32 %v1501, %v1706
      %v1780 = vadd.f32 %v1503, %v1708
      %v1781 = vadd.f32 %v1506, %v1711
      %v1782 = vadd.f32 %v1508, %v1713
      %v1783 = vadd.f32 %v1511, %v1716
      %v1784 = vadd.f32 %v1513, %v1718
      %v1785 = vadd.f32 %v1516, %v1721
      %v1786 = vadd.f32 %v1518, %v1723
      %v1787 = vadd.f32 %v1521, %v1726
      %v1788 = vadd.f32 %v1523, %v1728
      %v1789 = vadd.f32 %v1526, %v1731
      %v1790 = vadd.f32 %v1528, %v1733
      %v1791 = vadd.f32 %v1531, %v1736
      %v1792 = vadd.f32 %v1533, %v1738
      %v1793 = vadd.f32 %v1536, %v1741
      %v1794 = vadd.f32 %v1538, %v1743
      %v1795 = vadd.f32 %v1541, %v1746
      %v1796 = vadd.f32 %v1543, %v1748
      %v1797 = vadd.f32 %v1546, %v1751
      %v1798 = vadd.f32 %v1548, %v1753
      %v1799 = vadd.f32 %v1551, %v1756
      %v1800 = vadd.f32 %v1553, %v1758
      %v1801 = vadd.f32 %v1556, %v1761
      %v1802 = vadd.f32 %v1558, %v1763
      %v1803 = vadd.f32 %v1561, %v1766
      %v1804 = vadd.f32 %v1563, %v1768
      %v1805 = vadd.f32 %v1566, %v1771
      %v1806 = vadd.f32 %v1568, %v1773
      %v1807 = vpack.c.bf16 %v1099, %v1098
      %v1808 = vpack.c.bf16 %v1101, %v1100
      %v1809 = vpack.c.bf16 %v1103, %v1102
      %v1810 = vpack.c.bf16 %v1105, %v1104
      %v1811 = vpack.c.bf16 %v1107, %v1106
      %v1812 = vpack.c.bf16 %v1109, %v1108
      %v1813 = vpack.c.bf16 %v1111, %v1110
      %v1814 = vpack.c.bf16 %v1113, %v1112
      %v1815 = vpack.c.bf16 %v1115, %v1114
      %v1816 = vpack.c.bf16 %v1117, %v1116
      %v1817 = vpack.c.bf16 %v1119, %v1118
      %v1818 = vpack.c.bf16 %v1121, %v1120
      %v1819 = vpack.c.bf16 %v1123, %v1122
      %v1820 = vpack.c.bf16 %v1125, %v1124
      %v1821 = vpack.c.bf16 %v1127, %v1126
      %v1822 = vpack.c.bf16 0.0, %v1128
      %s1823 = scalar_lea.vmem %s2, 48
      %v1824 = vld [vmem:[%s1823] sm:$0xf]
      %v1825 = vld [vmem:[%s1823 + $0x4] sm:$0xf]
      %v1826 = vld [vmem:[%s1823 + $0x8] sm:$0xf]
      %v1827 = vld [vmem:[%s1823 + $0xc] sm:$0xf]
      %vm1828 = vsmask.f32 6400
      %v1830 = vshrl.u32 %v1807, 16
      %v1832 = vrot.slane %v1830, 1
      %v1833 = vshll.u32 %v1807, 16
      %v1835 = vrot.slane %v1833, 2
      %v1836 = vor.u32 %v1832, %v1835
      %v1838 = vshrl.u32 %v1808, 16
      %v1840 = vrot.slane %v1838, 1
      %v1841 = vshll.u32 %v1808, 16
      %v1843 = vrot.slane %v1841, 2
      %v1844 = vor.u32 %v1840, %v1843
      %v1845 = vsel %vm1828, %v1836, %v1844
      %v1847 = vshrl.u32 %v1809, 16
      %v1849 = vrot.slane %v1847, 1
      %v1850 = vshll.u32 %v1809, 16
      %v1852 = vrot.slane %v1850, 2
      %v1853 = vor.u32 %v1849, %v1852
      %v1854 = vsel %vm1828, %v1844, %v1853
      %v1856 = vshrl.u32 %v1810, 16
      %v1858 = vrot.slane %v1856, 1
      %v1859 = vshll.u32 %v1810, 16
      %v1861 = vrot.slane %v1859, 2
      %v1862 = vor.u32 %v1858, %v1861
      %v1863 = vsel %vm1828, %v1853, %v1862
      %v1865 = vshrl.u32 %v1811, 16
      %v1867 = vrot.slane %v1865, 1
      %v1868 = vshll.u32 %v1811, 16
      %v1870 = vrot.slane %v1868, 2
      %v1871 = vor.u32 %v1867, %v1870
      %v1872 = vsel %vm1828, %v1862, %v1871
      %v1874 = vshrl.u32 %v1812, 16
      %v1876 = vrot.slane %v1874, 1
      %v1877 = vshll.u32 %v1812, 16
      %v1879 = vrot.slane %v1877, 2
      %v1880 = vor.u32 %v1876, %v1879
      %v1881 = vsel %vm1828, %v1871, %v1880
      %v1883 = vshrl.u32 %v1813, 16
      %v1885 = vrot.slane %v1883, 1
      %v1886 = vshll.u32 %v1813, 16
      %v1888 = vrot.slane %v1886, 2
      %v1889 = vor.u32 %v1885, %v1888
      %v1890 = vsel %vm1828, %v1880, %v1889
      %v1892 = vshrl.u32 %v1814, 16
      %v1894 = vrot.slane %v1892, 1
      %v1895 = vshll.u32 %v1814, 16
      %v1897 = vrot.slane %v1895, 2
      %v1898 = vor.u32 %v1894, %v1897
      %v1899 = vsel %vm1828, %v1889, %v1898
      %v1901 = vshrl.u32 %v1815, 16
      %v1903 = vrot.slane %v1901, 1
      %v1904 = vshll.u32 %v1815, 16
      %v1906 = vrot.slane %v1904, 2
      %v1907 = vor.u32 %v1903, %v1906
      %v1908 = vsel %vm1828, %v1898, %v1907
      %v1910 = vshrl.u32 %v1816, 16
      %v1912 = vrot.slane %v1910, 1
      %v1913 = vshll.u32 %v1816, 16
      %v1915 = vrot.slane %v1913, 2
      %v1916 = vor.u32 %v1912, %v1915
      %v1917 = vsel %vm1828, %v1907, %v1916
      %v1919 = vshrl.u32 %v1817, 16
      %v1921 = vrot.slane %v1919, 1
      %v1922 = vshll.u32 %v1817, 16
      %v1924 = vrot.slane %v1922, 2
      %v1925 = vor.u32 %v1921, %v1924
      %v1926 = vsel %vm1828, %v1916, %v1925
      %v1928 = vshrl.u32 %v1818, 16
      %v1930 = vrot.slane %v1928, 1
      %v1931 = vshll.u32 %v1818, 16
      %v1933 = vrot.slane %v1931, 2
      %v1934 = vor.u32 %v1930, %v1933
      %v1935 = vsel %vm1828, %v1925, %v1934
      %v1937 = vshrl.u32 %v1819, 16
      %v1939 = vrot.slane %v1937, 1
      %v1940 = vshll.u32 %v1819, 16
      %v1942 = vrot.slane %v1940, 2
      %v1943 = vor.u32 %v1939, %v1942
      %v1944 = vsel %vm1828, %v1934, %v1943
      %v1946 = vshrl.u32 %v1820, 16
      %v1948 = vrot.slane %v1946, 1
      %v1949 = vshll.u32 %v1820, 16
      %v1951 = vrot.slane %v1949, 2
      %v1952 = vor.u32 %v1948, %v1951
      %v1953 = vsel %vm1828, %v1943, %v1952
      %v1955 = vshrl.u32 %v1821, 16
      %v1957 = vrot.slane %v1955, 1
      %v1958 = vshll.u32 %v1821, 16
      %v1960 = vrot.slane %v1958, 2
      %v1961 = vor.u32 %v1957, %v1960
      %v1962 = vsel %vm1828, %v1952, %v1961
      %v1964 = vshrl.u32 %v1822, 16
      %v1966 = vrot.slane %v1964, 1
      %v1967 = vshll.u32 %v1822, 16
      %v1969 = vrot.slane %v1967, 2
      %v1970 = vor.u32 %v1966, %v1969
      %v1971 = vsel %vm1828, %v1961, %v1970
      %v1972 = vshrl.u32 %v1149, 16
      %v1974 = vrot.slane %v1972, 1
      %v1975 = vrot.slane %v1284, 2
      %v1976 = vor.u32 %v1974, %v1975
      %v1977 = vsel %vm1828, %v1970, %v1976
      %v1982 = vunpack.c.l.b16 %v1824
      %v1983 = vunpack.c.l.b16 %v1825
      %v1984 = vunpack.c.l.b16 %v1826
      %v1985 = vunpack.c.l.b16 %v1827
      %v1986 = vpack.c.b16 %v1983, %v1982
      %v1987 = vpack.c.b16 %v1985, %v1984
      %v1991 = vsel %vm733, %v1845, 0
      %v1994 = vsel %vm733, %v1854, 0
      %v1997 = vsel %vm733, %v1863, 0
      %v2000 = vsel %vm733, %v1872, 0
      %v2003 = vsel %vm733, %v1881, 0
      %v2006 = vsel %vm733, %v1890, 0
      %v2009 = vsel %vm733, %v1899, 0
      %v2012 = vsel %vm733, %v1908, 0
      %v2015 = vsel %vm733, %v1917, 0
      %v2018 = vsel %vm733, %v1926, 0
      %v2021 = vsel %vm733, %v1935, 0
      %v2024 = vsel %vm733, %v1944, 0
      %v2027 = vsel %vm733, %v1953, 0
      %v2030 = vsel %vm733, %v1962, 0
      %v2033 = vsel %vm733, %v1971, 0
      %v2036 = vsel %vm733, %v1977, 0
      %2038 = vmatpush.bf16.msra.mxu0 0
      %2039 = vmatpush.bf16.msra.mxu0 0
      %2040 = vmatpush.bf16.msra.mxu0 0
      %2041 = vmatpush.bf16.msra.mxu0 0
      %2042 = vmatpush.bf16.msra.mxu0 0
      %2043 = vmatpush.bf16.msra.mxu0 0
      %2044 = vmatpush.bf16.msra.mxu0 %v1987
      %2045 = vmatpush.bf16.msra.mxu0 %v1986
      %2046 = vmatmul.bf16.gmra.mxu0 %v1991
      %v2047 = vpop.f32.mrf.mxu0
      %v2048 = vadd.f32 0.0, %v2047
      %v2049 = vpop.f32.mrf.mxu0
      %v2050 = vadd.f32 0.0, %v2049
      %2051 = vmatmul.bf16.gmra.mxu0 %v1994
      %v2052 = vpop.f32.mrf.mxu0
      %v2053 = vadd.f32 0.0, %v2052
      %v2054 = vpop.f32.mrf.mxu0
      %v2055 = vadd.f32 0.0, %v2054
      %2056 = vmatmul.bf16.gmra.mxu0 %v1997
      %v2057 = vpop.f32.mrf.mxu0
      %v2058 = vadd.f32 0.0, %v2057
      %v2059 = vpop.f32.mrf.mxu0
      %v2060 = vadd.f32 0.0, %v2059
      %2061 = vmatmul.bf16.gmra.mxu0 %v2000
      %v2062 = vpop.f32.mrf.mxu0
      %v2063 = vadd.f32 0.0, %v2062
      %v2064 = vpop.f32.mrf.mxu0
      %v2065 = vadd.f32 0.0, %v2064
      %2066 = vmatmul.bf16.gmra.mxu0 %v2003
      %v2067 = vpop.f32.mrf.mxu0
      %v2068 = vadd.f32 0.0, %v2067
      %v2069 = vpop.f32.mrf.mxu0
      %v2070 = vadd.f32 0.0, %v2069
      %2071 = vmatmul.bf16.gmra.mxu0 %v2006
      %v2072 = vpop.f32.mrf.mxu0
      %v2073 = vadd.f32 0.0, %v2072
      %v2074 = vpop.f32.mrf.mxu0
      %v2075 = vadd.f32 0.0, %v2074
      %2076 = vmatmul.bf16.gmra.mxu0 %v2009
      %v2077 = vpop.f32.mrf.mxu0
      %v2078 = vadd.f32 0.0, %v2077
      %v2079 = vpop.f32.mrf.mxu0
      %v2080 = vadd.f32 0.0, %v2079
      %2081 = vmatmul.bf16.gmra.mxu0 %v2012
      %v2082 = vpop.f32.mrf.mxu0
      %v2083 = vadd.f32 0.0, %v2082
      %v2084 = vpop.f32.mrf.mxu0
      %v2085 = vadd.f32 0.0, %v2084
      %2086 = vmatmul.bf16.gmra.mxu0 %v2015
      %v2087 = vpop.f32.mrf.mxu0
      %v2088 = vadd.f32 0.0, %v2087
      %v2089 = vpop.f32.mrf.mxu0
      %v2090 = vadd.f32 0.0, %v2089
      %2091 = vmatmul.bf16.gmra.mxu0 %v2018
      %v2092 = vpop.f32.mrf.mxu0
      %v2093 = vadd.f32 0.0, %v2092
      %v2094 = vpop.f32.mrf.mxu0
      %v2095 = vadd.f32 0.0, %v2094
      %2096 = vmatmul.bf16.gmra.mxu0 %v2021
      %v2097 = vpop.f32.mrf.mxu0
      %v2098 = vadd.f32 0.0, %v2097
      %v2099 = vpop.f32.mrf.mxu0
      %v2100 = vadd.f32 0.0, %v2099
      %2101 = vmatmul.bf16.gmra.mxu0 %v2024
      %v2102 = vpop.f32.mrf.mxu0
      %v2103 = vadd.f32 0.0, %v2102
      %v2104 = vpop.f32.mrf.mxu0
      %v2105 = vadd.f32 0.0, %v2104
      %2106 = vmatmul.bf16.gmra.mxu0 %v2027
      %v2107 = vpop.f32.mrf.mxu0
      %v2108 = vadd.f32 0.0, %v2107
      %v2109 = vpop.f32.mrf.mxu0
      %v2110 = vadd.f32 0.0, %v2109
      %2111 = vmatmul.bf16.gmra.mxu0 %v2030
      %v2112 = vpop.f32.mrf.mxu0
      %v2113 = vadd.f32 0.0, %v2112
      %v2114 = vpop.f32.mrf.mxu0
      %v2115 = vadd.f32 0.0, %v2114
      %2116 = vmatmul.bf16.gmra.mxu0 %v2033
      %v2117 = vpop.f32.mrf.mxu0
      %v2118 = vadd.f32 0.0, %v2117
      %v2119 = vpop.f32.mrf.mxu0
      %v2120 = vadd.f32 0.0, %v2119
      %2121 = vmatmul.bf16.gmra.mxu0 %v2036
      %v2122 = vpop.f32.mrf.mxu0
      %v2123 = vadd.f32 0.0, %v2122
      %v2124 = vpop.f32.mrf.mxu0
      %v2125 = vadd.f32 0.0, %v2124
      %2126 = vdwg.mxu0
      %v2127 = vadd.f32 %v1775, %v2048
      %v2128 = vadd.f32 %v1776, %v2050
      %v2129 = vadd.f32 %v1777, %v2053
      %v2130 = vadd.f32 %v1778, %v2055
      %v2131 = vadd.f32 %v1779, %v2058
      %v2132 = vadd.f32 %v1780, %v2060
      %v2133 = vadd.f32 %v1781, %v2063
      %v2134 = vadd.f32 %v1782, %v2065
      %v2135 = vadd.f32 %v1783, %v2068
      %v2136 = vadd.f32 %v1784, %v2070
      %v2137 = vadd.f32 %v1785, %v2073
      %v2138 = vadd.f32 %v1786, %v2075
      %v2139 = vadd.f32 %v1787, %v2078
      %v2140 = vadd.f32 %v1788, %v2080
      %v2141 = vadd.f32 %v1789, %v2083
      %v2142 = vadd.f32 %v1790, %v2085
      %v2143 = vadd.f32 %v1791, %v2088
      %v2144 = vadd.f32 %v1792, %v2090
      %v2145 = vadd.f32 %v1793, %v2093
      %v2146 = vadd.f32 %v1794, %v2095
      %v2147 = vadd.f32 %v1795, %v2098
      %v2148 = vadd.f32 %v1796, %v2100
      %v2149 = vadd.f32 %v1797, %v2103
      %v2150 = vadd.f32 %v1798, %v2105
      %v2151 = vadd.f32 %v1799, %v2108
      %v2152 = vadd.f32 %v1800, %v2110
      %v2153 = vadd.f32 %v1801, %v2113
      %v2154 = vadd.f32 %v1802, %v2115
      %v2155 = vadd.f32 %v1803, %v2118
      %v2156 = vadd.f32 %v1804, %v2120
      %v2157 = vadd.f32 %v1805, %v2123
      %v2158 = vadd.f32 %v1806, %v2125
      %s2159 = scalar_lea.vmem %s2, 64
      %v2160 = vld [vmem:[%s2159] sm:$0xf]
      %v2161 = vld [vmem:[%s2159 + $0x4] sm:$0xf]
      %v2162 = vld [vmem:[%s2159 + $0x8] sm:$0xf]
      %v2163 = vld [vmem:[%s2159 + $0xc] sm:$0xf]
      %vm2180 = vcmask 1045504
      %v2181 = vrot.slane %v1807, 2
      %v2182 = vrot.slane %v1808, 2
      %v2183 = vsel %vm2180, %v2181, %v2182
      %v2184 = vrot.slane %v1809, 2
      %v2185 = vsel %vm2180, %v2182, %v2184
      %v2186 = vrot.slane %v1810, 2
      %v2187 = vsel %vm2180, %v2184, %v2186
      %v2188 = vrot.slane %v1811, 2
      %v2189 = vsel %vm2180, %v2186, %v2188
      %v2190 = vrot.slane %v1812, 2
      %v2191 = vsel %vm2180, %v2188, %v2190
      %v2192 = vrot.slane %v1813, 2
      %v2193 = vsel %vm2180, %v2190, %v2192
      %v2194 = vrot.slane %v1814, 2
      %v2195 = vsel %vm2180, %v2192, %v2194
      %v2196 = vrot.slane %v1815, 2
      %v2197 = vsel %vm2180, %v2194, %v2196
      %v2198 = vrot.slane %v1816, 2
      %v2199 = vsel %vm2180, %v2196, %v2198
      %v2200 = vrot.slane %v1817, 2
      %v2201 = vsel %vm2180, %v2198, %v2200
      %v2202 = vrot.slane %v1818, 2
      %v2203 = vsel %vm2180, %v2200, %v2202
      %v2204 = vrot.slane %v1819, 2
      %v2205 = vsel %vm2180, %v2202, %v2204
      %v2206 = vrot.slane %v1820, 2
      %v2207 = vsel %vm2180, %v2204, %v2206
      %v2208 = vrot.slane %v1821, 2
      %v2209 = vsel %vm2180, %v2206, %v2208
      %v2210 = vrot.slane %v1822, 2
      %v2211 = vsel %vm2180, %v2208, %v2210
      %v2212 = vrot.slane %v1149, 2
      %v2213 = vsel %vm2180, %v2210, %v2212
      %v2218 = vunpack.c.l.b16 %v2160
      %v2219 = vunpack.c.l.b16 %v2161
      %v2220 = vunpack.c.l.b16 %v2162
      %v2221 = vunpack.c.l.b16 %v2163
      %v2222 = vpack.c.b16 %v2219, %v2218
      %v2223 = vpack.c.b16 %v2221, %v2220
      %v2227 = vsel %vm733, %v2183, 0
      %v2230 = vsel %vm733, %v2185, 0
      %v2233 = vsel %vm733, %v2187, 0
      %v2236 = vsel %vm733, %v2189, 0
      %v2239 = vsel %vm733, %v2191, 0
      %v2242 = vsel %vm733, %v2193, 0
      %v2245 = vsel %vm733, %v2195, 0
      %v2248 = vsel %vm733, %v2197, 0
      %v2251 = vsel %vm733, %v2199, 0
      %v2254 = vsel %vm733, %v2201, 0
      %v2257 = vsel %vm733, %v2203, 0
      %v2260 = vsel %vm733, %v2205, 0
      %v2263 = vsel %vm733, %v2207, 0
      %v2266 = vsel %vm733, %v2209, 0
      %v2269 = vsel %vm733, %v2211, 0
      %v2272 = vsel %vm733, %v2213, 0
      %2274 = vmatpush.bf16.msra.mxu0 0
      %2275 = vmatpush.bf16.msra.mxu0 0
      %2276 = vmatpush.bf16.msra.mxu0 0
      %2277 = vmatpush.bf16.msra.mxu0 0
      %2278 = vmatpush.bf16.msra.mxu0 0
      %2279 = vmatpush.bf16.msra.mxu0 0
      %2280 = vmatpush.bf16.msra.mxu0 %v2223
      %2281 = vmatpush.bf16.msra.mxu0 %v2222
      %2282 = vmatmul.bf16.gmra.mxu0 %v2227
      %v2283 = vpop.f32.mrf.mxu0
      %v2284 = vadd.f32 0.0, %v2283
      %v2285 = vpop.f32.mrf.mxu0
      %v2286 = vadd.f32 0.0, %v2285
      %2287 = vmatmul.bf16.gmra.mxu0 %v2230
      %v2288 = vpop.f32.mrf.mxu0
      %v2289 = vadd.f32 0.0, %v2288
      %v2290 = vpop.f32.mrf.mxu0
      %v2291 = vadd.f32 0.0, %v2290
      %2292 = vmatmul.bf16.gmra.mxu0 %v2233
      %v2293 = vpop.f32.mrf.mxu0
      %v2294 = vadd.f32 0.0, %v2293
      %v2295 = vpop.f32.mrf.mxu0
      %v2296 = vadd.f32 0.0, %v2295
      %2297 = vmatmul.bf16.gmra.mxu0 %v2236
      %v2298 = vpop.f32.mrf.mxu0
      %v2299 = vadd.f32 0.0, %v2298
      %v2300 = vpop.f32.mrf.mxu0
      %v2301 = vadd.f32 0.0, %v2300
      %2302 = vmatmul.bf16.gmra.mxu0 %v2239
      %v2303 = vpop.f32.mrf.mxu0
      %v2304 = vadd.f32 0.0, %v2303
      %v2305 = vpop.f32.mrf.mxu0
      %v2306 = vadd.f32 0.0, %v2305
      %2307 = vmatmul.bf16.gmra.mxu0 %v2242
      %v2308 = vpop.f32.mrf.mxu0
      %v2309 = vadd.f32 0.0, %v2308
      %v2310 = vpop.f32.mrf.mxu0
      %v2311 = vadd.f32 0.0, %v2310
      %2312 = vmatmul.bf16.gmra.mxu0 %v2245
      %v2313 = vpop.f32.mrf.mxu0
      %v2314 = vadd.f32 0.0, %v2313
      %v2315 = vpop.f32.mrf.mxu0
      %v2316 = vadd.f32 0.0, %v2315
      %2317 = vmatmul.bf16.gmra.mxu0 %v2248
      %v2318 = vpop.f32.mrf.mxu0
      %v2319 = vadd.f32 0.0, %v2318
      %v2320 = vpop.f32.mrf.mxu0
      %v2321 = vadd.f32 0.0, %v2320
      %2322 = vmatmul.bf16.gmra.mxu0 %v2251
      %v2323 = vpop.f32.mrf.mxu0
      %v2324 = vadd.f32 0.0, %v2323
      %v2325 = vpop.f32.mrf.mxu0
      %v2326 = vadd.f32 0.0, %v2325
      %2327 = vmatmul.bf16.gmra.mxu0 %v2254
      %v2328 = vpop.f32.mrf.mxu0
      %v2329 = vadd.f32 0.0, %v2328
      %v2330 = vpop.f32.mrf.mxu0
      %v2331 = vadd.f32 0.0, %v2330
      %2332 = vmatmul.bf16.gmra.mxu0 %v2257
      %v2333 = vpop.f32.mrf.mxu0
      %v2334 = vadd.f32 0.0, %v2333
      %v2335 = vpop.f32.mrf.mxu0
      %v2336 = vadd.f32 0.0, %v2335
      %2337 = vmatmul.bf16.gmra.mxu0 %v2260
      %v2338 = vpop.f32.mrf.mxu0
      %v2339 = vadd.f32 0.0, %v2338
      %v2340 = vpop.f32.mrf.mxu0
      %v2341 = vadd.f32 0.0, %v2340
      %2342 = vmatmul.bf16.gmra.mxu0 %v2263
      %v2343 = vpop.f32.mrf.mxu0
      %v2344 = vadd.f32 0.0, %v2343
      %v2345 = vpop.f32.mrf.mxu0
      %v2346 = vadd.f32 0.0, %v2345
      %2347 = vmatmul.bf16.gmra.mxu0 %v2266
      %v2348 = vpop.f32.mrf.mxu0
      %v2349 = vadd.f32 0.0, %v2348
      %v2350 = vpop.f32.mrf.mxu0
      %v2351 = vadd.f32 0.0, %v2350
      %2352 = vmatmul.bf16.gmra.mxu0 %v2269
      %v2353 = vpop.f32.mrf.mxu0
      %v2354 = vadd.f32 0.0, %v2353
      %v2355 = vpop.f32.mrf.mxu0
      %v2356 = vadd.f32 0.0, %v2355
      %2357 = vmatmul.bf16.gmra.mxu0 %v2272
      %v2358 = vpop.f32.mrf.mxu0
      %v2359 = vadd.f32 0.0, %v2358
      %v2360 = vpop.f32.mrf.mxu0
      %v2361 = vadd.f32 0.0, %v2360
      %2362 = vdwg.mxu0
      %v2363 = vadd.f32 %v2127, %v2284
      %v2364 = vadd.f32 %v2128, %v2286
      %v2365 = vadd.f32 %v2129, %v2289
      %v2366 = vadd.f32 %v2130, %v2291
      %v2367 = vadd.f32 %v2131, %v2294
      %v2368 = vadd.f32 %v2132, %v2296
      %v2369 = vadd.f32 %v2133, %v2299
      %v2370 = vadd.f32 %v2134, %v2301
      %v2371 = vadd.f32 %v2135, %v2304
      %v2372 = vadd.f32 %v2136, %v2306
      %v2373 = vadd.f32 %v2137, %v2309
      %v2374 = vadd.f32 %v2138, %v2311
      %v2375 = vadd.f32 %v2139, %v2314
      %v2376 = vadd.f32 %v2140, %v2316
      %v2377 = vadd.f32 %v2141, %v2319
      %v2378 = vadd.f32 %v2142, %v2321
      %v2379 = vadd.f32 %v2143, %v2324
      %v2380 = vadd.f32 %v2144, %v2326
      %v2381 = vadd.f32 %v2145, %v2329
      %v2382 = vadd.f32 %v2146, %v2331
      %v2383 = vadd.f32 %v2147, %v2334
      %v2384 = vadd.f32 %v2148, %v2336
      %v2385 = vadd.f32 %v2149, %v2339
      %v2386 = vadd.f32 %v2150, %v2341
      %v2387 = vadd.f32 %v2151, %v2344
      %v2388 = vadd.f32 %v2152, %v2346
      %v2389 = vadd.f32 %v2153, %v2349
      %v2390 = vadd.f32 %v2154, %v2351
      %v2391 = vadd.f32 %v2155, %v2354
      %v2392 = vadd.f32 %v2156, %v2356
      %v2393 = vadd.f32 %v2157, %v2359
      %v2394 = vadd.f32 %v2158, %v2361
      %s2395 = scalar_lea.vmem %s2, 80
      %v2396 = vld [vmem:[%s2395] sm:$0xf]
      %v2397 = vld [vmem:[%s2395 + $0x4] sm:$0xf]
      %v2398 = vld [vmem:[%s2395 + $0x8] sm:$0xf]
      %v2399 = vld [vmem:[%s2395 + $0xc] sm:$0xf]
      %vm2400 = vsmask.f32 5376
      %v2401 = vrot.slane %v1830, 2
      %v2402 = vrot.slane %v1833, 3
      %v2403 = vor.u32 %v2401, %v2402
      %v2404 = vrot.slane %v1838, 2
      %v2405 = vrot.slane %v1841, 3
      %v2406 = vor.u32 %v2404, %v2405
      %v2407 = vsel %vm2400, %v2403, %v2406
      %v2408 = vrot.slane %v1847, 2
      %v2409 = vrot.slane %v1850, 3
      %v2410 = vor.u32 %v2408, %v2409
      %v2411 = vsel %vm2400, %v2406, %v2410
      %v2412 = vrot.slane %v1856, 2
      %v2413 = vrot.slane %v1859, 3
      %v2414 = vor.u32 %v2412, %v2413
      %v2415 = vsel %vm2400, %v2410, %v2414
      %v2416 = vrot.slane %v1865, 2
      %v2417 = vrot.slane %v1868, 3
      %v2418 = vor.u32 %v2416, %v2417
      %v2419 = vsel %vm2400, %v2414, %v2418
      %v2420 = vrot.slane %v1874, 2
      %v2421 = vrot.slane %v1877, 3
      %v2422 = vor.u32 %v2420, %v2421
      %v2423 = vsel %vm2400, %v2418, %v2422
      %v2424 = vrot.slane %v1883, 2
      %v2425 = vrot.slane %v1886, 3
      %v2426 = vor.u32 %v2424, %v2425
      %v2427 = vsel %vm2400, %v2422, %v2426
      %v2428 = vrot.slane %v1892, 2
      %v2429 = vrot.slane %v1895, 3
      %v2430 = vor.u32 %v2428, %v2429
      %v2431 = vsel %vm2400, %v2426, %v2430
      %v2432 = vrot.slane %v1901, 2
      %v2433 = vrot.slane %v1904, 3
      %v2434 = vor.u32 %v2432, %v2433
      %v2435 = vsel %vm2400, %v2430, %v2434
      %v2436 = vrot.slane %v1910, 2
      %v2437 = vrot.slane %v1913, 3
      %v2438 = vor.u32 %v2436, %v2437
      %v2439 = vsel %vm2400, %v2434, %v2438
      %v2440 = vrot.slane %v1919, 2
      %v2441 = vrot.slane %v1922, 3
      %v2442 = vor.u32 %v2440, %v2441
      %v2443 = vsel %vm2400, %v2438, %v2442
      %v2444 = vrot.slane %v1928, 2
      %v2445 = vrot.slane %v1931, 3
      %v2446 = vor.u32 %v2444, %v2445
      %v2447 = vsel %vm2400, %v2442, %v2446
      %v2448 = vrot.slane %v1937, 2
      %v2449 = vrot.slane %v1940, 3
      %v2450 = vor.u32 %v2448, %v2449
      %v2451 = vsel %vm2400, %v2446, %v2450
      %v2452 = vrot.slane %v1946, 2
      %v2453 = vrot.slane %v1949, 3
      %v2454 = vor.u32 %v2452, %v2453
      %v2455 = vsel %vm2400, %v2450, %v2454
      %v2456 = vrot.slane %v1955, 2
      %v2457 = vrot.slane %v1958, 3
      %v2458 = vor.u32 %v2456, %v2457
      %v2459 = vsel %vm2400, %v2454, %v2458
      %v2460 = vrot.slane %v1964, 2
      %v2461 = vrot.slane %v1967, 3
      %v2462 = vor.u32 %v2460, %v2461
      %v2463 = vsel %vm2400, %v2458, %v2462
      %v2464 = vrot.slane %v1972, 2
      %v2465 = vrot.slane %v1284, 3
      %v2466 = vor.u32 %v2464, %v2465
      %v2467 = vsel %vm2400, %v2462, %v2466
      %v2472 = vunpack.c.l.b16 %v2396
      %v2473 = vunpack.c.l.b16 %v2397
      %v2474 = vunpack.c.l.b16 %v2398
      %v2475 = vunpack.c.l.b16 %v2399
      %v2476 = vpack.c.b16 %v2473, %v2472
      %v2477 = vpack.c.b16 %v2475, %v2474
      %v2481 = vsel %vm733, %v2407, 0
      %v2484 = vsel %vm733, %v2411, 0
      %v2487 = vsel %vm733, %v2415, 0
      %v2490 = vsel %vm733, %v2419, 0
      %v2493 = vsel %vm733, %v2423, 0
      %v2496 = vsel %vm733, %v2427, 0
      %v2499 = vsel %vm733, %v2431, 0
      %v2502 = vsel %vm733, %v2435, 0
      %v2505 = vsel %vm733, %v2439, 0
      %v2508 = vsel %vm733, %v2443, 0
      %v2511 = vsel %vm733, %v2447, 0
      %v2514 = vsel %vm733, %v2451, 0
      %v2517 = vsel %vm733, %v2455, 0
      %v2520 = vsel %vm733, %v2459, 0
      %v2523 = vsel %vm733, %v2463, 0
      %v2526 = vsel %vm733, %v2467, 0
      %2528 = vmatpush.bf16.msra.mxu0 0
      %2529 = vmatpush.bf16.msra.mxu0 0
      %2530 = vmatpush.bf16.msra.mxu0 0
      %2531 = vmatpush.bf16.msra.mxu0 0
      %2532 = vmatpush.bf16.msra.mxu0 0
      %2533 = vmatpush.bf16.msra.mxu0 0
      %2534 = vmatpush.bf16.msra.mxu0 %v2477
      %2535 = vmatpush.bf16.msra.mxu0 %v2476
      %2536 = vmatmul.bf16.gmra.mxu0 %v2481
      %v2537 = vpop.f32.mrf.mxu0
      %v2538 = vadd.f32 0.0, %v2537
      %v2539 = vpop.f32.mrf.mxu0
      %v2540 = vadd.f32 0.0, %v2539
      %2541 = vmatmul.bf16.gmra.mxu0 %v2484
      %v2542 = vpop.f32.mrf.mxu0
      %v2543 = vadd.f32 0.0, %v2542
      %v2544 = vpop.f32.mrf.mxu0
      %v2545 = vadd.f32 0.0, %v2544
      %2546 = vmatmul.bf16.gmra.mxu0 %v2487
      %v2547 = vpop.f32.mrf.mxu0
      %v2548 = vadd.f32 0.0, %v2547
      %v2549 = vpop.f32.mrf.mxu0
      %v2550 = vadd.f32 0.0, %v2549
      %2551 = vmatmul.bf16.gmra.mxu0 %v2490
      %v2552 = vpop.f32.mrf.mxu0
      %v2553 = vadd.f32 0.0, %v2552
      %v2554 = vpop.f32.mrf.mxu0
      %v2555 = vadd.f32 0.0, %v2554
      %2556 = vmatmul.bf16.gmra.mxu0 %v2493
      %v2557 = vpop.f32.mrf.mxu0
      %v2558 = vadd.f32 0.0, %v2557
      %v2559 = vpop.f32.mrf.mxu0
      %v2560 = vadd.f32 0.0, %v2559
      %2561 = vmatmul.bf16.gmra.mxu0 %v2496
      %v2562 = vpop.f32.mrf.mxu0
      %v2563 = vadd.f32 0.0, %v2562
      %v2564 = vpop.f32.mrf.mxu0
      %v2565 = vadd.f32 0.0, %v2564
      %2566 = vmatmul.bf16.gmra.mxu0 %v2499
      %v2567 = vpop.f32.mrf.mxu0
      %v2568 = vadd.f32 0.0, %v2567
      %v2569 = vpop.f32.mrf.mxu0
      %v2570 = vadd.f32 0.0, %v2569
      %2571 = vmatmul.bf16.gmra.mxu0 %v2502
      %v2572 = vpop.f32.mrf.mxu0
      %v2573 = vadd.f32 0.0, %v2572
      %v2574 = vpop.f32.mrf.mxu0
      %v2575 = vadd.f32 0.0, %v2574
      %2576 = vmatmul.bf16.gmra.mxu0 %v2505
      %v2577 = vpop.f32.mrf.mxu0
      %v2578 = vadd.f32 0.0, %v2577
      %v2579 = vpop.f32.mrf.mxu0
      %v2580 = vadd.f32 0.0, %v2579
      %2581 = vmatmul.bf16.gmra.mxu0 %v2508
      %v2582 = vpop.f32.mrf.mxu0
      %v2583 = vadd.f32 0.0, %v2582
      %v2584 = vpop.f32.mrf.mxu0
      %v2585 = vadd.f32 0.0, %v2584
      %2586 = vmatmul.bf16.gmra.mxu0 %v2511
      %v2587 = vpop.f32.mrf.mxu0
      %v2588 = vadd.f32 0.0, %v2587
      %v2589 = vpop.f32.mrf.mxu0
      %v2590 = vadd.f32 0.0, %v2589
      %2591 = vmatmul.bf16.gmra.mxu0 %v2514
      %v2592 = vpop.f32.mrf.mxu0
      %v2593 = vadd.f32 0.0, %v2592
      %v2594 = vpop.f32.mrf.mxu0
      %v2595 = vadd.f32 0.0, %v2594
      %2596 = vmatmul.bf16.gmra.mxu0 %v2517
      %v2597 = vpop.f32.mrf.mxu0
      %v2598 = vadd.f32 0.0, %v2597
      %v2599 = vpop.f32.mrf.mxu0
      %v2600 = vadd.f32 0.0, %v2599
      %2601 = vmatmul.bf16.gmra.mxu0 %v2520
      %v2602 = vpop.f32.mrf.mxu0
      %v2603 = vadd.f32 0.0, %v2602
      %v2604 = vpop.f32.mrf.mxu0
      %v2605 = vadd.f32 0.0, %v2604
      %2606 = vmatmul.bf16.gmra.mxu0 %v2523
      %v2607 = vpop.f32.mrf.mxu0
      %v2608 = vadd.f32 0.0, %v2607
      %v2609 = vpop.f32.mrf.mxu0
      %v2610 = vadd.f32 0.0, %v2609
      %2611 = vmatmul.bf16.gmra.mxu0 %v2526
      %v2612 = vpop.f32.mrf.mxu0
      %v2613 = vadd.f32 0.0, %v2612
      %v2614 = vpop.f32.mrf.mxu0
      %v2615 = vadd.f32 0.0, %v2614
      %2616 = vdwg.mxu0
      %v2617 = vadd.f32 %v2363, %v2538
      %v2618 = vadd.f32 %v2364, %v2540
      %v2619 = vadd.f32 %v2365, %v2543
      %v2620 = vadd.f32 %v2366, %v2545
      %v2621 = vadd.f32 %v2367, %v2548
      %v2622 = vadd.f32 %v2368, %v2550
      %v2623 = vadd.f32 %v2369, %v2553
      %v2624 = vadd.f32 %v2370, %v2555
      %v2625 = vadd.f32 %v2371, %v2558
      %v2626 = vadd.f32 %v2372, %v2560
      %v2627 = vadd.f32 %v2373, %v2563
      %v2628 = vadd.f32 %v2374, %v2565
      %v2629 = vadd.f32 %v2375, %v2568
      %v2630 = vadd.f32 %v2376, %v2570
      %v2631 = vadd.f32 %v2377, %v2573
      %v2632 = vadd.f32 %v2378, %v2575
      %v2633 = vadd.f32 %v2379, %v2578
      %v2634 = vadd.f32 %v2380, %v2580
      %v2635 = vadd.f32 %v2381, %v2583
      %v2636 = vadd.f32 %v2382, %v2585
      %v2637 = vadd.f32 %v2383, %v2588
      %v2638 = vadd.f32 %v2384, %v2590
      %v2639 = vadd.f32 %v2385, %v2593
      %v2640 = vadd.f32 %v2386, %v2595
      %v2641 = vadd.f32 %v2387, %v2598
      %v2642 = vadd.f32 %v2388, %v2600
      %v2643 = vadd.f32 %v2389, %v2603
      %v2644 = vadd.f32 %v2390, %v2605
      %v2645 = vadd.f32 %v2391, %v2608
      %v2646 = vadd.f32 %v2392, %v2610
      %v2647 = vadd.f32 %v2393, %v2613
      %v2648 = vadd.f32 %v2394, %v2615
      %s2649 = scalar_lea.vmem %s2, 96
      %v2650 = vld [vmem:[%s2649] sm:$0xf]
      %v2651 = vld [vmem:[%s2649 + $0x4] sm:$0xf]
      %v2652 = vld [vmem:[%s2649 + $0x8] sm:$0xf]
      %v2653 = vld [vmem:[%s2649 + $0xc] sm:$0xf]
      %vm2654 = vcmask 1044480
      %v2655 = vrot.slane %v1130, 3
      %v2656 = vrot.slane %v1131, 3
      %v2657 = vsel %vm2654, %v2655, %v2656
      %v2658 = vrot.slane %v1132, 3
      %v2659 = vsel %vm2654, %v2656, %v2658
      %v2660 = vrot.slane %v1133, 3
      %v2661 = vsel %vm2654, %v2658, %v2660
      %v2662 = vrot.slane %v1134, 3
      %v2663 = vsel %vm2654, %v2660, %v2662
      %v2664 = vrot.slane %v1135, 3
      %v2665 = vsel %vm2654, %v2662, %v2664
      %v2666 = vrot.slane %v1136, 3
      %v2667 = vsel %vm2654, %v2664, %v2666
      %v2668 = vrot.slane %v1137, 3
      %v2669 = vsel %vm2654, %v2666, %v2668
      %v2670 = vrot.slane %v1138, 3
      %v2671 = vsel %vm2654, %v2668, %v2670
      %v2672 = vrot.slane %v1139, 3
      %v2673 = vsel %vm2654, %v2670, %v2672
      %v2674 = vrot.slane %v1140, 3
      %v2675 = vsel %vm2654, %v2672, %v2674
      %v2676 = vrot.slane %v1141, 3
      %v2677 = vsel %vm2654, %v2674, %v2676
      %v2678 = vrot.slane %v1142, 3
      %v2679 = vsel %vm2654, %v2676, %v2678
      %v2680 = vrot.slane %v1143, 3
      %v2681 = vsel %vm2654, %v2678, %v2680
      %v2682 = vrot.slane %v1144, 3
      %v2683 = vsel %vm2654, %v2680, %v2682
      %v2684 = vrot.slane %v1149, 3
      %v2685 = vsel %vm2654, %v2682, %v2684
      %v2686 = vsel %vm2654, %v2684, %v2684
      %v2691 = vunpack.c.l.b16 %v2650
      %v2692 = vunpack.c.l.b16 %v2651
      %v2693 = vunpack.c.l.b16 %v2652
      %v2694 = vunpack.c.l.b16 %v2653
      %v2695 = vpack.c.b16 %v2692, %v2691
      %v2696 = vpack.c.b16 %v2694, %v2693
      %v2700 = vsel %vm733, %v2657, 0
      %v2703 = vsel %vm733, %v2659, 0
      %v2706 = vsel %vm733, %v2661, 0
      %v2709 = vsel %vm733, %v2663, 0
      %v2712 = vsel %vm733, %v2665, 0
      %v2715 = vsel %vm733, %v2667, 0
      %v2718 = vsel %vm733, %v2669, 0
      %v2721 = vsel %vm733, %v2671, 0
      %v2724 = vsel %vm733, %v2673, 0
      %v2727 = vsel %vm733, %v2675, 0
      %v2730 = vsel %vm733, %v2677, 0
      %v2733 = vsel %vm733, %v2679, 0
      %v2736 = vsel %vm733, %v2681, 0
      %v2739 = vsel %vm733, %v2683, 0
      %v2742 = vsel %vm733, %v2685, 0
      %v2745 = vsel %vm733, %v2686, 0
      %2747 = vmatpush.bf16.msra.mxu0 0
      %2748 = vmatpush.bf16.msra.mxu0 0
      %2749 = vmatpush.bf16.msra.mxu0 0
      %2750 = vmatpush.bf16.msra.mxu0 0
      %2751 = vmatpush.bf16.msra.mxu0 0
      %2752 = vmatpush.bf16.msra.mxu0 0
      %2753 = vmatpush.bf16.msra.mxu0 %v2696
      %2754 = vmatpush.bf16.msra.mxu0 %v2695
      %2755 = vmatmul.bf16.gmra.mxu0 %v2700
      %v2756 = vpop.f32.mrf.mxu0
      %v2757 = vadd.f32 0.0, %v2756
      %v2758 = vpop.f32.mrf.mxu0
      %v2759 = vadd.f32 0.0, %v2758
      %2760 = vmatmul.bf16.gmra.mxu0 %v2703
      %v2761 = vpop.f32.mrf.mxu0
      %v2762 = vadd.f32 0.0, %v2761
      %v2763 = vpop.f32.mrf.mxu0
      %v2764 = vadd.f32 0.0, %v2763
      %2765 = vmatmul.bf16.gmra.mxu0 %v2706
      %v2766 = vpop.f32.mrf.mxu0
      %v2767 = vadd.f32 0.0, %v2766
      %v2768 = vpop.f32.mrf.mxu0
      %v2769 = vadd.f32 0.0, %v2768
      %2770 = vmatmul.bf16.gmra.mxu0 %v2709
      %v2771 = vpop.f32.mrf.mxu0
      %v2772 = vadd.f32 0.0, %v2771
      %v2773 = vpop.f32.mrf.mxu0
      %v2774 = vadd.f32 0.0, %v2773
      %2775 = vmatmul.bf16.gmra.mxu0 %v2712
      %v2776 = vpop.f32.mrf.mxu0
      %v2777 = vadd.f32 0.0, %v2776
      %v2778 = vpop.f32.mrf.mxu0
      %v2779 = vadd.f32 0.0, %v2778
      %2780 = vmatmul.bf16.gmra.mxu0 %v2715
      %v2781 = vpop.f32.mrf.mxu0
      %v2782 = vadd.f32 0.0, %v2781
      %v2783 = vpop.f32.mrf.mxu0
      %v2784 = vadd.f32 0.0, %v2783
      %2785 = vmatmul.bf16.gmra.mxu0 %v2718
      %v2786 = vpop.f32.mrf.mxu0
      %v2787 = vadd.f32 0.0, %v2786
      %v2788 = vpop.f32.mrf.mxu0
      %v2789 = vadd.f32 0.0, %v2788
      %2790 = vmatmul.bf16.gmra.mxu0 %v2721
      %v2791 = vpop.f32.mrf.mxu0
      %v2792 = vadd.f32 0.0, %v2791
      %v2793 = vpop.f32.mrf.mxu0
      %v2794 = vadd.f32 0.0, %v2793
      %2795 = vmatmul.bf16.gmra.mxu0 %v2724
      %v2796 = vpop.f32.mrf.mxu0
      %v2797 = vadd.f32 0.0, %v2796
      %v2798 = vpop.f32.mrf.mxu0
      %v2799 = vadd.f32 0.0, %v2798
      %2800 = vmatmul.bf16.gmra.mxu0 %v2727
      %v2801 = vpop.f32.mrf.mxu0
      %v2802 = vadd.f32 0.0, %v2801
      %v2803 = vpop.f32.mrf.mxu0
      %v2804 = vadd.f32 0.0, %v2803
      %2805 = vmatmul.bf16.gmra.mxu0 %v2730
      %v2806 = vpop.f32.mrf.mxu0
      %v2807 = vadd.f32 0.0, %v2806
      %v2808 = vpop.f32.mrf.mxu0
      %v2809 = vadd.f32 0.0, %v2808
      %2810 = vmatmul.bf16.gmra.mxu0 %v2733
      %v2811 = vpop.f32.mrf.mxu0
      %v2812 = vadd.f32 0.0, %v2811
      %v2813 = vpop.f32.mrf.mxu0
      %v2814 = vadd.f32 0.0, %v2813
      %2815 = vmatmul.bf16.gmra.mxu0 %v2736
      %v2816 = vpop.f32.mrf.mxu0
      %v2817 = vadd.f32 0.0, %v2816
      %v2818 = vpop.f32.mrf.mxu0
      %v2819 = vadd.f32 0.0, %v2818
      %2820 = vmatmul.bf16.gmra.mxu0 %v2739
      %v2821 = vpop.f32.mrf.mxu0
      %v2822 = vadd.f32 0.0, %v2821
      %v2823 = vpop.f32.mrf.mxu0
      %v2824 = vadd.f32 0.0, %v2823
      %2825 = vmatmul.bf16.gmra.mxu0 %v2742
      %v2826 = vpop.f32.mrf.mxu0
      %v2827 = vadd.f32 0.0, %v2826
      %v2828 = vpop.f32.mrf.mxu0
      %v2829 = vadd.f32 0.0, %v2828
      %2830 = vmatmul.bf16.gmra.mxu0 %v2745
      %v2831 = vpop.f32.mrf.mxu0
      %v2832 = vadd.f32 0.0, %v2831
      %v2833 = vpop.f32.mrf.mxu0
      %v2834 = vadd.f32 0.0, %v2833
      %2835 = vdwg.mxu0
      %v2836 = vadd.f32 %v2617, %v2757
      %v2837 = vadd.f32 %v2618, %v2759
      %v2838 = vadd.f32 %v2619, %v2762
      %v2839 = vadd.f32 %v2620, %v2764
      %v2840 = vadd.f32 %v2621, %v2767
      %v2841 = vadd.f32 %v2622, %v2769
      %v2842 = vadd.f32 %v2623, %v2772
      %v2843 = vadd.f32 %v2624, %v2774
      %v2844 = vadd.f32 %v2625, %v2777
      %v2845 = vadd.f32 %v2626, %v2779
      %v2846 = vadd.f32 %v2627, %v2782
      %v2847 = vadd.f32 %v2628, %v2784
      %v2848 = vadd.f32 %v2629, %v2787
      %v2849 = vadd.f32 %v2630, %v2789
      %v2850 = vadd.f32 %v2631, %v2792
      %v2851 = vadd.f32 %v2632, %v2794
      %v2852 = vadd.f32 %v2633, %v2797
      %v2853 = vadd.f32 %v2634, %v2799
      %v2854 = vadd.f32 %v2635, %v2802
      %v2855 = vadd.f32 %v2636, %v2804
      %v2856 = vadd.f32 %v2637, %v2807
      %v2857 = vadd.f32 %v2638, %v2809
      %v2858 = vadd.f32 %v2639, %v2812
      %v2859 = vadd.f32 %v2640, %v2814
      %v2860 = vadd.f32 %v2641, %v2817
      %v2861 = vadd.f32 %v2642, %v2819
      %v2862 = vadd.f32 %v2643, %v2822
      %v2863 = vadd.f32 %v2644, %v2824
      %v2864 = vadd.f32 %v2645, %v2827
      %v2865 = vadd.f32 %v2646, %v2829
      %v2866 = vadd.f32 %v2647, %v2832
      %v2867 = vadd.f32 %v2648, %v2834
      %s2868 = scalar_lea.vmem %s2, 112
      %v2869 = vld [vmem:[%s2868] sm:$0xf]
      %v2870 = vld [vmem:[%s2868 + $0x4] sm:$0xf]
      %v2871 = vld [vmem:[%s2868 + $0x8] sm:$0xf]
      %v2872 = vld [vmem:[%s2868 + $0xc] sm:$0xf]
      %vm2873 = vsmask.f32 4352
      %v2874 = vrot.slane %v1168, 3
      %v2875 = vrot.slane %v1164, 4
      %v2876 = vor.u32 %v2874, %v2875
      %v2877 = vrot.slane %v1176, 3
      %v2878 = vrot.slane %v1172, 4
      %v2879 = vor.u32 %v2877, %v2878
      %v2880 = vsel %vm2873, %v2876, %v2879
      %v2881 = vrot.slane %v1184, 3
      %v2882 = vrot.slane %v1180, 4
      %v2883 = vor.u32 %v2881, %v2882
      %v2884 = vsel %vm2873, %v2879, %v2883
      %v2885 = vrot.slane %v1192, 3
      %v2886 = vrot.slane %v1188, 4
      %v2887 = vor.u32 %v2885, %v2886
      %v2888 = vsel %vm2873, %v2883, %v2887
      %v2889 = vrot.slane %v1200, 3
      %v2890 = vrot.slane %v1196, 4
      %v2891 = vor.u32 %v2889, %v2890
      %v2892 = vsel %vm2873, %v2887, %v2891
      %v2893 = vrot.slane %v1208, 3
      %v2894 = vrot.slane %v1204, 4
      %v2895 = vor.u32 %v2893, %v2894
      %v2896 = vsel %vm2873, %v2891, %v2895
      %v2897 = vrot.slane %v1216, 3
      %v2898 = vrot.slane %v1212, 4
      %v2899 = vor.u32 %v2897, %v2898
      %v2900 = vsel %vm2873, %v2895, %v2899
      %v2901 = vrot.slane %v1224, 3
      %v2902 = vrot.slane %v1220, 4
      %v2903 = vor.u32 %v2901, %v2902
      %v2904 = vsel %vm2873, %v2899, %v2903
      %v2905 = vrot.slane %v1232, 3
      %v2906 = vrot.slane %v1228, 4
      %v2907 = vor.u32 %v2905, %v2906
      %v2908 = vsel %vm2873, %v2903, %v2907
      %v2909 = vrot.slane %v1240, 3
      %v2910 = vrot.slane %v1236, 4
      %v2911 = vor.u32 %v2909, %v2910
      %v2912 = vsel %vm2873, %v2907, %v2911
      %v2913 = vrot.slane %v1248, 3
      %v2914 = vrot.slane %v1244, 4
      %v2915 = vor.u32 %v2913, %v2914
      %v2916 = vsel %vm2873, %v2911, %v2915
      %v2917 = vrot.slane %v1256, 3
      %v2918 = vrot.slane %v1252, 4
      %v2919 = vor.u32 %v2917, %v2918
      %v2920 = vsel %vm2873, %v2915, %v2919
      %v2921 = vrot.slane %v1264, 3
      %v2922 = vrot.slane %v1260, 4
      %v2923 = vor.u32 %v2921, %v2922
      %v2924 = vsel %vm2873, %v2919, %v2923
      %v2925 = vrot.slane %v1272, 3
      %v2926 = vrot.slane %v1268, 4
      %v2927 = vor.u32 %v2925, %v2926
      %v2928 = vsel %vm2873, %v2923, %v2927
      %v2929 = vrot.slane %v1280, 3
      %v2930 = vrot.slane %v1276, 4
      %v2931 = vor.u32 %v2929, %v2930
      %v2932 = vsel %vm2873, %v2927, %v2931
      %v2933 = vrot.slane %v1972, 3
      %v2934 = vrot.slane %v1284, 4
      %v2935 = vor.u32 %v2933, %v2934
      %v2936 = vsel %vm2873, %v2931, %v2935
      %v2937 = vsel %vm2873, %v2935, %v2935
      %v2942 = vunpack.c.l.b16 %v2869
      %v2943 = vunpack.c.l.b16 %v2870
      %v2944 = vunpack.c.l.b16 %v2871
      %v2945 = vunpack.c.l.b16 %v2872
      %v2946 = vpack.c.b16 %v2943, %v2942
      %v2947 = vpack.c.b16 %v2945, %v2944
      %v2951 = vsel %vm733, %v2880, 0
      %v2954 = vsel %vm733, %v2884, 0
      %v2957 = vsel %vm733, %v2888, 0
      %v2960 = vsel %vm733, %v2892, 0
      %v2963 = vsel %vm733, %v2896, 0
      %v2966 = vsel %vm733, %v2900, 0
      %v2969 = vsel %vm733, %v2904, 0
      %v2972 = vsel %vm733, %v2908, 0
      %v2975 = vsel %vm733, %v2912, 0
      %v2978 = vsel %vm733, %v2916, 0
      %v2981 = vsel %vm733, %v2920, 0
      %v2984 = vsel %vm733, %v2924, 0
      %v2987 = vsel %vm733, %v2928, 0
      %v2990 = vsel %vm733, %v2932, 0
      %v2993 = vsel %vm733, %v2936, 0
      %v2996 = vsel %vm733, %v2937, 0
      %2998 = vmatpush.bf16.msra.mxu0 0
      %2999 = vmatpush.bf16.msra.mxu0 0
      %3000 = vmatpush.bf16.msra.mxu0 0
      %3001 = vmatpush.bf16.msra.mxu0 0
      %3002 = vmatpush.bf16.msra.mxu0 0
      %3003 = vmatpush.bf16.msra.mxu0 0
      %3004 = vmatpush.bf16.msra.mxu0 %v2947
      %3005 = vmatpush.bf16.msra.mxu0 %v2946
      %3006 = vmatmul.bf16.gmra.mxu0 %v2951
      %v3007 = vpop.f32.mrf.mxu0
      %v3008 = vadd.f32 0.0, %v3007
      %v3009 = vpop.f32.mrf.mxu0
      %v3010 = vadd.f32 0.0, %v3009
      %3011 = vmatmul.bf16.gmra.mxu0 %v2954
      %v3012 = vpop.f32.mrf.mxu0
      %v3013 = vadd.f32 0.0, %v3012
      %v3014 = vpop.f32.mrf.mxu0
      %v3015 = vadd.f32 0.0, %v3014
      %3016 = vmatmul.bf16.gmra.mxu0 %v2957
      %v3017 = vpop.f32.mrf.mxu0
      %v3018 = vadd.f32 0.0, %v3017
      %v3019 = vpop.f32.mrf.mxu0
      %v3020 = vadd.f32 0.0, %v3019
      %3021 = vmatmul.bf16.gmra.mxu0 %v2960
      %v3022 = vpop.f32.mrf.mxu0
      %v3023 = vadd.f32 0.0, %v3022
      %v3024 = vpop.f32.mrf.mxu0
      %v3025 = vadd.f32 0.0, %v3024
      %3026 = vmatmul.bf16.gmra.mxu0 %v2963
      %v3027 = vpop.f32.mrf.mxu0
      %v3028 = vadd.f32 0.0, %v3027
      %v3029 = vpop.f32.mrf.mxu0
      %v3030 = vadd.f32 0.0, %v3029
      %3031 = vmatmul.bf16.gmra.mxu0 %v2966
      %v3032 = vpop.f32.mrf.mxu0
      %v3033 = vadd.f32 0.0, %v3032
      %v3034 = vpop.f32.mrf.mxu0
      %v3035 = vadd.f32 0.0, %v3034
      %3036 = vmatmul.bf16.gmra.mxu0 %v2969
      %v3037 = vpop.f32.mrf.mxu0
      %v3038 = vadd.f32 0.0, %v3037
      %v3039 = vpop.f32.mrf.mxu0
      %v3040 = vadd.f32 0.0, %v3039
      %3041 = vmatmul.bf16.gmra.mxu0 %v2972
      %v3042 = vpop.f32.mrf.mxu0
      %v3043 = vadd.f32 0.0, %v3042
      %v3044 = vpop.f32.mrf.mxu0
      %v3045 = vadd.f32 0.0, %v3044
      %3046 = vmatmul.bf16.gmra.mxu0 %v2975
      %v3047 = vpop.f32.mrf.mxu0
      %v3048 = vadd.f32 0.0, %v3047
      %v3049 = vpop.f32.mrf.mxu0
      %v3050 = vadd.f32 0.0, %v3049
      %3051 = vmatmul.bf16.gmra.mxu0 %v2978
      %v3052 = vpop.f32.mrf.mxu0
      %v3053 = vadd.f32 0.0, %v3052
      %v3054 = vpop.f32.mrf.mxu0
      %v3055 = vadd.f32 0.0, %v3054
      %3056 = vmatmul.bf16.gmra.mxu0 %v2981
      %v3057 = vpop.f32.mrf.mxu0
      %v3058 = vadd.f32 0.0, %v3057
      %v3059 = vpop.f32.mrf.mxu0
      %v3060 = vadd.f32 0.0, %v3059
      %3061 = vmatmul.bf16.gmra.mxu0 %v2984
      %v3062 = vpop.f32.mrf.mxu0
      %v3063 = vadd.f32 0.0, %v3062
      %v3064 = vpop.f32.mrf.mxu0
      %v3065 = vadd.f32 0.0, %v3064
      %3066 = vmatmul.bf16.gmra.mxu0 %v2987
      %v3067 = vpop.f32.mrf.mxu0
      %v3068 = vadd.f32 0.0, %v3067
      %v3069 = vpop.f32.mrf.mxu0
      %v3070 = vadd.f32 0.0, %v3069
      %3071 = vmatmul.bf16.gmra.mxu0 %v2990
      %v3072 = vpop.f32.mrf.mxu0
      %v3073 = vadd.f32 0.0, %v3072
      %v3074 = vpop.f32.mrf.mxu0
      %v3075 = vadd.f32 0.0, %v3074
      %3076 = vmatmul.bf16.gmra.mxu0 %v2993
      %v3077 = vpop.f32.mrf.mxu0
      %v3078 = vadd.f32 0.0, %v3077
      %v3079 = vpop.f32.mrf.mxu0
      %v3080 = vadd.f32 0.0, %v3079
      %3081 = vmatmul.bf16.gmra.mxu0 %v2996
      %v3082 = vpop.f32.mrf.mxu0
      %v3083 = vadd.f32 0.0, %v3082
      %v3084 = vpop.f32.mrf.mxu0
      %v3085 = vadd.f32 0.0, %v3084
      %3086 = vdwg.mxu0
      %v3087 = vadd.f32 %v2836, %v3008
      %v3088 = vadd.f32 %v2837, %v3010
      %v3089 = vadd.f32 %v2838, %v3013
      %v3090 = vadd.f32 %v2839, %v3015
      %v3091 = vadd.f32 %v2840, %v3018
      %v3092 = vadd.f32 %v2841, %v3020
      %v3093 = vadd.f32 %v2842, %v3023
      %v3094 = vadd.f32 %v2843, %v3025
      %v3095 = vadd.f32 %v2844, %v3028
      %v3096 = vadd.f32 %v2845, %v3030
      %v3097 = vadd.f32 %v2846, %v3033
      %v3098 = vadd.f32 %v2847, %v3035
      %v3099 = vadd.f32 %v2848, %v3038
      %v3100 = vadd.f32 %v2849, %v3040
      %v3101 = vadd.f32 %v2850, %v3043
      %v3102 = vadd.f32 %v2851, %v3045
      %v3103 = vadd.f32 %v2852, %v3048
      %v3104 = vadd.f32 %v2853, %v3050
      %v3105 = vadd.f32 %v2854, %v3053
      %v3106 = vadd.f32 %v2855, %v3055
      %v3107 = vadd.f32 %v2856, %v3058
      %v3108 = vadd.f32 %v2857, %v3060
      %v3109 = vadd.f32 %v2858, %v3063
      %v3110 = vadd.f32 %v2859, %v3065
      %v3111 = vadd.f32 %v2860, %v3068
      %v3112 = vadd.f32 %v2861, %v3070
      %v3113 = vadd.f32 %v2862, %v3073
      %v3114 = vadd.f32 %v2863, %v3075
      %v3115 = vadd.f32 %v2864, %v3078
      %v3116 = vadd.f32 %v2865, %v3080
      %v3117 = vadd.f32 %v2866, %v3083
      %v3118 = vadd.f32 %v2867, %v3085
      %s3119 = scalar_lea.vmem %s2, 128
      %v3120 = vld [vmem:[%s3119] sm:$0xf]
      %v3121 = vld [vmem:[%s3119 + $0x4] sm:$0xf]
      %v3122 = vld [vmem:[%s3119 + $0x8] sm:$0xf]
      %v3123 = vld [vmem:[%s3119 + $0xc] sm:$0xf]
      %v3128 = vunpack.c.l.b16 %v3120
      %v3129 = vunpack.c.l.b16 %v3121
      %v3130 = vunpack.c.l.b16 %v3122
      %v3131 = vunpack.c.l.b16 %v3123
      %v3132 = vpack.c.b16 %v3129, %v3128
      %v3133 = vpack.c.b16 %v3131, %v3130
      %v3136 = vsel %vm733, %v1808, 0
      %v3138 = vsel %vm733, %v1809, 0
      %v3140 = vsel %vm733, %v1810, 0
      %v3142 = vsel %vm733, %v1811, 0
      %v3144 = vsel %vm733, %v1812, 0
      %v3146 = vsel %vm733, %v1813, 0
      %v3148 = vsel %vm733, %v1814, 0
      %v3150 = vsel %vm733, %v1815, 0
      %v3152 = vsel %vm733, %v1816, 0
      %v3154 = vsel %vm733, %v1817, 0
      %v3156 = vsel %vm733, %v1818, 0
      %v3158 = vsel %vm733, %v1819, 0
      %v3160 = vsel %vm733, %v1820, 0
      %v3162 = vsel %vm733, %v1821, 0
      %v3164 = vsel %vm733, %v1822, 0
      %v3166 = vsel %vm733, %v1149, 0
      %3168 = vmatpush.bf16.msra.mxu0 0
      %3169 = vmatpush.bf16.msra.mxu0 0
      %3170 = vmatpush.bf16.msra.mxu0 0
      %3171 = vmatpush.bf16.msra.mxu0 0
      %3172 = vmatpush.bf16.msra.mxu0 0
      %3173 = vmatpush.bf16.msra.mxu0 0
      %3174 = vmatpush.bf16.msra.mxu0 %v3133
      %3175 = vmatpush.bf16.msra.mxu0 %v3132
      %3176 = vmatmul.bf16.gmra.mxu0 %v3136
      %v3177 = vpop.f32.mrf.mxu0
      %v3178 = vadd.f32 0.0, %v3177
      %v3179 = vpop.f32.mrf.mxu0
      %v3180 = vadd.f32 0.0, %v3179
      %3181 = vmatmul.bf16.gmra.mxu0 %v3138
      %v3182 = vpop.f32.mrf.mxu0
      %v3183 = vadd.f32 0.0, %v3182
      %v3184 = vpop.f32.mrf.mxu0
      %v3185 = vadd.f32 0.0, %v3184
      %3186 = vmatmul.bf16.gmra.mxu0 %v3140
      %v3187 = vpop.f32.mrf.mxu0
      %v3188 = vadd.f32 0.0, %v3187
      %v3189 = vpop.f32.mrf.mxu0
      %v3190 = vadd.f32 0.0, %v3189
      %3191 = vmatmul.bf16.gmra.mxu0 %v3142
      %v3192 = vpop.f32.mrf.mxu0
      %v3193 = vadd.f32 0.0, %v3192
      %v3194 = vpop.f32.mrf.mxu0
      %v3195 = vadd.f32 0.0, %v3194
      %3196 = vmatmul.bf16.gmra.mxu0 %v3144
      %v3197 = vpop.f32.mrf.mxu0
      %v3198 = vadd.f32 0.0, %v3197
      %v3199 = vpop.f32.mrf.mxu0
      %v3200 = vadd.f32 0.0, %v3199
      %3201 = vmatmul.bf16.gmra.mxu0 %v3146
      %v3202 = vpop.f32.mrf.mxu0
      %v3203 = vadd.f32 0.0, %v3202
      %v3204 = vpop.f32.mrf.mxu0
      %v3205 = vadd.f32 0.0, %v3204
      %3206 = vmatmul.bf16.gmra.mxu0 %v3148
      %v3207 = vpop.f32.mrf.mxu0
      %v3208 = vadd.f32 0.0, %v3207
      %v3209 = vpop.f32.mrf.mxu0
      %v3210 = vadd.f32 0.0, %v3209
      %3211 = vmatmul.bf16.gmra.mxu0 %v3150
      %v3212 = vpop.f32.mrf.mxu0
      %v3213 = vadd.f32 0.0, %v3212
      %v3214 = vpop.f32.mrf.mxu0
      %v3215 = vadd.f32 0.0, %v3214
      %3216 = vmatmul.bf16.gmra.mxu0 %v3152
      %v3217 = vpop.f32.mrf.mxu0
      %v3218 = vadd.f32 0.0, %v3217
      %v3219 = vpop.f32.mrf.mxu0
      %v3220 = vadd.f32 0.0, %v3219
      %3221 = vmatmul.bf16.gmra.mxu0 %v3154
      %v3222 = vpop.f32.mrf.mxu0
      %v3223 = vadd.f32 0.0, %v3222
      %v3224 = vpop.f32.mrf.mxu0
      %v3225 = vadd.f32 0.0, %v3224
      %3226 = vmatmul.bf16.gmra.mxu0 %v3156
      %v3227 = vpop.f32.mrf.mxu0
      %v3228 = vadd.f32 0.0, %v3227
      %v3229 = vpop.f32.mrf.mxu0
      %v3230 = vadd.f32 0.0, %v3229
      %3231 = vmatmul.bf16.gmra.mxu0 %v3158
      %v3232 = vpop.f32.mrf.mxu0
      %v3233 = vadd.f32 0.0, %v3232
      %v3234 = vpop.f32.mrf.mxu0
      %v3235 = vadd.f32 0.0, %v3234
      %3236 = vmatmul.bf16.gmra.mxu0 %v3160
      %v3237 = vpop.f32.mrf.mxu0
      %v3238 = vadd.f32 0.0, %v3237
      %v3239 = vpop.f32.mrf.mxu0
      %v3240 = vadd.f32 0.0, %v3239
      %3241 = vmatmul.bf16.gmra.mxu0 %v3162
      %v3242 = vpop.f32.mrf.mxu0
      %v3243 = vadd.f32 0.0, %v3242
      %v3244 = vpop.f32.mrf.mxu0
      %v3245 = vadd.f32 0.0, %v3244
      %3246 = vmatmul.bf16.gmra.mxu0 %v3164
      %v3247 = vpop.f32.mrf.mxu0
      %v3248 = vadd.f32 0.0, %v3247
      %v3249 = vpop.f32.mrf.mxu0
      %v3250 = vadd.f32 0.0, %v3249
      %3251 = vmatmul.bf16.gmra.mxu0 %v3166
      %v3252 = vpop.f32.mrf.mxu0
      %v3253 = vadd.f32 0.0, %v3252
      %v3254 = vpop.f32.mrf.mxu0
      %v3255 = vadd.f32 0.0, %v3254
      %3256 = vdwg.mxu0
      %v3257 = vadd.f32 %v3087, %v3178
      %v3258 = vadd.f32 %v3088, %v3180
      %v3259 = vadd.f32 %v3089, %v3183
      %v3260 = vadd.f32 %v3090, %v3185
      %v3261 = vadd.f32 %v3091, %v3188
      %v3262 = vadd.f32 %v3092, %v3190
      %v3263 = vadd.f32 %v3093, %v3193
      %v3264 = vadd.f32 %v3094, %v3195
      %v3265 = vadd.f32 %v3095, %v3198
      %v3266 = vadd.f32 %v3096, %v3200
      %v3267 = vadd.f32 %v3097, %v3203
      %v3268 = vadd.f32 %v3098, %v3205
      %v3269 = vadd.f32 %v3099, %v3208
      %v3270 = vadd.f32 %v3100, %v3210
      %v3271 = vadd.f32 %v3101, %v3213
      %v3272 = vadd.f32 %v3102, %v3215
      %v3273 = vadd.f32 %v3103, %v3218
      %v3274 = vadd.f32 %v3104, %v3220
      %v3275 = vadd.f32 %v3105, %v3223
      %v3276 = vadd.f32 %v3106, %v3225
      %v3277 = vadd.f32 %v3107, %v3228
      %v3278 = vadd.f32 %v3108, %v3230
      %v3279 = vadd.f32 %v3109, %v3233
      %v3280 = vadd.f32 %v3110, %v3235
      %v3281 = vadd.f32 %v3111, %v3238
      %v3282 = vadd.f32 %v3112, %v3240
      %v3283 = vadd.f32 %v3113, %v3243
      %v3284 = vadd.f32 %v3114, %v3245
      %v3285 = vadd.f32 %v3115, %v3248
      %v3286 = vadd.f32 %v3116, %v3250
      %v3287 = vadd.f32 %v3117, %v3253
      %v3288 = vadd.f32 %v3118, %v3255
      %v3289 = vld [vmem:[%s3 + $0x1] sm:$0x1]
      %v3290 = vperm.slane %v3289, 0
      %v3291 = vadd.f32 %v3257, %v3290
      %v3292 = vadd.f32 %v3258, %v3290
      %v3293 = vadd.f32 %v3259, %v3290
      %v3294 = vadd.f32 %v3260, %v3290
      %v3295 = vadd.f32 %v3261, %v3290
      %v3296 = vadd.f32 %v3262, %v3290
      %v3297 = vadd.f32 %v3263, %v3290
      %v3298 = vadd.f32 %v3264, %v3290
      %v3299 = vadd.f32 %v3265, %v3290
      %v3300 = vadd.f32 %v3266, %v3290
      %v3301 = vadd.f32 %v3267, %v3290
      %v3302 = vadd.f32 %v3268, %v3290
      %v3303 = vadd.f32 %v3269, %v3290
      %v3304 = vadd.f32 %v3270, %v3290
      %v3305 = vadd.f32 %v3271, %v3290
      %v3306 = vadd.f32 %v3272, %v3290
      %v3307 = vadd.f32 %v3273, %v3290
      %v3308 = vadd.f32 %v3274, %v3290
      %v3309 = vadd.f32 %v3275, %v3290
      %v3310 = vadd.f32 %v3276, %v3290
      %v3311 = vadd.f32 %v3277, %v3290
      %v3312 = vadd.f32 %v3278, %v3290
      %v3313 = vadd.f32 %v3279, %v3290
      %v3314 = vadd.f32 %v3280, %v3290
      %v3315 = vadd.f32 %v3281, %v3290
      %v3316 = vadd.f32 %v3282, %v3290
      %v3317 = vadd.f32 %v3283, %v3290
      %v3318 = vadd.f32 %v3284, %v3290
      %v3319 = vadd.f32 %v3285, %v3290
      %v3320 = vadd.f32 %v3286, %v3290
      %v3321 = vadd.f32 %v3287, %v3290
      %v3322 = vadd.f32 %v3288, %v3290
      %s3323 = scalar_lea.vmem %s4, 4
      %v3324 = vld [vmem:[%s3323] sm:$0x7]
      %vm3325 = vcmp.lt.f32.partialorder %v525, 98.5
      %vm3326 = vcmp.lt.f32.partialorder %v526, 98.5
      %vm3327 = vcmp.lt.f32.partialorder %v527, 98.5
      %vm3328 = vcmp.lt.f32.partialorder %v528, 98.5
      %vm3329 = vcmp.lt.f32.partialorder %v529, 98.5
      %vm3330 = vcmp.lt.f32.partialorder %v530, 98.5
      %vm3331 = vcmp.lt.f32.partialorder %v531, 98.5
      %vm3332 = vcmp.lt.f32.partialorder %v532, 98.5
      %vm3333 = vcmp.lt.f32.partialorder %v533, 98.5
      %vm3334 = vcmp.lt.f32.partialorder %v534, 98.5
      %vm3335 = vcmp.lt.f32.partialorder %v535, 98.5
      %vm3336 = vcmp.lt.f32.partialorder %v536, 98.5
      %vm3337 = vcmp.lt.f32.partialorder %v537, 98.5
      %vm3338 = vcmp.lt.f32.partialorder %v538, 98.5
      %vm3339 = vcmp.lt.f32.partialorder %v539, 98.5
      %vm3340 = vcmp.lt.f32.partialorder %v540, 98.5
      %vm3341 = vcmp.lt.f32.partialorder %v605, 8.5
      %vm3342 = vcmp.lt.f32.partialorder %v606, 8.5
      %vm3343 = vcmp.lt.f32.partialorder %v607, 8.5
      %vm3344 = vcmp.lt.f32.partialorder %v608, 8.5
      %vm3345 = vcmp.lt.f32.partialorder %v609, 8.5
      %vm3346 = vcmp.lt.f32.partialorder %v610, 8.5
      %vm3347 = vcmp.lt.f32.partialorder %v611, 8.5
      %vm3348 = vcmp.lt.f32.partialorder %v612, 8.5
      %vm3349 = vcmp.lt.f32.partialorder %v613, 8.5
      %vm3350 = vcmp.lt.f32.partialorder %v614, 8.5
      %vm3351 = vcmp.lt.f32.partialorder %v615, 8.5
      %vm3352 = vcmp.lt.f32.partialorder %v616, 8.5
      %vm3353 = vcmp.lt.f32.partialorder %v617, 8.5
      %vm3354 = vcmp.lt.f32.partialorder %v618, 8.5
      %vm3355 = vcmp.lt.f32.partialorder %v619, 8.5
      %vm3356 = vcmp.lt.f32.partialorder %v620, 8.5
      %vm3357 = vmand %vm3325, %vm3341
      %vm3358 = vmand %vm3326, %vm3342
      %vm3359 = vmand %vm3327, %vm3343
      %vm3360 = vmand %vm3328, %vm3344
      %vm3361 = vmand %vm3329, %vm3345
      %vm3362 = vmand %vm3330, %vm3346
      %vm3363 = vmand %vm3331, %vm3347
      %vm3364 = vmand %vm3332, %vm3348
      %vm3365 = vmand %vm3333, %vm3349
      %vm3366 = vmand %vm3334, %vm3350
      %vm3367 = vmand %vm3335, %vm3351
      %vm3368 = vmand %vm3336, %vm3352
      %vm3369 = vmand %vm3337, %vm3353
      %vm3370 = vmand %vm3338, %vm3354
      %vm3371 = vmand %vm3339, %vm3355
      %vm3372 = vmand %vm3340, %vm3356
      %v3373 = vsel %vm3357, 1, 0
      %v3374 = vsel %vm3358, 1, 0
      %v3375 = vsel %vm3359, 1, 0
      %v3376 = vsel %vm3360, 1, 0
      %v3377 = vsel %vm3361, 1, 0
      %v3378 = vsel %vm3362, 1, 0
      %v3379 = vsel %vm3363, 1, 0
      %v3380 = vsel %vm3364, 1, 0
      %v3381 = vsel %vm3365, 1, 0
      %v3382 = vsel %vm3366, 1, 0
      %v3383 = vsel %vm3367, 1, 0
      %v3384 = vsel %vm3368, 1, 0
      %v3385 = vsel %vm3369, 1, 0
      %v3386 = vsel %vm3370, 1, 0
      %v3387 = vsel %vm3371, 1, 0
      %v3388 = vsel %vm3372, 1, 0
      %vm3389 = vcmp.eq.s32.totalorder %v3373, 1
      %vm3390 = vcmp.eq.s32.totalorder %v3374, 1
      %vm3391 = vcmp.eq.s32.totalorder %v3375, 1
      %vm3392 = vcmp.eq.s32.totalorder %v3376, 1
      %vm3393 = vcmp.eq.s32.totalorder %v3377, 1
      %vm3394 = vcmp.eq.s32.totalorder %v3378, 1
      %vm3395 = vcmp.eq.s32.totalorder %v3379, 1
      %vm3396 = vcmp.eq.s32.totalorder %v3380, 1
      %vm3397 = vcmp.eq.s32.totalorder %v3381, 1
      %vm3398 = vcmp.eq.s32.totalorder %v3382, 1
      %vm3399 = vcmp.eq.s32.totalorder %v3383, 1
      %vm3400 = vcmp.eq.s32.totalorder %v3384, 1
      %vm3401 = vcmp.eq.s32.totalorder %v3385, 1
      %vm3402 = vcmp.eq.s32.totalorder %v3386, 1
      %vm3403 = vcmp.eq.s32.totalorder %v3387, 1
      %vm3404 = vcmp.eq.s32.totalorder %v3388, 1
      %v3405 = vsel %vm3389, %v3291, 0.0
      %v3406 = vsel %vm3390, %v3292, 0.0
      %v3407 = vsel %vm3391, %v3293, 0.0
      %v3408 = vsel %vm3392, %v3294, 0.0
      %v3409 = vsel %vm3393, %v3295, 0.0
      %v3410 = vsel %vm3394, %v3296, 0.0
      %v3411 = vsel %vm3395, %v3297, 0.0
      %v3412 = vsel %vm3396, %v3298, 0.0
      %v3413 = vsel %vm3397, %v3299, 0.0
      %v3414 = vsel %vm3398, %v3300, 0.0
      %v3415 = vsel %vm3399, %v3301, 0.0
      %v3416 = vsel %vm3400, %v3302, 0.0
      %v3417 = vsel %vm3401, %v3303, 0.0
      %v3418 = vsel %vm3402, %v3304, 0.0
      %v3419 = vsel %vm3403, %v3305, 0.0
      %v3420 = vsel %vm3404, %v3306, 0.0
      %v3421 = vsel %vm3389, %v3307, 0.0
      %v3422 = vsel %vm3390, %v3308, 0.0
      %v3423 = vsel %vm3391, %v3309, 0.0
      %v3424 = vsel %vm3392, %v3310, 0.0
      %v3425 = vsel %vm3393, %v3311, 0.0
      %v3426 = vsel %vm3394, %v3312, 0.0
      %v3427 = vsel %vm3395, %v3313, 0.0
      %v3428 = vsel %vm3396, %v3314, 0.0
      %v3429 = vsel %vm3397, %v3315, 0.0
      %v3430 = vsel %vm3398, %v3316, 0.0
      %v3431 = vsel %vm3399, %v3317, 0.0
      %v3432 = vsel %vm3400, %v3318, 0.0
      %v3433 = vsel %vm3401, %v3319, 0.0
      %v3434 = vsel %vm3402, %v3320, 0.0
      %v3435 = vsel %vm3403, %v3321, 0.0
      %v3436 = vsel %vm3404, %v3322, 0.0
      %v3437 = vsel %vm733, %v3405, 0.0
      %v3438 = vsel %vm733, %v3406, 0.0
      %v3439 = vadd.f32 %v3437, %v3438
      %v3440 = vsel %vm733, %v3407, 0.0
      %v3441 = vadd.f32 %v3439, %v3440
      %v3442 = vsel %vm733, %v3408, 0.0
      %v3443 = vadd.f32 %v3441, %v3442
      %v3444 = vsel %vm733, %v3409, 0.0
      %v3445 = vadd.f32 %v3443, %v3444
      %v3446 = vsel %vm733, %v3410, 0.0
      %v3447 = vadd.f32 %v3445, %v3446
      %v3448 = vsel %vm733, %v3411, 0.0
      %v3449 = vadd.f32 %v3447, %v3448
      %v3450 = vsel %vm733, %v3412, 0.0
      %v3451 = vadd.f32 %v3449, %v3450
      %v3452 = vsel %vm733, %v3413, 0.0
      %v3453 = vadd.f32 %v3451, %v3452
      %v3454 = vsel %vm733, %v3414, 0.0
      %v3455 = vadd.f32 %v3453, %v3454
      %v3456 = vsel %vm733, %v3415, 0.0
      %v3457 = vadd.f32 %v3455, %v3456
      %v3458 = vsel %vm733, %v3416, 0.0
      %v3459 = vadd.f32 %v3457, %v3458
      %v3460 = vsel %vm733, %v3417, 0.0
      %v3461 = vadd.f32 %v3459, %v3460
      %v3462 = vsel %vm733, %v3418, 0.0
      %v3463 = vadd.f32 %v3461, %v3462
      %v3464 = vsel %vm733, %v3419, 0.0
      %v3465 = vadd.f32 %v3463, %v3464
      %v3466 = vsel %vm733, %v3420, 0.0
      %v3467 = vadd.f32 %v3465, %v3466
      %v3468 = vrot.slane %v3467, 4
      %v3469 = vadd.f32 %v3467, %v3468
      %v3470 = vrot.slane %v3469, 2
      %v3471 = vadd.f32 %v3469, %v3470
      %v3472 = vrot.slane %v3471, 1
      %v3473 = vadd.f32 %v3471, %v3472
      %v3474 = vsel %vm733, %v3421, 0.0
      %v3475 = vsel %vm733, %v3422, 0.0
      %v3476 = vadd.f32 %v3474, %v3475
      %v3477 = vsel %vm733, %v3423, 0.0
      %v3478 = vadd.f32 %v3476, %v3477
      %v3479 = vsel %vm733, %v3424, 0.0
      %v3480 = vadd.f32 %v3478, %v3479
      %v3481 = vsel %vm733, %v3425, 0.0
      %v3482 = vadd.f32 %v3480, %v3481
      %v3483 = vsel %vm733, %v3426, 0.0
      %v3484 = vadd.f32 %v3482, %v3483
      %v3485 = vsel %vm733, %v3427, 0.0
      %v3486 = vadd.f32 %v3484, %v3485
      %v3487 = vsel %vm733, %v3428, 0.0
      %v3488 = vadd.f32 %v3486, %v3487
      %v3489 = vsel %vm733, %v3429, 0.0
      %v3490 = vadd.f32 %v3488, %v3489
      %v3491 = vsel %vm733, %v3430, 0.0
      %v3492 = vadd.f32 %v3490, %v3491
      %v3493 = vsel %vm733, %v3431, 0.0
      %v3494 = vadd.f32 %v3492, %v3493
      %v3495 = vsel %vm733, %v3432, 0.0
      %v3496 = vadd.f32 %v3494, %v3495
      %v3497 = vsel %vm733, %v3433, 0.0
      %v3498 = vadd.f32 %v3496, %v3497
      %v3499 = vsel %vm733, %v3434, 0.0
      %v3500 = vadd.f32 %v3498, %v3499
      %v3501 = vsel %vm733, %v3435, 0.0
      %v3502 = vadd.f32 %v3500, %v3501
      %v3503 = vsel %vm733, %v3436, 0.0
      %v3504 = vadd.f32 %v3502, %v3503
      %v3505 = vrot.slane %v3504, 4
      %v3506 = vadd.f32 %v3504, %v3505
      %v3507 = vrot.slane %v3506, 2
      %v3508 = vadd.f32 %v3506, %v3507
      %v3509 = vrot.slane %v3508, 1
      %v3510 = vadd.f32 %v3508, %v3509
      %v3511 = vmul.f32 %v3473, 0.012345679
      %v3512 = vmul.f32 %v3510, 0.012345679
      %v3513 = vsub.f32 %v3291, %v3511
      %v3514 = vsub.f32 %v3292, %v3511
      %v3515 = vsub.f32 %v3293, %v3511
      %v3516 = vsub.f32 %v3294, %v3511
      %v3517 = vsub.f32 %v3295, %v3511
      %v3518 = vsub.f32 %v3296, %v3511
      %v3519 = vsub.f32 %v3297, %v3511
      %v3520 = vsub.f32 %v3298, %v3511
      %v3521 = vsub.f32 %v3299, %v3511
      %v3522 = vsub.f32 %v3300, %v3511
      %v3523 = vsub.f32 %v3301, %v3511
      %v3524 = vsub.f32 %v3302, %v3511
      %v3525 = vsub.f32 %v3303, %v3511
      %v3526 = vsub.f32 %v3304, %v3511
      %v3527 = vsub.f32 %v3305, %v3511
      %v3528 = vsub.f32 %v3306, %v3511
      %v3529 = vsub.f32 %v3307, %v3512
      %v3530 = vsub.f32 %v3308, %v3512
      %v3531 = vsub.f32 %v3309, %v3512
      %v3532 = vsub.f32 %v3310, %v3512
      %v3533 = vsub.f32 %v3311, %v3512
      %v3534 = vsub.f32 %v3312, %v3512
      %v3535 = vsub.f32 %v3313, %v3512
      %v3536 = vsub.f32 %v3314, %v3512
      %v3537 = vsub.f32 %v3315, %v3512
      %v3538 = vsub.f32 %v3316, %v3512
      %v3539 = vsub.f32 %v3317, %v3512
      %v3540 = vsub.f32 %v3318, %v3512
      %v3541 = vsub.f32 %v3319, %v3512
      %v3542 = vsub.f32 %v3320, %v3512
      %v3543 = vsub.f32 %v3321, %v3512
      %v3544 = vsub.f32 %v3322, %v3512
      %v3545 = vsel %vm3389, %v3513, 0.0
      %v3546 = vsel %vm3390, %v3514, 0.0
      %v3547 = vsel %vm3391, %v3515, 0.0
      %v3548 = vsel %vm3392, %v3516, 0.0
      %v3549 = vsel %vm3393, %v3517, 0.0
      %v3550 = vsel %vm3394, %v3518, 0.0
      %v3551 = vsel %vm3395, %v3519, 0.0
      %v3552 = vsel %vm3396, %v3520, 0.0
      %v3553 = vsel %vm3397, %v3521, 0.0
      %v3554 = vsel %vm3398, %v3522, 0.0
      %v3555 = vsel %vm3399, %v3523, 0.0
      %v3556 = vsel %vm3400, %v3524, 0.0
      %v3557 = vsel %vm3401, %v3525, 0.0
      %v3558 = vsel %vm3402, %v3526, 0.0
      %v3559 = vsel %vm3403, %v3527, 0.0
      %v3560 = vsel %vm3404, %v3528, 0.0
      %v3561 = vsel %vm3389, %v3529, 0.0
      %v3562 = vsel %vm3390, %v3530, 0.0
      %v3563 = vsel %vm3391, %v3531, 0.0
      %v3564 = vsel %vm3392, %v3532, 0.0
      %v3565 = vsel %vm3393, %v3533, 0.0
      %v3566 = vsel %vm3394, %v3534, 0.0
      %v3567 = vsel %vm3395, %v3535, 0.0
      %v3568 = vsel %vm3396, %v3536, 0.0
      %v3569 = vsel %vm3397, %v3537, 0.0
      %v3570 = vsel %vm3398, %v3538, 0.0
      %v3571 = vsel %vm3399, %v3539, 0.0
      %v3572 = vsel %vm3400, %v3540, 0.0
      %v3573 = vsel %vm3401, %v3541, 0.0
      %v3574 = vsel %vm3402, %v3542, 0.0
      %v3575 = vsel %vm3403, %v3543, 0.0
      %v3576 = vsel %vm3404, %v3544, 0.0
      %v3577 = vmul.f32 %v3545, %v3545
      %v3578 = vmul.f32 %v3546, %v3546
      %v3579 = vmul.f32 %v3547, %v3547
      %v3580 = vmul.f32 %v3548, %v3548
      %v3581 = vmul.f32 %v3549, %v3549
      %v3582 = vmul.f32 %v3550, %v3550
      %v3583 = vmul.f32 %v3551, %v3551
      %v3584 = vmul.f32 %v3552, %v3552
      %v3585 = vmul.f32 %v3553, %v3553
      %v3586 = vmul.f32 %v3554, %v3554
      %v3587 = vmul.f32 %v3555, %v3555
      %v3588 = vmul.f32 %v3556, %v3556
      %v3589 = vmul.f32 %v3557, %v3557
      %v3590 = vmul.f32 %v3558, %v3558
      %v3591 = vmul.f32 %v3559, %v3559
      %v3592 = vmul.f32 %v3560, %v3560
      %v3593 = vmul.f32 %v3561, %v3561
      %v3594 = vmul.f32 %v3562, %v3562
      %v3595 = vmul.f32 %v3563, %v3563
      %v3596 = vmul.f32 %v3564, %v3564
      %v3597 = vmul.f32 %v3565, %v3565
      %v3598 = vmul.f32 %v3566, %v3566
      %v3599 = vmul.f32 %v3567, %v3567
      %v3600 = vmul.f32 %v3568, %v3568
      %v3601 = vmul.f32 %v3569, %v3569
      %v3602 = vmul.f32 %v3570, %v3570
      %v3603 = vmul.f32 %v3571, %v3571
      %v3604 = vmul.f32 %v3572, %v3572
      %v3605 = vmul.f32 %v3573, %v3573
      %v3606 = vmul.f32 %v3574, %v3574
      %v3607 = vmul.f32 %v3575, %v3575
      %v3608 = vmul.f32 %v3576, %v3576
      %v3609 = vsel %vm733, %v3577, 0.0
      %v3610 = vsel %vm733, %v3578, 0.0
      %v3611 = vadd.f32 %v3609, %v3610
      %v3612 = vsel %vm733, %v3579, 0.0
      %v3613 = vadd.f32 %v3611, %v3612
      %v3614 = vsel %vm733, %v3580, 0.0
      %v3615 = vadd.f32 %v3613, %v3614
      %v3616 = vsel %vm733, %v3581, 0.0
      %v3617 = vadd.f32 %v3615, %v3616
      %v3618 = vsel %vm733, %v3582, 0.0
      %v3619 = vadd.f32 %v3617, %v3618
      %v3620 = vsel %vm733, %v3583, 0.0
      %v3621 = vadd.f32 %v3619, %v3620
      %v3622 = vsel %vm733, %v3584, 0.0
      %v3623 = vadd.f32 %v3621, %v3622
      %v3624 = vsel %vm733, %v3585, 0.0
      %v3625 = vadd.f32 %v3623, %v3624
      %v3626 = vsel %vm733, %v3586, 0.0
      %v3627 = vadd.f32 %v3625, %v3626
      %v3628 = vsel %vm733, %v3587, 0.0
      %v3629 = vadd.f32 %v3627, %v3628
      %v3630 = vsel %vm733, %v3588, 0.0
      %v3631 = vadd.f32 %v3629, %v3630
      %v3632 = vsel %vm733, %v3589, 0.0
      %v3633 = vadd.f32 %v3631, %v3632
      %v3634 = vsel %vm733, %v3590, 0.0
      %v3635 = vadd.f32 %v3633, %v3634
      %v3636 = vsel %vm733, %v3591, 0.0
      %v3637 = vadd.f32 %v3635, %v3636
      %v3638 = vsel %vm733, %v3592, 0.0
      %v3639 = vadd.f32 %v3637, %v3638
      %v3640 = vrot.slane %v3639, 4
      %v3641 = vadd.f32 %v3639, %v3640
      %v3642 = vrot.slane %v3641, 2
      %v3643 = vadd.f32 %v3641, %v3642
      %v3644 = vrot.slane %v3643, 1
      %v3645 = vadd.f32 %v3643, %v3644
      %v3646 = vsel %vm733, %v3593, 0.0
      %v3647 = vsel %vm733, %v3594, 0.0
      %v3648 = vadd.f32 %v3646, %v3647
      %v3649 = vsel %vm733, %v3595, 0.0
      %v3650 = vadd.f32 %v3648, %v3649
      %v3651 = vsel %vm733, %v3596, 0.0
      %v3652 = vadd.f32 %v3650, %v3651
      %v3653 = vsel %vm733, %v3597, 0.0
      %v3654 = vadd.f32 %v3652, %v3653
      %v3655 = vsel %vm733, %v3598, 0.0
      %v3656 = vadd.f32 %v3654, %v3655
      %v3657 = vsel %vm733, %v3599, 0.0
      %v3658 = vadd.f32 %v3656, %v3657
      %v3659 = vsel %vm733, %v3600, 0.0
      %v3660 = vadd.f32 %v3658, %v3659
      %v3661 = vsel %vm733, %v3601, 0.0
      %v3662 = vadd.f32 %v3660, %v3661
      %v3663 = vsel %vm733, %v3602, 0.0
      %v3664 = vadd.f32 %v3662, %v3663
      %v3665 = vsel %vm733, %v3603, 0.0
      %v3666 = vadd.f32 %v3664, %v3665
      %v3667 = vsel %vm733, %v3604, 0.0
      %v3668 = vadd.f32 %v3666, %v3667
      %v3669 = vsel %vm733, %v3605, 0.0
      %v3670 = vadd.f32 %v3668, %v3669
      %v3671 = vsel %vm733, %v3606, 0.0
      %v3672 = vadd.f32 %v3670, %v3671
      %v3673 = vsel %vm733, %v3607, 0.0
      %v3674 = vadd.f32 %v3672, %v3673
      %v3675 = vsel %vm733, %v3608, 0.0
      %v3676 = vadd.f32 %v3674, %v3675
      %v3677 = vrot.slane %v3676, 4
      %v3678 = vadd.f32 %v3676, %v3677
      %v3679 = vrot.slane %v3678, 2
      %v3680 = vadd.f32 %v3678, %v3679
      %v3681 = vrot.slane %v3680, 1
      %v3682 = vadd.f32 %v3680, %v3681
      %v3683 = vmul.f32 %v3645, 0.0125
      %v3684 = vmul.f32 %v3682, 0.0125
      %v3685 = vadd.f32 %v3683, 1e-12
      %v3686 = vadd.f32 %v3684, 1e-12
      %v3687 = vrsqrt.pop %v3685
      %v3688 = vmul.f32 %v3687, %v3685
      %v3689 = vmul.f32 %v3688, %v3687
      %v3690 = vmul.f32 0.5, %v3689
      %v3691 = vsub.f32 1.5, %v3690
      %v3692 = vmul.f32 %v3687, %v3691
      %v3693 = vmul.f32 %v3685, %v3692
      %vm3694 = vcmp.eq.f32.partialorder %v3685, inf
      %v3695 = vsel %vm3694, %v3685, %v3693
      %vm3696 = vcmp.eq.f32.partialorder %v3685, 0.0
      %v3697 = vand.u32 %v3685, 2147483648
      %v3698 = vsel %vm3696, %v3697, %v3695
      %v3699 = vrsqrt.pop %v3686
      %v3700 = vmul.f32 %v3699, %v3686
      %v3701 = vmul.f32 %v3700, %v3699
      %v3702 = vmul.f32 0.5, %v3701
      %v3703 = vsub.f32 1.5, %v3702
      %v3704 = vmul.f32 %v3699, %v3703
      %v3705 = vmul.f32 %v3686, %v3704
      %vm3706 = vcmp.eq.f32.partialorder %v3686, inf
      %v3707 = vsel %vm3706, %v3686, %v3705
      %vm3708 = vcmp.eq.f32.partialorder %v3686, 0.0
      %v3709 = vand.u32 %v3686, 2147483648
      %v3710 = vsel %vm3708, %v3709, %v3707
      %v3711 = vmul.f32 %v3324, %v3511
      %v3712 = vmul.f32 %v3324, %v3512
      %v3713 = vmul.f32 %v3324, %v3698
      %v3714 = vmul.f32 %v3324, %v3710
      %v3717 = vrot.slane %v3713, 1
      %v3718 = vrot.slane %v3714, 1
      %v3721 = vadd.f32 %v3711, %v3717
      %v3722 = vadd.f32 %v3712, %v3718
      %v3724 = vrot.slane %v3324, 2
      %v3726 = vadd.f32 %v3721, %v3724
      %v3727 = vadd.f32 %v3722, %v3724
      %v3728 = vxor.u32 %v3726, 2147483648
      %v3729 = vxor.u32 %v3727, 2147483648
      %v3730 = vmul.f32 %v3728, 1.442695
      %v3731 = vpow.pop %v3730
      %v3732 = vmul.f32 %v3729, 1.442695
      %v3733 = vpow.pop %v3732
      %v3734 = vadd.f32 %v3731, 1.0
      %v3735 = vadd.f32 %v3733, 1.0
      %v3736 = vrcp.pop %v3734
      %v3737 = vmul.f32 %v3734, %v3736
      %v3738 = vsub.f32 1.0, %v3737
      %v3739 = vmul.f32 %v3736, %v3738
      %v3740 = vadd.f32 %v3736, %v3739
      %vm3741 = vweird.f32 %v3734
      %vm3742 = vweird.f32 %v3736
      %vm3743 = vmor %vm3741, %vm3742
      %v3744 = vsel %vm3743, %v3736, %v3740
      %v3745 = vand.u32 2147483647, %v3734
      %vm3746 = vcmp.eq.f32.partialorder %v3745, 8.507059e+37
      %v3747 = vand.u32 %v3734, 2147483648
      %v3748 = vor.u32 1.1754944e-38, %v3747
      %v3749 = vsel %vm3746, %v3748, %v3744
      %v3750 = vmul.f32 1.0, %v3749
      %v3751 = vrcp.pop %v3735
      %v3752 = vmul.f32 %v3735, %v3751
      %v3753 = vsub.f32 1.0, %v3752
      %v3754 = vmul.f32 %v3751, %v3753
      %v3755 = vadd.f32 %v3751, %v3754
      %vm3756 = vweird.f32 %v3735
      %vm3757 = vweird.f32 %v3751
      %vm3758 = vmor %vm3756, %vm3757
      %v3759 = vsel %vm3758, %v3751, %v3755
      %v3760 = vand.u32 2147483647, %v3735
      %vm3761 = vcmp.eq.f32.partialorder %v3760, 8.507059e+37
      %v3762 = vand.u32 %v3735, 2147483648
      %v3763 = vor.u32 1.1754944e-38, %v3762
      %v3764 = vsel %vm3761, %v3763, %v3759
      %v3765 = vmul.f32 1.0, %v3764
      %v3766 = vperm.slane %v3750, 0
      %v3767 = vperm.slane %v3765, 0
      %v3768 = vmul.f32 %v3291, %v3766
      %v3769 = vmul.f32 %v3292, %v3766
      %v3770 = vmul.f32 %v3293, %v3766
      %v3771 = vmul.f32 %v3294, %v3766
      %v3772 = vmul.f32 %v3295, %v3766
      %v3773 = vmul.f32 %v3296, %v3766
      %v3774 = vmul.f32 %v3297, %v3766
      %v3775 = vmul.f32 %v3298, %v3766
      %v3776 = vmul.f32 %v3299, %v3766
      %v3777 = vmul.f32 %v3300, %v3766
      %v3778 = vmul.f32 %v3301, %v3766
      %v3779 = vmul.f32 %v3302, %v3766
      %v3780 = vmul.f32 %v3303, %v3766
      %v3781 = vmul.f32 %v3304, %v3766
      %v3782 = vmul.f32 %v3305, %v3766
      %v3783 = vmul.f32 %v3306, %v3766
      %v3784 = vmul.f32 %v3307, %v3767
      %v3785 = vmul.f32 %v3308, %v3767
      %v3786 = vmul.f32 %v3309, %v3767
      %v3787 = vmul.f32 %v3310, %v3767
      %v3788 = vmul.f32 %v3311, %v3767
      %v3789 = vmul.f32 %v3312, %v3767
      %v3790 = vmul.f32 %v3313, %v3767
      %v3791 = vmul.f32 %v3314, %v3767
      %v3792 = vmul.f32 %v3315, %v3767
      %v3793 = vmul.f32 %v3316, %v3767
      %v3794 = vmul.f32 %v3317, %v3767
      %v3795 = vmul.f32 %v3318, %v3767
      %v3796 = vmul.f32 %v3319, %v3767
      %v3797 = vmul.f32 %v3320, %v3767
      %v3798 = vmul.f32 %v3321, %v3767
      %v3799 = vmul.f32 %v3322, %v3767
      %v3800 = vmax.f32 %v3768, 0.0
      %v3801 = vmax.f32 %v3769, 0.0
      %v3802 = vmax.f32 %v3770, 0.0
      %v3803 = vmax.f32 %v3771, 0.0
      %v3804 = vmax.f32 %v3772, 0.0
      %v3805 = vmax.f32 %v3773, 0.0
      %v3806 = vmax.f32 %v3774, 0.0
      %v3807 = vmax.f32 %v3775, 0.0
      %v3808 = vmax.f32 %v3776, 0.0
      %v3809 = vmax.f32 %v3777, 0.0
      %v3810 = vmax.f32 %v3778, 0.0
      %v3811 = vmax.f32 %v3779, 0.0
      %v3812 = vmax.f32 %v3780, 0.0
      %v3813 = vmax.f32 %v3781, 0.0
      %v3814 = vmax.f32 %v3782, 0.0
      %v3815 = vmax.f32 %v3783, 0.0
      %v3816 = vmax.f32 %v3784, 0.0
      %v3817 = vmax.f32 %v3785, 0.0
      %v3818 = vmax.f32 %v3786, 0.0
      %v3819 = vmax.f32 %v3787, 0.0
      %v3820 = vmax.f32 %v3788, 0.0
      %v3821 = vmax.f32 %v3789, 0.0
      %v3822 = vmax.f32 %v3790, 0.0
      %v3823 = vmax.f32 %v3791, 0.0
      %v3824 = vmax.f32 %v3792, 0.0
      %v3825 = vmax.f32 %v3793, 0.0
      %v3826 = vmax.f32 %v3794, 0.0
      %v3827 = vmax.f32 %v3795, 0.0
      %v3828 = vmax.f32 %v3796, 0.0
      %v3829 = vmax.f32 %v3797, 0.0
      %v3830 = vmax.f32 %v3798, 0.0
      %v3831 = vmax.f32 %v3799, 0.0
      %v3832 = vpack.c.bf16 %v3801, %v3800
      %v3833 = vpack.c.bf16 %v3803, %v3802
      %v3834 = vpack.c.bf16 %v3805, %v3804
      %v3835 = vpack.c.bf16 %v3807, %v3806
      %v3836 = vpack.c.bf16 %v3809, %v3808
      %v3837 = vpack.c.bf16 %v3811, %v3810
      %v3838 = vpack.c.bf16 %v3813, %v3812
      %v3839 = vpack.c.bf16 %v3815, %v3814
      %v3840 = vpack.c.bf16 %v3817, %v3816
      %v3841 = vpack.c.bf16 %v3819, %v3818
      %v3842 = vpack.c.bf16 %v3821, %v3820
      %v3843 = vpack.c.bf16 %v3823, %v3822
      %v3844 = vpack.c.bf16 %v3825, %v3824
      %v3845 = vpack.c.bf16 %v3827, %v3826
      %v3846 = vpack.c.bf16 %v3829, %v3828
      %v3847 = vpack.c.bf16 %v3831, %v3830
      %s3848 = scalar_lea.vmem %s2, 144
      %v3849 = vld [vmem:[%s3848] sm:$0xf]
      %v3850 = vld [vmem:[%s3848 + $0x4] sm:$0xf]
      %v3851 = vld [vmem:[%s3848 + $0x8] sm:$0xf]
      %v3852 = vld [vmem:[%s3848 + $0xc] sm:$0xf]
      %s3853 = scalar_lea.vmem %s2, 160
      %v3854 = vld [vmem:[%s3853] sm:$0xf]
      %v3855 = vld [vmem:[%s3853 + $0x4] sm:$0xf]
      %v3856 = vld [vmem:[%s3853 + $0x8] sm:$0xf]
      %v3857 = vld [vmem:[%s3853 + $0xc] sm:$0xf]
      %v3859 = vshrl.u32 %v3832, 16
      %v3861 = vshll.u32 %v3832, 16
      %v3863 = vrot.slane %v3861, 1
      %v3864 = vor.u32 %v3859, %v3863
      %v3866 = vshll.u32 %v3833, 16
      %v3868 = vrot.slane %v3866, 1
      %v3869 = vsel %vm1155, %v3864, %v3868
      %v3870 = vshrl.u32 %v3833, 16
      %v3872 = vor.u32 %v3870, %v3868
      %v3874 = vshll.u32 %v3834, 16
      %v3876 = vrot.slane %v3874, 1
      %v3877 = vsel %vm1155, %v3872, %v3876
      %v3878 = vshrl.u32 %v3834, 16
      %v3880 = vor.u32 %v3878, %v3876
      %v3882 = vshll.u32 %v3835, 16
      %v3884 = vrot.slane %v3882, 1
      %v3885 = vsel %vm1155, %v3880, %v3884
      %v3886 = vshrl.u32 %v3835, 16
      %v3888 = vor.u32 %v3886, %v3884
      %v3890 = vshll.u32 %v3836, 16
      %v3892 = vrot.slane %v3890, 1
      %v3893 = vsel %vm1155, %v3888, %v3892
      %v3894 = vshrl.u32 %v3836, 16
      %v3896 = vor.u32 %v3894, %v3892
      %v3898 = vshll.u32 %v3837, 16
      %v3900 = vrot.slane %v3898, 1
      %v3901 = vsel %vm1155, %v3896, %v3900
      %v3902 = vshrl.u32 %v3837, 16
      %v3904 = vor.u32 %v3902, %v3900
      %v3906 = vshll.u32 %v3838, 16
      %v3908 = vrot.slane %v3906, 1
      %v3909 = vsel %vm1155, %v3904, %v3908
      %v3910 = vshrl.u32 %v3838, 16
      %v3912 = vor.u32 %v3910, %v3908
      %v3914 = vshll.u32 %v3839, 16
      %v3916 = vrot.slane %v3914, 1
      %v3917 = vsel %vm1155, %v3912, %v3916
      %v3918 = vshrl.u32 %v3839, 16
      %v3920 = vor.u32 %v3918, %v3916
      %v3922 = vshll.u32 %v3840, 16
      %v3924 = vrot.slane %v3922, 1
      %v3925 = vsel %vm1155, %v3920, %v3924
      %v3926 = vshrl.u32 %v3840, 16
      %v3928 = vor.u32 %v3926, %v3924
      %v3930 = vshll.u32 %v3841, 16
      %v3932 = vrot.slane %v3930, 1
      %v3933 = vsel %vm1155, %v3928, %v3932
      %v3934 = vshrl.u32 %v3841, 16
      %v3936 = vor.u32 %v3934, %v3932
      %v3938 = vshll.u32 %v3842, 16
      %v3940 = vrot.slane %v3938, 1
      %v3941 = vsel %vm1155, %v3936, %v3940
      %v3942 = vshrl.u32 %v3842, 16
      %v3944 = vor.u32 %v3942, %v3940
      %v3946 = vshll.u32 %v3843, 16
      %v3948 = vrot.slane %v3946, 1
      %v3949 = vsel %vm1155, %v3944, %v3948
      %v3950 = vshrl.u32 %v3843, 16
      %v3952 = vor.u32 %v3950, %v3948
      %v3954 = vshll.u32 %v3844, 16
      %v3956 = vrot.slane %v3954, 1
      %v3957 = vsel %vm1155, %v3952, %v3956
      %v3958 = vshrl.u32 %v3844, 16
      %v3960 = vor.u32 %v3958, %v3956
      %v3962 = vshll.u32 %v3845, 16
      %v3964 = vrot.slane %v3962, 1
      %v3965 = vsel %vm1155, %v3960, %v3964
      %v3966 = vshrl.u32 %v3845, 16
      %v3968 = vor.u32 %v3966, %v3964
      %v3970 = vshll.u32 %v3846, 16
      %v3972 = vrot.slane %v3970, 1
      %v3973 = vsel %vm1155, %v3968, %v3972
      %v3974 = vshrl.u32 %v3846, 16
      %v3976 = vor.u32 %v3974, %v3972
      %v3978 = vshll.u32 %v3847, 16
      %v3980 = vrot.slane %v3978, 1
      %v3981 = vsel %vm1155, %v3976, %v3980
      %v3982 = vshrl.u32 %v3847, 16
      %v3984 = vor.u32 %v3982, %v3980
      %v3985 = vsel %vm1155, %v3984, %v1286
      %v3990 = vunpack.c.l.b16 %v3854
      %v3991 = vunpack.c.l.b16 %v3855
      %v3992 = vunpack.c.l.b16 %v3856
      %v3993 = vunpack.c.l.b16 %v3857
      %v3994 = vpack.c.b16 %v3991, %v3990
      %v3995 = vpack.c.b16 %v3993, %v3992
      %v3999 = vsel %vm733, %v3869, 0
      %v4002 = vsel %vm733, %v3877, 0
      %v4005 = vsel %vm733, %v3885, 0
      %v4008 = vsel %vm733, %v3893, 0
      %v4011 = vsel %vm733, %v3901, 0
      %v4014 = vsel %vm733, %v3909, 0
      %v4017 = vsel %vm733, %v3917, 0
      %v4020 = vsel %vm733, %v3925, 0
      %v4023 = vsel %vm733, %v3933, 0
      %v4026 = vsel %vm733, %v3941, 0
      %v4029 = vsel %vm733, %v3949, 0
      %v4032 = vsel %vm733, %v3957, 0
      %v4035 = vsel %vm733, %v3965, 0
      %v4038 = vsel %vm733, %v3973, 0
      %v4041 = vsel %vm733, %v3981, 0
      %v4044 = vsel %vm733, %v3985, 0
      %4046 = vmatpush.bf16.msra.mxu0 0
      %4047 = vmatpush.bf16.msra.mxu0 0
      %4048 = vmatpush.bf16.msra.mxu0 0
      %4049 = vmatpush.bf16.msra.mxu0 0
      %4050 = vmatpush.bf16.msra.mxu0 0
      %4051 = vmatpush.bf16.msra.mxu0 0
      %4052 = vmatpush.bf16.msra.mxu0 %v3995
      %4053 = vmatpush.bf16.msra.mxu0 %v3994
      %4054 = vmatmul.bf16.gmra.mxu0 %v3999
      %v4055 = vpop.f32.mrf.mxu0
      %v4056 = vadd.f32 0.0, %v4055
      %v4057 = vpop.f32.mrf.mxu0
      %v4058 = vadd.f32 0.0, %v4057
      %4059 = vmatmul.bf16.gmra.mxu0 %v4002
      %v4060 = vpop.f32.mrf.mxu0
      %v4061 = vadd.f32 0.0, %v4060
      %v4062 = vpop.f32.mrf.mxu0
      %v4063 = vadd.f32 0.0, %v4062
      %4064 = vmatmul.bf16.gmra.mxu0 %v4005
      %v4065 = vpop.f32.mrf.mxu0
      %v4066 = vadd.f32 0.0, %v4065
      %v4067 = vpop.f32.mrf.mxu0
      %v4068 = vadd.f32 0.0, %v4067
      %4069 = vmatmul.bf16.gmra.mxu0 %v4008
      %v4070 = vpop.f32.mrf.mxu0
      %v4071 = vadd.f32 0.0, %v4070
      %v4072 = vpop.f32.mrf.mxu0
      %v4073 = vadd.f32 0.0, %v4072
      %4074 = vmatmul.bf16.gmra.mxu0 %v4011
      %v4075 = vpop.f32.mrf.mxu0
      %v4076 = vadd.f32 0.0, %v4075
      %v4077 = vpop.f32.mrf.mxu0
      %v4078 = vadd.f32 0.0, %v4077
      %4079 = vmatmul.bf16.gmra.mxu0 %v4014
      %v4080 = vpop.f32.mrf.mxu0
      %v4081 = vadd.f32 0.0, %v4080
      %v4082 = vpop.f32.mrf.mxu0
      %v4083 = vadd.f32 0.0, %v4082
      %4084 = vmatmul.bf16.gmra.mxu0 %v4017
      %v4085 = vpop.f32.mrf.mxu0
      %v4086 = vadd.f32 0.0, %v4085
      %v4087 = vpop.f32.mrf.mxu0
      %v4088 = vadd.f32 0.0, %v4087
      %4089 = vmatmul.bf16.gmra.mxu0 %v4020
      %v4090 = vpop.f32.mrf.mxu0
      %v4091 = vadd.f32 0.0, %v4090
      %v4092 = vpop.f32.mrf.mxu0
      %v4093 = vadd.f32 0.0, %v4092
      %4094 = vmatmul.bf16.gmra.mxu0 %v4023
      %v4095 = vpop.f32.mrf.mxu0
      %v4096 = vadd.f32 0.0, %v4095
      %v4097 = vpop.f32.mrf.mxu0
      %v4098 = vadd.f32 0.0, %v4097
      %4099 = vmatmul.bf16.gmra.mxu0 %v4026
      %v4100 = vpop.f32.mrf.mxu0
      %v4101 = vadd.f32 0.0, %v4100
      %v4102 = vpop.f32.mrf.mxu0
      %v4103 = vadd.f32 0.0, %v4102
      %4104 = vmatmul.bf16.gmra.mxu0 %v4029
      %v4105 = vpop.f32.mrf.mxu0
      %v4106 = vadd.f32 0.0, %v4105
      %v4107 = vpop.f32.mrf.mxu0
      %v4108 = vadd.f32 0.0, %v4107
      %4109 = vmatmul.bf16.gmra.mxu0 %v4032
      %v4110 = vpop.f32.mrf.mxu0
      %v4111 = vadd.f32 0.0, %v4110
      %v4112 = vpop.f32.mrf.mxu0
      %v4113 = vadd.f32 0.0, %v4112
      %4114 = vmatmul.bf16.gmra.mxu0 %v4035
      %v4115 = vpop.f32.mrf.mxu0
      %v4116 = vadd.f32 0.0, %v4115
      %v4117 = vpop.f32.mrf.mxu0
      %v4118 = vadd.f32 0.0, %v4117
      %4119 = vmatmul.bf16.gmra.mxu0 %v4038
      %v4120 = vpop.f32.mrf.mxu0
      %v4121 = vadd.f32 0.0, %v4120
      %v4122 = vpop.f32.mrf.mxu0
      %v4123 = vadd.f32 0.0, %v4122
      %4124 = vmatmul.bf16.gmra.mxu0 %v4041
      %v4125 = vpop.f32.mrf.mxu0
      %v4126 = vadd.f32 0.0, %v4125
      %v4127 = vpop.f32.mrf.mxu0
      %v4128 = vadd.f32 0.0, %v4127
      %4129 = vmatmul.bf16.gmra.mxu0 %v4044
      %v4130 = vpop.f32.mrf.mxu0
      %v4131 = vadd.f32 0.0, %v4130
      %v4132 = vpop.f32.mrf.mxu0
      %v4133 = vadd.f32 0.0, %v4132
      %4134 = vdwg.mxu0
      %v4139 = vunpack.c.l.b16 %v3849
      %v4140 = vunpack.c.l.b16 %v3850
      %v4141 = vunpack.c.l.b16 %v3851
      %v4142 = vunpack.c.l.b16 %v3852
      %v4143 = vpack.c.b16 %v4140, %v4139
      %v4144 = vpack.c.b16 %v4142, %v4141
      %v4147 = vsel %vm733, %v3832, 0
      %v4149 = vsel %vm733, %v3833, 0
      %v4151 = vsel %vm733, %v3834, 0
      %v4153 = vsel %vm733, %v3835, 0
      %v4155 = vsel %vm733, %v3836, 0
      %v4157 = vsel %vm733, %v3837, 0
      %v4159 = vsel %vm733, %v3838, 0
      %v4161 = vsel %vm733, %v3839, 0
      %v4163 = vsel %vm733, %v3840, 0
      %v4165 = vsel %vm733, %v3841, 0
      %v4167 = vsel %vm733, %v3842, 0
      %v4169 = vsel %vm733, %v3843, 0
      %v4171 = vsel %vm733, %v3844, 0
      %v4173 = vsel %vm733, %v3845, 0
      %v4175 = vsel %vm733, %v3846, 0
      %v4177 = vsel %vm733, %v3847, 0
      %4179 = vmatpush.bf16.msra.mxu0 0
      %4180 = vmatpush.bf16.msra.mxu0 0
      %4181 = vmatpush.bf16.msra.mxu0 0
      %4182 = vmatpush.bf16.msra.mxu0 0
      %4183 = vmatpush.bf16.msra.mxu0 0
      %4184 = vmatpush.bf16.msra.mxu0 0
      %4185 = vmatpush.bf16.msra.mxu0 %v4144
      %4186 = vmatpush.bf16.msra.mxu0 %v4143
      %4187 = vmatmul.bf16.gmra.mxu0 %v4147
      %v4188 = vpop.f32.mrf.mxu0
      %v4189 = vadd.f32 %v4056, %v4188
      %v4190 = vpop.f32.mrf.mxu0
      %v4191 = vadd.f32 %v4058, %v4190
      %4192 = vmatmul.bf16.gmra.mxu0 %v4149
      %v4193 = vpop.f32.mrf.mxu0
      %v4194 = vadd.f32 %v4061, %v4193
      %v4195 = vpop.f32.mrf.mxu0
      %v4196 = vadd.f32 %v4063, %v4195
      %4197 = vmatmul.bf16.gmra.mxu0 %v4151
      %v4198 = vpop.f32.mrf.mxu0
      %v4199 = vadd.f32 %v4066, %v4198
      %v4200 = vpop.f32.mrf.mxu0
      %v4201 = vadd.f32 %v4068, %v4200
      %4202 = vmatmul.bf16.gmra.mxu0 %v4153
      %v4203 = vpop.f32.mrf.mxu0
      %v4204 = vadd.f32 %v4071, %v4203
      %v4205 = vpop.f32.mrf.mxu0
      %v4206 = vadd.f32 %v4073, %v4205
      %4207 = vmatmul.bf16.gmra.mxu0 %v4155
      %v4208 = vpop.f32.mrf.mxu0
      %v4209 = vadd.f32 %v4076, %v4208
      %v4210 = vpop.f32.mrf.mxu0
      %v4211 = vadd.f32 %v4078, %v4210
      %4212 = vmatmul.bf16.gmra.mxu0 %v4157
      %v4213 = vpop.f32.mrf.mxu0
      %v4214 = vadd.f32 %v4081, %v4213
      %v4215 = vpop.f32.mrf.mxu0
      %v4216 = vadd.f32 %v4083, %v4215
      %4217 = vmatmul.bf16.gmra.mxu0 %v4159
      %v4218 = vpop.f32.mrf.mxu0
      %v4219 = vadd.f32 %v4086, %v4218
      %v4220 = vpop.f32.mrf.mxu0
      %v4221 = vadd.f32 %v4088, %v4220
      %4222 = vmatmul.bf16.gmra.mxu0 %v4161
      %v4223 = vpop.f32.mrf.mxu0
      %v4224 = vadd.f32 %v4091, %v4223
      %v4225 = vpop.f32.mrf.mxu0
      %v4226 = vadd.f32 %v4093, %v4225
      %4227 = vmatmul.bf16.gmra.mxu0 %v4163
      %v4228 = vpop.f32.mrf.mxu0
      %v4229 = vadd.f32 %v4096, %v4228
      %v4230 = vpop.f32.mrf.mxu0
      %v4231 = vadd.f32 %v4098, %v4230
      %4232 = vmatmul.bf16.gmra.mxu0 %v4165
      %v4233 = vpop.f32.mrf.mxu0
      %v4234 = vadd.f32 %v4101, %v4233
      %v4235 = vpop.f32.mrf.mxu0
      %v4236 = vadd.f32 %v4103, %v4235
      %4237 = vmatmul.bf16.gmra.mxu0 %v4167
      %v4238 = vpop.f32.mrf.mxu0
      %v4239 = vadd.f32 %v4106, %v4238
      %v4240 = vpop.f32.mrf.mxu0
      %v4241 = vadd.f32 %v4108, %v4240
      %4242 = vmatmul.bf16.gmra.mxu0 %v4169
      %v4243 = vpop.f32.mrf.mxu0
      %v4244 = vadd.f32 %v4111, %v4243
      %v4245 = vpop.f32.mrf.mxu0
      %v4246 = vadd.f32 %v4113, %v4245
      %4247 = vmatmul.bf16.gmra.mxu0 %v4171
      %v4248 = vpop.f32.mrf.mxu0
      %v4249 = vadd.f32 %v4116, %v4248
      %v4250 = vpop.f32.mrf.mxu0
      %v4251 = vadd.f32 %v4118, %v4250
      %4252 = vmatmul.bf16.gmra.mxu0 %v4173
      %v4253 = vpop.f32.mrf.mxu0
      %v4254 = vadd.f32 %v4121, %v4253
      %v4255 = vpop.f32.mrf.mxu0
      %v4256 = vadd.f32 %v4123, %v4255
      %4257 = vmatmul.bf16.gmra.mxu0 %v4175
      %v4258 = vpop.f32.mrf.mxu0
      %v4259 = vadd.f32 %v4126, %v4258
      %v4260 = vpop.f32.mrf.mxu0
      %v4261 = vadd.f32 %v4128, %v4260
      %4262 = vmatmul.bf16.gmra.mxu0 %v4177
      %v4263 = vpop.f32.mrf.mxu0
      %v4264 = vadd.f32 %v4131, %v4263
      %v4265 = vpop.f32.mrf.mxu0
      %v4266 = vadd.f32 %v4133, %v4265
      %4267 = vdwg.mxu0
      %s4268 = scalar_lea.vmem %s2, 176
      %v4269 = vld [vmem:[%s4268] sm:$0xf]
      %v4270 = vld [vmem:[%s4268 + $0x4] sm:$0xf]
      %v4271 = vld [vmem:[%s4268 + $0x8] sm:$0xf]
      %v4272 = vld [vmem:[%s4268 + $0xc] sm:$0xf]
      %v4289 = vrot.slane %v3832, 1
      %v4290 = vrot.slane %v3833, 1
      %v4291 = vsel %vm1592, %v4289, %v4290
      %v4292 = vrot.slane %v3834, 1
      %v4293 = vsel %vm1592, %v4290, %v4292
      %v4294 = vrot.slane %v3835, 1
      %v4295 = vsel %vm1592, %v4292, %v4294
      %v4296 = vrot.slane %v3836, 1
      %v4297 = vsel %vm1592, %v4294, %v4296
      %v4298 = vrot.slane %v3837, 1
      %v4299 = vsel %vm1592, %v4296, %v4298
      %v4300 = vrot.slane %v3838, 1
      %v4301 = vsel %vm1592, %v4298, %v4300
      %v4302 = vrot.slane %v3839, 1
      %v4303 = vsel %vm1592, %v4300, %v4302
      %v4304 = vrot.slane %v3840, 1
      %v4305 = vsel %vm1592, %v4302, %v4304
      %v4306 = vrot.slane %v3841, 1
      %v4307 = vsel %vm1592, %v4304, %v4306
      %v4308 = vrot.slane %v3842, 1
      %v4309 = vsel %vm1592, %v4306, %v4308
      %v4310 = vrot.slane %v3843, 1
      %v4311 = vsel %vm1592, %v4308, %v4310
      %v4312 = vrot.slane %v3844, 1
      %v4313 = vsel %vm1592, %v4310, %v4312
      %v4314 = vrot.slane %v3845, 1
      %v4315 = vsel %vm1592, %v4312, %v4314
      %v4316 = vrot.slane %v3846, 1
      %v4317 = vsel %vm1592, %v4314, %v4316
      %v4318 = vrot.slane %v3847, 1
      %v4319 = vsel %vm1592, %v4316, %v4318
      %v4320 = vsel %vm1592, %v4318, %v1624
      %v4325 = vunpack.c.l.b16 %v4269
      %v4326 = vunpack.c.l.b16 %v4270
      %v4327 = vunpack.c.l.b16 %v4271
      %v4328 = vunpack.c.l.b16 %v4272
      %v4329 = vpack.c.b16 %v4326, %v4325
      %v4330 = vpack.c.b16 %v4328, %v4327
      %v4334 = vsel %vm733, %v4291, 0
      %v4337 = vsel %vm733, %v4293, 0
      %v4340 = vsel %vm733, %v4295, 0
      %v4343 = vsel %vm733, %v4297, 0
      %v4346 = vsel %vm733, %v4299, 0
      %v4349 = vsel %vm733, %v4301, 0
      %v4352 = vsel %vm733, %v4303, 0
      %v4355 = vsel %vm733, %v4305, 0
      %v4358 = vsel %vm733, %v4307, 0
      %v4361 = vsel %vm733, %v4309, 0
      %v4364 = vsel %vm733, %v4311, 0
      %v4367 = vsel %vm733, %v4313, 0
      %v4370 = vsel %vm733, %v4315, 0
      %v4373 = vsel %vm733, %v4317, 0
      %v4376 = vsel %vm733, %v4319, 0
      %v4379 = vsel %vm733, %v4320, 0
      %4381 = vmatpush.bf16.msra.mxu0 0
      %4382 = vmatpush.bf16.msra.mxu0 0
      %4383 = vmatpush.bf16.msra.mxu0 0
      %4384 = vmatpush.bf16.msra.mxu0 0
      %4385 = vmatpush.bf16.msra.mxu0 0
      %4386 = vmatpush.bf16.msra.mxu0 0
      %4387 = vmatpush.bf16.msra.mxu0 %v4330
      %4388 = vmatpush.bf16.msra.mxu0 %v4329
      %4389 = vmatmul.bf16.gmra.mxu0 %v4334
      %v4390 = vpop.f32.mrf.mxu0
      %v4391 = vadd.f32 0.0, %v4390
      %v4392 = vpop.f32.mrf.mxu0
      %v4393 = vadd.f32 0.0, %v4392
      %4394 = vmatmul.bf16.gmra.mxu0 %v4337
      %v4395 = vpop.f32.mrf.mxu0
      %v4396 = vadd.f32 0.0, %v4395
      %v4397 = vpop.f32.mrf.mxu0
      %v4398 = vadd.f32 0.0, %v4397
      %4399 = vmatmul.bf16.gmra.mxu0 %v4340
      %v4400 = vpop.f32.mrf.mxu0
      %v4401 = vadd.f32 0.0, %v4400
      %v4402 = vpop.f32.mrf.mxu0
      %v4403 = vadd.f32 0.0, %v4402
      %4404 = vmatmul.bf16.gmra.mxu0 %v4343
      %v4405 = vpop.f32.mrf.mxu0
      %v4406 = vadd.f32 0.0, %v4405
      %v4407 = vpop.f32.mrf.mxu0
      %v4408 = vadd.f32 0.0, %v4407
      %4409 = vmatmul.bf16.gmra.mxu0 %v4346
      %v4410 = vpop.f32.mrf.mxu0
      %v4411 = vadd.f32 0.0, %v4410
      %v4412 = vpop.f32.mrf.mxu0
      %v4413 = vadd.f32 0.0, %v4412
      %4414 = vmatmul.bf16.gmra.mxu0 %v4349
      %v4415 = vpop.f32.mrf.mxu0
      %v4416 = vadd.f32 0.0, %v4415
      %v4417 = vpop.f32.mrf.mxu0
      %v4418 = vadd.f32 0.0, %v4417
      %4419 = vmatmul.bf16.gmra.mxu0 %v4352
      %v4420 = vpop.f32.mrf.mxu0
      %v4421 = vadd.f32 0.0, %v4420
      %v4422 = vpop.f32.mrf.mxu0
      %v4423 = vadd.f32 0.0, %v4422
      %4424 = vmatmul.bf16.gmra.mxu0 %v4355
      %v4425 = vpop.f32.mrf.mxu0
      %v4426 = vadd.f32 0.0, %v4425
      %v4427 = vpop.f32.mrf.mxu0
      %v4428 = vadd.f32 0.0, %v4427
      %4429 = vmatmul.bf16.gmra.mxu0 %v4358
      %v4430 = vpop.f32.mrf.mxu0
      %v4431 = vadd.f32 0.0, %v4430
      %v4432 = vpop.f32.mrf.mxu0
      %v4433 = vadd.f32 0.0, %v4432
      %4434 = vmatmul.bf16.gmra.mxu0 %v4361
      %v4435 = vpop.f32.mrf.mxu0
      %v4436 = vadd.f32 0.0, %v4435
      %v4437 = vpop.f32.mrf.mxu0
      %v4438 = vadd.f32 0.0, %v4437
      %4439 = vmatmul.bf16.gmra.mxu0 %v4364
      %v4440 = vpop.f32.mrf.mxu0
      %v4441 = vadd.f32 0.0, %v4440
      %v4442 = vpop.f32.mrf.mxu0
      %v4443 = vadd.f32 0.0, %v4442
      %4444 = vmatmul.bf16.gmra.mxu0 %v4367
      %v4445 = vpop.f32.mrf.mxu0
      %v4446 = vadd.f32 0.0, %v4445
      %v4447 = vpop.f32.mrf.mxu0
      %v4448 = vadd.f32 0.0, %v4447
      %4449 = vmatmul.bf16.gmra.mxu0 %v4370
      %v4450 = vpop.f32.mrf.mxu0
      %v4451 = vadd.f32 0.0, %v4450
      %v4452 = vpop.f32.mrf.mxu0
      %v4453 = vadd.f32 0.0, %v4452
      %4454 = vmatmul.bf16.gmra.mxu0 %v4373
      %v4455 = vpop.f32.mrf.mxu0
      %v4456 = vadd.f32 0.0, %v4455
      %v4457 = vpop.f32.mrf.mxu0
      %v4458 = vadd.f32 0.0, %v4457
      %4459 = vmatmul.bf16.gmra.mxu0 %v4376
      %v4460 = vpop.f32.mrf.mxu0
      %v4461 = vadd.f32 0.0, %v4460
      %v4462 = vpop.f32.mrf.mxu0
      %v4463 = vadd.f32 0.0, %v4462
      %4464 = vmatmul.bf16.gmra.mxu0 %v4379
      %v4465 = vpop.f32.mrf.mxu0
      %v4466 = vadd.f32 0.0, %v4465
      %v4467 = vpop.f32.mrf.mxu0
      %v4468 = vadd.f32 0.0, %v4467
      %4469 = vdwg.mxu0
      %v4470 = vadd.f32 %v4189, %v4391
      %v4471 = vadd.f32 %v4191, %v4393
      %v4472 = vadd.f32 %v4194, %v4396
      %v4473 = vadd.f32 %v4196, %v4398
      %v4474 = vadd.f32 %v4199, %v4401
      %v4475 = vadd.f32 %v4201, %v4403
      %v4476 = vadd.f32 %v4204, %v4406
      %v4477 = vadd.f32 %v4206, %v4408
      %v4478 = vadd.f32 %v4209, %v4411
      %v4479 = vadd.f32 %v4211, %v4413
      %v4480 = vadd.f32 %v4214, %v4416
      %v4481 = vadd.f32 %v4216, %v4418
      %v4482 = vadd.f32 %v4219, %v4421
      %v4483 = vadd.f32 %v4221, %v4423
      %v4484 = vadd.f32 %v4224, %v4426
      %v4485 = vadd.f32 %v4226, %v4428
      %v4486 = vadd.f32 %v4229, %v4431
      %v4487 = vadd.f32 %v4231, %v4433
      %v4488 = vadd.f32 %v4234, %v4436
      %v4489 = vadd.f32 %v4236, %v4438
      %v4490 = vadd.f32 %v4239, %v4441
      %v4491 = vadd.f32 %v4241, %v4443
      %v4492 = vadd.f32 %v4244, %v4446
      %v4493 = vadd.f32 %v4246, %v4448
      %v4494 = vadd.f32 %v4249, %v4451
      %v4495 = vadd.f32 %v4251, %v4453
      %v4496 = vadd.f32 %v4254, %v4456
      %v4497 = vadd.f32 %v4256, %v4458
      %v4498 = vadd.f32 %v4259, %v4461
      %v4499 = vadd.f32 %v4261, %v4463
      %v4500 = vadd.f32 %v4264, %v4466
      %v4501 = vadd.f32 %v4266, %v4468
      %v4502 = vpack.c.bf16 %v3802, %v3801
      %v4503 = vpack.c.bf16 %v3804, %v3803
      %v4504 = vpack.c.bf16 %v3806, %v3805
      %v4505 = vpack.c.bf16 %v3808, %v3807
      %v4506 = vpack.c.bf16 %v3810, %v3809
      %v4507 = vpack.c.bf16 %v3812, %v3811
      %v4508 = vpack.c.bf16 %v3814, %v3813
      %v4509 = vpack.c.bf16 %v3816, %v3815
      %v4510 = vpack.c.bf16 %v3818, %v3817
      %v4511 = vpack.c.bf16 %v3820, %v3819
      %v4512 = vpack.c.bf16 %v3822, %v3821
      %v4513 = vpack.c.bf16 %v3824, %v3823
      %v4514 = vpack.c.bf16 %v3826, %v3825
      %v4515 = vpack.c.bf16 %v3828, %v3827
      %v4516 = vpack.c.bf16 %v3830, %v3829
      %v4517 = vpack.c.bf16 0.0, %v3831
      %s4518 = scalar_lea.vmem %s2, 192
      %v4519 = vld [vmem:[%s4518] sm:$0xf]
      %v4520 = vld [vmem:[%s4518 + $0x4] sm:$0xf]
      %v4521 = vld [vmem:[%s4518 + $0x8] sm:$0xf]
      %v4522 = vld [vmem:[%s4518 + $0xc] sm:$0xf]
      %v4524 = vshrl.u32 %v4502, 16
      %v4526 = vrot.slane %v4524, 1
      %v4527 = vshll.u32 %v4502, 16
      %v4529 = vrot.slane %v4527, 2
      %v4530 = vor.u32 %v4526, %v4529
      %v4532 = vshrl.u32 %v4503, 16
      %v4534 = vrot.slane %v4532, 1
      %v4535 = vshll.u32 %v4503, 16
      %v4537 = vrot.slane %v4535, 2
      %v4538 = vor.u32 %v4534, %v4537
      %v4539 = vsel %vm1828, %v4530, %v4538
      %v4541 = vshrl.u32 %v4504, 16
      %v4543 = vrot.slane %v4541, 1
      %v4544 = vshll.u32 %v4504, 16
      %v4546 = vrot.slane %v4544, 2
      %v4547 = vor.u32 %v4543, %v4546
      %v4548 = vsel %vm1828, %v4538, %v4547
      %v4550 = vshrl.u32 %v4505, 16
      %v4552 = vrot.slane %v4550, 1
      %v4553 = vshll.u32 %v4505, 16
      %v4555 = vrot.slane %v4553, 2
      %v4556 = vor.u32 %v4552, %v4555
      %v4557 = vsel %vm1828, %v4547, %v4556
      %v4559 = vshrl.u32 %v4506, 16
      %v4561 = vrot.slane %v4559, 1
      %v4562 = vshll.u32 %v4506, 16
      %v4564 = vrot.slane %v4562, 2
      %v4565 = vor.u32 %v4561, %v4564
      %v4566 = vsel %vm1828, %v4556, %v4565
      %v4568 = vshrl.u32 %v4507, 16
      %v4570 = vrot.slane %v4568, 1
      %v4571 = vshll.u32 %v4507, 16
      %v4573 = vrot.slane %v4571, 2
      %v4574 = vor.u32 %v4570, %v4573
      %v4575 = vsel %vm1828, %v4565, %v4574
      %v4577 = vshrl.u32 %v4508, 16
      %v4579 = vrot.slane %v4577, 1
      %v4580 = vshll.u32 %v4508, 16
      %v4582 = vrot.slane %v4580, 2
      %v4583 = vor.u32 %v4579, %v4582
      %v4584 = vsel %vm1828, %v4574, %v4583
      %v4586 = vshrl.u32 %v4509, 16
      %v4588 = vrot.slane %v4586, 1
      %v4589 = vshll.u32 %v4509, 16
      %v4591 = vrot.slane %v4589, 2
      %v4592 = vor.u32 %v4588, %v4591
      %v4593 = vsel %vm1828, %v4583, %v4592
      %v4595 = vshrl.u32 %v4510, 16
      %v4597 = vrot.slane %v4595, 1
      %v4598 = vshll.u32 %v4510, 16
      %v4600 = vrot.slane %v4598, 2
      %v4601 = vor.u32 %v4597, %v4600
      %v4602 = vsel %vm1828, %v4592, %v4601
      %v4604 = vshrl.u32 %v4511, 16
      %v4606 = vrot.slane %v4604, 1
      %v4607 = vshll.u32 %v4511, 16
      %v4609 = vrot.slane %v4607, 2
      %v4610 = vor.u32 %v4606, %v4609
      %v4611 = vsel %vm1828, %v4601, %v4610
      %v4613 = vshrl.u32 %v4512, 16
      %v4615 = vrot.slane %v4613, 1
      %v4616 = vshll.u32 %v4512, 16
      %v4618 = vrot.slane %v4616, 2
      %v4619 = vor.u32 %v4615, %v4618
      %v4620 = vsel %vm1828, %v4610, %v4619
      %v4622 = vshrl.u32 %v4513, 16
      %v4624 = vrot.slane %v4622, 1
      %v4625 = vshll.u32 %v4513, 16
      %v4627 = vrot.slane %v4625, 2
      %v4628 = vor.u32 %v4624, %v4627
      %v4629 = vsel %vm1828, %v4619, %v4628
      %v4631 = vshrl.u32 %v4514, 16
      %v4633 = vrot.slane %v4631, 1
      %v4634 = vshll.u32 %v4514, 16
      %v4636 = vrot.slane %v4634, 2
      %v4637 = vor.u32 %v4633, %v4636
      %v4638 = vsel %vm1828, %v4628, %v4637
      %v4640 = vshrl.u32 %v4515, 16
      %v4642 = vrot.slane %v4640, 1
      %v4643 = vshll.u32 %v4515, 16
      %v4645 = vrot.slane %v4643, 2
      %v4646 = vor.u32 %v4642, %v4645
      %v4647 = vsel %vm1828, %v4637, %v4646
      %v4649 = vshrl.u32 %v4516, 16
      %v4651 = vrot.slane %v4649, 1
      %v4652 = vshll.u32 %v4516, 16
      %v4654 = vrot.slane %v4652, 2
      %v4655 = vor.u32 %v4651, %v4654
      %v4656 = vsel %vm1828, %v4646, %v4655
      %v4658 = vshrl.u32 %v4517, 16
      %v4660 = vrot.slane %v4658, 1
      %v4661 = vshll.u32 %v4517, 16
      %v4663 = vrot.slane %v4661, 2
      %v4664 = vor.u32 %v4660, %v4663
      %v4665 = vsel %vm1828, %v4655, %v4664
      %v4666 = vsel %vm1828, %v4664, %v1976
      %v4671 = vunpack.c.l.b16 %v4519
      %v4672 = vunpack.c.l.b16 %v4520
      %v4673 = vunpack.c.l.b16 %v4521
      %v4674 = vunpack.c.l.b16 %v4522
      %v4675 = vpack.c.b16 %v4672, %v4671
      %v4676 = vpack.c.b16 %v4674, %v4673
      %v4680 = vsel %vm733, %v4539, 0
      %v4683 = vsel %vm733, %v4548, 0
      %v4686 = vsel %vm733, %v4557, 0
      %v4689 = vsel %vm733, %v4566, 0
      %v4692 = vsel %vm733, %v4575, 0
      %v4695 = vsel %vm733, %v4584, 0
      %v4698 = vsel %vm733, %v4593, 0
      %v4701 = vsel %vm733, %v4602, 0
      %v4704 = vsel %vm733, %v4611, 0
      %v4707 = vsel %vm733, %v4620, 0
      %v4710 = vsel %vm733, %v4629, 0
      %v4713 = vsel %vm733, %v4638, 0
      %v4716 = vsel %vm733, %v4647, 0
      %v4719 = vsel %vm733, %v4656, 0
      %v4722 = vsel %vm733, %v4665, 0
      %v4725 = vsel %vm733, %v4666, 0
      %4727 = vmatpush.bf16.msra.mxu0 0
      %4728 = vmatpush.bf16.msra.mxu0 0
      %4729 = vmatpush.bf16.msra.mxu0 0
      %4730 = vmatpush.bf16.msra.mxu0 0
      %4731 = vmatpush.bf16.msra.mxu0 0
      %4732 = vmatpush.bf16.msra.mxu0 0
      %4733 = vmatpush.bf16.msra.mxu0 %v4676
      %4734 = vmatpush.bf16.msra.mxu0 %v4675
      %4735 = vmatmul.bf16.gmra.mxu0 %v4680
      %v4736 = vpop.f32.mrf.mxu0
      %v4737 = vadd.f32 0.0, %v4736
      %v4738 = vpop.f32.mrf.mxu0
      %v4739 = vadd.f32 0.0, %v4738
      %4740 = vmatmul.bf16.gmra.mxu0 %v4683
      %v4741 = vpop.f32.mrf.mxu0
      %v4742 = vadd.f32 0.0, %v4741
      %v4743 = vpop.f32.mrf.mxu0
      %v4744 = vadd.f32 0.0, %v4743
      %4745 = vmatmul.bf16.gmra.mxu0 %v4686
      %v4746 = vpop.f32.mrf.mxu0
      %v4747 = vadd.f32 0.0, %v4746
      %v4748 = vpop.f32.mrf.mxu0
      %v4749 = vadd.f32 0.0, %v4748
      %4750 = vmatmul.bf16.gmra.mxu0 %v4689
      %v4751 = vpop.f32.mrf.mxu0
      %v4752 = vadd.f32 0.0, %v4751
      %v4753 = vpop.f32.mrf.mxu0
      %v4754 = vadd.f32 0.0, %v4753
      %4755 = vmatmul.bf16.gmra.mxu0 %v4692
      %v4756 = vpop.f32.mrf.mxu0
      %v4757 = vadd.f32 0.0, %v4756
      %v4758 = vpop.f32.mrf.mxu0
      %v4759 = vadd.f32 0.0, %v4758
      %4760 = vmatmul.bf16.gmra.mxu0 %v4695
      %v4761 = vpop.f32.mrf.mxu0
      %v4762 = vadd.f32 0.0, %v4761
      %v4763 = vpop.f32.mrf.mxu0
      %v4764 = vadd.f32 0.0, %v4763
      %4765 = vmatmul.bf16.gmra.mxu0 %v4698
      %v4766 = vpop.f32.mrf.mxu0
      %v4767 = vadd.f32 0.0, %v4766
      %v4768 = vpop.f32.mrf.mxu0
      %v4769 = vadd.f32 0.0, %v4768
      %4770 = vmatmul.bf16.gmra.mxu0 %v4701
      %v4771 = vpop.f32.mrf.mxu0
      %v4772 = vadd.f32 0.0, %v4771
      %v4773 = vpop.f32.mrf.mxu0
      %v4774 = vadd.f32 0.0, %v4773
      %4775 = vmatmul.bf16.gmra.mxu0 %v4704
      %v4776 = vpop.f32.mrf.mxu0
      %v4777 = vadd.f32 0.0, %v4776
      %v4778 = vpop.f32.mrf.mxu0
      %v4779 = vadd.f32 0.0, %v4778
      %4780 = vmatmul.bf16.gmra.mxu0 %v4707
      %v4781 = vpop.f32.mrf.mxu0
      %v4782 = vadd.f32 0.0, %v4781
      %v4783 = vpop.f32.mrf.mxu0
      %v4784 = vadd.f32 0.0, %v4783
      %4785 = vmatmul.bf16.gmra.mxu0 %v4710
      %v4786 = vpop.f32.mrf.mxu0
      %v4787 = vadd.f32 0.0, %v4786
      %v4788 = vpop.f32.mrf.mxu0
      %v4789 = vadd.f32 0.0, %v4788
      %4790 = vmatmul.bf16.gmra.mxu0 %v4713
      %v4791 = vpop.f32.mrf.mxu0
      %v4792 = vadd.f32 0.0, %v4791
      %v4793 = vpop.f32.mrf.mxu0
      %v4794 = vadd.f32 0.0, %v4793
      %4795 = vmatmul.bf16.gmra.mxu0 %v4716
      %v4796 = vpop.f32.mrf.mxu0
      %v4797 = vadd.f32 0.0, %v4796
      %v4798 = vpop.f32.mrf.mxu0
      %v4799 = vadd.f32 0.0, %v4798
      %4800 = vmatmul.bf16.gmra.mxu0 %v4719
      %v4801 = vpop.f32.mrf.mxu0
      %v4802 = vadd.f32 0.0, %v4801
      %v4803 = vpop.f32.mrf.mxu0
      %v4804 = vadd.f32 0.0, %v4803
      %4805 = vmatmul.bf16.gmra.mxu0 %v4722
      %v4806 = vpop.f32.mrf.mxu0
      %v4807 = vadd.f32 0.0, %v4806
      %v4808 = vpop.f32.mrf.mxu0
      %v4809 = vadd.f32 0.0, %v4808
      %4810 = vmatmul.bf16.gmra.mxu0 %v4725
      %v4811 = vpop.f32.mrf.mxu0
      %v4812 = vadd.f32 0.0, %v4811
      %v4813 = vpop.f32.mrf.mxu0
      %v4814 = vadd.f32 0.0, %v4813
      %4815 = vdwg.mxu0
      %v4816 = vadd.f32 %v4470, %v4737
      %v4817 = vadd.f32 %v4471, %v4739
      %v4818 = vadd.f32 %v4472, %v4742
      %v4819 = vadd.f32 %v4473, %v4744
      %v4820 = vadd.f32 %v4474, %v4747
      %v4821 = vadd.f32 %v4475, %v4749
      %v4822 = vadd.f32 %v4476, %v4752
      %v4823 = vadd.f32 %v4477, %v4754
      %v4824 = vadd.f32 %v4478, %v4757
      %v4825 = vadd.f32 %v4479, %v4759
      %v4826 = vadd.f32 %v4480, %v4762
      %v4827 = vadd.f32 %v4481, %v4764
      %v4828 = vadd.f32 %v4482, %v4767
      %v4829 = vadd.f32 %v4483, %v4769
      %v4830 = vadd.f32 %v4484, %v4772
      %v4831 = vadd.f32 %v4485, %v4774
      %v4832 = vadd.f32 %v4486, %v4777
      %v4833 = vadd.f32 %v4487, %v4779
      %v4834 = vadd.f32 %v4488, %v4782
      %v4835 = vadd.f32 %v4489, %v4784
      %v4836 = vadd.f32 %v4490, %v4787
      %v4837 = vadd.f32 %v4491, %v4789
      %v4838 = vadd.f32 %v4492, %v4792
      %v4839 = vadd.f32 %v4493, %v4794
      %v4840 = vadd.f32 %v4494, %v4797
      %v4841 = vadd.f32 %v4495, %v4799
      %v4842 = vadd.f32 %v4496, %v4802
      %v4843 = vadd.f32 %v4497, %v4804
      %v4844 = vadd.f32 %v4498, %v4807
      %v4845 = vadd.f32 %v4499, %v4809
      %v4846 = vadd.f32 %v4500, %v4812
      %v4847 = vadd.f32 %v4501, %v4814
      %s4848 = scalar_lea.vmem %s2, 208
      %v4849 = vld [vmem:[%s4848] sm:$0xf]
      %v4850 = vld [vmem:[%s4848 + $0x4] sm:$0xf]
      %v4851 = vld [vmem:[%s4848 + $0x8] sm:$0xf]
      %v4852 = vld [vmem:[%s4848 + $0xc] sm:$0xf]
      %v4869 = vrot.slane %v4502, 2
      %v4870 = vrot.slane %v4503, 2
      %v4871 = vsel %vm2180, %v4869, %v4870
      %v4872 = vrot.slane %v4504, 2
      %v4873 = vsel %vm2180, %v4870, %v4872
      %v4874 = vrot.slane %v4505, 2
      %v4875 = vsel %vm2180, %v4872, %v4874
      %v4876 = vrot.slane %v4506, 2
      %v4877 = vsel %vm2180, %v4874, %v4876
      %v4878 = vrot.slane %v4507, 2
      %v4879 = vsel %vm2180, %v4876, %v4878
      %v4880 = vrot.slane %v4508, 2
      %v4881 = vsel %vm2180, %v4878, %v4880
      %v4882 = vrot.slane %v4509, 2
      %v4883 = vsel %vm2180, %v4880, %v4882
      %v4884 = vrot.slane %v4510, 2
      %v4885 = vsel %vm2180, %v4882, %v4884
      %v4886 = vrot.slane %v4511, 2
      %v4887 = vsel %vm2180, %v4884, %v4886
      %v4888 = vrot.slane %v4512, 2
      %v4889 = vsel %vm2180, %v4886, %v4888
      %v4890 = vrot.slane %v4513, 2
      %v4891 = vsel %vm2180, %v4888, %v4890
      %v4892 = vrot.slane %v4514, 2
      %v4893 = vsel %vm2180, %v4890, %v4892
      %v4894 = vrot.slane %v4515, 2
      %v4895 = vsel %vm2180, %v4892, %v4894
      %v4896 = vrot.slane %v4516, 2
      %v4897 = vsel %vm2180, %v4894, %v4896
      %v4898 = vrot.slane %v4517, 2
      %v4899 = vsel %vm2180, %v4896, %v4898
      %v4900 = vsel %vm2180, %v4898, %v2212
      %v4905 = vunpack.c.l.b16 %v4849
      %v4906 = vunpack.c.l.b16 %v4850
      %v4907 = vunpack.c.l.b16 %v4851
      %v4908 = vunpack.c.l.b16 %v4852
      %v4909 = vpack.c.b16 %v4906, %v4905
      %v4910 = vpack.c.b16 %v4908, %v4907
      %v4914 = vsel %vm733, %v4871, 0
      %v4917 = vsel %vm733, %v4873, 0
      %v4920 = vsel %vm733, %v4875, 0
      %v4923 = vsel %vm733, %v4877, 0
      %v4926 = vsel %vm733, %v4879, 0
      %v4929 = vsel %vm733, %v4881, 0
      %v4932 = vsel %vm733, %v4883, 0
      %v4935 = vsel %vm733, %v4885, 0
      %v4938 = vsel %vm733, %v4887, 0
      %v4941 = vsel %vm733, %v4889, 0
      %v4944 = vsel %vm733, %v4891, 0
      %v4947 = vsel %vm733, %v4893, 0
      %v4950 = vsel %vm733, %v4895, 0
      %v4953 = vsel %vm733, %v4897, 0
      %v4956 = vsel %vm733, %v4899, 0
      %v4959 = vsel %vm733, %v4900, 0
      %4961 = vmatpush.bf16.msra.mxu0 0
      %4962 = vmatpush.bf16.msra.mxu0 0
      %4963 = vmatpush.bf16.msra.mxu0 0
      %4964 = vmatpush.bf16.msra.mxu0 0
      %4965 = vmatpush.bf16.msra.mxu0 0
      %4966 = vmatpush.bf16.msra.mxu0 0
      %4967 = vmatpush.bf16.msra.mxu0 %v4910
      %4968 = vmatpush.bf16.msra.mxu0 %v4909
      %4969 = vmatmul.bf16.gmra.mxu0 %v4914
      %v4970 = vpop.f32.mrf.mxu0
      %v4971 = vadd.f32 0.0, %v4970
      %v4972 = vpop.f32.mrf.mxu0
      %v4973 = vadd.f32 0.0, %v4972
      %4974 = vmatmul.bf16.gmra.mxu0 %v4917
      %v4975 = vpop.f32.mrf.mxu0
      %v4976 = vadd.f32 0.0, %v4975
      %v4977 = vpop.f32.mrf.mxu0
      %v4978 = vadd.f32 0.0, %v4977
      %4979 = vmatmul.bf16.gmra.mxu0 %v4920
      %v4980 = vpop.f32.mrf.mxu0
      %v4981 = vadd.f32 0.0, %v4980
      %v4982 = vpop.f32.mrf.mxu0
      %v4983 = vadd.f32 0.0, %v4982
      %4984 = vmatmul.bf16.gmra.mxu0 %v4923
      %v4985 = vpop.f32.mrf.mxu0
      %v4986 = vadd.f32 0.0, %v4985
      %v4987 = vpop.f32.mrf.mxu0
      %v4988 = vadd.f32 0.0, %v4987
      %4989 = vmatmul.bf16.gmra.mxu0 %v4926
      %v4990 = vpop.f32.mrf.mxu0
      %v4991 = vadd.f32 0.0, %v4990
      %v4992 = vpop.f32.mrf.mxu0
      %v4993 = vadd.f32 0.0, %v4992
      %4994 = vmatmul.bf16.gmra.mxu0 %v4929
      %v4995 = vpop.f32.mrf.mxu0
      %v4996 = vadd.f32 0.0, %v4995
      %v4997 = vpop.f32.mrf.mxu0
      %v4998 = vadd.f32 0.0, %v4997
      %4999 = vmatmul.bf16.gmra.mxu0 %v4932
      %v5000 = vpop.f32.mrf.mxu0
      %v5001 = vadd.f32 0.0, %v5000
      %v5002 = vpop.f32.mrf.mxu0
      %v5003 = vadd.f32 0.0, %v5002
      %5004 = vmatmul.bf16.gmra.mxu0 %v4935
      %v5005 = vpop.f32.mrf.mxu0
      %v5006 = vadd.f32 0.0, %v5005
      %v5007 = vpop.f32.mrf.mxu0
      %v5008 = vadd.f32 0.0, %v5007
      %5009 = vmatmul.bf16.gmra.mxu0 %v4938
      %v5010 = vpop.f32.mrf.mxu0
      %v5011 = vadd.f32 0.0, %v5010
      %v5012 = vpop.f32.mrf.mxu0
      %v5013 = vadd.f32 0.0, %v5012
      %5014 = vmatmul.bf16.gmra.mxu0 %v4941
      %v5015 = vpop.f32.mrf.mxu0
      %v5016 = vadd.f32 0.0, %v5015
      %v5017 = vpop.f32.mrf.mxu0
      %v5018 = vadd.f32 0.0, %v5017
      %5019 = vmatmul.bf16.gmra.mxu0 %v4944
      %v5020 = vpop.f32.mrf.mxu0
      %v5021 = vadd.f32 0.0, %v5020
      %v5022 = vpop.f32.mrf.mxu0
      %v5023 = vadd.f32 0.0, %v5022
      %5024 = vmatmul.bf16.gmra.mxu0 %v4947
      %v5025 = vpop.f32.mrf.mxu0
      %v5026 = vadd.f32 0.0, %v5025
      %v5027 = vpop.f32.mrf.mxu0
      %v5028 = vadd.f32 0.0, %v5027
      %5029 = vmatmul.bf16.gmra.mxu0 %v4950
      %v5030 = vpop.f32.mrf.mxu0
      %v5031 = vadd.f32 0.0, %v5030
      %v5032 = vpop.f32.mrf.mxu0
      %v5033 = vadd.f32 0.0, %v5032
      %5034 = vmatmul.bf16.gmra.mxu0 %v4953
      %v5035 = vpop.f32.mrf.mxu0
      %v5036 = vadd.f32 0.0, %v5035
      %v5037 = vpop.f32.mrf.mxu0
      %v5038 = vadd.f32 0.0, %v5037
      %5039 = vmatmul.bf16.gmra.mxu0 %v4956
      %v5040 = vpop.f32.mrf.mxu0
      %v5041 = vadd.f32 0.0, %v5040
      %v5042 = vpop.f32.mrf.mxu0
      %v5043 = vadd.f32 0.0, %v5042
      %5044 = vmatmul.bf16.gmra.mxu0 %v4959
      %v5045 = vpop.f32.mrf.mxu0
      %v5046 = vadd.f32 0.0, %v5045
      %v5047 = vpop.f32.mrf.mxu0
      %v5048 = vadd.f32 0.0, %v5047
      %5049 = vdwg.mxu0
      %v5050 = vadd.f32 %v4816, %v4971
      %v5051 = vadd.f32 %v4817, %v4973
      %v5052 = vadd.f32 %v4818, %v4976
      %v5053 = vadd.f32 %v4819, %v4978
      %v5054 = vadd.f32 %v4820, %v4981
      %v5055 = vadd.f32 %v4821, %v4983
      %v5056 = vadd.f32 %v4822, %v4986
      %v5057 = vadd.f32 %v4823, %v4988
      %v5058 = vadd.f32 %v4824, %v4991
      %v5059 = vadd.f32 %v4825, %v4993
      %v5060 = vadd.f32 %v4826, %v4996
      %v5061 = vadd.f32 %v4827, %v4998
      %v5062 = vadd.f32 %v4828, %v5001
      %v5063 = vadd.f32 %v4829, %v5003
      %v5064 = vadd.f32 %v4830, %v5006
      %v5065 = vadd.f32 %v4831, %v5008
      %v5066 = vadd.f32 %v4832, %v5011
      %v5067 = vadd.f32 %v4833, %v5013
      %v5068 = vadd.f32 %v4834, %v5016
      %v5069 = vadd.f32 %v4835, %v5018
      %v5070 = vadd.f32 %v4836, %v5021
      %v5071 = vadd.f32 %v4837, %v5023
      %v5072 = vadd.f32 %v4838, %v5026
      %v5073 = vadd.f32 %v4839, %v5028
      %v5074 = vadd.f32 %v4840, %v5031
      %v5075 = vadd.f32 %v4841, %v5033
      %v5076 = vadd.f32 %v4842, %v5036
      %v5077 = vadd.f32 %v4843, %v5038
      %v5078 = vadd.f32 %v4844, %v5041
      %v5079 = vadd.f32 %v4845, %v5043
      %v5080 = vadd.f32 %v4846, %v5046
      %v5081 = vadd.f32 %v4847, %v5048
      %s5082 = scalar_lea.vmem %s2, 224
      %v5083 = vld [vmem:[%s5082] sm:$0xf]
      %v5084 = vld [vmem:[%s5082 + $0x4] sm:$0xf]
      %v5085 = vld [vmem:[%s5082 + $0x8] sm:$0xf]
      %v5086 = vld [vmem:[%s5082 + $0xc] sm:$0xf]
      %v5087 = vrot.slane %v4524, 2
      %v5088 = vrot.slane %v4527, 3
      %v5089 = vor.u32 %v5087, %v5088
      %v5090 = vrot.slane %v4532, 2
      %v5091 = vrot.slane %v4535, 3
      %v5092 = vor.u32 %v5090, %v5091
      %v5093 = vsel %vm2400, %v5089, %v5092
      %v5094 = vrot.slane %v4541, 2
      %v5095 = vrot.slane %v4544, 3
      %v5096 = vor.u32 %v5094, %v5095
      %v5097 = vsel %vm2400, %v5092, %v5096
      %v5098 = vrot.slane %v4550, 2
      %v5099 = vrot.slane %v4553, 3
      %v5100 = vor.u32 %v5098, %v5099
      %v5101 = vsel %vm2400, %v5096, %v5100
      %v5102 = vrot.slane %v4559, 2
      %v5103 = vrot.slane %v4562, 3
      %v5104 = vor.u32 %v5102, %v5103
      %v5105 = vsel %vm2400, %v5100, %v5104
      %v5106 = vrot.slane %v4568, 2
      %v5107 = vrot.slane %v4571, 3
      %v5108 = vor.u32 %v5106, %v5107
      %v5109 = vsel %vm2400, %v5104, %v5108
      %v5110 = vrot.slane %v4577, 2
      %v5111 = vrot.slane %v4580, 3
      %v5112 = vor.u32 %v5110, %v5111
      %v5113 = vsel %vm2400, %v5108, %v5112
      %v5114 = vrot.slane %v4586, 2
      %v5115 = vrot.slane %v4589, 3
      %v5116 = vor.u32 %v5114, %v5115
      %v5117 = vsel %vm2400, %v5112, %v5116
      %v5118 = vrot.slane %v4595, 2
      %v5119 = vrot.slane %v4598, 3
      %v5120 = vor.u32 %v5118, %v5119
      %v5121 = vsel %vm2400, %v5116, %v5120
      %v5122 = vrot.slane %v4604, 2
      %v5123 = vrot.slane %v4607, 3
      %v5124 = vor.u32 %v5122, %v5123
      %v5125 = vsel %vm2400, %v5120, %v5124
      %v5126 = vrot.slane %v4613, 2
      %v5127 = vrot.slane %v4616, 3
      %v5128 = vor.u32 %v5126, %v5127
      %v5129 = vsel %vm2400, %v5124, %v5128
      %v5130 = vrot.slane %v4622, 2
      %v5131 = vrot.slane %v4625, 3
      %v5132 = vor.u32 %v5130, %v5131
      %v5133 = vsel %vm2400, %v5128, %v5132
      %v5134 = vrot.slane %v4631, 2
      %v5135 = vrot.slane %v4634, 3
      %v5136 = vor.u32 %v5134, %v5135
      %v5137 = vsel %vm2400, %v5132, %v5136
      %v5138 = vrot.slane %v4640, 2
      %v5139 = vrot.slane %v4643, 3
      %v5140 = vor.u32 %v5138, %v5139
      %v5141 = vsel %vm2400, %v5136, %v5140
      %v5142 = vrot.slane %v4649, 2
      %v5143 = vrot.slane %v4652, 3
      %v5144 = vor.u32 %v5142, %v5143
      %v5145 = vsel %vm2400, %v5140, %v5144
      %v5146 = vrot.slane %v4658, 2
      %v5147 = vrot.slane %v4661, 3
      %v5148 = vor.u32 %v5146, %v5147
      %v5149 = vsel %vm2400, %v5144, %v5148
      %v5150 = vsel %vm2400, %v5148, %v2466
      %v5155 = vunpack.c.l.b16 %v5083
      %v5156 = vunpack.c.l.b16 %v5084
      %v5157 = vunpack.c.l.b16 %v5085
      %v5158 = vunpack.c.l.b16 %v5086
      %v5159 = vpack.c.b16 %v5156, %v5155
      %v5160 = vpack.c.b16 %v5158, %v5157
      %v5164 = vsel %vm733, %v5093, 0
      %v5167 = vsel %vm733, %v5097, 0
      %v5170 = vsel %vm733, %v5101, 0
      %v5173 = vsel %vm733, %v5105, 0
      %v5176 = vsel %vm733, %v5109, 0
      %v5179 = vsel %vm733, %v5113, 0
      %v5182 = vsel %vm733, %v5117, 0
      %v5185 = vsel %vm733, %v5121, 0
      %v5188 = vsel %vm733, %v5125, 0
      %v5191 = vsel %vm733, %v5129, 0
      %v5194 = vsel %vm733, %v5133, 0
      %v5197 = vsel %vm733, %v5137, 0
      %v5200 = vsel %vm733, %v5141, 0
      %v5203 = vsel %vm733, %v5145, 0
      %v5206 = vsel %vm733, %v5149, 0
      %v5209 = vsel %vm733, %v5150, 0
      %5211 = vmatpush.bf16.msra.mxu0 0
      %5212 = vmatpush.bf16.msra.mxu0 0
      %5213 = vmatpush.bf16.msra.mxu0 0
      %5214 = vmatpush.bf16.msra.mxu0 0
      %5215 = vmatpush.bf16.msra.mxu0 0
      %5216 = vmatpush.bf16.msra.mxu0 0
      %5217 = vmatpush.bf16.msra.mxu0 %v5160
      %5218 = vmatpush.bf16.msra.mxu0 %v5159
      %5219 = vmatmul.bf16.gmra.mxu0 %v5164
      %v5220 = vpop.f32.mrf.mxu0
      %v5221 = vadd.f32 0.0, %v5220
      %v5222 = vpop.f32.mrf.mxu0
      %v5223 = vadd.f32 0.0, %v5222
      %5224 = vmatmul.bf16.gmra.mxu0 %v5167
      %v5225 = vpop.f32.mrf.mxu0
      %v5226 = vadd.f32 0.0, %v5225
      %v5227 = vpop.f32.mrf.mxu0
      %v5228 = vadd.f32 0.0, %v5227
      %5229 = vmatmul.bf16.gmra.mxu0 %v5170
      %v5230 = vpop.f32.mrf.mxu0
      %v5231 = vadd.f32 0.0, %v5230
      %v5232 = vpop.f32.mrf.mxu0
      %v5233 = vadd.f32 0.0, %v5232
      %5234 = vmatmul.bf16.gmra.mxu0 %v5173
      %v5235 = vpop.f32.mrf.mxu0
      %v5236 = vadd.f32 0.0, %v5235
      %v5237 = vpop.f32.mrf.mxu0
      %v5238 = vadd.f32 0.0, %v5237
      %5239 = vmatmul.bf16.gmra.mxu0 %v5176
      %v5240 = vpop.f32.mrf.mxu0
      %v5241 = vadd.f32 0.0, %v5240
      %v5242 = vpop.f32.mrf.mxu0
      %v5243 = vadd.f32 0.0, %v5242
      %5244 = vmatmul.bf16.gmra.mxu0 %v5179
      %v5245 = vpop.f32.mrf.mxu0
      %v5246 = vadd.f32 0.0, %v5245
      %v5247 = vpop.f32.mrf.mxu0
      %v5248 = vadd.f32 0.0, %v5247
      %5249 = vmatmul.bf16.gmra.mxu0 %v5182
      %v5250 = vpop.f32.mrf.mxu0
      %v5251 = vadd.f32 0.0, %v5250
      %v5252 = vpop.f32.mrf.mxu0
      %v5253 = vadd.f32 0.0, %v5252
      %5254 = vmatmul.bf16.gmra.mxu0 %v5185
      %v5255 = vpop.f32.mrf.mxu0
      %v5256 = vadd.f32 0.0, %v5255
      %v5257 = vpop.f32.mrf.mxu0
      %v5258 = vadd.f32 0.0, %v5257
      %5259 = vmatmul.bf16.gmra.mxu0 %v5188
      %v5260 = vpop.f32.mrf.mxu0
      %v5261 = vadd.f32 0.0, %v5260
      %v5262 = vpop.f32.mrf.mxu0
      %v5263 = vadd.f32 0.0, %v5262
      %5264 = vmatmul.bf16.gmra.mxu0 %v5191
      %v5265 = vpop.f32.mrf.mxu0
      %v5266 = vadd.f32 0.0, %v5265
      %v5267 = vpop.f32.mrf.mxu0
      %v5268 = vadd.f32 0.0, %v5267
      %5269 = vmatmul.bf16.gmra.mxu0 %v5194
      %v5270 = vpop.f32.mrf.mxu0
      %v5271 = vadd.f32 0.0, %v5270
      %v5272 = vpop.f32.mrf.mxu0
      %v5273 = vadd.f32 0.0, %v5272
      %5274 = vmatmul.bf16.gmra.mxu0 %v5197
      %v5275 = vpop.f32.mrf.mxu0
      %v5276 = vadd.f32 0.0, %v5275
      %v5277 = vpop.f32.mrf.mxu0
      %v5278 = vadd.f32 0.0, %v5277
      %5279 = vmatmul.bf16.gmra.mxu0 %v5200
      %v5280 = vpop.f32.mrf.mxu0
      %v5281 = vadd.f32 0.0, %v5280
      %v5282 = vpop.f32.mrf.mxu0
      %v5283 = vadd.f32 0.0, %v5282
      %5284 = vmatmul.bf16.gmra.mxu0 %v5203
      %v5285 = vpop.f32.mrf.mxu0
      %v5286 = vadd.f32 0.0, %v5285
      %v5287 = vpop.f32.mrf.mxu0
      %v5288 = vadd.f32 0.0, %v5287
      %5289 = vmatmul.bf16.gmra.mxu0 %v5206
      %v5290 = vpop.f32.mrf.mxu0
      %v5291 = vadd.f32 0.0, %v5290
      %v5292 = vpop.f32.mrf.mxu0
      %v5293 = vadd.f32 0.0, %v5292
      %5294 = vmatmul.bf16.gmra.mxu0 %v5209
      %v5295 = vpop.f32.mrf.mxu0
      %v5296 = vadd.f32 0.0, %v5295
      %v5297 = vpop.f32.mrf.mxu0
      %v5298 = vadd.f32 0.0, %v5297
      %5299 = vdwg.mxu0
      %v5300 = vadd.f32 %v5050, %v5221
      %v5301 = vadd.f32 %v5051, %v5223
      %v5302 = vadd.f32 %v5052, %v5226
      %v5303 = vadd.f32 %v5053, %v5228
      %v5304 = vadd.f32 %v5054, %v5231
      %v5305 = vadd.f32 %v5055, %v5233
      %v5306 = vadd.f32 %v5056, %v5236
      %v5307 = vadd.f32 %v5057, %v5238
      %v5308 = vadd.f32 %v5058, %v5241
      %v5309 = vadd.f32 %v5059, %v5243
      %v5310 = vadd.f32 %v5060, %v5246
      %v5311 = vadd.f32 %v5061, %v5248
      %v5312 = vadd.f32 %v5062, %v5251
      %v5313 = vadd.f32 %v5063, %v5253
      %v5314 = vadd.f32 %v5064, %v5256
      %v5315 = vadd.f32 %v5065, %v5258
      %v5316 = vadd.f32 %v5066, %v5261
      %v5317 = vadd.f32 %v5067, %v5263
      %v5318 = vadd.f32 %v5068, %v5266
      %v5319 = vadd.f32 %v5069, %v5268
      %v5320 = vadd.f32 %v5070, %v5271
      %v5321 = vadd.f32 %v5071, %v5273
      %v5322 = vadd.f32 %v5072, %v5276
      %v5323 = vadd.f32 %v5073, %v5278
      %v5324 = vadd.f32 %v5074, %v5281
      %v5325 = vadd.f32 %v5075, %v5283
      %v5326 = vadd.f32 %v5076, %v5286
      %v5327 = vadd.f32 %v5077, %v5288
      %v5328 = vadd.f32 %v5078, %v5291
      %v5329 = vadd.f32 %v5079, %v5293
      %v5330 = vadd.f32 %v5080, %v5296
      %v5331 = vadd.f32 %v5081, %v5298
      %s5332 = scalar_lea.vmem %s2, 240
      %v5333 = vld [vmem:[%s5332] sm:$0xf]
      %v5334 = vld [vmem:[%s5332 + $0x4] sm:$0xf]
      %v5335 = vld [vmem:[%s5332 + $0x8] sm:$0xf]
      %v5336 = vld [vmem:[%s5332 + $0xc] sm:$0xf]
      %v5337 = vrot.slane %v3833, 3
      %v5338 = vrot.slane %v3834, 3
      %v5339 = vsel %vm2654, %v5337, %v5338
      %v5340 = vrot.slane %v3835, 3
      %v5341 = vsel %vm2654, %v5338, %v5340
      %v5342 = vrot.slane %v3836, 3
      %v5343 = vsel %vm2654, %v5340, %v5342
      %v5344 = vrot.slane %v3837, 3
      %v5345 = vsel %vm2654, %v5342, %v5344
      %v5346 = vrot.slane %v3838, 3
      %v5347 = vsel %vm2654, %v5344, %v5346
      %v5348 = vrot.slane %v3839, 3
      %v5349 = vsel %vm2654, %v5346, %v5348
      %v5350 = vrot.slane %v3840, 3
      %v5351 = vsel %vm2654, %v5348, %v5350
      %v5352 = vrot.slane %v3841, 3
      %v5353 = vsel %vm2654, %v5350, %v5352
      %v5354 = vrot.slane %v3842, 3
      %v5355 = vsel %vm2654, %v5352, %v5354
      %v5356 = vrot.slane %v3843, 3
      %v5357 = vsel %vm2654, %v5354, %v5356
      %v5358 = vrot.slane %v3844, 3
      %v5359 = vsel %vm2654, %v5356, %v5358
      %v5360 = vrot.slane %v3845, 3
      %v5361 = vsel %vm2654, %v5358, %v5360
      %v5362 = vrot.slane %v3846, 3
      %v5363 = vsel %vm2654, %v5360, %v5362
      %v5364 = vrot.slane %v3847, 3
      %v5365 = vsel %vm2654, %v5362, %v5364
      %v5366 = vsel %vm2654, %v5364, %v2684
      %v5371 = vunpack.c.l.b16 %v5333
      %v5372 = vunpack.c.l.b16 %v5334
      %v5373 = vunpack.c.l.b16 %v5335
      %v5374 = vunpack.c.l.b16 %v5336
      %v5375 = vpack.c.b16 %v5372, %v5371
      %v5376 = vpack.c.b16 %v5374, %v5373
      %v5380 = vsel %vm733, %v5339, 0
      %v5383 = vsel %vm733, %v5341, 0
      %v5386 = vsel %vm733, %v5343, 0
      %v5389 = vsel %vm733, %v5345, 0
      %v5392 = vsel %vm733, %v5347, 0
      %v5395 = vsel %vm733, %v5349, 0
      %v5398 = vsel %vm733, %v5351, 0
      %v5401 = vsel %vm733, %v5353, 0
      %v5404 = vsel %vm733, %v5355, 0
      %v5407 = vsel %vm733, %v5357, 0
      %v5410 = vsel %vm733, %v5359, 0
      %v5413 = vsel %vm733, %v5361, 0
      %v5416 = vsel %vm733, %v5363, 0
      %v5419 = vsel %vm733, %v5365, 0
      %v5422 = vsel %vm733, %v5366, 0
      %5424 = vmatpush.bf16.msra.mxu0 0
      %5425 = vmatpush.bf16.msra.mxu0 0
      %5426 = vmatpush.bf16.msra.mxu0 0
      %5427 = vmatpush.bf16.msra.mxu0 0
      %5428 = vmatpush.bf16.msra.mxu0 0
      %5429 = vmatpush.bf16.msra.mxu0 0
      %5430 = vmatpush.bf16.msra.mxu0 %v5376
      %5431 = vmatpush.bf16.msra.mxu0 %v5375
      %5432 = vmatmul.bf16.gmra.mxu0 %v5380
      %v5433 = vpop.f32.mrf.mxu0
      %v5434 = vadd.f32 0.0, %v5433
      %v5435 = vpop.f32.mrf.mxu0
      %v5436 = vadd.f32 0.0, %v5435
      %5437 = vmatmul.bf16.gmra.mxu0 %v5383
      %v5438 = vpop.f32.mrf.mxu0
      %v5439 = vadd.f32 0.0, %v5438
      %v5440 = vpop.f32.mrf.mxu0
      %v5441 = vadd.f32 0.0, %v5440
      %5442 = vmatmul.bf16.gmra.mxu0 %v5386
      %v5443 = vpop.f32.mrf.mxu0
      %v5444 = vadd.f32 0.0, %v5443
      %v5445 = vpop.f32.mrf.mxu0
      %v5446 = vadd.f32 0.0, %v5445
      %5447 = vmatmul.bf16.gmra.mxu0 %v5389
      %v5448 = vpop.f32.mrf.mxu0
      %v5449 = vadd.f32 0.0, %v5448
      %v5450 = vpop.f32.mrf.mxu0
      %v5451 = vadd.f32 0.0, %v5450
      %5452 = vmatmul.bf16.gmra.mxu0 %v5392
      %v5453 = vpop.f32.mrf.mxu0
      %v5454 = vadd.f32 0.0, %v5453
      %v5455 = vpop.f32.mrf.mxu0
      %v5456 = vadd.f32 0.0, %v5455
      %5457 = vmatmul.bf16.gmra.mxu0 %v5395
      %v5458 = vpop.f32.mrf.mxu0
      %v5459 = vadd.f32 0.0, %v5458
      %v5460 = vpop.f32.mrf.mxu0
      %v5461 = vadd.f32 0.0, %v5460
      %5462 = vmatmul.bf16.gmra.mxu0 %v5398
      %v5463 = vpop.f32.mrf.mxu0
      %v5464 = vadd.f32 0.0, %v5463
      %v5465 = vpop.f32.mrf.mxu0
      %v5466 = vadd.f32 0.0, %v5465
      %5467 = vmatmul.bf16.gmra.mxu0 %v5401
      %v5468 = vpop.f32.mrf.mxu0
      %v5469 = vadd.f32 0.0, %v5468
      %v5470 = vpop.f32.mrf.mxu0
      %v5471 = vadd.f32 0.0, %v5470
      %5472 = vmatmul.bf16.gmra.mxu0 %v5404
      %v5473 = vpop.f32.mrf.mxu0
      %v5474 = vadd.f32 0.0, %v5473
      %v5475 = vpop.f32.mrf.mxu0
      %v5476 = vadd.f32 0.0, %v5475
      %5477 = vmatmul.bf16.gmra.mxu0 %v5407
      %v5478 = vpop.f32.mrf.mxu0
      %v5479 = vadd.f32 0.0, %v5478
      %v5480 = vpop.f32.mrf.mxu0
      %v5481 = vadd.f32 0.0, %v5480
      %5482 = vmatmul.bf16.gmra.mxu0 %v5410
      %v5483 = vpop.f32.mrf.mxu0
      %v5484 = vadd.f32 0.0, %v5483
      %v5485 = vpop.f32.mrf.mxu0
      %v5486 = vadd.f32 0.0, %v5485
      %5487 = vmatmul.bf16.gmra.mxu0 %v5413
      %v5488 = vpop.f32.mrf.mxu0
      %v5489 = vadd.f32 0.0, %v5488
      %v5490 = vpop.f32.mrf.mxu0
      %v5491 = vadd.f32 0.0, %v5490
      %5492 = vmatmul.bf16.gmra.mxu0 %v5416
      %v5493 = vpop.f32.mrf.mxu0
      %v5494 = vadd.f32 0.0, %v5493
      %v5495 = vpop.f32.mrf.mxu0
      %v5496 = vadd.f32 0.0, %v5495
      %5497 = vmatmul.bf16.gmra.mxu0 %v5419
      %v5498 = vpop.f32.mrf.mxu0
      %v5499 = vadd.f32 0.0, %v5498
      %v5500 = vpop.f32.mrf.mxu0
      %v5501 = vadd.f32 0.0, %v5500
      %5502 = vmatmul.bf16.gmra.mxu0 %v5422
      %v5503 = vpop.f32.mrf.mxu0
      %v5504 = vadd.f32 0.0, %v5503
      %v5505 = vpop.f32.mrf.mxu0
      %v5506 = vadd.f32 0.0, %v5505
      %5507 = vmatmul.bf16.gmra.mxu0 %v2745
      %v5508 = vpop.f32.mrf.mxu0
      %v5509 = vadd.f32 0.0, %v5508
      %v5510 = vpop.f32.mrf.mxu0
      %v5511 = vadd.f32 0.0, %v5510
      %5512 = vdwg.mxu0
      %v5513 = vadd.f32 %v5300, %v5434
      %v5514 = vadd.f32 %v5301, %v5436
      %v5515 = vadd.f32 %v5302, %v5439
      %v5516 = vadd.f32 %v5303, %v5441
      %v5517 = vadd.f32 %v5304, %v5444
      %v5518 = vadd.f32 %v5305, %v5446
      %v5519 = vadd.f32 %v5306, %v5449
      %v5520 = vadd.f32 %v5307, %v5451
      %v5521 = vadd.f32 %v5308, %v5454
      %v5522 = vadd.f32 %v5309, %v5456
      %v5523 = vadd.f32 %v5310, %v5459
      %v5524 = vadd.f32 %v5311, %v5461
      %v5525 = vadd.f32 %v5312, %v5464
      %v5526 = vadd.f32 %v5313, %v5466
      %v5527 = vadd.f32 %v5314, %v5469
      %v5528 = vadd.f32 %v5315, %v5471
      %v5529 = vadd.f32 %v5316, %v5474
      %v5530 = vadd.f32 %v5317, %v5476
      %v5531 = vadd.f32 %v5318, %v5479
      %v5532 = vadd.f32 %v5319, %v5481
      %v5533 = vadd.f32 %v5320, %v5484
      %v5534 = vadd.f32 %v5321, %v5486
      %v5535 = vadd.f32 %v5322, %v5489
      %v5536 = vadd.f32 %v5323, %v5491
      %v5537 = vadd.f32 %v5324, %v5494
      %v5538 = vadd.f32 %v5325, %v5496
      %v5539 = vadd.f32 %v5326, %v5499
      %v5540 = vadd.f32 %v5327, %v5501
      %v5541 = vadd.f32 %v5328, %v5504
      %v5542 = vadd.f32 %v5329, %v5506
      %v5543 = vadd.f32 %v5330, %v5509
      %v5544 = vadd.f32 %v5331, %v5511
      %s5545 = scalar_lea.vmem %s2, 256
      %v5546 = vld [vmem:[%s5545] sm:$0xf]
      %v5547 = vld [vmem:[%s5545 + $0x4] sm:$0xf]
      %v5548 = vld [vmem:[%s5545 + $0x8] sm:$0xf]
      %v5549 = vld [vmem:[%s5545 + $0xc] sm:$0xf]
      %v5550 = vrot.slane %v3870, 3
      %v5551 = vrot.slane %v3866, 4
      %v5552 = vor.u32 %v5550, %v5551
      %v5553 = vrot.slane %v3878, 3
      %v5554 = vrot.slane %v3874, 4
      %v5555 = vor.u32 %v5553, %v5554
      %v5556 = vsel %vm2873, %v5552, %v5555
      %v5557 = vrot.slane %v3886, 3
      %v5558 = vrot.slane %v3882, 4
      %v5559 = vor.u32 %v5557, %v5558
      %v5560 = vsel %vm2873, %v5555, %v5559
      %v5561 = vrot.slane %v3894, 3
      %v5562 = vrot.slane %v3890, 4
      %v5563 = vor.u32 %v5561, %v5562
      %v5564 = vsel %vm2873, %v5559, %v5563
      %v5565 = vrot.slane %v3902, 3
      %v5566 = vrot.slane %v3898, 4
      %v5567 = vor.u32 %v5565, %v5566
      %v5568 = vsel %vm2873, %v5563, %v5567
      %v5569 = vrot.slane %v3910, 3
      %v5570 = vrot.slane %v3906, 4
      %v5571 = vor.u32 %v5569, %v5570
      %v5572 = vsel %vm2873, %v5567, %v5571
      %v5573 = vrot.slane %v3918, 3
      %v5574 = vrot.slane %v3914, 4
      %v5575 = vor.u32 %v5573, %v5574
      %v5576 = vsel %vm2873, %v5571, %v5575
      %v5577 = vrot.slane %v3926, 3
      %v5578 = vrot.slane %v3922, 4
      %v5579 = vor.u32 %v5577, %v5578
      %v5580 = vsel %vm2873, %v5575, %v5579
      %v5581 = vrot.slane %v3934, 3
      %v5582 = vrot.slane %v3930, 4
      %v5583 = vor.u32 %v5581, %v5582
      %v5584 = vsel %vm2873, %v5579, %v5583
      %v5585 = vrot.slane %v3942, 3
      %v5586 = vrot.slane %v3938, 4
      %v5587 = vor.u32 %v5585, %v5586
      %v5588 = vsel %vm2873, %v5583, %v5587
      %v5589 = vrot.slane %v3950, 3
      %v5590 = vrot.slane %v3946, 4
      %v5591 = vor.u32 %v5589, %v5590
      %v5592 = vsel %vm2873, %v5587, %v5591
      %v5593 = vrot.slane %v3958, 3
      %v5594 = vrot.slane %v3954, 4
      %v5595 = vor.u32 %v5593, %v5594
      %v5596 = vsel %vm2873, %v5591, %v5595
      %v5597 = vrot.slane %v3966, 3
      %v5598 = vrot.slane %v3962, 4
      %v5599 = vor.u32 %v5597, %v5598
      %v5600 = vsel %vm2873, %v5595, %v5599
      %v5601 = vrot.slane %v3974, 3
      %v5602 = vrot.slane %v3970, 4
      %v5603 = vor.u32 %v5601, %v5602
      %v5604 = vsel %vm2873, %v5599, %v5603
      %v5605 = vrot.slane %v3982, 3
      %v5606 = vrot.slane %v3978, 4
      %v5607 = vor.u32 %v5605, %v5606
      %v5608 = vsel %vm2873, %v5603, %v5607
      %v5609 = vsel %vm2873, %v5607, %v2935
      %v5614 = vunpack.c.l.b16 %v5546
      %v5615 = vunpack.c.l.b16 %v5547
      %v5616 = vunpack.c.l.b16 %v5548
      %v5617 = vunpack.c.l.b16 %v5549
      %v5618 = vpack.c.b16 %v5615, %v5614
      %v5619 = vpack.c.b16 %v5617, %v5616
      %v5623 = vsel %vm733, %v5556, 0
      %v5626 = vsel %vm733, %v5560, 0
      %v5629 = vsel %vm733, %v5564, 0
      %v5632 = vsel %vm733, %v5568, 0
      %v5635 = vsel %vm733, %v5572, 0
      %v5638 = vsel %vm733, %v5576, 0
      %v5641 = vsel %vm733, %v5580, 0
      %v5644 = vsel %vm733, %v5584, 0
      %v5647 = vsel %vm733, %v5588, 0
      %v5650 = vsel %vm733, %v5592, 0
      %v5653 = vsel %vm733, %v5596, 0
      %v5656 = vsel %vm733, %v5600, 0
      %v5659 = vsel %vm733, %v5604, 0
      %v5662 = vsel %vm733, %v5608, 0
      %v5665 = vsel %vm733, %v5609, 0
      %5667 = vmatpush.bf16.msra.mxu0 0
      %5668 = vmatpush.bf16.msra.mxu0 0
      %5669 = vmatpush.bf16.msra.mxu0 0
      %5670 = vmatpush.bf16.msra.mxu0 0
      %5671 = vmatpush.bf16.msra.mxu0 0
      %5672 = vmatpush.bf16.msra.mxu0 0
      %5673 = vmatpush.bf16.msra.mxu0 %v5619
      %5674 = vmatpush.bf16.msra.mxu0 %v5618
      %5675 = vmatmul.bf16.gmra.mxu0 %v5623
      %v5676 = vpop.f32.mrf.mxu0
      %v5677 = vadd.f32 0.0, %v5676
      %v5678 = vpop.f32.mrf.mxu0
      %v5679 = vadd.f32 0.0, %v5678
      %5680 = vmatmul.bf16.gmra.mxu0 %v5626
      %v5681 = vpop.f32.mrf.mxu0
      %v5682 = vadd.f32 0.0, %v5681
      %v5683 = vpop.f32.mrf.mxu0
      %v5684 = vadd.f32 0.0, %v5683
      %5685 = vmatmul.bf16.gmra.mxu0 %v5629
      %v5686 = vpop.f32.mrf.mxu0
      %v5687 = vadd.f32 0.0, %v5686
      %v5688 = vpop.f32.mrf.mxu0
      %v5689 = vadd.f32 0.0, %v5688
      %5690 = vmatmul.bf16.gmra.mxu0 %v5632
      %v5691 = vpop.f32.mrf.mxu0
      %v5692 = vadd.f32 0.0, %v5691
      %v5693 = vpop.f32.mrf.mxu0
      %v5694 = vadd.f32 0.0, %v5693
      %5695 = vmatmul.bf16.gmra.mxu0 %v5635
      %v5696 = vpop.f32.mrf.mxu0
      %v5697 = vadd.f32 0.0, %v5696
      %v5698 = vpop.f32.mrf.mxu0
      %v5699 = vadd.f32 0.0, %v5698
      %5700 = vmatmul.bf16.gmra.mxu0 %v5638
      %v5701 = vpop.f32.mrf.mxu0
      %v5702 = vadd.f32 0.0, %v5701
      %v5703 = vpop.f32.mrf.mxu0
      %v5704 = vadd.f32 0.0, %v5703
      %5705 = vmatmul.bf16.gmra.mxu0 %v5641
      %v5706 = vpop.f32.mrf.mxu0
      %v5707 = vadd.f32 0.0, %v5706
      %v5708 = vpop.f32.mrf.mxu0
      %v5709 = vadd.f32 0.0, %v5708
      %5710 = vmatmul.bf16.gmra.mxu0 %v5644
      %v5711 = vpop.f32.mrf.mxu0
      %v5712 = vadd.f32 0.0, %v5711
      %v5713 = vpop.f32.mrf.mxu0
      %v5714 = vadd.f32 0.0, %v5713
      %5715 = vmatmul.bf16.gmra.mxu0 %v5647
      %v5716 = vpop.f32.mrf.mxu0
      %v5717 = vadd.f32 0.0, %v5716
      %v5718 = vpop.f32.mrf.mxu0
      %v5719 = vadd.f32 0.0, %v5718
      %5720 = vmatmul.bf16.gmra.mxu0 %v5650
      %v5721 = vpop.f32.mrf.mxu0
      %v5722 = vadd.f32 0.0, %v5721
      %v5723 = vpop.f32.mrf.mxu0
      %v5724 = vadd.f32 0.0, %v5723
      %5725 = vmatmul.bf16.gmra.mxu0 %v5653
      %v5726 = vpop.f32.mrf.mxu0
      %v5727 = vadd.f32 0.0, %v5726
      %v5728 = vpop.f32.mrf.mxu0
      %v5729 = vadd.f32 0.0, %v5728
      %5730 = vmatmul.bf16.gmra.mxu0 %v5656
      %v5731 = vpop.f32.mrf.mxu0
      %v5732 = vadd.f32 0.0, %v5731
      %v5733 = vpop.f32.mrf.mxu0
      %v5734 = vadd.f32 0.0, %v5733
      %5735 = vmatmul.bf16.gmra.mxu0 %v5659
      %v5736 = vpop.f32.mrf.mxu0
      %v5737 = vadd.f32 0.0, %v5736
      %v5738 = vpop.f32.mrf.mxu0
      %v5739 = vadd.f32 0.0, %v5738
      %5740 = vmatmul.bf16.gmra.mxu0 %v5662
      %v5741 = vpop.f32.mrf.mxu0
      %v5742 = vadd.f32 0.0, %v5741
      %v5743 = vpop.f32.mrf.mxu0
      %v5744 = vadd.f32 0.0, %v5743
      %5745 = vmatmul.bf16.gmra.mxu0 %v5665
      %v5746 = vpop.f32.mrf.mxu0
      %v5747 = vadd.f32 0.0, %v5746
      %v5748 = vpop.f32.mrf.mxu0
      %v5749 = vadd.f32 0.0, %v5748
      %5750 = vmatmul.bf16.gmra.mxu0 %v2996
      %v5751 = vpop.f32.mrf.mxu0
      %v5752 = vadd.f32 0.0, %v5751
      %v5753 = vpop.f32.mrf.mxu0
      %v5754 = vadd.f32 0.0, %v5753
      %5755 = vdwg.mxu0
      %v5756 = vadd.f32 %v5513, %v5677
      %v5757 = vadd.f32 %v5514, %v5679
      %v5758 = vadd.f32 %v5515, %v5682
      %v5759 = vadd.f32 %v5516, %v5684
      %v5760 = vadd.f32 %v5517, %v5687
      %v5761 = vadd.f32 %v5518, %v5689
      %v5762 = vadd.f32 %v5519, %v5692
      %v5763 = vadd.f32 %v5520, %v5694
      %v5764 = vadd.f32 %v5521, %v5697
      %v5765 = vadd.f32 %v5522, %v5699
      %v5766 = vadd.f32 %v5523, %v5702
      %v5767 = vadd.f32 %v5524, %v5704
      %v5768 = vadd.f32 %v5525, %v5707
      %v5769 = vadd.f32 %v5526, %v5709
      %v5770 = vadd.f32 %v5527, %v5712
      %v5771 = vadd.f32 %v5528, %v5714
      %v5772 = vadd.f32 %v5529, %v5717
      %v5773 = vadd.f32 %v5530, %v5719
      %v5774 = vadd.f32 %v5531, %v5722
      %v5775 = vadd.f32 %v5532, %v5724
      %v5776 = vadd.f32 %v5533, %v5727
      %v5777 = vadd.f32 %v5534, %v5729
      %v5778 = vadd.f32 %v5535, %v5732
      %v5779 = vadd.f32 %v5536, %v5734
      %v5780 = vadd.f32 %v5537, %v5737
      %v5781 = vadd.f32 %v5538, %v5739
      %v5782 = vadd.f32 %v5539, %v5742
      %v5783 = vadd.f32 %v5540, %v5744
      %v5784 = vadd.f32 %v5541, %v5747
      %v5785 = vadd.f32 %v5542, %v5749
      %v5786 = vadd.f32 %v5543, %v5752
      %v5787 = vadd.f32 %v5544, %v5754
      %s5788 = scalar_lea.vmem %s2, 272
      %v5789 = vld [vmem:[%s5788] sm:$0xf]
      %v5790 = vld [vmem:[%s5788 + $0x4] sm:$0xf]
      %v5791 = vld [vmem:[%s5788 + $0x8] sm:$0xf]
      %v5792 = vld [vmem:[%s5788 + $0xc] sm:$0xf]
      %v5797 = vunpack.c.l.b16 %v5789
      %v5798 = vunpack.c.l.b16 %v5790
      %v5799 = vunpack.c.l.b16 %v5791
      %v5800 = vunpack.c.l.b16 %v5792
      %v5801 = vpack.c.b16 %v5798, %v5797
      %v5802 = vpack.c.b16 %v5800, %v5799
      %v5805 = vsel %vm733, %v4503, 0
      %v5807 = vsel %vm733, %v4504, 0
      %v5809 = vsel %vm733, %v4505, 0
      %v5811 = vsel %vm733, %v4506, 0
      %v5813 = vsel %vm733, %v4507, 0
      %v5815 = vsel %vm733, %v4508, 0
      %v5817 = vsel %vm733, %v4509, 0
      %v5819 = vsel %vm733, %v4510, 0
      %v5821 = vsel %vm733, %v4511, 0
      %v5823 = vsel %vm733, %v4512, 0
      %v5825 = vsel %vm733, %v4513, 0
      %v5827 = vsel %vm733, %v4514, 0
      %v5829 = vsel %vm733, %v4515, 0
      %v5831 = vsel %vm733, %v4516, 0
      %v5833 = vsel %vm733, %v4517, 0
      %5835 = vmatpush.bf16.msra.mxu0 0
      %5836 = vmatpush.bf16.msra.mxu0 0
      %5837 = vmatpush.bf16.msra.mxu0 0
      %5838 = vmatpush.bf16.msra.mxu0 0
      %5839 = vmatpush.bf16.msra.mxu0 0
      %5840 = vmatpush.bf16.msra.mxu0 0
      %5841 = vmatpush.bf16.msra.mxu0 %v5802
      %5842 = vmatpush.bf16.msra.mxu0 %v5801
      %5843 = vmatmul.bf16.gmra.mxu0 %v5805
      %v5844 = vpop.f32.mrf.mxu0
      %v5845 = vadd.f32 0.0, %v5844
      %v5846 = vpop.f32.mrf.mxu0
      %v5847 = vadd.f32 0.0, %v5846
      %5848 = vmatmul.bf16.gmra.mxu0 %v5807
      %v5849 = vpop.f32.mrf.mxu0
      %v5850 = vadd.f32 0.0, %v5849
      %v5851 = vpop.f32.mrf.mxu0
      %v5852 = vadd.f32 0.0, %v5851
      %5853 = vmatmul.bf16.gmra.mxu0 %v5809
      %v5854 = vpop.f32.mrf.mxu0
      %v5855 = vadd.f32 0.0, %v5854
      %v5856 = vpop.f32.mrf.mxu0
      %v5857 = vadd.f32 0.0, %v5856
      %5858 = vmatmul.bf16.gmra.mxu0 %v5811
      %v5859 = vpop.f32.mrf.mxu0
      %v5860 = vadd.f32 0.0, %v5859
      %v5861 = vpop.f32.mrf.mxu0
      %v5862 = vadd.f32 0.0, %v5861
      %5863 = vmatmul.bf16.gmra.mxu0 %v5813
      %v5864 = vpop.f32.mrf.mxu0
      %v5865 = vadd.f32 0.0, %v5864
      %v5866 = vpop.f32.mrf.mxu0
      %v5867 = vadd.f32 0.0, %v5866
      %5868 = vmatmul.bf16.gmra.mxu0 %v5815
      %v5869 = vpop.f32.mrf.mxu0
      %v5870 = vadd.f32 0.0, %v5869
      %v5871 = vpop.f32.mrf.mxu0
      %v5872 = vadd.f32 0.0, %v5871
      %5873 = vmatmul.bf16.gmra.mxu0 %v5817
      %v5874 = vpop.f32.mrf.mxu0
      %v5875 = vadd.f32 0.0, %v5874
      %v5876 = vpop.f32.mrf.mxu0
      %v5877 = vadd.f32 0.0, %v5876
      %5878 = vmatmul.bf16.gmra.mxu0 %v5819
      %v5879 = vpop.f32.mrf.mxu0
      %v5880 = vadd.f32 0.0, %v5879
      %v5881 = vpop.f32.mrf.mxu0
      %v5882 = vadd.f32 0.0, %v5881
      %5883 = vmatmul.bf16.gmra.mxu0 %v5821
      %v5884 = vpop.f32.mrf.mxu0
      %v5885 = vadd.f32 0.0, %v5884
      %v5886 = vpop.f32.mrf.mxu0
      %v5887 = vadd.f32 0.0, %v5886
      %5888 = vmatmul.bf16.gmra.mxu0 %v5823
      %v5889 = vpop.f32.mrf.mxu0
      %v5890 = vadd.f32 0.0, %v5889
      %v5891 = vpop.f32.mrf.mxu0
      %v5892 = vadd.f32 0.0, %v5891
      %5893 = vmatmul.bf16.gmra.mxu0 %v5825
      %v5894 = vpop.f32.mrf.mxu0
      %v5895 = vadd.f32 0.0, %v5894
      %v5896 = vpop.f32.mrf.mxu0
      %v5897 = vadd.f32 0.0, %v5896
      %5898 = vmatmul.bf16.gmra.mxu0 %v5827
      %v5899 = vpop.f32.mrf.mxu0
      %v5900 = vadd.f32 0.0, %v5899
      %v5901 = vpop.f32.mrf.mxu0
      %v5902 = vadd.f32 0.0, %v5901
      %5903 = vmatmul.bf16.gmra.mxu0 %v5829
      %v5904 = vpop.f32.mrf.mxu0
      %v5905 = vadd.f32 0.0, %v5904
      %v5906 = vpop.f32.mrf.mxu0
      %v5907 = vadd.f32 0.0, %v5906
      %5908 = vmatmul.bf16.gmra.mxu0 %v5831
      %v5909 = vpop.f32.mrf.mxu0
      %v5910 = vadd.f32 0.0, %v5909
      %v5911 = vpop.f32.mrf.mxu0
      %v5912 = vadd.f32 0.0, %v5911
      %5913 = vmatmul.bf16.gmra.mxu0 %v5833
      %v5914 = vpop.f32.mrf.mxu0
      %v5915 = vadd.f32 0.0, %v5914
      %v5916 = vpop.f32.mrf.mxu0
      %v5917 = vadd.f32 0.0, %v5916
      %5918 = vmatmul.bf16.gmra.mxu0 %v3166
      %v5919 = vpop.f32.mrf.mxu0
      %v5920 = vadd.f32 0.0, %v5919
      %v5921 = vpop.f32.mrf.mxu0
      %v5922 = vadd.f32 0.0, %v5921
      %5923 = vdwg.mxu0
      %v5924 = vadd.f32 %v5756, %v5845
      %v5925 = vadd.f32 %v5757, %v5847
      %v5926 = vadd.f32 %v5758, %v5850
      %v5927 = vadd.f32 %v5759, %v5852
      %v5928 = vadd.f32 %v5760, %v5855
      %v5929 = vadd.f32 %v5761, %v5857
      %v5930 = vadd.f32 %v5762, %v5860
      %v5931 = vadd.f32 %v5763, %v5862
      %v5932 = vadd.f32 %v5764, %v5865
      %v5933 = vadd.f32 %v5765, %v5867
      %v5934 = vadd.f32 %v5766, %v5870
      %v5935 = vadd.f32 %v5767, %v5872
      %v5936 = vadd.f32 %v5768, %v5875
      %v5937 = vadd.f32 %v5769, %v5877
      %v5938 = vadd.f32 %v5770, %v5880
      %v5939 = vadd.f32 %v5771, %v5882
      %v5940 = vadd.f32 %v5772, %v5885
      %v5941 = vadd.f32 %v5773, %v5887
      %v5942 = vadd.f32 %v5774, %v5890
      %v5943 = vadd.f32 %v5775, %v5892
      %v5944 = vadd.f32 %v5776, %v5895
      %v5945 = vadd.f32 %v5777, %v5897
      %v5946 = vadd.f32 %v5778, %v5900
      %v5947 = vadd.f32 %v5779, %v5902
      %v5948 = vadd.f32 %v5780, %v5905
      %v5949 = vadd.f32 %v5781, %v5907
      %v5950 = vadd.f32 %v5782, %v5910
      %v5951 = vadd.f32 %v5783, %v5912
      %v5952 = vadd.f32 %v5784, %v5915
      %v5953 = vadd.f32 %v5785, %v5917
      %v5954 = vadd.f32 %v5786, %v5920
      %v5955 = vadd.f32 %v5787, %v5922
      %v5956 = vld [vmem:[%s3 + $0x2] sm:$0x1]
      %v5957 = vperm.slane %v5956, 0
      %v5958 = vadd.f32 %v5924, %v5957
      %v5959 = vadd.f32 %v5925, %v5957
      %v5960 = vadd.f32 %v5926, %v5957
      %v5961 = vadd.f32 %v5927, %v5957
      %v5962 = vadd.f32 %v5928, %v5957
      %v5963 = vadd.f32 %v5929, %v5957
      %v5964 = vadd.f32 %v5930, %v5957
      %v5965 = vadd.f32 %v5931, %v5957
      %v5966 = vadd.f32 %v5932, %v5957
      %v5967 = vadd.f32 %v5933, %v5957
      %v5968 = vadd.f32 %v5934, %v5957
      %v5969 = vadd.f32 %v5935, %v5957
      %v5970 = vadd.f32 %v5936, %v5957
      %v5971 = vadd.f32 %v5937, %v5957
      %v5972 = vadd.f32 %v5938, %v5957
      %v5973 = vadd.f32 %v5939, %v5957
      %v5974 = vadd.f32 %v5940, %v5957
      %v5975 = vadd.f32 %v5941, %v5957
      %v5976 = vadd.f32 %v5942, %v5957
      %v5977 = vadd.f32 %v5943, %v5957
      %v5978 = vadd.f32 %v5944, %v5957
      %v5979 = vadd.f32 %v5945, %v5957
      %v5980 = vadd.f32 %v5946, %v5957
      %v5981 = vadd.f32 %v5947, %v5957
      %v5982 = vadd.f32 %v5948, %v5957
      %v5983 = vadd.f32 %v5949, %v5957
      %v5984 = vadd.f32 %v5950, %v5957
      %v5985 = vadd.f32 %v5951, %v5957
      %v5986 = vadd.f32 %v5952, %v5957
      %v5987 = vadd.f32 %v5953, %v5957
      %v5988 = vadd.f32 %v5954, %v5957
      %v5989 = vadd.f32 %v5955, %v5957
      %s5990 = scalar_lea.vmem %s4, 8
      %v5991 = vld [vmem:[%s5990] sm:$0x7]
      %vm5992 = vcmp.lt.f32.partialorder %v525, 76.5
      %vm5993 = vcmp.lt.f32.partialorder %v526, 76.5
      %vm5994 = vcmp.lt.f32.partialorder %v527, 76.5
      %vm5995 = vcmp.lt.f32.partialorder %v528, 76.5
      %vm5996 = vcmp.lt.f32.partialorder %v529, 76.5
      %vm5997 = vcmp.lt.f32.partialorder %v530, 76.5
      %vm5998 = vcmp.lt.f32.partialorder %v531, 76.5
      %vm5999 = vcmp.lt.f32.partialorder %v532, 76.5
      %vm6000 = vcmp.lt.f32.partialorder %v533, 76.5
      %vm6001 = vcmp.lt.f32.partialorder %v534, 76.5
      %vm6002 = vcmp.lt.f32.partialorder %v535, 76.5
      %vm6003 = vcmp.lt.f32.partialorder %v536, 76.5
      %vm6004 = vcmp.lt.f32.partialorder %v537, 76.5
      %vm6005 = vcmp.lt.f32.partialorder %v538, 76.5
      %vm6006 = vcmp.lt.f32.partialorder %v539, 76.5
      %vm6007 = vcmp.lt.f32.partialorder %v540, 76.5
      %vm6008 = vcmp.lt.f32.partialorder %v605, 6.5
      %vm6009 = vcmp.lt.f32.partialorder %v606, 6.5
      %vm6010 = vcmp.lt.f32.partialorder %v607, 6.5
      %vm6011 = vcmp.lt.f32.partialorder %v608, 6.5
      %vm6012 = vcmp.lt.f32.partialorder %v609, 6.5
      %vm6013 = vcmp.lt.f32.partialorder %v610, 6.5
      %vm6014 = vcmp.lt.f32.partialorder %v611, 6.5
      %vm6015 = vcmp.lt.f32.partialorder %v612, 6.5
      %vm6016 = vcmp.lt.f32.partialorder %v613, 6.5
      %vm6017 = vcmp.lt.f32.partialorder %v614, 6.5
      %vm6018 = vcmp.lt.f32.partialorder %v615, 6.5
      %vm6019 = vcmp.lt.f32.partialorder %v616, 6.5
      %vm6020 = vcmp.lt.f32.partialorder %v617, 6.5
      %vm6021 = vcmp.lt.f32.partialorder %v618, 6.5
      %vm6022 = vcmp.lt.f32.partialorder %v619, 6.5
      %vm6023 = vcmp.lt.f32.partialorder %v620, 6.5
      %vm6024 = vmand %vm5992, %vm6008
      %vm6025 = vmand %vm5993, %vm6009
      %vm6026 = vmand %vm5994, %vm6010
      %vm6027 = vmand %vm5995, %vm6011
      %vm6028 = vmand %vm5996, %vm6012
      %vm6029 = vmand %vm5997, %vm6013
      %vm6030 = vmand %vm5998, %vm6014
      %vm6031 = vmand %vm5999, %vm6015
      %vm6032 = vmand %vm6000, %vm6016
      %vm6033 = vmand %vm6001, %vm6017
      %vm6034 = vmand %vm6002, %vm6018
      %vm6035 = vmand %vm6003, %vm6019
      %vm6036 = vmand %vm6004, %vm6020
      %vm6037 = vmand %vm6005, %vm6021
      %vm6038 = vmand %vm6006, %vm6022
      %vm6039 = vmand %vm6007, %vm6023
      %v6040 = vsel %vm6024, 1, 0
      %v6041 = vsel %vm6025, 1, 0
      %v6042 = vsel %vm6026, 1, 0
      %v6043 = vsel %vm6027, 1, 0
      %v6044 = vsel %vm6028, 1, 0
      %v6045 = vsel %vm6029, 1, 0
      %v6046 = vsel %vm6030, 1, 0
      %v6047 = vsel %vm6031, 1, 0
      %v6048 = vsel %vm6032, 1, 0
      %v6049 = vsel %vm6033, 1, 0
      %v6050 = vsel %vm6034, 1, 0
      %v6051 = vsel %vm6035, 1, 0
      %v6052 = vsel %vm6036, 1, 0
      %v6053 = vsel %vm6037, 1, 0
      %v6054 = vsel %vm6038, 1, 0
      %v6055 = vsel %vm6039, 1, 0
      %vm6056 = vcmp.eq.s32.totalorder %v6040, 1
      %vm6057 = vcmp.eq.s32.totalorder %v6041, 1
      %vm6058 = vcmp.eq.s32.totalorder %v6042, 1
      %vm6059 = vcmp.eq.s32.totalorder %v6043, 1
      %vm6060 = vcmp.eq.s32.totalorder %v6044, 1
      %vm6061 = vcmp.eq.s32.totalorder %v6045, 1
      %vm6062 = vcmp.eq.s32.totalorder %v6046, 1
      %vm6063 = vcmp.eq.s32.totalorder %v6047, 1
      %vm6064 = vcmp.eq.s32.totalorder %v6048, 1
      %vm6065 = vcmp.eq.s32.totalorder %v6049, 1
      %vm6066 = vcmp.eq.s32.totalorder %v6050, 1
      %vm6067 = vcmp.eq.s32.totalorder %v6051, 1
      %vm6068 = vcmp.eq.s32.totalorder %v6052, 1
      %vm6069 = vcmp.eq.s32.totalorder %v6053, 1
      %vm6070 = vcmp.eq.s32.totalorder %v6054, 1
      %vm6071 = vcmp.eq.s32.totalorder %v6055, 1
      %v6072 = vsel %vm6056, %v5958, 0.0
      %v6073 = vsel %vm6057, %v5959, 0.0
      %v6074 = vsel %vm6058, %v5960, 0.0
      %v6075 = vsel %vm6059, %v5961, 0.0
      %v6076 = vsel %vm6060, %v5962, 0.0
      %v6077 = vsel %vm6061, %v5963, 0.0
      %v6078 = vsel %vm6062, %v5964, 0.0
      %v6079 = vsel %vm6063, %v5965, 0.0
      %v6080 = vsel %vm6064, %v5966, 0.0
      %v6081 = vsel %vm6065, %v5967, 0.0
      %v6082 = vsel %vm6066, %v5968, 0.0
      %v6083 = vsel %vm6067, %v5969, 0.0
      %v6084 = vsel %vm6068, %v5970, 0.0
      %v6085 = vsel %vm6069, %v5971, 0.0
      %v6086 = vsel %vm6070, %v5972, 0.0
      %v6087 = vsel %vm6071, %v5973, 0.0
      %v6088 = vsel %vm6056, %v5974, 0.0
      %v6089 = vsel %vm6057, %v5975, 0.0
      %v6090 = vsel %vm6058, %v5976, 0.0
      %v6091 = vsel %vm6059, %v5977, 0.0
      %v6092 = vsel %vm6060, %v5978, 0.0
      %v6093 = vsel %vm6061, %v5979, 0.0
      %v6094 = vsel %vm6062, %v5980, 0.0
      %v6095 = vsel %vm6063, %v5981, 0.0
      %v6096 = vsel %vm6064, %v5982, 0.0
      %v6097 = vsel %vm6065, %v5983, 0.0
      %v6098 = vsel %vm6066, %v5984, 0.0
      %v6099 = vsel %vm6067, %v5985, 0.0
      %v6100 = vsel %vm6068, %v5986, 0.0
      %v6101 = vsel %vm6069, %v5987, 0.0
      %v6102 = vsel %vm6070, %v5988, 0.0
      %v6103 = vsel %vm6071, %v5989, 0.0
      %v6104 = vsel %vm733, %v6072, 0.0
      %v6105 = vsel %vm733, %v6073, 0.0
      %v6106 = vadd.f32 %v6104, %v6105
      %v6107 = vsel %vm733, %v6074, 0.0
      %v6108 = vadd.f32 %v6106, %v6107
      %v6109 = vsel %vm733, %v6075, 0.0
      %v6110 = vadd.f32 %v6108, %v6109
      %v6111 = vsel %vm733, %v6076, 0.0
      %v6112 = vadd.f32 %v6110, %v6111
      %v6113 = vsel %vm733, %v6077, 0.0
      %v6114 = vadd.f32 %v6112, %v6113
      %v6115 = vsel %vm733, %v6078, 0.0
      %v6116 = vadd.f32 %v6114, %v6115
      %v6117 = vsel %vm733, %v6079, 0.0
      %v6118 = vadd.f32 %v6116, %v6117
      %v6119 = vsel %vm733, %v6080, 0.0
      %v6120 = vadd.f32 %v6118, %v6119
      %v6121 = vsel %vm733, %v6081, 0.0
      %v6122 = vadd.f32 %v6120, %v6121
      %v6123 = vsel %vm733, %v6082, 0.0
      %v6124 = vadd.f32 %v6122, %v6123
      %v6125 = vsel %vm733, %v6083, 0.0
      %v6126 = vadd.f32 %v6124, %v6125
      %v6127 = vsel %vm733, %v6084, 0.0
      %v6128 = vadd.f32 %v6126, %v6127
      %v6129 = vsel %vm733, %v6085, 0.0
      %v6130 = vadd.f32 %v6128, %v6129
      %v6131 = vsel %vm733, %v6086, 0.0
      %v6132 = vadd.f32 %v6130, %v6131
      %v6133 = vsel %vm733, %v6087, 0.0
      %v6134 = vadd.f32 %v6132, %v6133
      %v6135 = vrot.slane %v6134, 4
      %v6136 = vadd.f32 %v6134, %v6135
      %v6137 = vrot.slane %v6136, 2
      %v6138 = vadd.f32 %v6136, %v6137
      %v6139 = vrot.slane %v6138, 1
      %v6140 = vadd.f32 %v6138, %v6139
      %v6141 = vsel %vm733, %v6088, 0.0
      %v6142 = vsel %vm733, %v6089, 0.0
      %v6143 = vadd.f32 %v6141, %v6142
      %v6144 = vsel %vm733, %v6090, 0.0
      %v6145 = vadd.f32 %v6143, %v6144
      %v6146 = vsel %vm733, %v6091, 0.0
      %v6147 = vadd.f32 %v6145, %v6146
      %v6148 = vsel %vm733, %v6092, 0.0
      %v6149 = vadd.f32 %v6147, %v6148
      %v6150 = vsel %vm733, %v6093, 0.0
      %v6151 = vadd.f32 %v6149, %v6150
      %v6152 = vsel %vm733, %v6094, 0.0
      %v6153 = vadd.f32 %v6151, %v6152
      %v6154 = vsel %vm733, %v6095, 0.0
      %v6155 = vadd.f32 %v6153, %v6154
      %v6156 = vsel %vm733, %v6096, 0.0
      %v6157 = vadd.f32 %v6155, %v6156
      %v6158 = vsel %vm733, %v6097, 0.0
      %v6159 = vadd.f32 %v6157, %v6158
      %v6160 = vsel %vm733, %v6098, 0.0
      %v6161 = vadd.f32 %v6159, %v6160
      %v6162 = vsel %vm733, %v6099, 0.0
      %v6163 = vadd.f32 %v6161, %v6162
      %v6164 = vsel %vm733, %v6100, 0.0
      %v6165 = vadd.f32 %v6163, %v6164
      %v6166 = vsel %vm733, %v6101, 0.0
      %v6167 = vadd.f32 %v6165, %v6166
      %v6168 = vsel %vm733, %v6102, 0.0
      %v6169 = vadd.f32 %v6167, %v6168
      %v6170 = vsel %vm733, %v6103, 0.0
      %v6171 = vadd.f32 %v6169, %v6170
      %v6172 = vrot.slane %v6171, 4
      %v6173 = vadd.f32 %v6171, %v6172
      %v6174 = vrot.slane %v6173, 2
      %v6175 = vadd.f32 %v6173, %v6174
      %v6176 = vrot.slane %v6175, 1
      %v6177 = vadd.f32 %v6175, %v6176
      %v6178 = vmul.f32 %v6140, 0.020408163
      %v6179 = vmul.f32 %v6177, 0.020408163
      %v6180 = vsub.f32 %v5958, %v6178
      %v6181 = vsub.f32 %v5959, %v6178
      %v6182 = vsub.f32 %v5960, %v6178
      %v6183 = vsub.f32 %v5961, %v6178
      %v6184 = vsub.f32 %v5962, %v6178
      %v6185 = vsub.f32 %v5963, %v6178
      %v6186 = vsub.f32 %v5964, %v6178
      %v6187 = vsub.f32 %v5965, %v6178
      %v6188 = vsub.f32 %v5966, %v6178
      %v6189 = vsub.f32 %v5967, %v6178
      %v6190 = vsub.f32 %v5968, %v6178
      %v6191 = vsub.f32 %v5969, %v6178
      %v6192 = vsub.f32 %v5970, %v6178
      %v6193 = vsub.f32 %v5971, %v6178
      %v6194 = vsub.f32 %v5972, %v6178
      %v6195 = vsub.f32 %v5973, %v6178
      %v6196 = vsub.f32 %v5974, %v6179
      %v6197 = vsub.f32 %v5975, %v6179
      %v6198 = vsub.f32 %v5976, %v6179
      %v6199 = vsub.f32 %v5977, %v6179
      %v6200 = vsub.f32 %v5978, %v6179
      %v6201 = vsub.f32 %v5979, %v6179
      %v6202 = vsub.f32 %v5980, %v6179
      %v6203 = vsub.f32 %v5981, %v6179
      %v6204 = vsub.f32 %v5982, %v6179
      %v6205 = vsub.f32 %v5983, %v6179
      %v6206 = vsub.f32 %v5984, %v6179
      %v6207 = vsub.f32 %v5985, %v6179
      %v6208 = vsub.f32 %v5986, %v6179
      %v6209 = vsub.f32 %v5987, %v6179
      %v6210 = vsub.f32 %v5988, %v6179
      %v6211 = vsub.f32 %v5989, %v6179
      %v6212 = vsel %vm6056, %v6180, 0.0
      %v6213 = vsel %vm6057, %v6181, 0.0
      %v6214 = vsel %vm6058, %v6182, 0.0
      %v6215 = vsel %vm6059, %v6183, 0.0
      %v6216 = vsel %vm6060, %v6184, 0.0
      %v6217 = vsel %vm6061, %v6185, 0.0
      %v6218 = vsel %vm6062, %v6186, 0.0
      %v6219 = vsel %vm6063, %v6187, 0.0
      %v6220 = vsel %vm6064, %v6188, 0.0
      %v6221 = vsel %vm6065, %v6189, 0.0
      %v6222 = vsel %vm6066, %v6190, 0.0
      %v6223 = vsel %vm6067, %v6191, 0.0
      %v6224 = vsel %vm6068, %v6192, 0.0
      %v6225 = vsel %vm6069, %v6193, 0.0
      %v6226 = vsel %vm6070, %v6194, 0.0
      %v6227 = vsel %vm6071, %v6195, 0.0
      %v6228 = vsel %vm6056, %v6196, 0.0
      %v6229 = vsel %vm6057, %v6197, 0.0
      %v6230 = vsel %vm6058, %v6198, 0.0
      %v6231 = vsel %vm6059, %v6199, 0.0
      %v6232 = vsel %vm6060, %v6200, 0.0
      %v6233 = vsel %vm6061, %v6201, 0.0
      %v6234 = vsel %vm6062, %v6202, 0.0
      %v6235 = vsel %vm6063, %v6203, 0.0
      %v6236 = vsel %vm6064, %v6204, 0.0
      %v6237 = vsel %vm6065, %v6205, 0.0
      %v6238 = vsel %vm6066, %v6206, 0.0
      %v6239 = vsel %vm6067, %v6207, 0.0
      %v6240 = vsel %vm6068, %v6208, 0.0
      %v6241 = vsel %vm6069, %v6209, 0.0
      %v6242 = vsel %vm6070, %v6210, 0.0
      %v6243 = vsel %vm6071, %v6211, 0.0
      %v6244 = vmul.f32 %v6212, %v6212
      %v6245 = vmul.f32 %v6213, %v6213
      %v6246 = vmul.f32 %v6214, %v6214
      %v6247 = vmul.f32 %v6215, %v6215
      %v6248 = vmul.f32 %v6216, %v6216
      %v6249 = vmul.f32 %v6217, %v6217
      %v6250 = vmul.f32 %v6218, %v6218
      %v6251 = vmul.f32 %v6219, %v6219
      %v6252 = vmul.f32 %v6220, %v6220
      %v6253 = vmul.f32 %v6221, %v6221
      %v6254 = vmul.f32 %v6222, %v6222
      %v6255 = vmul.f32 %v6223, %v6223
      %v6256 = vmul.f32 %v6224, %v6224
      %v6257 = vmul.f32 %v6225, %v6225
      %v6258 = vmul.f32 %v6226, %v6226
      %v6259 = vmul.f32 %v6227, %v6227
      %v6260 = vmul.f32 %v6228, %v6228
      %v6261 = vmul.f32 %v6229, %v6229
      %v6262 = vmul.f32 %v6230, %v6230
      %v6263 = vmul.f32 %v6231, %v6231
      %v6264 = vmul.f32 %v6232, %v6232
      %v6265 = vmul.f32 %v6233, %v6233
      %v6266 = vmul.f32 %v6234, %v6234
      %v6267 = vmul.f32 %v6235, %v6235
      %v6268 = vmul.f32 %v6236, %v6236
      %v6269 = vmul.f32 %v6237, %v6237
      %v6270 = vmul.f32 %v6238, %v6238
      %v6271 = vmul.f32 %v6239, %v6239
      %v6272 = vmul.f32 %v6240, %v6240
      %v6273 = vmul.f32 %v6241, %v6241
      %v6274 = vmul.f32 %v6242, %v6242
      %v6275 = vmul.f32 %v6243, %v6243
      %v6276 = vsel %vm733, %v6244, 0.0
      %v6277 = vsel %vm733, %v6245, 0.0
      %v6278 = vadd.f32 %v6276, %v6277
      %v6279 = vsel %vm733, %v6246, 0.0
      %v6280 = vadd.f32 %v6278, %v6279
      %v6281 = vsel %vm733, %v6247, 0.0
      %v6282 = vadd.f32 %v6280, %v6281
      %v6283 = vsel %vm733, %v6248, 0.0
      %v6284 = vadd.f32 %v6282, %v6283
      %v6285 = vsel %vm733, %v6249, 0.0
      %v6286 = vadd.f32 %v6284, %v6285
      %v6287 = vsel %vm733, %v6250, 0.0
      %v6288 = vadd.f32 %v6286, %v6287
      %v6289 = vsel %vm733, %v6251, 0.0
      %v6290 = vadd.f32 %v6288, %v6289
      %v6291 = vsel %vm733, %v6252, 0.0
      %v6292 = vadd.f32 %v6290, %v6291
      %v6293 = vsel %vm733, %v6253, 0.0
      %v6294 = vadd.f32 %v6292, %v6293
      %v6295 = vsel %vm733, %v6254, 0.0
      %v6296 = vadd.f32 %v6294, %v6295
      %v6297 = vsel %vm733, %v6255, 0.0
      %v6298 = vadd.f32 %v6296, %v6297
      %v6299 = vsel %vm733, %v6256, 0.0
      %v6300 = vadd.f32 %v6298, %v6299
      %v6301 = vsel %vm733, %v6257, 0.0
      %v6302 = vadd.f32 %v6300, %v6301
      %v6303 = vsel %vm733, %v6258, 0.0
      %v6304 = vadd.f32 %v6302, %v6303
      %v6305 = vsel %vm733, %v6259, 0.0
      %v6306 = vadd.f32 %v6304, %v6305
      %v6307 = vrot.slane %v6306, 4
      %v6308 = vadd.f32 %v6306, %v6307
      %v6309 = vrot.slane %v6308, 2
      %v6310 = vadd.f32 %v6308, %v6309
      %v6311 = vrot.slane %v6310, 1
      %v6312 = vadd.f32 %v6310, %v6311
      %v6313 = vsel %vm733, %v6260, 0.0
      %v6314 = vsel %vm733, %v6261, 0.0
      %v6315 = vadd.f32 %v6313, %v6314
      %v6316 = vsel %vm733, %v6262, 0.0
      %v6317 = vadd.f32 %v6315, %v6316
      %v6318 = vsel %vm733, %v6263, 0.0
      %v6319 = vadd.f32 %v6317, %v6318
      %v6320 = vsel %vm733, %v6264, 0.0
      %v6321 = vadd.f32 %v6319, %v6320
      %v6322 = vsel %vm733, %v6265, 0.0
      %v6323 = vadd.f32 %v6321, %v6322
      %v6324 = vsel %vm733, %v6266, 0.0
      %v6325 = vadd.f32 %v6323, %v6324
      %v6326 = vsel %vm733, %v6267, 0.0
      %v6327 = vadd.f32 %v6325, %v6326
      %v6328 = vsel %vm733, %v6268, 0.0
      %v6329 = vadd.f32 %v6327, %v6328
      %v6330 = vsel %vm733, %v6269, 0.0
      %v6331 = vadd.f32 %v6329, %v6330
      %v6332 = vsel %vm733, %v6270, 0.0
      %v6333 = vadd.f32 %v6331, %v6332
      %v6334 = vsel %vm733, %v6271, 0.0
      %v6335 = vadd.f32 %v6333, %v6334
      %v6336 = vsel %vm733, %v6272, 0.0
      %v6337 = vadd.f32 %v6335, %v6336
      %v6338 = vsel %vm733, %v6273, 0.0
      %v6339 = vadd.f32 %v6337, %v6338
      %v6340 = vsel %vm733, %v6274, 0.0
      %v6341 = vadd.f32 %v6339, %v6340
      %v6342 = vsel %vm733, %v6275, 0.0
      %v6343 = vadd.f32 %v6341, %v6342
      %v6344 = vrot.slane %v6343, 4
      %v6345 = vadd.f32 %v6343, %v6344
      %v6346 = vrot.slane %v6345, 2
      %v6347 = vadd.f32 %v6345, %v6346
      %v6348 = vrot.slane %v6347, 1
      %v6349 = vadd.f32 %v6347, %v6348
      %v6350 = vmul.f32 %v6312, 0.020833334
      %v6351 = vmul.f32 %v6349, 0.020833334
      %v6352 = vadd.f32 %v6350, 1e-12
      %v6353 = vadd.f32 %v6351, 1e-12
      %v6354 = vrsqrt.pop %v6352
      %v6355 = vmul.f32 %v6354, %v6352
      %v6356 = vmul.f32 %v6355, %v6354
      %v6357 = vmul.f32 0.5, %v6356
      %v6358 = vsub.f32 1.5, %v6357
      %v6359 = vmul.f32 %v6354, %v6358
      %v6360 = vmul.f32 %v6352, %v6359
      %vm6361 = vcmp.eq.f32.partialorder %v6352, inf
      %v6362 = vsel %vm6361, %v6352, %v6360
      %vm6363 = vcmp.eq.f32.partialorder %v6352, 0.0
      %v6364 = vand.u32 %v6352, 2147483648
      %v6365 = vsel %vm6363, %v6364, %v6362
      %v6366 = vrsqrt.pop %v6353
      %v6367 = vmul.f32 %v6366, %v6353
      %v6368 = vmul.f32 %v6367, %v6366
      %v6369 = vmul.f32 0.5, %v6368
      %v6370 = vsub.f32 1.5, %v6369
      %v6371 = vmul.f32 %v6366, %v6370
      %v6372 = vmul.f32 %v6353, %v6371
      %vm6373 = vcmp.eq.f32.partialorder %v6353, inf
      %v6374 = vsel %vm6373, %v6353, %v6372
      %vm6375 = vcmp.eq.f32.partialorder %v6353, 0.0
      %v6376 = vand.u32 %v6353, 2147483648
      %v6377 = vsel %vm6375, %v6376, %v6374
      %v6378 = vmul.f32 %v5991, %v6178
      %v6379 = vmul.f32 %v5991, %v6179
      %v6380 = vmul.f32 %v5991, %v6365
      %v6381 = vmul.f32 %v5991, %v6377
      %v6384 = vrot.slane %v6380, 1
      %v6385 = vrot.slane %v6381, 1
      %v6388 = vadd.f32 %v6378, %v6384
      %v6389 = vadd.f32 %v6379, %v6385
      %v6391 = vrot.slane %v5991, 2
      %v6393 = vadd.f32 %v6388, %v6391
      %v6394 = vadd.f32 %v6389, %v6391
      %v6395 = vxor.u32 %v6393, 2147483648
      %v6396 = vxor.u32 %v6394, 2147483648
      %v6397 = vmul.f32 %v6395, 1.442695
      %v6398 = vpow.pop %v6397
      %v6399 = vmul.f32 %v6396, 1.442695
      %v6400 = vpow.pop %v6399
      %v6401 = vadd.f32 %v6398, 1.0
      %v6402 = vadd.f32 %v6400, 1.0
      %v6403 = vrcp.pop %v6401
      %v6404 = vmul.f32 %v6401, %v6403
      %v6405 = vsub.f32 1.0, %v6404
      %v6406 = vmul.f32 %v6403, %v6405
      %v6407 = vadd.f32 %v6403, %v6406
      %vm6408 = vweird.f32 %v6401
      %vm6409 = vweird.f32 %v6403
      %vm6410 = vmor %vm6408, %vm6409
      %v6411 = vsel %vm6410, %v6403, %v6407
      %v6412 = vand.u32 2147483647, %v6401
      %vm6413 = vcmp.eq.f32.partialorder %v6412, 8.507059e+37
      %v6414 = vand.u32 %v6401, 2147483648
      %v6415 = vor.u32 1.1754944e-38, %v6414
      %v6416 = vsel %vm6413, %v6415, %v6411
      %v6417 = vmul.f32 1.0, %v6416
      %v6418 = vrcp.pop %v6402
      %v6419 = vmul.f32 %v6402, %v6418
      %v6420 = vsub.f32 1.0, %v6419
      %v6421 = vmul.f32 %v6418, %v6420
      %v6422 = vadd.f32 %v6418, %v6421
      %vm6423 = vweird.f32 %v6402
      %vm6424 = vweird.f32 %v6418
      %vm6425 = vmor %vm6423, %vm6424
      %v6426 = vsel %vm6425, %v6418, %v6422
      %v6427 = vand.u32 2147483647, %v6402
      %vm6428 = vcmp.eq.f32.partialorder %v6427, 8.507059e+37
      %v6429 = vand.u32 %v6402, 2147483648
      %v6430 = vor.u32 1.1754944e-38, %v6429
      %v6431 = vsel %vm6428, %v6430, %v6426
      %v6432 = vmul.f32 1.0, %v6431
      %v6433 = vperm.slane %v6417, 0
      %v6434 = vperm.slane %v6432, 0
      %v6435 = vmul.f32 %v5958, %v6433
      %v6436 = vmul.f32 %v5959, %v6433
      %v6437 = vmul.f32 %v5960, %v6433
      %v6438 = vmul.f32 %v5961, %v6433
      %v6439 = vmul.f32 %v5962, %v6433
      %v6440 = vmul.f32 %v5963, %v6433
      %v6441 = vmul.f32 %v5964, %v6433
      %v6442 = vmul.f32 %v5965, %v6433
      %v6443 = vmul.f32 %v5966, %v6433
      %v6444 = vmul.f32 %v5967, %v6433
      %v6445 = vmul.f32 %v5968, %v6433
      %v6446 = vmul.f32 %v5969, %v6433
      %v6447 = vmul.f32 %v5970, %v6433
      %v6448 = vmul.f32 %v5971, %v6433
      %v6449 = vmul.f32 %v5972, %v6433
      %v6450 = vmul.f32 %v5973, %v6433
      %v6451 = vmul.f32 %v5974, %v6434
      %v6452 = vmul.f32 %v5975, %v6434
      %v6453 = vmul.f32 %v5976, %v6434
      %v6454 = vmul.f32 %v5977, %v6434
      %v6455 = vmul.f32 %v5978, %v6434
      %v6456 = vmul.f32 %v5979, %v6434
      %v6457 = vmul.f32 %v5980, %v6434
      %v6458 = vmul.f32 %v5981, %v6434
      %v6459 = vmul.f32 %v5982, %v6434
      %v6460 = vmul.f32 %v5983, %v6434
      %v6461 = vmul.f32 %v5984, %v6434
      %v6462 = vmul.f32 %v5985, %v6434
      %v6463 = vmul.f32 %v5986, %v6434
      %v6464 = vmul.f32 %v5987, %v6434
      %v6465 = vmul.f32 %v5988, %v6434
      %v6466 = vmul.f32 %v5989, %v6434
      %v6467 = vmax.f32 %v6435, 0.0
      %v6468 = vmax.f32 %v6436, 0.0
      %v6469 = vmax.f32 %v6437, 0.0
      %v6470 = vmax.f32 %v6438, 0.0
      %v6471 = vmax.f32 %v6439, 0.0
      %v6472 = vmax.f32 %v6440, 0.0
      %v6473 = vmax.f32 %v6441, 0.0
      %v6474 = vmax.f32 %v6442, 0.0
      %v6475 = vmax.f32 %v6443, 0.0
      %v6476 = vmax.f32 %v6444, 0.0
      %v6477 = vmax.f32 %v6445, 0.0
      %v6478 = vmax.f32 %v6446, 0.0
      %v6479 = vmax.f32 %v6447, 0.0
      %v6480 = vmax.f32 %v6448, 0.0
      %v6481 = vmax.f32 %v6449, 0.0
      %v6482 = vmax.f32 %v6450, 0.0
      %v6483 = vmax.f32 %v6451, 0.0
      %v6484 = vmax.f32 %v6452, 0.0
      %v6485 = vmax.f32 %v6453, 0.0
      %v6486 = vmax.f32 %v6454, 0.0
      %v6487 = vmax.f32 %v6455, 0.0
      %v6488 = vmax.f32 %v6456, 0.0
      %v6489 = vmax.f32 %v6457, 0.0
      %v6490 = vmax.f32 %v6458, 0.0
      %v6491 = vmax.f32 %v6459, 0.0
      %v6492 = vmax.f32 %v6460, 0.0
      %v6493 = vmax.f32 %v6461, 0.0
      %v6494 = vmax.f32 %v6462, 0.0
      %v6495 = vmax.f32 %v6463, 0.0
      %v6496 = vmax.f32 %v6464, 0.0
      %v6497 = vmax.f32 %v6465, 0.0
      %v6498 = vmax.f32 %v6466, 0.0
      %v6499 = vpack.c.bf16 %v6468, %v6467
      %v6500 = vpack.c.bf16 %v6470, %v6469
      %v6501 = vpack.c.bf16 %v6472, %v6471
      %v6502 = vpack.c.bf16 %v6474, %v6473
      %v6503 = vpack.c.bf16 %v6476, %v6475
      %v6504 = vpack.c.bf16 %v6478, %v6477
      %v6505 = vpack.c.bf16 %v6480, %v6479
      %v6506 = vpack.c.bf16 %v6482, %v6481
      %v6507 = vpack.c.bf16 %v6484, %v6483
      %v6508 = vpack.c.bf16 %v6486, %v6485
      %v6509 = vpack.c.bf16 %v6488, %v6487
      %v6510 = vpack.c.bf16 %v6490, %v6489
      %v6511 = vpack.c.bf16 %v6492, %v6491
      %v6512 = vpack.c.bf16 %v6494, %v6493
      %v6513 = vpack.c.bf16 %v6496, %v6495
      %v6514 = vpack.c.bf16 %v6498, %v6497
      %s6515 = scalar_lea.vmem %s2, 288
      %v6516 = vld [vmem:[%s6515] sm:$0xf]
      %v6517 = vld [vmem:[%s6515 + $0x4] sm:$0xf]
      %v6518 = vld [vmem:[%s6515 + $0x8] sm:$0xf]
      %v6519 = vld [vmem:[%s6515 + $0xc] sm:$0xf]
      %s6520 = scalar_lea.vmem %s2, 304
      %v6521 = vld [vmem:[%s6520] sm:$0xf]
      %v6522 = vld [vmem:[%s6520 + $0x4] sm:$0xf]
      %v6523 = vld [vmem:[%s6520 + $0x8] sm:$0xf]
      %v6524 = vld [vmem:[%s6520 + $0xc] sm:$0xf]
      %v6526 = vshrl.u32 %v6499, 16
      %v6528 = vshll.u32 %v6499, 16
      %v6530 = vrot.slane %v6528, 1
      %v6531 = vor.u32 %v6526, %v6530
      %v6533 = vshll.u32 %v6500, 16
      %v6535 = vrot.slane %v6533, 1
      %v6536 = vsel %vm1155, %v6531, %v6535
      %v6537 = vshrl.u32 %v6500, 16
      %v6539 = vor.u32 %v6537, %v6535
      %v6541 = vshll.u32 %v6501, 16
      %v6543 = vrot.slane %v6541, 1
      %v6544 = vsel %vm1155, %v6539, %v6543
      %v6545 = vshrl.u32 %v6501, 16
      %v6547 = vor.u32 %v6545, %v6543
      %v6549 = vshll.u32 %v6502, 16
      %v6551 = vrot.slane %v6549, 1
      %v6552 = vsel %vm1155, %v6547, %v6551
      %v6553 = vshrl.u32 %v6502, 16
      %v6555 = vor.u32 %v6553, %v6551
      %v6557 = vshll.u32 %v6503, 16
      %v6559 = vrot.slane %v6557, 1
      %v6560 = vsel %vm1155, %v6555, %v6559
      %v6561 = vshrl.u32 %v6503, 16
      %v6563 = vor.u32 %v6561, %v6559
      %v6565 = vshll.u32 %v6504, 16
      %v6567 = vrot.slane %v6565, 1
      %v6568 = vsel %vm1155, %v6563, %v6567
      %v6569 = vshrl.u32 %v6504, 16
      %v6571 = vor.u32 %v6569, %v6567
      %v6573 = vshll.u32 %v6505, 16
      %v6575 = vrot.slane %v6573, 1
      %v6576 = vsel %vm1155, %v6571, %v6575
      %v6577 = vshrl.u32 %v6505, 16
      %v6579 = vor.u32 %v6577, %v6575
      %v6581 = vshll.u32 %v6506, 16
      %v6583 = vrot.slane %v6581, 1
      %v6584 = vsel %vm1155, %v6579, %v6583
      %v6585 = vshrl.u32 %v6506, 16
      %v6587 = vor.u32 %v6585, %v6583
      %v6589 = vshll.u32 %v6507, 16
      %v6591 = vrot.slane %v6589, 1
      %v6592 = vsel %vm1155, %v6587, %v6591
      %v6593 = vshrl.u32 %v6507, 16
      %v6595 = vor.u32 %v6593, %v6591
      %v6597 = vshll.u32 %v6508, 16
      %v6599 = vrot.slane %v6597, 1
      %v6600 = vsel %vm1155, %v6595, %v6599
      %v6601 = vshrl.u32 %v6508, 16
      %v6603 = vor.u32 %v6601, %v6599
      %v6605 = vshll.u32 %v6509, 16
      %v6607 = vrot.slane %v6605, 1
      %v6608 = vsel %vm1155, %v6603, %v6607
      %v6609 = vshrl.u32 %v6509, 16
      %v6611 = vor.u32 %v6609, %v6607
      %v6613 = vshll.u32 %v6510, 16
      %v6615 = vrot.slane %v6613, 1
      %v6616 = vsel %vm1155, %v6611, %v6615
      %v6617 = vshrl.u32 %v6510, 16
      %v6619 = vor.u32 %v6617, %v6615
      %v6621 = vshll.u32 %v6511, 16
      %v6623 = vrot.slane %v6621, 1
      %v6624 = vsel %vm1155, %v6619, %v6623
      %v6625 = vshrl.u32 %v6511, 16
      %v6627 = vor.u32 %v6625, %v6623
      %v6629 = vshll.u32 %v6512, 16
      %v6631 = vrot.slane %v6629, 1
      %v6632 = vsel %vm1155, %v6627, %v6631
      %v6633 = vshrl.u32 %v6512, 16
      %v6635 = vor.u32 %v6633, %v6631
      %v6637 = vshll.u32 %v6513, 16
      %v6639 = vrot.slane %v6637, 1
      %v6640 = vsel %vm1155, %v6635, %v6639
      %v6641 = vshrl.u32 %v6513, 16
      %v6643 = vor.u32 %v6641, %v6639
      %v6645 = vshll.u32 %v6514, 16
      %v6647 = vrot.slane %v6645, 1
      %v6648 = vsel %vm1155, %v6643, %v6647
      %v6649 = vshrl.u32 %v6514, 16
      %v6651 = vor.u32 %v6649, %v6647
      %v6652 = vsel %vm1155, %v6651, %v1286
      %v6657 = vunpack.c.l.b16 %v6521
      %v6658 = vunpack.c.l.b16 %v6522
      %v6659 = vunpack.c.l.b16 %v6523
      %v6660 = vunpack.c.l.b16 %v6524
      %v6661 = vpack.c.b16 %v6658, %v6657
      %v6662 = vpack.c.b16 %v6660, %v6659
      %v6666 = vsel %vm733, %v6536, 0
      %v6669 = vsel %vm733, %v6544, 0
      %v6672 = vsel %vm733, %v6552, 0
      %v6675 = vsel %vm733, %v6560, 0
      %v6678 = vsel %vm733, %v6568, 0
      %v6681 = vsel %vm733, %v6576, 0
      %v6684 = vsel %vm733, %v6584, 0
      %v6687 = vsel %vm733, %v6592, 0
      %v6690 = vsel %vm733, %v6600, 0
      %v6693 = vsel %vm733, %v6608, 0
      %v6696 = vsel %vm733, %v6616, 0
      %v6699 = vsel %vm733, %v6624, 0
      %v6702 = vsel %vm733, %v6632, 0
      %v6705 = vsel %vm733, %v6640, 0
      %v6708 = vsel %vm733, %v6648, 0
      %v6711 = vsel %vm733, %v6652, 0
      %6713 = vmatpush.bf16.msra.mxu0 0
      %6714 = vmatpush.bf16.msra.mxu0 0
      %6715 = vmatpush.bf16.msra.mxu0 0
      %6716 = vmatpush.bf16.msra.mxu0 0
      %6717 = vmatpush.bf16.msra.mxu0 0
      %6718 = vmatpush.bf16.msra.mxu0 0
      %6719 = vmatpush.bf16.msra.mxu0 %v6662
      %6720 = vmatpush.bf16.msra.mxu0 %v6661
      %6721 = vmatmul.bf16.gmra.mxu0 %v6666
      %v6722 = vpop.f32.mrf.mxu0
      %v6723 = vadd.f32 0.0, %v6722
      %v6724 = vpop.f32.mrf.mxu0
      %v6725 = vadd.f32 0.0, %v6724
      %6726 = vmatmul.bf16.gmra.mxu0 %v6669
      %v6727 = vpop.f32.mrf.mxu0
      %v6728 = vadd.f32 0.0, %v6727
      %v6729 = vpop.f32.mrf.mxu0
      %v6730 = vadd.f32 0.0, %v6729
      %6731 = vmatmul.bf16.gmra.mxu0 %v6672
      %v6732 = vpop.f32.mrf.mxu0
      %v6733 = vadd.f32 0.0, %v6732
      %v6734 = vpop.f32.mrf.mxu0
      %v6735 = vadd.f32 0.0, %v6734
      %6736 = vmatmul.bf16.gmra.mxu0 %v6675
      %v6737 = vpop.f32.mrf.mxu0
      %v6738 = vadd.f32 0.0, %v6737
      %v6739 = vpop.f32.mrf.mxu0
      %v6740 = vadd.f32 0.0, %v6739
      %6741 = vmatmul.bf16.gmra.mxu0 %v6678
      %v6742 = vpop.f32.mrf.mxu0
      %v6743 = vadd.f32 0.0, %v6742
      %v6744 = vpop.f32.mrf.mxu0
      %v6745 = vadd.f32 0.0, %v6744
      %6746 = vmatmul.bf16.gmra.mxu0 %v6681
      %v6747 = vpop.f32.mrf.mxu0
      %v6748 = vadd.f32 0.0, %v6747
      %v6749 = vpop.f32.mrf.mxu0
      %v6750 = vadd.f32 0.0, %v6749
      %6751 = vmatmul.bf16.gmra.mxu0 %v6684
      %v6752 = vpop.f32.mrf.mxu0
      %v6753 = vadd.f32 0.0, %v6752
      %v6754 = vpop.f32.mrf.mxu0
      %v6755 = vadd.f32 0.0, %v6754
      %6756 = vmatmul.bf16.gmra.mxu0 %v6687
      %v6757 = vpop.f32.mrf.mxu0
      %v6758 = vadd.f32 0.0, %v6757
      %v6759 = vpop.f32.mrf.mxu0
      %v6760 = vadd.f32 0.0, %v6759
      %6761 = vmatmul.bf16.gmra.mxu0 %v6690
      %v6762 = vpop.f32.mrf.mxu0
      %v6763 = vadd.f32 0.0, %v6762
      %v6764 = vpop.f32.mrf.mxu0
      %v6765 = vadd.f32 0.0, %v6764
      %6766 = vmatmul.bf16.gmra.mxu0 %v6693
      %v6767 = vpop.f32.mrf.mxu0
      %v6768 = vadd.f32 0.0, %v6767
      %v6769 = vpop.f32.mrf.mxu0
      %v6770 = vadd.f32 0.0, %v6769
      %6771 = vmatmul.bf16.gmra.mxu0 %v6696
      %v6772 = vpop.f32.mrf.mxu0
      %v6773 = vadd.f32 0.0, %v6772
      %v6774 = vpop.f32.mrf.mxu0
      %v6775 = vadd.f32 0.0, %v6774
      %6776 = vmatmul.bf16.gmra.mxu0 %v6699
      %v6777 = vpop.f32.mrf.mxu0
      %v6778 = vadd.f32 0.0, %v6777
      %v6779 = vpop.f32.mrf.mxu0
      %v6780 = vadd.f32 0.0, %v6779
      %6781 = vmatmul.bf16.gmra.mxu0 %v6702
      %v6782 = vpop.f32.mrf.mxu0
      %v6783 = vadd.f32 0.0, %v6782
      %v6784 = vpop.f32.mrf.mxu0
      %v6785 = vadd.f32 0.0, %v6784
      %6786 = vmatmul.bf16.gmra.mxu0 %v6705
      %v6787 = vpop.f32.mrf.mxu0
      %v6788 = vadd.f32 0.0, %v6787
      %v6789 = vpop.f32.mrf.mxu0
      %v6790 = vadd.f32 0.0, %v6789
      %6791 = vmatmul.bf16.gmra.mxu0 %v6708
      %v6792 = vpop.f32.mrf.mxu0
      %v6793 = vadd.f32 0.0, %v6792
      %v6794 = vpop.f32.mrf.mxu0
      %v6795 = vadd.f32 0.0, %v6794
      %6796 = vmatmul.bf16.gmra.mxu0 %v6711
      %v6797 = vpop.f32.mrf.mxu0
      %v6798 = vadd.f32 0.0, %v6797
      %v6799 = vpop.f32.mrf.mxu0
      %v6800 = vadd.f32 0.0, %v6799
      %6801 = vdwg.mxu0
      %v6806 = vunpack.c.l.b16 %v6516
      %v6807 = vunpack.c.l.b16 %v6517
      %v6808 = vunpack.c.l.b16 %v6518
      %v6809 = vunpack.c.l.b16 %v6519
      %v6810 = vpack.c.b16 %v6807, %v6806
      %v6811 = vpack.c.b16 %v6809, %v6808
      %v6814 = vsel %vm733, %v6499, 0
      %v6816 = vsel %vm733, %v6500, 0
      %v6818 = vsel %vm733, %v6501, 0
      %v6820 = vsel %vm733, %v6502, 0
      %v6822 = vsel %vm733, %v6503, 0
      %v6824 = vsel %vm733, %v6504, 0
      %v6826 = vsel %vm733, %v6505, 0
      %v6828 = vsel %vm733, %v6506, 0
      %v6830 = vsel %vm733, %v6507, 0
      %v6832 = vsel %vm733, %v6508, 0
      %v6834 = vsel %vm733, %v6509, 0
      %v6836 = vsel %vm733, %v6510, 0
      %v6838 = vsel %vm733, %v6511, 0
      %v6840 = vsel %vm733, %v6512, 0
      %v6842 = vsel %vm733, %v6513, 0
      %v6844 = vsel %vm733, %v6514, 0
      %6846 = vmatpush.bf16.msra.mxu0 0
      %6847 = vmatpush.bf16.msra.mxu0 0
      %6848 = vmatpush.bf16.msra.mxu0 0
      %6849 = vmatpush.bf16.msra.mxu0 0
      %6850 = vmatpush.bf16.msra.mxu0 0
      %6851 = vmatpush.bf16.msra.mxu0 0
      %6852 = vmatpush.bf16.msra.mxu0 %v6811
      %6853 = vmatpush.bf16.msra.mxu0 %v6810
      %6854 = vmatmul.bf16.gmra.mxu0 %v6814
      %v6855 = vpop.f32.mrf.mxu0
      %v6856 = vadd.f32 %v6723, %v6855
      %v6857 = vpop.f32.mrf.mxu0
      %v6858 = vadd.f32 %v6725, %v6857
      %6859 = vmatmul.bf16.gmra.mxu0 %v6816
      %v6860 = vpop.f32.mrf.mxu0
      %v6861 = vadd.f32 %v6728, %v6860
      %v6862 = vpop.f32.mrf.mxu0
      %v6863 = vadd.f32 %v6730, %v6862
      %6864 = vmatmul.bf16.gmra.mxu0 %v6818
      %v6865 = vpop.f32.mrf.mxu0
      %v6866 = vadd.f32 %v6733, %v6865
      %v6867 = vpop.f32.mrf.mxu0
      %v6868 = vadd.f32 %v6735, %v6867
      %6869 = vmatmul.bf16.gmra.mxu0 %v6820
      %v6870 = vpop.f32.mrf.mxu0
      %v6871 = vadd.f32 %v6738, %v6870
      %v6872 = vpop.f32.mrf.mxu0
      %v6873 = vadd.f32 %v6740, %v6872
      %6874 = vmatmul.bf16.gmra.mxu0 %v6822
      %v6875 = vpop.f32.mrf.mxu0
      %v6876 = vadd.f32 %v6743, %v6875
      %v6877 = vpop.f32.mrf.mxu0
      %v6878 = vadd.f32 %v6745, %v6877
      %6879 = vmatmul.bf16.gmra.mxu0 %v6824
      %v6880 = vpop.f32.mrf.mxu0
      %v6881 = vadd.f32 %v6748, %v6880
      %v6882 = vpop.f32.mrf.mxu0
      %v6883 = vadd.f32 %v6750, %v6882
      %6884 = vmatmul.bf16.gmra.mxu0 %v6826
      %v6885 = vpop.f32.mrf.mxu0
      %v6886 = vadd.f32 %v6753, %v6885
      %v6887 = vpop.f32.mrf.mxu0
      %v6888 = vadd.f32 %v6755, %v6887
      %6889 = vmatmul.bf16.gmra.mxu0 %v6828
      %v6890 = vpop.f32.mrf.mxu0
      %v6891 = vadd.f32 %v6758, %v6890
      %v6892 = vpop.f32.mrf.mxu0
      %v6893 = vadd.f32 %v6760, %v6892
      %6894 = vmatmul.bf16.gmra.mxu0 %v6830
      %v6895 = vpop.f32.mrf.mxu0
      %v6896 = vadd.f32 %v6763, %v6895
      %v6897 = vpop.f32.mrf.mxu0
      %v6898 = vadd.f32 %v6765, %v6897
      %6899 = vmatmul.bf16.gmra.mxu0 %v6832
      %v6900 = vpop.f32.mrf.mxu0
      %v6901 = vadd.f32 %v6768, %v6900
      %v6902 = vpop.f32.mrf.mxu0
      %v6903 = vadd.f32 %v6770, %v6902
      %6904 = vmatmul.bf16.gmra.mxu0 %v6834
      %v6905 = vpop.f32.mrf.mxu0
      %v6906 = vadd.f32 %v6773, %v6905
      %v6907 = vpop.f32.mrf.mxu0
      %v6908 = vadd.f32 %v6775, %v6907
      %6909 = vmatmul.bf16.gmra.mxu0 %v6836
      %v6910 = vpop.f32.mrf.mxu0
      %v6911 = vadd.f32 %v6778, %v6910
      %v6912 = vpop.f32.mrf.mxu0
      %v6913 = vadd.f32 %v6780, %v6912
      %6914 = vmatmul.bf16.gmra.mxu0 %v6838
      %v6915 = vpop.f32.mrf.mxu0
      %v6916 = vadd.f32 %v6783, %v6915
      %v6917 = vpop.f32.mrf.mxu0
      %v6918 = vadd.f32 %v6785, %v6917
      %6919 = vmatmul.bf16.gmra.mxu0 %v6840
      %v6920 = vpop.f32.mrf.mxu0
      %v6921 = vadd.f32 %v6788, %v6920
      %v6922 = vpop.f32.mrf.mxu0
      %v6923 = vadd.f32 %v6790, %v6922
      %6924 = vmatmul.bf16.gmra.mxu0 %v6842
      %v6925 = vpop.f32.mrf.mxu0
      %v6926 = vadd.f32 %v6793, %v6925
      %v6927 = vpop.f32.mrf.mxu0
      %v6928 = vadd.f32 %v6795, %v6927
      %6929 = vmatmul.bf16.gmra.mxu0 %v6844
      %v6930 = vpop.f32.mrf.mxu0
      %v6931 = vadd.f32 %v6798, %v6930
      %v6932 = vpop.f32.mrf.mxu0
      %v6933 = vadd.f32 %v6800, %v6932
      %6934 = vdwg.mxu0
      %s6935 = scalar_lea.vmem %s2, 320
      %v6936 = vld [vmem:[%s6935] sm:$0xf]
      %v6937 = vld [vmem:[%s6935 + $0x4] sm:$0xf]
      %v6938 = vld [vmem:[%s6935 + $0x8] sm:$0xf]
      %v6939 = vld [vmem:[%s6935 + $0xc] sm:$0xf]
      %v6956 = vrot.slane %v6499, 1
      %v6957 = vrot.slane %v6500, 1
      %v6958 = vsel %vm1592, %v6956, %v6957
      %v6959 = vrot.slane %v6501, 1
      %v6960 = vsel %vm1592, %v6957, %v6959
      %v6961 = vrot.slane %v6502, 1
      %v6962 = vsel %vm1592, %v6959, %v6961
      %v6963 = vrot.slane %v6503, 1
      %v6964 = vsel %vm1592, %v6961, %v6963
      %v6965 = vrot.slane %v6504, 1
      %v6966 = vsel %vm1592, %v6963, %v6965
      %v6967 = vrot.slane %v6505, 1
      %v6968 = vsel %vm1592, %v6965, %v6967
      %v6969 = vrot.slane %v6506, 1
      %v6970 = vsel %vm1592, %v6967, %v6969
      %v6971 = vrot.slane %v6507, 1
      %v6972 = vsel %vm1592, %v6969, %v6971
      %v6973 = vrot.slane %v6508, 1
      %v6974 = vsel %vm1592, %v6971, %v6973
      %v6975 = vrot.slane %v6509, 1
      %v6976 = vsel %vm1592, %v6973, %v6975
      %v6977 = vrot.slane %v6510, 1
      %v6978 = vsel %vm1592, %v6975, %v6977
      %v6979 = vrot.slane %v6511, 1
      %v6980 = vsel %vm1592, %v6977, %v6979
      %v6981 = vrot.slane %v6512, 1
      %v6982 = vsel %vm1592, %v6979, %v6981
      %v6983 = vrot.slane %v6513, 1
      %v6984 = vsel %vm1592, %v6981, %v6983
      %v6985 = vrot.slane %v6514, 1
      %v6986 = vsel %vm1592, %v6983, %v6985
      %v6987 = vsel %vm1592, %v6985, %v1624
      %v6992 = vunpack.c.l.b16 %v6936
      %v6993 = vunpack.c.l.b16 %v6937
      %v6994 = vunpack.c.l.b16 %v6938
      %v6995 = vunpack.c.l.b16 %v6939
      %v6996 = vpack.c.b16 %v6993, %v6992
      %v6997 = vpack.c.b16 %v6995, %v6994
      %v7001 = vsel %vm733, %v6958, 0
      %v7004 = vsel %vm733, %v6960, 0
      %v7007 = vsel %vm733, %v6962, 0
      %v7010 = vsel %vm733, %v6964, 0
      %v7013 = vsel %vm733, %v6966, 0
      %v7016 = vsel %vm733, %v6968, 0
      %v7019 = vsel %vm733, %v6970, 0
      %v7022 = vsel %vm733, %v6972, 0
      %v7025 = vsel %vm733, %v6974, 0
      %v7028 = vsel %vm733, %v6976, 0
      %v7031 = vsel %vm733, %v6978, 0
      %v7034 = vsel %vm733, %v6980, 0
      %v7037 = vsel %vm733, %v6982, 0
      %v7040 = vsel %vm733, %v6984, 0
      %v7043 = vsel %vm733, %v6986, 0
      %v7046 = vsel %vm733, %v6987, 0
      %7048 = vmatpush.bf16.msra.mxu0 0
      %7049 = vmatpush.bf16.msra.mxu0 0
      %7050 = vmatpush.bf16.msra.mxu0 0
      %7051 = vmatpush.bf16.msra.mxu0 0
      %7052 = vmatpush.bf16.msra.mxu0 0
      %7053 = vmatpush.bf16.msra.mxu0 0
      %7054 = vmatpush.bf16.msra.mxu0 %v6997
      %7055 = vmatpush.bf16.msra.mxu0 %v6996
      %7056 = vmatmul.bf16.gmra.mxu0 %v7001
      %v7057 = vpop.f32.mrf.mxu0
      %v7058 = vadd.f32 0.0, %v7057
      %v7059 = vpop.f32.mrf.mxu0
      %v7060 = vadd.f32 0.0, %v7059
      %7061 = vmatmul.bf16.gmra.mxu0 %v7004
      %v7062 = vpop.f32.mrf.mxu0
      %v7063 = vadd.f32 0.0, %v7062
      %v7064 = vpop.f32.mrf.mxu0
      %v7065 = vadd.f32 0.0, %v7064
      %7066 = vmatmul.bf16.gmra.mxu0 %v7007
      %v7067 = vpop.f32.mrf.mxu0
      %v7068 = vadd.f32 0.0, %v7067
      %v7069 = vpop.f32.mrf.mxu0
      %v7070 = vadd.f32 0.0, %v7069
      %7071 = vmatmul.bf16.gmra.mxu0 %v7010
      %v7072 = vpop.f32.mrf.mxu0
      %v7073 = vadd.f32 0.0, %v7072
      %v7074 = vpop.f32.mrf.mxu0
      %v7075 = vadd.f32 0.0, %v7074
      %7076 = vmatmul.bf16.gmra.mxu0 %v7013
      %v7077 = vpop.f32.mrf.mxu0
      %v7078 = vadd.f32 0.0, %v7077
      %v7079 = vpop.f32.mrf.mxu0
      %v7080 = vadd.f32 0.0, %v7079
      %7081 = vmatmul.bf16.gmra.mxu0 %v7016
      %v7082 = vpop.f32.mrf.mxu0
      %v7083 = vadd.f32 0.0, %v7082
      %v7084 = vpop.f32.mrf.mxu0
      %v7085 = vadd.f32 0.0, %v7084
      %7086 = vmatmul.bf16.gmra.mxu0 %v7019
      %v7087 = vpop.f32.mrf.mxu0
      %v7088 = vadd.f32 0.0, %v7087
      %v7089 = vpop.f32.mrf.mxu0
      %v7090 = vadd.f32 0.0, %v7089
      %7091 = vmatmul.bf16.gmra.mxu0 %v7022
      %v7092 = vpop.f32.mrf.mxu0
      %v7093 = vadd.f32 0.0, %v7092
      %v7094 = vpop.f32.mrf.mxu0
      %v7095 = vadd.f32 0.0, %v7094
      %7096 = vmatmul.bf16.gmra.mxu0 %v7025
      %v7097 = vpop.f32.mrf.mxu0
      %v7098 = vadd.f32 0.0, %v7097
      %v7099 = vpop.f32.mrf.mxu0
      %v7100 = vadd.f32 0.0, %v7099
      %7101 = vmatmul.bf16.gmra.mxu0 %v7028
      %v7102 = vpop.f32.mrf.mxu0
      %v7103 = vadd.f32 0.0, %v7102
      %v7104 = vpop.f32.mrf.mxu0
      %v7105 = vadd.f32 0.0, %v7104
      %7106 = vmatmul.bf16.gmra.mxu0 %v7031
      %v7107 = vpop.f32.mrf.mxu0
      %v7108 = vadd.f32 0.0, %v7107
      %v7109 = vpop.f32.mrf.mxu0
      %v7110 = vadd.f32 0.0, %v7109
      %7111 = vmatmul.bf16.gmra.mxu0 %v7034
      %v7112 = vpop.f32.mrf.mxu0
      %v7113 = vadd.f32 0.0, %v7112
      %v7114 = vpop.f32.mrf.mxu0
      %v7115 = vadd.f32 0.0, %v7114
      %7116 = vmatmul.bf16.gmra.mxu0 %v7037
      %v7117 = vpop.f32.mrf.mxu0
      %v7118 = vadd.f32 0.0, %v7117
      %v7119 = vpop.f32.mrf.mxu0
      %v7120 = vadd.f32 0.0, %v7119
      %7121 = vmatmul.bf16.gmra.mxu0 %v7040
      %v7122 = vpop.f32.mrf.mxu0
      %v7123 = vadd.f32 0.0, %v7122
      %v7124 = vpop.f32.mrf.mxu0
      %v7125 = vadd.f32 0.0, %v7124
      %7126 = vmatmul.bf16.gmra.mxu0 %v7043
      %v7127 = vpop.f32.mrf.mxu0
      %v7128 = vadd.f32 0.0, %v7127
      %v7129 = vpop.f32.mrf.mxu0
      %v7130 = vadd.f32 0.0, %v7129
      %7131 = vmatmul.bf16.gmra.mxu0 %v7046
      %v7132 = vpop.f32.mrf.mxu0
      %v7133 = vadd.f32 0.0, %v7132
      %v7134 = vpop.f32.mrf.mxu0
      %v7135 = vadd.f32 0.0, %v7134
      %7136 = vdwg.mxu0
      %v7137 = vadd.f32 %v6856, %v7058
      %v7138 = vadd.f32 %v6858, %v7060
      %v7139 = vadd.f32 %v6861, %v7063
      %v7140 = vadd.f32 %v6863, %v7065
      %v7141 = vadd.f32 %v6866, %v7068
      %v7142 = vadd.f32 %v6868, %v7070
      %v7143 = vadd.f32 %v6871, %v7073
      %v7144 = vadd.f32 %v6873, %v7075
      %v7145 = vadd.f32 %v6876, %v7078
      %v7146 = vadd.f32 %v6878, %v7080
      %v7147 = vadd.f32 %v6881, %v7083
      %v7148 = vadd.f32 %v6883, %v7085
      %v7149 = vadd.f32 %v6886, %v7088
      %v7150 = vadd.f32 %v6888, %v7090
      %v7151 = vadd.f32 %v6891, %v7093
      %v7152 = vadd.f32 %v6893, %v7095
      %v7153 = vadd.f32 %v6896, %v7098
      %v7154 = vadd.f32 %v6898, %v7100
      %v7155 = vadd.f32 %v6901, %v7103
      %v7156 = vadd.f32 %v6903, %v7105
      %v7157 = vadd.f32 %v6906, %v7108
      %v7158 = vadd.f32 %v6908, %v7110
      %v7159 = vadd.f32 %v6911, %v7113
      %v7160 = vadd.f32 %v6913, %v7115
      %v7161 = vadd.f32 %v6916, %v7118
      %v7162 = vadd.f32 %v6918, %v7120
      %v7163 = vadd.f32 %v6921, %v7123
      %v7164 = vadd.f32 %v6923, %v7125
      %v7165 = vadd.f32 %v6926, %v7128
      %v7166 = vadd.f32 %v6928, %v7130
      %v7167 = vadd.f32 %v6931, %v7133
      %v7168 = vadd.f32 %v6933, %v7135
      %v7169 = vpack.c.bf16 %v6469, %v6468
      %v7170 = vpack.c.bf16 %v6471, %v6470
      %v7171 = vpack.c.bf16 %v6473, %v6472
      %v7172 = vpack.c.bf16 %v6475, %v6474
      %v7173 = vpack.c.bf16 %v6477, %v6476
      %v7174 = vpack.c.bf16 %v6479, %v6478
      %v7175 = vpack.c.bf16 %v6481, %v6480
      %v7176 = vpack.c.bf16 %v6483, %v6482
      %v7177 = vpack.c.bf16 %v6485, %v6484
      %v7178 = vpack.c.bf16 %v6487, %v6486
      %v7179 = vpack.c.bf16 %v6489, %v6488
      %v7180 = vpack.c.bf16 %v6491, %v6490
      %v7181 = vpack.c.bf16 %v6493, %v6492
      %v7182 = vpack.c.bf16 %v6495, %v6494
      %v7183 = vpack.c.bf16 %v6497, %v6496
      %v7184 = vpack.c.bf16 0.0, %v6498
      %s7185 = scalar_lea.vmem %s2, 336
      %v7186 = vld [vmem:[%s7185] sm:$0xf]
      %v7187 = vld [vmem:[%s7185 + $0x4] sm:$0xf]
      %v7188 = vld [vmem:[%s7185 + $0x8] sm:$0xf]
      %v7189 = vld [vmem:[%s7185 + $0xc] sm:$0xf]
      %v7191 = vshrl.u32 %v7169, 16
      %v7193 = vrot.slane %v7191, 1
      %v7194 = vshll.u32 %v7169, 16
      %v7196 = vrot.slane %v7194, 2
      %v7197 = vor.u32 %v7193, %v7196
      %v7199 = vshrl.u32 %v7170, 16
      %v7201 = vrot.slane %v7199, 1
      %v7202 = vshll.u32 %v7170, 16
      %v7204 = vrot.slane %v7202, 2
      %v7205 = vor.u32 %v7201, %v7204
      %v7206 = vsel %vm1828, %v7197, %v7205
      %v7208 = vshrl.u32 %v7171, 16
      %v7210 = vrot.slane %v7208, 1
      %v7211 = vshll.u32 %v7171, 16
      %v7213 = vrot.slane %v7211, 2
      %v7214 = vor.u32 %v7210, %v7213
      %v7215 = vsel %vm1828, %v7205, %v7214
      %v7217 = vshrl.u32 %v7172, 16
      %v7219 = vrot.slane %v7217, 1
      %v7220 = vshll.u32 %v7172, 16
      %v7222 = vrot.slane %v7220, 2
      %v7223 = vor.u32 %v7219, %v7222
      %v7224 = vsel %vm1828, %v7214, %v7223
      %v7226 = vshrl.u32 %v7173, 16
      %v7228 = vrot.slane %v7226, 1
      %v7229 = vshll.u32 %v7173, 16
      %v7231 = vrot.slane %v7229, 2
      %v7232 = vor.u32 %v7228, %v7231
      %v7233 = vsel %vm1828, %v7223, %v7232
      %v7235 = vshrl.u32 %v7174, 16
      %v7237 = vrot.slane %v7235, 1
      %v7238 = vshll.u32 %v7174, 16
      %v7240 = vrot.slane %v7238, 2
      %v7241 = vor.u32 %v7237, %v7240
      %v7242 = vsel %vm1828, %v7232, %v7241
      %v7244 = vshrl.u32 %v7175, 16
      %v7246 = vrot.slane %v7244, 1
      %v7247 = vshll.u32 %v7175, 16
      %v7249 = vrot.slane %v7247, 2
      %v7250 = vor.u32 %v7246, %v7249
      %v7251 = vsel %vm1828, %v7241, %v7250
      %v7253 = vshrl.u32 %v7176, 16
      %v7255 = vrot.slane %v7253, 1
      %v7256 = vshll.u32 %v7176, 16
      %v7258 = vrot.slane %v7256, 2
      %v7259 = vor.u32 %v7255, %v7258
      %v7260 = vsel %vm1828, %v7250, %v7259
      %v7262 = vshrl.u32 %v7177, 16
      %v7264 = vrot.slane %v7262, 1
      %v7265 = vshll.u32 %v7177, 16
      %v7267 = vrot.slane %v7265, 2
      %v7268 = vor.u32 %v7264, %v7267
      %v7269 = vsel %vm1828, %v7259, %v7268
      %v7271 = vshrl.u32 %v7178, 16
      %v7273 = vrot.slane %v7271, 1
      %v7274 = vshll.u32 %v7178, 16
      %v7276 = vrot.slane %v7274, 2
      %v7277 = vor.u32 %v7273, %v7276
      %v7278 = vsel %vm1828, %v7268, %v7277
      %v7280 = vshrl.u32 %v7179, 16
      %v7282 = vrot.slane %v7280, 1
      %v7283 = vshll.u32 %v7179, 16
      %v7285 = vrot.slane %v7283, 2
      %v7286 = vor.u32 %v7282, %v7285
      %v7287 = vsel %vm1828, %v7277, %v7286
      %v7289 = vshrl.u32 %v7180, 16
      %v7291 = vrot.slane %v7289, 1
      %v7292 = vshll.u32 %v7180, 16
      %v7294 = vrot.slane %v7292, 2
      %v7295 = vor.u32 %v7291, %v7294
      %v7296 = vsel %vm1828, %v7286, %v7295
      %v7298 = vshrl.u32 %v7181, 16
      %v7300 = vrot.slane %v7298, 1
      %v7301 = vshll.u32 %v7181, 16
      %v7303 = vrot.slane %v7301, 2
      %v7304 = vor.u32 %v7300, %v7303
      %v7305 = vsel %vm1828, %v7295, %v7304
      %v7307 = vshrl.u32 %v7182, 16
      %v7309 = vrot.slane %v7307, 1
      %v7310 = vshll.u32 %v7182, 16
      %v7312 = vrot.slane %v7310, 2
      %v7313 = vor.u32 %v7309, %v7312
      %v7314 = vsel %vm1828, %v7304, %v7313
      %v7316 = vshrl.u32 %v7183, 16
      %v7318 = vrot.slane %v7316, 1
      %v7319 = vshll.u32 %v7183, 16
      %v7321 = vrot.slane %v7319, 2
      %v7322 = vor.u32 %v7318, %v7321
      %v7323 = vsel %vm1828, %v7313, %v7322
      %v7325 = vshrl.u32 %v7184, 16
      %v7327 = vrot.slane %v7325, 1
      %v7328 = vshll.u32 %v7184, 16
      %v7330 = vrot.slane %v7328, 2
      %v7331 = vor.u32 %v7327, %v7330
      %v7332 = vsel %vm1828, %v7322, %v7331
      %v7333 = vsel %vm1828, %v7331, %v1976
      %v7338 = vunpack.c.l.b16 %v7186
      %v7339 = vunpack.c.l.b16 %v7187
      %v7340 = vunpack.c.l.b16 %v7188
      %v7341 = vunpack.c.l.b16 %v7189
      %v7342 = vpack.c.b16 %v7339, %v7338
      %v7343 = vpack.c.b16 %v7341, %v7340
      %v7347 = vsel %vm733, %v7206, 0
      %v7350 = vsel %vm733, %v7215, 0
      %v7353 = vsel %vm733, %v7224, 0
      %v7356 = vsel %vm733, %v7233, 0
      %v7359 = vsel %vm733, %v7242, 0
      %v7362 = vsel %vm733, %v7251, 0
      %v7365 = vsel %vm733, %v7260, 0
      %v7368 = vsel %vm733, %v7269, 0
      %v7371 = vsel %vm733, %v7278, 0
      %v7374 = vsel %vm733, %v7287, 0
      %v7377 = vsel %vm733, %v7296, 0
      %v7380 = vsel %vm733, %v7305, 0
      %v7383 = vsel %vm733, %v7314, 0
      %v7386 = vsel %vm733, %v7323, 0
      %v7389 = vsel %vm733, %v7332, 0
      %v7392 = vsel %vm733, %v7333, 0
      %7394 = vmatpush.bf16.msra.mxu0 0
      %7395 = vmatpush.bf16.msra.mxu0 0
      %7396 = vmatpush.bf16.msra.mxu0 0
      %7397 = vmatpush.bf16.msra.mxu0 0
      %7398 = vmatpush.bf16.msra.mxu0 0
      %7399 = vmatpush.bf16.msra.mxu0 0
      %7400 = vmatpush.bf16.msra.mxu0 %v7343
      %7401 = vmatpush.bf16.msra.mxu0 %v7342
      %7402 = vmatmul.bf16.gmra.mxu0 %v7347
      %v7403 = vpop.f32.mrf.mxu0
      %v7404 = vadd.f32 0.0, %v7403
      %v7405 = vpop.f32.mrf.mxu0
      %v7406 = vadd.f32 0.0, %v7405
      %7407 = vmatmul.bf16.gmra.mxu0 %v7350
      %v7408 = vpop.f32.mrf.mxu0
      %v7409 = vadd.f32 0.0, %v7408
      %v7410 = vpop.f32.mrf.mxu0
      %v7411 = vadd.f32 0.0, %v7410
      %7412 = vmatmul.bf16.gmra.mxu0 %v7353
      %v7413 = vpop.f32.mrf.mxu0
      %v7414 = vadd.f32 0.0, %v7413
      %v7415 = vpop.f32.mrf.mxu0
      %v7416 = vadd.f32 0.0, %v7415
      %7417 = vmatmul.bf16.gmra.mxu0 %v7356
      %v7418 = vpop.f32.mrf.mxu0
      %v7419 = vadd.f32 0.0, %v7418
      %v7420 = vpop.f32.mrf.mxu0
      %v7421 = vadd.f32 0.0, %v7420
      %7422 = vmatmul.bf16.gmra.mxu0 %v7359
      %v7423 = vpop.f32.mrf.mxu0
      %v7424 = vadd.f32 0.0, %v7423
      %v7425 = vpop.f32.mrf.mxu0
      %v7426 = vadd.f32 0.0, %v7425
      %7427 = vmatmul.bf16.gmra.mxu0 %v7362
      %v7428 = vpop.f32.mrf.mxu0
      %v7429 = vadd.f32 0.0, %v7428
      %v7430 = vpop.f32.mrf.mxu0
      %v7431 = vadd.f32 0.0, %v7430
      %7432 = vmatmul.bf16.gmra.mxu0 %v7365
      %v7433 = vpop.f32.mrf.mxu0
      %v7434 = vadd.f32 0.0, %v7433
      %v7435 = vpop.f32.mrf.mxu0
      %v7436 = vadd.f32 0.0, %v7435
      %7437 = vmatmul.bf16.gmra.mxu0 %v7368
      %v7438 = vpop.f32.mrf.mxu0
      %v7439 = vadd.f32 0.0, %v7438
      %v7440 = vpop.f32.mrf.mxu0
      %v7441 = vadd.f32 0.0, %v7440
      %7442 = vmatmul.bf16.gmra.mxu0 %v7371
      %v7443 = vpop.f32.mrf.mxu0
      %v7444 = vadd.f32 0.0, %v7443
      %v7445 = vpop.f32.mrf.mxu0
      %v7446 = vadd.f32 0.0, %v7445
      %7447 = vmatmul.bf16.gmra.mxu0 %v7374
      %v7448 = vpop.f32.mrf.mxu0
      %v7449 = vadd.f32 0.0, %v7448
      %v7450 = vpop.f32.mrf.mxu0
      %v7451 = vadd.f32 0.0, %v7450
      %7452 = vmatmul.bf16.gmra.mxu0 %v7377
      %v7453 = vpop.f32.mrf.mxu0
      %v7454 = vadd.f32 0.0, %v7453
      %v7455 = vpop.f32.mrf.mxu0
      %v7456 = vadd.f32 0.0, %v7455
      %7457 = vmatmul.bf16.gmra.mxu0 %v7380
      %v7458 = vpop.f32.mrf.mxu0
      %v7459 = vadd.f32 0.0, %v7458
      %v7460 = vpop.f32.mrf.mxu0
      %v7461 = vadd.f32 0.0, %v7460
      %7462 = vmatmul.bf16.gmra.mxu0 %v7383
      %v7463 = vpop.f32.mrf.mxu0
      %v7464 = vadd.f32 0.0, %v7463
      %v7465 = vpop.f32.mrf.mxu0
      %v7466 = vadd.f32 0.0, %v7465
      %7467 = vmatmul.bf16.gmra.mxu0 %v7386
      %v7468 = vpop.f32.mrf.mxu0
      %v7469 = vadd.f32 0.0, %v7468
      %v7470 = vpop.f32.mrf.mxu0
      %v7471 = vadd.f32 0.0, %v7470
      %7472 = vmatmul.bf16.gmra.mxu0 %v7389
      %v7473 = vpop.f32.mrf.mxu0
      %v7474 = vadd.f32 0.0, %v7473
      %v7475 = vpop.f32.mrf.mxu0
      %v7476 = vadd.f32 0.0, %v7475
      %7477 = vmatmul.bf16.gmra.mxu0 %v7392
      %v7478 = vpop.f32.mrf.mxu0
      %v7479 = vadd.f32 0.0, %v7478
      %v7480 = vpop.f32.mrf.mxu0
      %v7481 = vadd.f32 0.0, %v7480
      %7482 = vdwg.mxu0
      %v7483 = vadd.f32 %v7137, %v7404
      %v7484 = vadd.f32 %v7138, %v7406
      %v7485 = vadd.f32 %v7139, %v7409
      %v7486 = vadd.f32 %v7140, %v7411
      %v7487 = vadd.f32 %v7141, %v7414
      %v7488 = vadd.f32 %v7142, %v7416
      %v7489 = vadd.f32 %v7143, %v7419
      %v7490 = vadd.f32 %v7144, %v7421
      %v7491 = vadd.f32 %v7145, %v7424
      %v7492 = vadd.f32 %v7146, %v7426
      %v7493 = vadd.f32 %v7147, %v7429
      %v7494 = vadd.f32 %v7148, %v7431
      %v7495 = vadd.f32 %v7149, %v7434
      %v7496 = vadd.f32 %v7150, %v7436
      %v7497 = vadd.f32 %v7151, %v7439
      %v7498 = vadd.f32 %v7152, %v7441
      %v7499 = vadd.f32 %v7153, %v7444
      %v7500 = vadd.f32 %v7154, %v7446
      %v7501 = vadd.f32 %v7155, %v7449
      %v7502 = vadd.f32 %v7156, %v7451
      %v7503 = vadd.f32 %v7157, %v7454
      %v7504 = vadd.f32 %v7158, %v7456
      %v7505 = vadd.f32 %v7159, %v7459
      %v7506 = vadd.f32 %v7160, %v7461
      %v7507 = vadd.f32 %v7161, %v7464
      %v7508 = vadd.f32 %v7162, %v7466
      %v7509 = vadd.f32 %v7163, %v7469
      %v7510 = vadd.f32 %v7164, %v7471
      %v7511 = vadd.f32 %v7165, %v7474
      %v7512 = vadd.f32 %v7166, %v7476
      %v7513 = vadd.f32 %v7167, %v7479
      %v7514 = vadd.f32 %v7168, %v7481
      %s7515 = scalar_lea.vmem %s2, 352
      %v7516 = vld [vmem:[%s7515] sm:$0xf]
      %v7517 = vld [vmem:[%s7515 + $0x4] sm:$0xf]
      %v7518 = vld [vmem:[%s7515 + $0x8] sm:$0xf]
      %v7519 = vld [vmem:[%s7515 + $0xc] sm:$0xf]
      %v7536 = vrot.slane %v7169, 2
      %v7537 = vrot.slane %v7170, 2
      %v7538 = vsel %vm2180, %v7536, %v7537
      %v7539 = vrot.slane %v7171, 2
      %v7540 = vsel %vm2180, %v7537, %v7539
      %v7541 = vrot.slane %v7172, 2
      %v7542 = vsel %vm2180, %v7539, %v7541
      %v7543 = vrot.slane %v7173, 2
      %v7544 = vsel %vm2180, %v7541, %v7543
      %v7545 = vrot.slane %v7174, 2
      %v7546 = vsel %vm2180, %v7543, %v7545
      %v7547 = vrot.slane %v7175, 2
      %v7548 = vsel %vm2180, %v7545, %v7547
      %v7549 = vrot.slane %v7176, 2
      %v7550 = vsel %vm2180, %v7547, %v7549
      %v7551 = vrot.slane %v7177, 2
      %v7552 = vsel %vm2180, %v7549, %v7551
      %v7553 = vrot.slane %v7178, 2
      %v7554 = vsel %vm2180, %v7551, %v7553
      %v7555 = vrot.slane %v7179, 2
      %v7556 = vsel %vm2180, %v7553, %v7555
      %v7557 = vrot.slane %v7180, 2
      %v7558 = vsel %vm2180, %v7555, %v7557
      %v7559 = vrot.slane %v7181, 2
      %v7560 = vsel %vm2180, %v7557, %v7559
      %v7561 = vrot.slane %v7182, 2
      %v7562 = vsel %vm2180, %v7559, %v7561
      %v7563 = vrot.slane %v7183, 2
      %v7564 = vsel %vm2180, %v7561, %v7563
      %v7565 = vrot.slane %v7184, 2
      %v7566 = vsel %vm2180, %v7563, %v7565
      %v7567 = vsel %vm2180, %v7565, %v2212
      %v7572 = vunpack.c.l.b16 %v7516
      %v7573 = vunpack.c.l.b16 %v7517
      %v7574 = vunpack.c.l.b16 %v7518
      %v7575 = vunpack.c.l.b16 %v7519
      %v7576 = vpack.c.b16 %v7573, %v7572
      %v7577 = vpack.c.b16 %v7575, %v7574
      %v7581 = vsel %vm733, %v7538, 0
      %v7584 = vsel %vm733, %v7540, 0
      %v7587 = vsel %vm733, %v7542, 0
      %v7590 = vsel %vm733, %v7544, 0
      %v7593 = vsel %vm733, %v7546, 0
      %v7596 = vsel %vm733, %v7548, 0
      %v7599 = vsel %vm733, %v7550, 0
      %v7602 = vsel %vm733, %v7552, 0
      %v7605 = vsel %vm733, %v7554, 0
      %v7608 = vsel %vm733, %v7556, 0
      %v7611 = vsel %vm733, %v7558, 0
      %v7614 = vsel %vm733, %v7560, 0
      %v7617 = vsel %vm733, %v7562, 0
      %v7620 = vsel %vm733, %v7564, 0
      %v7623 = vsel %vm733, %v7566, 0
      %v7626 = vsel %vm733, %v7567, 0
      %7628 = vmatpush.bf16.msra.mxu0 0
      %7629 = vmatpush.bf16.msra.mxu0 0
      %7630 = vmatpush.bf16.msra.mxu0 0
      %7631 = vmatpush.bf16.msra.mxu0 0
      %7632 = vmatpush.bf16.msra.mxu0 0
      %7633 = vmatpush.bf16.msra.mxu0 0
      %7634 = vmatpush.bf16.msra.mxu0 %v7577
      %7635 = vmatpush.bf16.msra.mxu0 %v7576
      %7636 = vmatmul.bf16.gmra.mxu0 %v7581
      %v7637 = vpop.f32.mrf.mxu0
      %v7638 = vadd.f32 0.0, %v7637
      %v7639 = vpop.f32.mrf.mxu0
      %v7640 = vadd.f32 0.0, %v7639
      %7641 = vmatmul.bf16.gmra.mxu0 %v7584
      %v7642 = vpop.f32.mrf.mxu0
      %v7643 = vadd.f32 0.0, %v7642
      %v7644 = vpop.f32.mrf.mxu0
      %v7645 = vadd.f32 0.0, %v7644
      %7646 = vmatmul.bf16.gmra.mxu0 %v7587
      %v7647 = vpop.f32.mrf.mxu0
      %v7648 = vadd.f32 0.0, %v7647
      %v7649 = vpop.f32.mrf.mxu0
      %v7650 = vadd.f32 0.0, %v7649
      %7651 = vmatmul.bf16.gmra.mxu0 %v7590
      %v7652 = vpop.f32.mrf.mxu0
      %v7653 = vadd.f32 0.0, %v7652
      %v7654 = vpop.f32.mrf.mxu0
      %v7655 = vadd.f32 0.0, %v7654
      %7656 = vmatmul.bf16.gmra.mxu0 %v7593
      %v7657 = vpop.f32.mrf.mxu0
      %v7658 = vadd.f32 0.0, %v7657
      %v7659 = vpop.f32.mrf.mxu0
      %v7660 = vadd.f32 0.0, %v7659
      %7661 = vmatmul.bf16.gmra.mxu0 %v7596
      %v7662 = vpop.f32.mrf.mxu0
      %v7663 = vadd.f32 0.0, %v7662
      %v7664 = vpop.f32.mrf.mxu0
      %v7665 = vadd.f32 0.0, %v7664
      %7666 = vmatmul.bf16.gmra.mxu0 %v7599
      %v7667 = vpop.f32.mrf.mxu0
      %v7668 = vadd.f32 0.0, %v7667
      %v7669 = vpop.f32.mrf.mxu0
      %v7670 = vadd.f32 0.0, %v7669
      %7671 = vmatmul.bf16.gmra.mxu0 %v7602
      %v7672 = vpop.f32.mrf.mxu0
      %v7673 = vadd.f32 0.0, %v7672
      %v7674 = vpop.f32.mrf.mxu0
      %v7675 = vadd.f32 0.0, %v7674
      %7676 = vmatmul.bf16.gmra.mxu0 %v7605
      %v7677 = vpop.f32.mrf.mxu0
      %v7678 = vadd.f32 0.0, %v7677
      %v7679 = vpop.f32.mrf.mxu0
      %v7680 = vadd.f32 0.0, %v7679
      %7681 = vmatmul.bf16.gmra.mxu0 %v7608
      %v7682 = vpop.f32.mrf.mxu0
      %v7683 = vadd.f32 0.0, %v7682
      %v7684 = vpop.f32.mrf.mxu0
      %v7685 = vadd.f32 0.0, %v7684
      %7686 = vmatmul.bf16.gmra.mxu0 %v7611
      %v7687 = vpop.f32.mrf.mxu0
      %v7688 = vadd.f32 0.0, %v7687
      %v7689 = vpop.f32.mrf.mxu0
      %v7690 = vadd.f32 0.0, %v7689
      %7691 = vmatmul.bf16.gmra.mxu0 %v7614
      %v7692 = vpop.f32.mrf.mxu0
      %v7693 = vadd.f32 0.0, %v7692
      %v7694 = vpop.f32.mrf.mxu0
      %v7695 = vadd.f32 0.0, %v7694
      %7696 = vmatmul.bf16.gmra.mxu0 %v7617
      %v7697 = vpop.f32.mrf.mxu0
      %v7698 = vadd.f32 0.0, %v7697
      %v7699 = vpop.f32.mrf.mxu0
      %v7700 = vadd.f32 0.0, %v7699
      %7701 = vmatmul.bf16.gmra.mxu0 %v7620
      %v7702 = vpop.f32.mrf.mxu0
      %v7703 = vadd.f32 0.0, %v7702
      %v7704 = vpop.f32.mrf.mxu0
      %v7705 = vadd.f32 0.0, %v7704
      %7706 = vmatmul.bf16.gmra.mxu0 %v7623
      %v7707 = vpop.f32.mrf.mxu0
      %v7708 = vadd.f32 0.0, %v7707
      %v7709 = vpop.f32.mrf.mxu0
      %v7710 = vadd.f32 0.0, %v7709
      %7711 = vmatmul.bf16.gmra.mxu0 %v7626
      %v7712 = vpop.f32.mrf.mxu0
      %v7713 = vadd.f32 0.0, %v7712
      %v7714 = vpop.f32.mrf.mxu0
      %v7715 = vadd.f32 0.0, %v7714
      %7716 = vdwg.mxu0
      %v7717 = vadd.f32 %v7483, %v7638
      %v7718 = vadd.f32 %v7484, %v7640
      %v7719 = vadd.f32 %v7485, %v7643
      %v7720 = vadd.f32 %v7486, %v7645
      %v7721 = vadd.f32 %v7487, %v7648
      %v7722 = vadd.f32 %v7488, %v7650
      %v7723 = vadd.f32 %v7489, %v7653
      %v7724 = vadd.f32 %v7490, %v7655
      %v7725 = vadd.f32 %v7491, %v7658
      %v7726 = vadd.f32 %v7492, %v7660
      %v7727 = vadd.f32 %v7493, %v7663
      %v7728 = vadd.f32 %v7494, %v7665
      %v7729 = vadd.f32 %v7495, %v7668
      %v7730 = vadd.f32 %v7496, %v7670
      %v7731 = vadd.f32 %v7497, %v7673
      %v7732 = vadd.f32 %v7498, %v7675
      %v7733 = vadd.f32 %v7499, %v7678
      %v7734 = vadd.f32 %v7500, %v7680
      %v7735 = vadd.f32 %v7501, %v7683
      %v7736 = vadd.f32 %v7502, %v7685
      %v7737 = vadd.f32 %v7503, %v7688
      %v7738 = vadd.f32 %v7504, %v7690
      %v7739 = vadd.f32 %v7505, %v7693
      %v7740 = vadd.f32 %v7506, %v7695
      %v7741 = vadd.f32 %v7507, %v7698
      %v7742 = vadd.f32 %v7508, %v7700
      %v7743 = vadd.f32 %v7509, %v7703
      %v7744 = vadd.f32 %v7510, %v7705
      %v7745 = vadd.f32 %v7511, %v7708
      %v7746 = vadd.f32 %v7512, %v7710
      %v7747 = vadd.f32 %v7513, %v7713
      %v7748 = vadd.f32 %v7514, %v7715
      %s7749 = scalar_lea.vmem %s2, 368
      %v7750 = vld [vmem:[%s7749] sm:$0xf]
      %v7751 = vld [vmem:[%s7749 + $0x4] sm:$0xf]
      %v7752 = vld [vmem:[%s7749 + $0x8] sm:$0xf]
      %v7753 = vld [vmem:[%s7749 + $0xc] sm:$0xf]
      %v7754 = vrot.slane %v7191, 2
      %v7755 = vrot.slane %v7194, 3
      %v7756 = vor.u32 %v7754, %v7755
      %v7757 = vrot.slane %v7199, 2
      %v7758 = vrot.slane %v7202, 3
      %v7759 = vor.u32 %v7757, %v7758
      %v7760 = vsel %vm2400, %v7756, %v7759
      %v7761 = vrot.slane %v7208, 2
      %v7762 = vrot.slane %v7211, 3
      %v7763 = vor.u32 %v7761, %v7762
      %v7764 = vsel %vm2400, %v7759, %v7763
      %v7765 = vrot.slane %v7217, 2
      %v7766 = vrot.slane %v7220, 3
      %v7767 = vor.u32 %v7765, %v7766
      %v7768 = vsel %vm2400, %v7763, %v7767
      %v7769 = vrot.slane %v7226, 2
      %v7770 = vrot.slane %v7229, 3
      %v7771 = vor.u32 %v7769, %v7770
      %v7772 = vsel %vm2400, %v7767, %v7771
      %v7773 = vrot.slane %v7235, 2
      %v7774 = vrot.slane %v7238, 3
      %v7775 = vor.u32 %v7773, %v7774
      %v7776 = vsel %vm2400, %v7771, %v7775
      %v7777 = vrot.slane %v7244, 2
      %v7778 = vrot.slane %v7247, 3
      %v7779 = vor.u32 %v7777, %v7778
      %v7780 = vsel %vm2400, %v7775, %v7779
      %v7781 = vrot.slane %v7253, 2
      %v7782 = vrot.slane %v7256, 3
      %v7783 = vor.u32 %v7781, %v7782
      %v7784 = vsel %vm2400, %v7779, %v7783
      %v7785 = vrot.slane %v7262, 2
      %v7786 = vrot.slane %v7265, 3
      %v7787 = vor.u32 %v7785, %v7786
      %v7788 = vsel %vm2400, %v7783, %v7787
      %v7789 = vrot.slane %v7271, 2
      %v7790 = vrot.slane %v7274, 3
      %v7791 = vor.u32 %v7789, %v7790
      %v7792 = vsel %vm2400, %v7787, %v7791
      %v7793 = vrot.slane %v7280, 2
      %v7794 = vrot.slane %v7283, 3
      %v7795 = vor.u32 %v7793, %v7794
      %v7796 = vsel %vm2400, %v7791, %v7795
      %v7797 = vrot.slane %v7289, 2
      %v7798 = vrot.slane %v7292, 3
      %v7799 = vor.u32 %v7797, %v7798
      %v7800 = vsel %vm2400, %v7795, %v7799
      %v7801 = vrot.slane %v7298, 2
      %v7802 = vrot.slane %v7301, 3
      %v7803 = vor.u32 %v7801, %v7802
      %v7804 = vsel %vm2400, %v7799, %v7803
      %v7805 = vrot.slane %v7307, 2
      %v7806 = vrot.slane %v7310, 3
      %v7807 = vor.u32 %v7805, %v7806
      %v7808 = vsel %vm2400, %v7803, %v7807
      %v7809 = vrot.slane %v7316, 2
      %v7810 = vrot.slane %v7319, 3
      %v7811 = vor.u32 %v7809, %v7810
      %v7812 = vsel %vm2400, %v7807, %v7811
      %v7813 = vrot.slane %v7325, 2
      %v7814 = vrot.slane %v7328, 3
      %v7815 = vor.u32 %v7813, %v7814
      %v7816 = vsel %vm2400, %v7811, %v7815
      %v7817 = vsel %vm2400, %v7815, %v2466
      %v7822 = vunpack.c.l.b16 %v7750
      %v7823 = vunpack.c.l.b16 %v7751
      %v7824 = vunpack.c.l.b16 %v7752
      %v7825 = vunpack.c.l.b16 %v7753
      %v7826 = vpack.c.b16 %v7823, %v7822
      %v7827 = vpack.c.b16 %v7825, %v7824
      %v7831 = vsel %vm733, %v7760, 0
      %v7834 = vsel %vm733, %v7764, 0
      %v7837 = vsel %vm733, %v7768, 0
      %v7840 = vsel %vm733, %v7772, 0
      %v7843 = vsel %vm733, %v7776, 0
      %v7846 = vsel %vm733, %v7780, 0
      %v7849 = vsel %vm733, %v7784, 0
      %v7852 = vsel %vm733, %v7788, 0
      %v7855 = vsel %vm733, %v7792, 0
      %v7858 = vsel %vm733, %v7796, 0
      %v7861 = vsel %vm733, %v7800, 0
      %v7864 = vsel %vm733, %v7804, 0
      %v7867 = vsel %vm733, %v7808, 0
      %v7870 = vsel %vm733, %v7812, 0
      %v7873 = vsel %vm733, %v7816, 0
      %v7876 = vsel %vm733, %v7817, 0
      %7878 = vmatpush.bf16.msra.mxu0 0
      %7879 = vmatpush.bf16.msra.mxu0 0
      %7880 = vmatpush.bf16.msra.mxu0 0
      %7881 = vmatpush.bf16.msra.mxu0 0
      %7882 = vmatpush.bf16.msra.mxu0 0
      %7883 = vmatpush.bf16.msra.mxu0 0
      %7884 = vmatpush.bf16.msra.mxu0 %v7827
      %7885 = vmatpush.bf16.msra.mxu0 %v7826
      %7886 = vmatmul.bf16.gmra.mxu0 %v7831
      %v7887 = vpop.f32.mrf.mxu0
      %v7888 = vadd.f32 0.0, %v7887
      %v7889 = vpop.f32.mrf.mxu0
      %v7890 = vadd.f32 0.0, %v7889
      %7891 = vmatmul.bf16.gmra.mxu0 %v7834
      %v7892 = vpop.f32.mrf.mxu0
      %v7893 = vadd.f32 0.0, %v7892
      %v7894 = vpop.f32.mrf.mxu0
      %v7895 = vadd.f32 0.0, %v7894
      %7896 = vmatmul.bf16.gmra.mxu0 %v7837
      %v7897 = vpop.f32.mrf.mxu0
      %v7898 = vadd.f32 0.0, %v7897
      %v7899 = vpop.f32.mrf.mxu0
      %v7900 = vadd.f32 0.0, %v7899
      %7901 = vmatmul.bf16.gmra.mxu0 %v7840
      %v7902 = vpop.f32.mrf.mxu0
      %v7903 = vadd.f32 0.0, %v7902
      %v7904 = vpop.f32.mrf.mxu0
      %v7905 = vadd.f32 0.0, %v7904
      %7906 = vmatmul.bf16.gmra.mxu0 %v7843
      %v7907 = vpop.f32.mrf.mxu0
      %v7908 = vadd.f32 0.0, %v7907
      %v7909 = vpop.f32.mrf.mxu0
      %v7910 = vadd.f32 0.0, %v7909
      %7911 = vmatmul.bf16.gmra.mxu0 %v7846
      %v7912 = vpop.f32.mrf.mxu0
      %v7913 = vadd.f32 0.0, %v7912
      %v7914 = vpop.f32.mrf.mxu0
      %v7915 = vadd.f32 0.0, %v7914
      %7916 = vmatmul.bf16.gmra.mxu0 %v7849
      %v7917 = vpop.f32.mrf.mxu0
      %v7918 = vadd.f32 0.0, %v7917
      %v7919 = vpop.f32.mrf.mxu0
      %v7920 = vadd.f32 0.0, %v7919
      %7921 = vmatmul.bf16.gmra.mxu0 %v7852
      %v7922 = vpop.f32.mrf.mxu0
      %v7923 = vadd.f32 0.0, %v7922
      %v7924 = vpop.f32.mrf.mxu0
      %v7925 = vadd.f32 0.0, %v7924
      %7926 = vmatmul.bf16.gmra.mxu0 %v7855
      %v7927 = vpop.f32.mrf.mxu0
      %v7928 = vadd.f32 0.0, %v7927
      %v7929 = vpop.f32.mrf.mxu0
      %v7930 = vadd.f32 0.0, %v7929
      %7931 = vmatmul.bf16.gmra.mxu0 %v7858
      %v7932 = vpop.f32.mrf.mxu0
      %v7933 = vadd.f32 0.0, %v7932
      %v7934 = vpop.f32.mrf.mxu0
      %v7935 = vadd.f32 0.0, %v7934
      %7936 = vmatmul.bf16.gmra.mxu0 %v7861
      %v7937 = vpop.f32.mrf.mxu0
      %v7938 = vadd.f32 0.0, %v7937
      %v7939 = vpop.f32.mrf.mxu0
      %v7940 = vadd.f32 0.0, %v7939
      %7941 = vmatmul.bf16.gmra.mxu0 %v7864
      %v7942 = vpop.f32.mrf.mxu0
      %v7943 = vadd.f32 0.0, %v7942
      %v7944 = vpop.f32.mrf.mxu0
      %v7945 = vadd.f32 0.0, %v7944
      %7946 = vmatmul.bf16.gmra.mxu0 %v7867
      %v7947 = vpop.f32.mrf.mxu0
      %v7948 = vadd.f32 0.0, %v7947
      %v7949 = vpop.f32.mrf.mxu0
      %v7950 = vadd.f32 0.0, %v7949
      %7951 = vmatmul.bf16.gmra.mxu0 %v7870
      %v7952 = vpop.f32.mrf.mxu0
      %v7953 = vadd.f32 0.0, %v7952
      %v7954 = vpop.f32.mrf.mxu0
      %v7955 = vadd.f32 0.0, %v7954
      %7956 = vmatmul.bf16.gmra.mxu0 %v7873
      %v7957 = vpop.f32.mrf.mxu0
      %v7958 = vadd.f32 0.0, %v7957
      %v7959 = vpop.f32.mrf.mxu0
      %v7960 = vadd.f32 0.0, %v7959
      %7961 = vmatmul.bf16.gmra.mxu0 %v7876
      %v7962 = vpop.f32.mrf.mxu0
      %v7963 = vadd.f32 0.0, %v7962
      %v7964 = vpop.f32.mrf.mxu0
      %v7965 = vadd.f32 0.0, %v7964
      %7966 = vdwg.mxu0
      %v7967 = vadd.f32 %v7717, %v7888
      %v7968 = vadd.f32 %v7718, %v7890
      %v7969 = vadd.f32 %v7719, %v7893
      %v7970 = vadd.f32 %v7720, %v7895
      %v7971 = vadd.f32 %v7721, %v7898
      %v7972 = vadd.f32 %v7722, %v7900
      %v7973 = vadd.f32 %v7723, %v7903
      %v7974 = vadd.f32 %v7724, %v7905
      %v7975 = vadd.f32 %v7725, %v7908
      %v7976 = vadd.f32 %v7726, %v7910
      %v7977 = vadd.f32 %v7727, %v7913
      %v7978 = vadd.f32 %v7728, %v7915
      %v7979 = vadd.f32 %v7729, %v7918
      %v7980 = vadd.f32 %v7730, %v7920
      %v7981 = vadd.f32 %v7731, %v7923
      %v7982 = vadd.f32 %v7732, %v7925
      %v7983 = vadd.f32 %v7733, %v7928
      %v7984 = vadd.f32 %v7734, %v7930
      %v7985 = vadd.f32 %v7735, %v7933
      %v7986 = vadd.f32 %v7736, %v7935
      %v7987 = vadd.f32 %v7737, %v7938
      %v7988 = vadd.f32 %v7738, %v7940
      %v7989 = vadd.f32 %v7739, %v7943
      %v7990 = vadd.f32 %v7740, %v7945
      %v7991 = vadd.f32 %v7741, %v7948
      %v7992 = vadd.f32 %v7742, %v7950
      %v7993 = vadd.f32 %v7743, %v7953
      %v7994 = vadd.f32 %v7744, %v7955
      %v7995 = vadd.f32 %v7745, %v7958
      %v7996 = vadd.f32 %v7746, %v7960
      %v7997 = vadd.f32 %v7747, %v7963
      %v7998 = vadd.f32 %v7748, %v7965
      %s7999 = scalar_lea.vmem %s2, 384
      %v8000 = vld [vmem:[%s7999] sm:$0xf]
      %v8001 = vld [vmem:[%s7999 + $0x4] sm:$0xf]
      %v8002 = vld [vmem:[%s7999 + $0x8] sm:$0xf]
      %v8003 = vld [vmem:[%s7999 + $0xc] sm:$0xf]
      %v8004 = vrot.slane %v6500, 3
      %v8005 = vrot.slane %v6501, 3
      %v8006 = vsel %vm2654, %v8004, %v8005
      %v8007 = vrot.slane %v6502, 3
      %v8008 = vsel %vm2654, %v8005, %v8007
      %v8009 = vrot.slane %v6503, 3
      %v8010 = vsel %vm2654, %v8007, %v8009
      %v8011 = vrot.slane %v6504, 3
      %v8012 = vsel %vm2654, %v8009, %v8011
      %v8013 = vrot.slane %v6505, 3
      %v8014 = vsel %vm2654, %v8011, %v8013
      %v8015 = vrot.slane %v6506, 3
      %v8016 = vsel %vm2654, %v8013, %v8015
      %v8017 = vrot.slane %v6507, 3
      %v8018 = vsel %vm2654, %v8015, %v8017
      %v8019 = vrot.slane %v6508, 3
      %v8020 = vsel %vm2654, %v8017, %v8019
      %v8021 = vrot.slane %v6509, 3
      %v8022 = vsel %vm2654, %v8019, %v8021
      %v8023 = vrot.slane %v6510, 3
      %v8024 = vsel %vm2654, %v8021, %v8023
      %v8025 = vrot.slane %v6511, 3
      %v8026 = vsel %vm2654, %v8023, %v8025
      %v8027 = vrot.slane %v6512, 3
      %v8028 = vsel %vm2654, %v8025, %v8027
      %v8029 = vrot.slane %v6513, 3
      %v8030 = vsel %vm2654, %v8027, %v8029
      %v8031 = vrot.slane %v6514, 3
      %v8032 = vsel %vm2654, %v8029, %v8031
      %v8033 = vsel %vm2654, %v8031, %v2684
      %v8038 = vunpack.c.l.b16 %v8000
      %v8039 = vunpack.c.l.b16 %v8001
      %v8040 = vunpack.c.l.b16 %v8002
      %v8041 = vunpack.c.l.b16 %v8003
      %v8042 = vpack.c.b16 %v8039, %v8038
      %v8043 = vpack.c.b16 %v8041, %v8040
      %v8047 = vsel %vm733, %v8006, 0
      %v8050 = vsel %vm733, %v8008, 0
      %v8053 = vsel %vm733, %v8010, 0
      %v8056 = vsel %vm733, %v8012, 0
      %v8059 = vsel %vm733, %v8014, 0
      %v8062 = vsel %vm733, %v8016, 0
      %v8065 = vsel %vm733, %v8018, 0
      %v8068 = vsel %vm733, %v8020, 0
      %v8071 = vsel %vm733, %v8022, 0
      %v8074 = vsel %vm733, %v8024, 0
      %v8077 = vsel %vm733, %v8026, 0
      %v8080 = vsel %vm733, %v8028, 0
      %v8083 = vsel %vm733, %v8030, 0
      %v8086 = vsel %vm733, %v8032, 0
      %v8089 = vsel %vm733, %v8033, 0
      %8091 = vmatpush.bf16.msra.mxu0 0
      %8092 = vmatpush.bf16.msra.mxu0 0
      %8093 = vmatpush.bf16.msra.mxu0 0
      %8094 = vmatpush.bf16.msra.mxu0 0
      %8095 = vmatpush.bf16.msra.mxu0 0
      %8096 = vmatpush.bf16.msra.mxu0 0
      %8097 = vmatpush.bf16.msra.mxu0 %v8043
      %8098 = vmatpush.bf16.msra.mxu0 %v8042
      %8099 = vmatmul.bf16.gmra.mxu0 %v8047
      %v8100 = vpop.f32.mrf.mxu0
      %v8101 = vadd.f32 0.0, %v8100
      %v8102 = vpop.f32.mrf.mxu0
      %v8103 = vadd.f32 0.0, %v8102
      %8104 = vmatmul.bf16.gmra.mxu0 %v8050
      %v8105 = vpop.f32.mrf.mxu0
      %v8106 = vadd.f32 0.0, %v8105
      %v8107 = vpop.f32.mrf.mxu0
      %v8108 = vadd.f32 0.0, %v8107
      %8109 = vmatmul.bf16.gmra.mxu0 %v8053
      %v8110 = vpop.f32.mrf.mxu0
      %v8111 = vadd.f32 0.0, %v8110
      %v8112 = vpop.f32.mrf.mxu0
      %v8113 = vadd.f32 0.0, %v8112
      %8114 = vmatmul.bf16.gmra.mxu0 %v8056
      %v8115 = vpop.f32.mrf.mxu0
      %v8116 = vadd.f32 0.0, %v8115
      %v8117 = vpop.f32.mrf.mxu0
      %v8118 = vadd.f32 0.0, %v8117
      %8119 = vmatmul.bf16.gmra.mxu0 %v8059
      %v8120 = vpop.f32.mrf.mxu0
      %v8121 = vadd.f32 0.0, %v8120
      %v8122 = vpop.f32.mrf.mxu0
      %v8123 = vadd.f32 0.0, %v8122
      %8124 = vmatmul.bf16.gmra.mxu0 %v8062
      %v8125 = vpop.f32.mrf.mxu0
      %v8126 = vadd.f32 0.0, %v8125
      %v8127 = vpop.f32.mrf.mxu0
      %v8128 = vadd.f32 0.0, %v8127
      %8129 = vmatmul.bf16.gmra.mxu0 %v8065
      %v8130 = vpop.f32.mrf.mxu0
      %v8131 = vadd.f32 0.0, %v8130
      %v8132 = vpop.f32.mrf.mxu0
      %v8133 = vadd.f32 0.0, %v8132
      %8134 = vmatmul.bf16.gmra.mxu0 %v8068
      %v8135 = vpop.f32.mrf.mxu0
      %v8136 = vadd.f32 0.0, %v8135
      %v8137 = vpop.f32.mrf.mxu0
      %v8138 = vadd.f32 0.0, %v8137
      %8139 = vmatmul.bf16.gmra.mxu0 %v8071
      %v8140 = vpop.f32.mrf.mxu0
      %v8141 = vadd.f32 0.0, %v8140
      %v8142 = vpop.f32.mrf.mxu0
      %v8143 = vadd.f32 0.0, %v8142
      %8144 = vmatmul.bf16.gmra.mxu0 %v8074
      %v8145 = vpop.f32.mrf.mxu0
      %v8146 = vadd.f32 0.0, %v8145
      %v8147 = vpop.f32.mrf.mxu0
      %v8148 = vadd.f32 0.0, %v8147
      %8149 = vmatmul.bf16.gmra.mxu0 %v8077
      %v8150 = vpop.f32.mrf.mxu0
      %v8151 = vadd.f32 0.0, %v8150
      %v8152 = vpop.f32.mrf.mxu0
      %v8153 = vadd.f32 0.0, %v8152
      %8154 = vmatmul.bf16.gmra.mxu0 %v8080
      %v8155 = vpop.f32.mrf.mxu0
      %v8156 = vadd.f32 0.0, %v8155
      %v8157 = vpop.f32.mrf.mxu0
      %v8158 = vadd.f32 0.0, %v8157
      %8159 = vmatmul.bf16.gmra.mxu0 %v8083
      %v8160 = vpop.f32.mrf.mxu0
      %v8161 = vadd.f32 0.0, %v8160
      %v8162 = vpop.f32.mrf.mxu0
      %v8163 = vadd.f32 0.0, %v8162
      %8164 = vmatmul.bf16.gmra.mxu0 %v8086
      %v8165 = vpop.f32.mrf.mxu0
      %v8166 = vadd.f32 0.0, %v8165
      %v8167 = vpop.f32.mrf.mxu0
      %v8168 = vadd.f32 0.0, %v8167
      %8169 = vmatmul.bf16.gmra.mxu0 %v8089
      %v8170 = vpop.f32.mrf.mxu0
      %v8171 = vadd.f32 0.0, %v8170
      %v8172 = vpop.f32.mrf.mxu0
      %v8173 = vadd.f32 0.0, %v8172
      %8174 = vmatmul.bf16.gmra.mxu0 %v2745
      %v8175 = vpop.f32.mrf.mxu0
      %v8176 = vadd.f32 0.0, %v8175
      %v8177 = vpop.f32.mrf.mxu0
      %v8178 = vadd.f32 0.0, %v8177
      %8179 = vdwg.mxu0
      %v8180 = vadd.f32 %v7967, %v8101
      %v8181 = vadd.f32 %v7968, %v8103
      %v8182 = vadd.f32 %v7969, %v8106
      %v8183 = vadd.f32 %v7970, %v8108
      %v8184 = vadd.f32 %v7971, %v8111
      %v8185 = vadd.f32 %v7972, %v8113
      %v8186 = vadd.f32 %v7973, %v8116
      %v8187 = vadd.f32 %v7974, %v8118
      %v8188 = vadd.f32 %v7975, %v8121
      %v8189 = vadd.f32 %v7976, %v8123
      %v8190 = vadd.f32 %v7977, %v8126
      %v8191 = vadd.f32 %v7978, %v8128
      %v8192 = vadd.f32 %v7979, %v8131
      %v8193 = vadd.f32 %v7980, %v8133
      %v8194 = vadd.f32 %v7981, %v8136
      %v8195 = vadd.f32 %v7982, %v8138
      %v8196 = vadd.f32 %v7983, %v8141
      %v8197 = vadd.f32 %v7984, %v8143
      %v8198 = vadd.f32 %v7985, %v8146
      %v8199 = vadd.f32 %v7986, %v8148
      %v8200 = vadd.f32 %v7987, %v8151
      %v8201 = vadd.f32 %v7988, %v8153
      %v8202 = vadd.f32 %v7989, %v8156
      %v8203 = vadd.f32 %v7990, %v8158
      %v8204 = vadd.f32 %v7991, %v8161
      %v8205 = vadd.f32 %v7992, %v8163
      %v8206 = vadd.f32 %v7993, %v8166
      %v8207 = vadd.f32 %v7994, %v8168
      %v8208 = vadd.f32 %v7995, %v8171
      %v8209 = vadd.f32 %v7996, %v8173
      %v8210 = vadd.f32 %v7997, %v8176
      %v8211 = vadd.f32 %v7998, %v8178
      %s8212 = scalar_lea.vmem %s2, 400
      %v8213 = vld [vmem:[%s8212] sm:$0xf]
      %v8214 = vld [vmem:[%s8212 + $0x4] sm:$0xf]
      %v8215 = vld [vmem:[%s8212 + $0x8] sm:$0xf]
      %v8216 = vld [vmem:[%s8212 + $0xc] sm:$0xf]
      %v8217 = vrot.slane %v6537, 3
      %v8218 = vrot.slane %v6533, 4
      %v8219 = vor.u32 %v8217, %v8218
      %v8220 = vrot.slane %v6545, 3
      %v8221 = vrot.slane %v6541, 4
      %v8222 = vor.u32 %v8220, %v8221
      %v8223 = vsel %vm2873, %v8219, %v8222
      %v8224 = vrot.slane %v6553, 3
      %v8225 = vrot.slane %v6549, 4
      %v8226 = vor.u32 %v8224, %v8225
      %v8227 = vsel %vm2873, %v8222, %v8226
      %v8228 = vrot.slane %v6561, 3
      %v8229 = vrot.slane %v6557, 4
      %v8230 = vor.u32 %v8228, %v8229
      %v8231 = vsel %vm2873, %v8226, %v8230
      %v8232 = vrot.slane %v6569, 3
      %v8233 = vrot.slane %v6565, 4
      %v8234 = vor.u32 %v8232, %v8233
      %v8235 = vsel %vm2873, %v8230, %v8234
      %v8236 = vrot.slane %v6577, 3
      %v8237 = vrot.slane %v6573, 4
      %v8238 = vor.u32 %v8236, %v8237
      %v8239 = vsel %vm2873, %v8234, %v8238
      %v8240 = vrot.slane %v6585, 3
      %v8241 = vrot.slane %v6581, 4
      %v8242 = vor.u32 %v8240, %v8241
      %v8243 = vsel %vm2873, %v8238, %v8242
      %v8244 = vrot.slane %v6593, 3
      %v8245 = vrot.slane %v6589, 4
      %v8246 = vor.u32 %v8244, %v8245
      %v8247 = vsel %vm2873, %v8242, %v8246
      %v8248 = vrot.slane %v6601, 3
      %v8249 = vrot.slane %v6597, 4
      %v8250 = vor.u32 %v8248, %v8249
      %v8251 = vsel %vm2873, %v8246, %v8250
      %v8252 = vrot.slane %v6609, 3
      %v8253 = vrot.slane %v6605, 4
      %v8254 = vor.u32 %v8252, %v8253
      %v8255 = vsel %vm2873, %v8250, %v8254
      %v8256 = vrot.slane %v6617, 3
      %v8257 = vrot.slane %v6613, 4
      %v8258 = vor.u32 %v8256, %v8257
      %v8259 = vsel %vm2873, %v8254, %v8258
      %v8260 = vrot.slane %v6625, 3
      %v8261 = vrot.slane %v6621, 4
      %v8262 = vor.u32 %v8260, %v8261
      %v8263 = vsel %vm2873, %v8258, %v8262
      %v8264 = vrot.slane %v6633, 3
      %v8265 = vrot.slane %v6629, 4
      %v8266 = vor.u32 %v8264, %v8265
      %v8267 = vsel %vm2873, %v8262, %v8266
      %v8268 = vrot.slane %v6641, 3
      %v8269 = vrot.slane %v6637, 4
      %v8270 = vor.u32 %v8268, %v8269
      %v8271 = vsel %vm2873, %v8266, %v8270
      %v8272 = vrot.slane %v6649, 3
      %v8273 = vrot.slane %v6645, 4
      %v8274 = vor.u32 %v8272, %v8273
      %v8275 = vsel %vm2873, %v8270, %v8274
      %v8276 = vsel %vm2873, %v8274, %v2935
      %v8281 = vunpack.c.l.b16 %v8213
      %v8282 = vunpack.c.l.b16 %v8214
      %v8283 = vunpack.c.l.b16 %v8215
      %v8284 = vunpack.c.l.b16 %v8216
      %v8285 = vpack.c.b16 %v8282, %v8281
      %v8286 = vpack.c.b16 %v8284, %v8283
      %v8290 = vsel %vm733, %v8223, 0
      %v8293 = vsel %vm733, %v8227, 0
      %v8296 = vsel %vm733, %v8231, 0
      %v8299 = vsel %vm733, %v8235, 0
      %v8302 = vsel %vm733, %v8239, 0
      %v8305 = vsel %vm733, %v8243, 0
      %v8308 = vsel %vm733, %v8247, 0
      %v8311 = vsel %vm733, %v8251, 0
      %v8314 = vsel %vm733, %v8255, 0
      %v8317 = vsel %vm733, %v8259, 0
      %v8320 = vsel %vm733, %v8263, 0
      %v8323 = vsel %vm733, %v8267, 0
      %v8326 = vsel %vm733, %v8271, 0
      %v8329 = vsel %vm733, %v8275, 0
      %v8332 = vsel %vm733, %v8276, 0
      %8334 = vmatpush.bf16.msra.mxu0 0
      %8335 = vmatpush.bf16.msra.mxu0 0
      %8336 = vmatpush.bf16.msra.mxu0 0
      %8337 = vmatpush.bf16.msra.mxu0 0
      %8338 = vmatpush.bf16.msra.mxu0 0
      %8339 = vmatpush.bf16.msra.mxu0 0
      %8340 = vmatpush.bf16.msra.mxu0 %v8286
      %8341 = vmatpush.bf16.msra.mxu0 %v8285
      %8342 = vmatmul.bf16.gmra.mxu0 %v8290
      %v8343 = vpop.f32.mrf.mxu0
      %v8344 = vadd.f32 0.0, %v8343
      %v8345 = vpop.f32.mrf.mxu0
      %v8346 = vadd.f32 0.0, %v8345
      %8347 = vmatmul.bf16.gmra.mxu0 %v8293
      %v8348 = vpop.f32.mrf.mxu0
      %v8349 = vadd.f32 0.0, %v8348
      %v8350 = vpop.f32.mrf.mxu0
      %v8351 = vadd.f32 0.0, %v8350
      %8352 = vmatmul.bf16.gmra.mxu0 %v8296
      %v8353 = vpop.f32.mrf.mxu0
      %v8354 = vadd.f32 0.0, %v8353
      %v8355 = vpop.f32.mrf.mxu0
      %v8356 = vadd.f32 0.0, %v8355
      %8357 = vmatmul.bf16.gmra.mxu0 %v8299
      %v8358 = vpop.f32.mrf.mxu0
      %v8359 = vadd.f32 0.0, %v8358
      %v8360 = vpop.f32.mrf.mxu0
      %v8361 = vadd.f32 0.0, %v8360
      %8362 = vmatmul.bf16.gmra.mxu0 %v8302
      %v8363 = vpop.f32.mrf.mxu0
      %v8364 = vadd.f32 0.0, %v8363
      %v8365 = vpop.f32.mrf.mxu0
      %v8366 = vadd.f32 0.0, %v8365
      %8367 = vmatmul.bf16.gmra.mxu0 %v8305
      %v8368 = vpop.f32.mrf.mxu0
      %v8369 = vadd.f32 0.0, %v8368
      %v8370 = vpop.f32.mrf.mxu0
      %v8371 = vadd.f32 0.0, %v8370
      %8372 = vmatmul.bf16.gmra.mxu0 %v8308
      %v8373 = vpop.f32.mrf.mxu0
      %v8374 = vadd.f32 0.0, %v8373
      %v8375 = vpop.f32.mrf.mxu0
      %v8376 = vadd.f32 0.0, %v8375
      %8377 = vmatmul.bf16.gmra.mxu0 %v8311
      %v8378 = vpop.f32.mrf.mxu0
      %v8379 = vadd.f32 0.0, %v8378
      %v8380 = vpop.f32.mrf.mxu0
      %v8381 = vadd.f32 0.0, %v8380
      %8382 = vmatmul.bf16.gmra.mxu0 %v8314
      %v8383 = vpop.f32.mrf.mxu0
      %v8384 = vadd.f32 0.0, %v8383
      %v8385 = vpop.f32.mrf.mxu0
      %v8386 = vadd.f32 0.0, %v8385
      %8387 = vmatmul.bf16.gmra.mxu0 %v8317
      %v8388 = vpop.f32.mrf.mxu0
      %v8389 = vadd.f32 0.0, %v8388
      %v8390 = vpop.f32.mrf.mxu0
      %v8391 = vadd.f32 0.0, %v8390
      %8392 = vmatmul.bf16.gmra.mxu0 %v8320
      %v8393 = vpop.f32.mrf.mxu0
      %v8394 = vadd.f32 0.0, %v8393
      %v8395 = vpop.f32.mrf.mxu0
      %v8396 = vadd.f32 0.0, %v8395
      %8397 = vmatmul.bf16.gmra.mxu0 %v8323
      %v8398 = vpop.f32.mrf.mxu0
      %v8399 = vadd.f32 0.0, %v8398
      %v8400 = vpop.f32.mrf.mxu0
      %v8401 = vadd.f32 0.0, %v8400
      %8402 = vmatmul.bf16.gmra.mxu0 %v8326
      %v8403 = vpop.f32.mrf.mxu0
      %v8404 = vadd.f32 0.0, %v8403
      %v8405 = vpop.f32.mrf.mxu0
      %v8406 = vadd.f32 0.0, %v8405
      %8407 = vmatmul.bf16.gmra.mxu0 %v8329
      %v8408 = vpop.f32.mrf.mxu0
      %v8409 = vadd.f32 0.0, %v8408
      %v8410 = vpop.f32.mrf.mxu0
      %v8411 = vadd.f32 0.0, %v8410
      %8412 = vmatmul.bf16.gmra.mxu0 %v8332
      %v8413 = vpop.f32.mrf.mxu0
      %v8414 = vadd.f32 0.0, %v8413
      %v8415 = vpop.f32.mrf.mxu0
      %v8416 = vadd.f32 0.0, %v8415
      %8417 = vmatmul.bf16.gmra.mxu0 %v2996
      %v8418 = vpop.f32.mrf.mxu0
      %v8419 = vadd.f32 0.0, %v8418
      %v8420 = vpop.f32.mrf.mxu0
      %v8421 = vadd.f32 0.0, %v8420
      %8422 = vdwg.mxu0
      %v8423 = vadd.f32 %v8180, %v8344
      %v8424 = vadd.f32 %v8181, %v8346
      %v8425 = vadd.f32 %v8182, %v8349
      %v8426 = vadd.f32 %v8183, %v8351
      %v8427 = vadd.f32 %v8184, %v8354
      %v8428 = vadd.f32 %v8185, %v8356
      %v8429 = vadd.f32 %v8186, %v8359
      %v8430 = vadd.f32 %v8187, %v8361
      %v8431 = vadd.f32 %v8188, %v8364
      %v8432 = vadd.f32 %v8189, %v8366
      %v8433 = vadd.f32 %v8190, %v8369
      %v8434 = vadd.f32 %v8191, %v8371
      %v8435 = vadd.f32 %v8192, %v8374
      %v8436 = vadd.f32 %v8193, %v8376
      %v8437 = vadd.f32 %v8194, %v8379
      %v8438 = vadd.f32 %v8195, %v8381
      %v8439 = vadd.f32 %v8196, %v8384
      %v8440 = vadd.f32 %v8197, %v8386
      %v8441 = vadd.f32 %v8198, %v8389
      %v8442 = vadd.f32 %v8199, %v8391
      %v8443 = vadd.f32 %v8200, %v8394
      %v8444 = vadd.f32 %v8201, %v8396
      %v8445 = vadd.f32 %v8202, %v8399
      %v8446 = vadd.f32 %v8203, %v8401
      %v8447 = vadd.f32 %v8204, %v8404
      %v8448 = vadd.f32 %v8205, %v8406
      %v8449 = vadd.f32 %v8206, %v8409
      %v8450 = vadd.f32 %v8207, %v8411
      %v8451 = vadd.f32 %v8208, %v8414
      %v8452 = vadd.f32 %v8209, %v8416
      %v8453 = vadd.f32 %v8210, %v8419
      %v8454 = vadd.f32 %v8211, %v8421
      %s8455 = scalar_lea.vmem %s2, 416
      %v8456 = vld [vmem:[%s8455] sm:$0xf]
      %v8457 = vld [vmem:[%s8455 + $0x4] sm:$0xf]
      %v8458 = vld [vmem:[%s8455 + $0x8] sm:$0xf]
      %v8459 = vld [vmem:[%s8455 + $0xc] sm:$0xf]
      %v8464 = vunpack.c.l.b16 %v8456
      %v8465 = vunpack.c.l.b16 %v8457
      %v8466 = vunpack.c.l.b16 %v8458
      %v8467 = vunpack.c.l.b16 %v8459
      %v8468 = vpack.c.b16 %v8465, %v8464
      %v8469 = vpack.c.b16 %v8467, %v8466
      %v8472 = vsel %vm733, %v7170, 0
      %v8474 = vsel %vm733, %v7171, 0
      %v8476 = vsel %vm733, %v7172, 0
      %v8478 = vsel %vm733, %v7173, 0
      %v8480 = vsel %vm733, %v7174, 0
      %v8482 = vsel %vm733, %v7175, 0
      %v8484 = vsel %vm733, %v7176, 0
      %v8486 = vsel %vm733, %v7177, 0
      %v8488 = vsel %vm733, %v7178, 0
      %v8490 = vsel %vm733, %v7179, 0
      %v8492 = vsel %vm733, %v7180, 0
      %v8494 = vsel %vm733, %v7181, 0
      %v8496 = vsel %vm733, %v7182, 0
      %v8498 = vsel %vm733, %v7183, 0
      %v8500 = vsel %vm733, %v7184, 0
      %8502 = vmatpush.bf16.msra.mxu0 0
      %8503 = vmatpush.bf16.msra.mxu0 0
      %8504 = vmatpush.bf16.msra.mxu0 0
      %8505 = vmatpush.bf16.msra.mxu0 0
      %8506 = vmatpush.bf16.msra.mxu0 0
      %8507 = vmatpush.bf16.msra.mxu0 0
      %8508 = vmatpush.bf16.msra.mxu0 %v8469
      %8509 = vmatpush.bf16.msra.mxu0 %v8468
      %8510 = vmatmul.bf16.gmra.mxu0 %v8472
      %v8511 = vpop.f32.mrf.mxu0
      %v8512 = vadd.f32 0.0, %v8511
      %v8513 = vpop.f32.mrf.mxu0
      %v8514 = vadd.f32 0.0, %v8513
      %8515 = vmatmul.bf16.gmra.mxu0 %v8474
      %v8516 = vpop.f32.mrf.mxu0
      %v8517 = vadd.f32 0.0, %v8516
      %v8518 = vpop.f32.mrf.mxu0
      %v8519 = vadd.f32 0.0, %v8518
      %8520 = vmatmul.bf16.gmra.mxu0 %v8476
      %v8521 = vpop.f32.mrf.mxu0
      %v8522 = vadd.f32 0.0, %v8521
      %v8523 = vpop.f32.mrf.mxu0
      %v8524 = vadd.f32 0.0, %v8523
      %8525 = vmatmul.bf16.gmra.mxu0 %v8478
      %v8526 = vpop.f32.mrf.mxu0
      %v8527 = vadd.f32 0.0, %v8526
      %v8528 = vpop.f32.mrf.mxu0
      %v8529 = vadd.f32 0.0, %v8528
      %8530 = vmatmul.bf16.gmra.mxu0 %v8480
      %v8531 = vpop.f32.mrf.mxu0
      %v8532 = vadd.f32 0.0, %v8531
      %v8533 = vpop.f32.mrf.mxu0
      %v8534 = vadd.f32 0.0, %v8533
      %8535 = vmatmul.bf16.gmra.mxu0 %v8482
      %v8536 = vpop.f32.mrf.mxu0
      %v8537 = vadd.f32 0.0, %v8536
      %v8538 = vpop.f32.mrf.mxu0
      %v8539 = vadd.f32 0.0, %v8538
      %8540 = vmatmul.bf16.gmra.mxu0 %v8484
      %v8541 = vpop.f32.mrf.mxu0
      %v8542 = vadd.f32 0.0, %v8541
      %v8543 = vpop.f32.mrf.mxu0
      %v8544 = vadd.f32 0.0, %v8543
      %8545 = vmatmul.bf16.gmra.mxu0 %v8486
      %v8546 = vpop.f32.mrf.mxu0
      %v8547 = vadd.f32 0.0, %v8546
      %v8548 = vpop.f32.mrf.mxu0
      %v8549 = vadd.f32 0.0, %v8548
      %8550 = vmatmul.bf16.gmra.mxu0 %v8488
      %v8551 = vpop.f32.mrf.mxu0
      %v8552 = vadd.f32 0.0, %v8551
      %v8553 = vpop.f32.mrf.mxu0
      %v8554 = vadd.f32 0.0, %v8553
      %8555 = vmatmul.bf16.gmra.mxu0 %v8490
      %v8556 = vpop.f32.mrf.mxu0
      %v8557 = vadd.f32 0.0, %v8556
      %v8558 = vpop.f32.mrf.mxu0
      %v8559 = vadd.f32 0.0, %v8558
      %8560 = vmatmul.bf16.gmra.mxu0 %v8492
      %v8561 = vpop.f32.mrf.mxu0
      %v8562 = vadd.f32 0.0, %v8561
      %v8563 = vpop.f32.mrf.mxu0
      %v8564 = vadd.f32 0.0, %v8563
      %8565 = vmatmul.bf16.gmra.mxu0 %v8494
      %v8566 = vpop.f32.mrf.mxu0
      %v8567 = vadd.f32 0.0, %v8566
      %v8568 = vpop.f32.mrf.mxu0
      %v8569 = vadd.f32 0.0, %v8568
      %8570 = vmatmul.bf16.gmra.mxu0 %v8496
      %v8571 = vpop.f32.mrf.mxu0
      %v8572 = vadd.f32 0.0, %v8571
      %v8573 = vpop.f32.mrf.mxu0
      %v8574 = vadd.f32 0.0, %v8573
      %8575 = vmatmul.bf16.gmra.mxu0 %v8498
      %v8576 = vpop.f32.mrf.mxu0
      %v8577 = vadd.f32 0.0, %v8576
      %v8578 = vpop.f32.mrf.mxu0
      %v8579 = vadd.f32 0.0, %v8578
      %8580 = vmatmul.bf16.gmra.mxu0 %v8500
      %v8581 = vpop.f32.mrf.mxu0
      %v8582 = vadd.f32 0.0, %v8581
      %v8583 = vpop.f32.mrf.mxu0
      %v8584 = vadd.f32 0.0, %v8583
      %8585 = vmatmul.bf16.gmra.mxu0 %v3166
      %v8586 = vpop.f32.mrf.mxu0
      %v8587 = vadd.f32 0.0, %v8586
      %v8588 = vpop.f32.mrf.mxu0
      %v8589 = vadd.f32 0.0, %v8588
      %8590 = vdwg.mxu0
      %v8591 = vadd.f32 %v8423, %v8512
      %v8592 = vadd.f32 %v8424, %v8514
      %v8593 = vadd.f32 %v8425, %v8517
      %v8594 = vadd.f32 %v8426, %v8519
      %v8595 = vadd.f32 %v8427, %v8522
      %v8596 = vadd.f32 %v8428, %v8524
      %v8597 = vadd.f32 %v8429, %v8527
      %v8598 = vadd.f32 %v8430, %v8529
      %v8599 = vadd.f32 %v8431, %v8532
      %v8600 = vadd.f32 %v8432, %v8534
      %v8601 = vadd.f32 %v8433, %v8537
      %v8602 = vadd.f32 %v8434, %v8539
      %v8603 = vadd.f32 %v8435, %v8542
      %v8604 = vadd.f32 %v8436, %v8544
      %v8605 = vadd.f32 %v8437, %v8547
      %v8606 = vadd.f32 %v8438, %v8549
      %v8607 = vadd.f32 %v8439, %v8552
      %v8608 = vadd.f32 %v8440, %v8554
      %v8609 = vadd.f32 %v8441, %v8557
      %v8610 = vadd.f32 %v8442, %v8559
      %v8611 = vadd.f32 %v8443, %v8562
      %v8612 = vadd.f32 %v8444, %v8564
      %v8613 = vadd.f32 %v8445, %v8567
      %v8614 = vadd.f32 %v8446, %v8569
      %v8615 = vadd.f32 %v8447, %v8572
      %v8616 = vadd.f32 %v8448, %v8574
      %v8617 = vadd.f32 %v8449, %v8577
      %v8618 = vadd.f32 %v8450, %v8579
      %v8619 = vadd.f32 %v8451, %v8582
      %v8620 = vadd.f32 %v8452, %v8584
      %v8621 = vadd.f32 %v8453, %v8587
      %v8622 = vadd.f32 %v8454, %v8589
      %v8623 = vld [vmem:[%s3 + $0x3] sm:$0x1]
      %v8624 = vperm.slane %v8623, 0
      %v8625 = vadd.f32 %v8591, %v8624
      %v8626 = vadd.f32 %v8592, %v8624
      %v8627 = vadd.f32 %v8593, %v8624
      %v8628 = vadd.f32 %v8594, %v8624
      %v8629 = vadd.f32 %v8595, %v8624
      %v8630 = vadd.f32 %v8596, %v8624
      %v8631 = vadd.f32 %v8597, %v8624
      %v8632 = vadd.f32 %v8598, %v8624
      %v8633 = vadd.f32 %v8599, %v8624
      %v8634 = vadd.f32 %v8600, %v8624
      %v8635 = vadd.f32 %v8601, %v8624
      %v8636 = vadd.f32 %v8602, %v8624
      %v8637 = vadd.f32 %v8603, %v8624
      %v8638 = vadd.f32 %v8604, %v8624
      %v8639 = vadd.f32 %v8605, %v8624
      %v8640 = vadd.f32 %v8606, %v8624
      %v8641 = vadd.f32 %v8607, %v8624
      %v8642 = vadd.f32 %v8608, %v8624
      %v8643 = vadd.f32 %v8609, %v8624
      %v8644 = vadd.f32 %v8610, %v8624
      %v8645 = vadd.f32 %v8611, %v8624
      %v8646 = vadd.f32 %v8612, %v8624
      %v8647 = vadd.f32 %v8613, %v8624
      %v8648 = vadd.f32 %v8614, %v8624
      %v8649 = vadd.f32 %v8615, %v8624
      %v8650 = vadd.f32 %v8616, %v8624
      %v8651 = vadd.f32 %v8617, %v8624
      %v8652 = vadd.f32 %v8618, %v8624
      %v8653 = vadd.f32 %v8619, %v8624
      %v8654 = vadd.f32 %v8620, %v8624
      %v8655 = vadd.f32 %v8621, %v8624
      %v8656 = vadd.f32 %v8622, %v8624
      %s8657 = scalar_lea.vmem %s4, 12
      %v8658 = vld [vmem:[%s8657] sm:$0x7]
      %vm8659 = vcmp.lt.f32.partialorder %v525, 54.5
      %vm8660 = vcmp.lt.f32.partialorder %v526, 54.5
      %vm8661 = vcmp.lt.f32.partialorder %v527, 54.5
      %vm8662 = vcmp.lt.f32.partialorder %v528, 54.5
      %vm8663 = vcmp.lt.f32.partialorder %v529, 54.5
      %vm8664 = vcmp.lt.f32.partialorder %v530, 54.5
      %vm8665 = vcmp.lt.f32.partialorder %v531, 54.5
      %vm8666 = vcmp.lt.f32.partialorder %v532, 54.5
      %vm8667 = vcmp.lt.f32.partialorder %v533, 54.5
      %vm8668 = vcmp.lt.f32.partialorder %v534, 54.5
      %vm8669 = vcmp.lt.f32.partialorder %v535, 54.5
      %vm8670 = vcmp.lt.f32.partialorder %v536, 54.5
      %vm8671 = vcmp.lt.f32.partialorder %v537, 54.5
      %vm8672 = vcmp.lt.f32.partialorder %v538, 54.5
      %vm8673 = vcmp.lt.f32.partialorder %v539, 54.5
      %vm8674 = vcmp.lt.f32.partialorder %v540, 54.5
      %vm8675 = vcmp.lt.f32.partialorder %v605, 4.5
      %vm8676 = vcmp.lt.f32.partialorder %v606, 4.5
      %vm8677 = vcmp.lt.f32.partialorder %v607, 4.5
      %vm8678 = vcmp.lt.f32.partialorder %v608, 4.5
      %vm8679 = vcmp.lt.f32.partialorder %v609, 4.5
      %vm8680 = vcmp.lt.f32.partialorder %v610, 4.5
      %vm8681 = vcmp.lt.f32.partialorder %v611, 4.5
      %vm8682 = vcmp.lt.f32.partialorder %v612, 4.5
      %vm8683 = vcmp.lt.f32.partialorder %v613, 4.5
      %vm8684 = vcmp.lt.f32.partialorder %v614, 4.5
      %vm8685 = vcmp.lt.f32.partialorder %v615, 4.5
      %vm8686 = vcmp.lt.f32.partialorder %v616, 4.5
      %vm8687 = vcmp.lt.f32.partialorder %v617, 4.5
      %vm8688 = vcmp.lt.f32.partialorder %v618, 4.5
      %vm8689 = vcmp.lt.f32.partialorder %v619, 4.5
      %vm8690 = vcmp.lt.f32.partialorder %v620, 4.5
      %vm8691 = vmand %vm8659, %vm8675
      %vm8692 = vmand %vm8660, %vm8676
      %vm8693 = vmand %vm8661, %vm8677
      %vm8694 = vmand %vm8662, %vm8678
      %vm8695 = vmand %vm8663, %vm8679
      %vm8696 = vmand %vm8664, %vm8680
      %vm8697 = vmand %vm8665, %vm8681
      %vm8698 = vmand %vm8666, %vm8682
      %vm8699 = vmand %vm8667, %vm8683
      %vm8700 = vmand %vm8668, %vm8684
      %vm8701 = vmand %vm8669, %vm8685
      %vm8702 = vmand %vm8670, %vm8686
      %vm8703 = vmand %vm8671, %vm8687
      %vm8704 = vmand %vm8672, %vm8688
      %vm8705 = vmand %vm8673, %vm8689
      %vm8706 = vmand %vm8674, %vm8690
      %v8707 = vsel %vm8691, 1, 0
      %v8708 = vsel %vm8692, 1, 0
      %v8709 = vsel %vm8693, 1, 0
      %v8710 = vsel %vm8694, 1, 0
      %v8711 = vsel %vm8695, 1, 0
      %v8712 = vsel %vm8696, 1, 0
      %v8713 = vsel %vm8697, 1, 0
      %v8714 = vsel %vm8698, 1, 0
      %v8715 = vsel %vm8699, 1, 0
      %v8716 = vsel %vm8700, 1, 0
      %v8717 = vsel %vm8701, 1, 0
      %v8718 = vsel %vm8702, 1, 0
      %v8719 = vsel %vm8703, 1, 0
      %v8720 = vsel %vm8704, 1, 0
      %v8721 = vsel %vm8705, 1, 0
      %v8722 = vsel %vm8706, 1, 0
      %vm8723 = vcmp.eq.s32.totalorder %v8707, 1
      %vm8724 = vcmp.eq.s32.totalorder %v8708, 1
      %vm8725 = vcmp.eq.s32.totalorder %v8709, 1
      %vm8726 = vcmp.eq.s32.totalorder %v8710, 1
      %vm8727 = vcmp.eq.s32.totalorder %v8711, 1
      %vm8728 = vcmp.eq.s32.totalorder %v8712, 1
      %vm8729 = vcmp.eq.s32.totalorder %v8713, 1
      %vm8730 = vcmp.eq.s32.totalorder %v8714, 1
      %vm8731 = vcmp.eq.s32.totalorder %v8715, 1
      %vm8732 = vcmp.eq.s32.totalorder %v8716, 1
      %vm8733 = vcmp.eq.s32.totalorder %v8717, 1
      %vm8734 = vcmp.eq.s32.totalorder %v8718, 1
      %vm8735 = vcmp.eq.s32.totalorder %v8719, 1
      %vm8736 = vcmp.eq.s32.totalorder %v8720, 1
      %vm8737 = vcmp.eq.s32.totalorder %v8721, 1
      %vm8738 = vcmp.eq.s32.totalorder %v8722, 1
      %v8739 = vsel %vm8723, %v8625, 0.0
      %v8740 = vsel %vm8724, %v8626, 0.0
      %v8741 = vsel %vm8725, %v8627, 0.0
      %v8742 = vsel %vm8726, %v8628, 0.0
      %v8743 = vsel %vm8727, %v8629, 0.0
      %v8744 = vsel %vm8728, %v8630, 0.0
      %v8745 = vsel %vm8729, %v8631, 0.0
      %v8746 = vsel %vm8730, %v8632, 0.0
      %v8747 = vsel %vm8731, %v8633, 0.0
      %v8748 = vsel %vm8732, %v8634, 0.0
      %v8749 = vsel %vm8733, %v8635, 0.0
      %v8750 = vsel %vm8734, %v8636, 0.0
      %v8751 = vsel %vm8735, %v8637, 0.0
      %v8752 = vsel %vm8736, %v8638, 0.0
      %v8753 = vsel %vm8737, %v8639, 0.0
      %v8754 = vsel %vm8738, %v8640, 0.0
      %v8755 = vsel %vm8723, %v8641, 0.0
      %v8756 = vsel %vm8724, %v8642, 0.0
      %v8757 = vsel %vm8725, %v8643, 0.0
      %v8758 = vsel %vm8726, %v8644, 0.0
      %v8759 = vsel %vm8727, %v8645, 0.0
      %v8760 = vsel %vm8728, %v8646, 0.0
      %v8761 = vsel %vm8729, %v8647, 0.0
      %v8762 = vsel %vm8730, %v8648, 0.0
      %v8763 = vsel %vm8731, %v8649, 0.0
      %v8764 = vsel %vm8732, %v8650, 0.0
      %v8765 = vsel %vm8733, %v8651, 0.0
      %v8766 = vsel %vm8734, %v8652, 0.0
      %v8767 = vsel %vm8735, %v8653, 0.0
      %v8768 = vsel %vm8736, %v8654, 0.0
      %v8769 = vsel %vm8737, %v8655, 0.0
      %v8770 = vsel %vm8738, %v8656, 0.0
      %v8771 = vsel %vm733, %v8739, 0.0
      %v8772 = vsel %vm733, %v8740, 0.0
      %v8773 = vadd.f32 %v8771, %v8772
      %v8774 = vsel %vm733, %v8741, 0.0
      %v8775 = vadd.f32 %v8773, %v8774
      %v8776 = vsel %vm733, %v8742, 0.0
      %v8777 = vadd.f32 %v8775, %v8776
      %v8778 = vsel %vm733, %v8743, 0.0
      %v8779 = vadd.f32 %v8777, %v8778
      %v8780 = vsel %vm733, %v8744, 0.0
      %v8781 = vadd.f32 %v8779, %v8780
      %v8782 = vsel %vm733, %v8745, 0.0
      %v8783 = vadd.f32 %v8781, %v8782
      %v8784 = vsel %vm733, %v8746, 0.0
      %v8785 = vadd.f32 %v8783, %v8784
      %v8786 = vsel %vm733, %v8747, 0.0
      %v8787 = vadd.f32 %v8785, %v8786
      %v8788 = vsel %vm733, %v8748, 0.0
      %v8789 = vadd.f32 %v8787, %v8788
      %v8790 = vsel %vm733, %v8749, 0.0
      %v8791 = vadd.f32 %v8789, %v8790
      %v8792 = vsel %vm733, %v8750, 0.0
      %v8793 = vadd.f32 %v8791, %v8792
      %v8794 = vsel %vm733, %v8751, 0.0
      %v8795 = vadd.f32 %v8793, %v8794
      %v8796 = vsel %vm733, %v8752, 0.0
      %v8797 = vadd.f32 %v8795, %v8796
      %v8798 = vsel %vm733, %v8753, 0.0
      %v8799 = vadd.f32 %v8797, %v8798
      %v8800 = vsel %vm733, %v8754, 0.0
      %v8801 = vadd.f32 %v8799, %v8800
      %v8802 = vrot.slane %v8801, 4
      %v8803 = vadd.f32 %v8801, %v8802
      %v8804 = vrot.slane %v8803, 2
      %v8805 = vadd.f32 %v8803, %v8804
      %v8806 = vrot.slane %v8805, 1
      %v8807 = vadd.f32 %v8805, %v8806
      %v8808 = vsel %vm733, %v8755, 0.0
      %v8809 = vsel %vm733, %v8756, 0.0
      %v8810 = vadd.f32 %v8808, %v8809
      %v8811 = vsel %vm733, %v8757, 0.0
      %v8812 = vadd.f32 %v8810, %v8811
      %v8813 = vsel %vm733, %v8758, 0.0
      %v8814 = vadd.f32 %v8812, %v8813
      %v8815 = vsel %vm733, %v8759, 0.0
      %v8816 = vadd.f32 %v8814, %v8815
      %v8817 = vsel %vm733, %v8760, 0.0
      %v8818 = vadd.f32 %v8816, %v8817
      %v8819 = vsel %vm733, %v8761, 0.0
      %v8820 = vadd.f32 %v8818, %v8819
      %v8821 = vsel %vm733, %v8762, 0.0
      %v8822 = vadd.f32 %v8820, %v8821
      %v8823 = vsel %vm733, %v8763, 0.0
      %v8824 = vadd.f32 %v8822, %v8823
      %v8825 = vsel %vm733, %v8764, 0.0
      %v8826 = vadd.f32 %v8824, %v8825
      %v8827 = vsel %vm733, %v8765, 0.0
      %v8828 = vadd.f32 %v8826, %v8827
      %v8829 = vsel %vm733, %v8766, 0.0
      %v8830 = vadd.f32 %v8828, %v8829
      %v8831 = vsel %vm733, %v8767, 0.0
      %v8832 = vadd.f32 %v8830, %v8831
      %v8833 = vsel %vm733, %v8768, 0.0
      %v8834 = vadd.f32 %v8832, %v8833
      %v8835 = vsel %vm733, %v8769, 0.0
      %v8836 = vadd.f32 %v8834, %v8835
      %v8837 = vsel %vm733, %v8770, 0.0
      %v8838 = vadd.f32 %v8836, %v8837
      %v8839 = vrot.slane %v8838, 4
      %v8840 = vadd.f32 %v8838, %v8839
      %v8841 = vrot.slane %v8840, 2
      %v8842 = vadd.f32 %v8840, %v8841
      %v8843 = vrot.slane %v8842, 1
      %v8844 = vadd.f32 %v8842, %v8843
      %v8845 = vmul.f32 %v8807, 0.04
      %v8846 = vmul.f32 %v8844, 0.04
      %v8847 = vsub.f32 %v8625, %v8845
      %v8848 = vsub.f32 %v8626, %v8845
      %v8849 = vsub.f32 %v8627, %v8845
      %v8850 = vsub.f32 %v8628, %v8845
      %v8851 = vsub.f32 %v8629, %v8845
      %v8852 = vsub.f32 %v8630, %v8845
      %v8853 = vsub.f32 %v8631, %v8845
      %v8854 = vsub.f32 %v8632, %v8845
      %v8855 = vsub.f32 %v8633, %v8845
      %v8856 = vsub.f32 %v8634, %v8845
      %v8857 = vsub.f32 %v8635, %v8845
      %v8858 = vsub.f32 %v8636, %v8845
      %v8859 = vsub.f32 %v8637, %v8845
      %v8860 = vsub.f32 %v8638, %v8845
      %v8861 = vsub.f32 %v8639, %v8845
      %v8862 = vsub.f32 %v8640, %v8845
      %v8863 = vsub.f32 %v8641, %v8846
      %v8864 = vsub.f32 %v8642, %v8846
      %v8865 = vsub.f32 %v8643, %v8846
      %v8866 = vsub.f32 %v8644, %v8846
      %v8867 = vsub.f32 %v8645, %v8846
      %v8868 = vsub.f32 %v8646, %v8846
      %v8869 = vsub.f32 %v8647, %v8846
      %v8870 = vsub.f32 %v8648, %v8846
      %v8871 = vsub.f32 %v8649, %v8846
      %v8872 = vsub.f32 %v8650, %v8846
      %v8873 = vsub.f32 %v8651, %v8846
      %v8874 = vsub.f32 %v8652, %v8846
      %v8875 = vsub.f32 %v8653, %v8846
      %v8876 = vsub.f32 %v8654, %v8846
      %v8877 = vsub.f32 %v8655, %v8846
      %v8878 = vsub.f32 %v8656, %v8846
      %v8879 = vsel %vm8723, %v8847, 0.0
      %v8880 = vsel %vm8724, %v8848, 0.0
      %v8881 = vsel %vm8725, %v8849, 0.0
      %v8882 = vsel %vm8726, %v8850, 0.0
      %v8883 = vsel %vm8727, %v8851, 0.0
      %v8884 = vsel %vm8728, %v8852, 0.0
      %v8885 = vsel %vm8729, %v8853, 0.0
      %v8886 = vsel %vm8730, %v8854, 0.0
      %v8887 = vsel %vm8731, %v8855, 0.0
      %v8888 = vsel %vm8732, %v8856, 0.0
      %v8889 = vsel %vm8733, %v8857, 0.0
      %v8890 = vsel %vm8734, %v8858, 0.0
      %v8891 = vsel %vm8735, %v8859, 0.0
      %v8892 = vsel %vm8736, %v8860, 0.0
      %v8893 = vsel %vm8737, %v8861, 0.0
      %v8894 = vsel %vm8738, %v8862, 0.0
      %v8895 = vsel %vm8723, %v8863, 0.0
      %v8896 = vsel %vm8724, %v8864, 0.0
      %v8897 = vsel %vm8725, %v8865, 0.0
      %v8898 = vsel %vm8726, %v8866, 0.0
      %v8899 = vsel %vm8727, %v8867, 0.0
      %v8900 = vsel %vm8728, %v8868, 0.0
      %v8901 = vsel %vm8729, %v8869, 0.0
      %v8902 = vsel %vm8730, %v8870, 0.0
      %v8903 = vsel %vm8731, %v8871, 0.0
      %v8904 = vsel %vm8732, %v8872, 0.0
      %v8905 = vsel %vm8733, %v8873, 0.0
      %v8906 = vsel %vm8734, %v8874, 0.0
      %v8907 = vsel %vm8735, %v8875, 0.0
      %v8908 = vsel %vm8736, %v8876, 0.0
      %v8909 = vsel %vm8737, %v8877, 0.0
      %v8910 = vsel %vm8738, %v8878, 0.0
      %v8911 = vmul.f32 %v8879, %v8879
      %v8912 = vmul.f32 %v8880, %v8880
      %v8913 = vmul.f32 %v8881, %v8881
      %v8914 = vmul.f32 %v8882, %v8882
      %v8915 = vmul.f32 %v8883, %v8883
      %v8916 = vmul.f32 %v8884, %v8884
      %v8917 = vmul.f32 %v8885, %v8885
      %v8918 = vmul.f32 %v8886, %v8886
      %v8919 = vmul.f32 %v8887, %v8887
      %v8920 = vmul.f32 %v8888, %v8888
      %v8921 = vmul.f32 %v8889, %v8889
      %v8922 = vmul.f32 %v8890, %v8890
      %v8923 = vmul.f32 %v8891, %v8891
      %v8924 = vmul.f32 %v8892, %v8892
      %v8925 = vmul.f32 %v8893, %v8893
      %v8926 = vmul.f32 %v8894, %v8894
      %v8927 = vmul.f32 %v8895, %v8895
      %v8928 = vmul.f32 %v8896, %v8896
      %v8929 = vmul.f32 %v8897, %v8897
      %v8930 = vmul.f32 %v8898, %v8898
      %v8931 = vmul.f32 %v8899, %v8899
      %v8932 = vmul.f32 %v8900, %v8900
      %v8933 = vmul.f32 %v8901, %v8901
      %v8934 = vmul.f32 %v8902, %v8902
      %v8935 = vmul.f32 %v8903, %v8903
      %v8936 = vmul.f32 %v8904, %v8904
      %v8937 = vmul.f32 %v8905, %v8905
      %v8938 = vmul.f32 %v8906, %v8906
      %v8939 = vmul.f32 %v8907, %v8907
      %v8940 = vmul.f32 %v8908, %v8908
      %v8941 = vmul.f32 %v8909, %v8909
      %v8942 = vmul.f32 %v8910, %v8910
      %v8943 = vsel %vm733, %v8911, 0.0
      %v8944 = vsel %vm733, %v8912, 0.0
      %v8945 = vadd.f32 %v8943, %v8944
      %v8946 = vsel %vm733, %v8913, 0.0
      %v8947 = vadd.f32 %v8945, %v8946
      %v8948 = vsel %vm733, %v8914, 0.0
      %v8949 = vadd.f32 %v8947, %v8948
      %v8950 = vsel %vm733, %v8915, 0.0
      %v8951 = vadd.f32 %v8949, %v8950
      %v8952 = vsel %vm733, %v8916, 0.0
      %v8953 = vadd.f32 %v8951, %v8952
      %v8954 = vsel %vm733, %v8917, 0.0
      %v8955 = vadd.f32 %v8953, %v8954
      %v8956 = vsel %vm733, %v8918, 0.0
      %v8957 = vadd.f32 %v8955, %v8956
      %v8958 = vsel %vm733, %v8919, 0.0
      %v8959 = vadd.f32 %v8957, %v8958
      %v8960 = vsel %vm733, %v8920, 0.0
      %v8961 = vadd.f32 %v8959, %v8960
      %v8962 = vsel %vm733, %v8921, 0.0
      %v8963 = vadd.f32 %v8961, %v8962
      %v8964 = vsel %vm733, %v8922, 0.0
      %v8965 = vadd.f32 %v8963, %v8964
      %v8966 = vsel %vm733, %v8923, 0.0
      %v8967 = vadd.f32 %v8965, %v8966
      %v8968 = vsel %vm733, %v8924, 0.0
      %v8969 = vadd.f32 %v8967, %v8968
      %v8970 = vsel %vm733, %v8925, 0.0
      %v8971 = vadd.f32 %v8969, %v8970
      %v8972 = vsel %vm733, %v8926, 0.0
      %v8973 = vadd.f32 %v8971, %v8972
      %v8974 = vrot.slane %v8973, 4
      %v8975 = vadd.f32 %v8973, %v8974
      %v8976 = vrot.slane %v8975, 2
      %v8977 = vadd.f32 %v8975, %v8976
      %v8978 = vrot.slane %v8977, 1
      %v8979 = vadd.f32 %v8977, %v8978
      %v8980 = vsel %vm733, %v8927, 0.0
      %v8981 = vsel %vm733, %v8928, 0.0
      %v8982 = vadd.f32 %v8980, %v8981
      %v8983 = vsel %vm733, %v8929, 0.0
      %v8984 = vadd.f32 %v8982, %v8983
      %v8985 = vsel %vm733, %v8930, 0.0
      %v8986 = vadd.f32 %v8984, %v8985
      %v8987 = vsel %vm733, %v8931, 0.0
      %v8988 = vadd.f32 %v8986, %v8987
      %v8989 = vsel %vm733, %v8932, 0.0
      %v8990 = vadd.f32 %v8988, %v8989
      %v8991 = vsel %vm733, %v8933, 0.0
      %v8992 = vadd.f32 %v8990, %v8991
      %v8993 = vsel %vm733, %v8934, 0.0
      %v8994 = vadd.f32 %v8992, %v8993
      %v8995 = vsel %vm733, %v8935, 0.0
      %v8996 = vadd.f32 %v8994, %v8995
      %v8997 = vsel %vm733, %v8936, 0.0
      %v8998 = vadd.f32 %v8996, %v8997
      %v8999 = vsel %vm733, %v8937, 0.0
      %v9000 = vadd.f32 %v8998, %v8999
      %v9001 = vsel %vm733, %v8938, 0.0
      %v9002 = vadd.f32 %v9000, %v9001
      %v9003 = vsel %vm733, %v8939, 0.0
      %v9004 = vadd.f32 %v9002, %v9003
      %v9005 = vsel %vm733, %v8940, 0.0
      %v9006 = vadd.f32 %v9004, %v9005
      %v9007 = vsel %vm733, %v8941, 0.0
      %v9008 = vadd.f32 %v9006, %v9007
      %v9009 = vsel %vm733, %v8942, 0.0
      %v9010 = vadd.f32 %v9008, %v9009
      %v9011 = vrot.slane %v9010, 4
      %v9012 = vadd.f32 %v9010, %v9011
      %v9013 = vrot.slane %v9012, 2
      %v9014 = vadd.f32 %v9012, %v9013
      %v9015 = vrot.slane %v9014, 1
      %v9016 = vadd.f32 %v9014, %v9015
      %v9017 = vmul.f32 %v8979, 0.041666668
      %v9018 = vmul.f32 %v9016, 0.041666668
      %v9019 = vadd.f32 %v9017, 1e-12
      %v9020 = vadd.f32 %v9018, 1e-12
      %v9021 = vrsqrt.pop %v9019
      %v9022 = vmul.f32 %v9021, %v9019
      %v9023 = vmul.f32 %v9022, %v9021
      %v9024 = vmul.f32 0.5, %v9023
      %v9025 = vsub.f32 1.5, %v9024
      %v9026 = vmul.f32 %v9021, %v9025
      %v9027 = vmul.f32 %v9019, %v9026
      %vm9028 = vcmp.eq.f32.partialorder %v9019, inf
      %v9029 = vsel %vm9028, %v9019, %v9027
      %vm9030 = vcmp.eq.f32.partialorder %v9019, 0.0
      %v9031 = vand.u32 %v9019, 2147483648
      %v9032 = vsel %vm9030, %v9031, %v9029
      %v9033 = vrsqrt.pop %v9020
      %v9034 = vmul.f32 %v9033, %v9020
      %v9035 = vmul.f32 %v9034, %v9033
      %v9036 = vmul.f32 0.5, %v9035
      %v9037 = vsub.f32 1.5, %v9036
      %v9038 = vmul.f32 %v9033, %v9037
      %v9039 = vmul.f32 %v9020, %v9038
      %vm9040 = vcmp.eq.f32.partialorder %v9020, inf
      %v9041 = vsel %vm9040, %v9020, %v9039
      %vm9042 = vcmp.eq.f32.partialorder %v9020, 0.0
      %v9043 = vand.u32 %v9020, 2147483648
      %v9044 = vsel %vm9042, %v9043, %v9041
      %v9045 = vmul.f32 %v8658, %v8845
      %v9046 = vmul.f32 %v8658, %v8846
      %v9047 = vmul.f32 %v8658, %v9032
      %v9048 = vmul.f32 %v8658, %v9044
      %v9051 = vrot.slane %v9047, 1
      %v9052 = vrot.slane %v9048, 1
      %v9055 = vadd.f32 %v9045, %v9051
      %v9056 = vadd.f32 %v9046, %v9052
      %v9058 = vrot.slane %v8658, 2
      %v9060 = vadd.f32 %v9055, %v9058
      %v9061 = vadd.f32 %v9056, %v9058
      %v9062 = vxor.u32 %v9060, 2147483648
      %v9063 = vxor.u32 %v9061, 2147483648
      %v9064 = vmul.f32 %v9062, 1.442695
      %v9065 = vpow.pop %v9064
      %v9066 = vmul.f32 %v9063, 1.442695
      %v9067 = vpow.pop %v9066
      %v9068 = vadd.f32 %v9065, 1.0
      %v9069 = vadd.f32 %v9067, 1.0
      %v9070 = vrcp.pop %v9068
      %v9071 = vmul.f32 %v9068, %v9070
      %v9072 = vsub.f32 1.0, %v9071
      %v9073 = vmul.f32 %v9070, %v9072
      %v9074 = vadd.f32 %v9070, %v9073
      %vm9075 = vweird.f32 %v9068
      %vm9076 = vweird.f32 %v9070
      %vm9077 = vmor %vm9075, %vm9076
      %v9078 = vsel %vm9077, %v9070, %v9074
      %v9079 = vand.u32 2147483647, %v9068
      %vm9080 = vcmp.eq.f32.partialorder %v9079, 8.507059e+37
      %v9081 = vand.u32 %v9068, 2147483648
      %v9082 = vor.u32 1.1754944e-38, %v9081
      %v9083 = vsel %vm9080, %v9082, %v9078
      %v9084 = vmul.f32 1.0, %v9083
      %v9085 = vrcp.pop %v9069
      %v9086 = vmul.f32 %v9069, %v9085
      %v9087 = vsub.f32 1.0, %v9086
      %v9088 = vmul.f32 %v9085, %v9087
      %v9089 = vadd.f32 %v9085, %v9088
      %vm9090 = vweird.f32 %v9069
      %vm9091 = vweird.f32 %v9085
      %vm9092 = vmor %vm9090, %vm9091
      %v9093 = vsel %vm9092, %v9085, %v9089
      %v9094 = vand.u32 2147483647, %v9069
      %vm9095 = vcmp.eq.f32.partialorder %v9094, 8.507059e+37
      %v9096 = vand.u32 %v9069, 2147483648
      %v9097 = vor.u32 1.1754944e-38, %v9096
      %v9098 = vsel %vm9095, %v9097, %v9093
      %v9099 = vmul.f32 1.0, %v9098
      %v9100 = vperm.slane %v9084, 0
      %v9101 = vperm.slane %v9099, 0
      %v9102 = vmul.f32 %v8625, %v9100
      %v9103 = vmul.f32 %v8626, %v9100
      %v9104 = vmul.f32 %v8627, %v9100
      %v9105 = vmul.f32 %v8628, %v9100
      %v9106 = vmul.f32 %v8629, %v9100
      %v9107 = vmul.f32 %v8630, %v9100
      %v9108 = vmul.f32 %v8631, %v9100
      %v9109 = vmul.f32 %v8632, %v9100
      %v9110 = vmul.f32 %v8633, %v9100
      %v9111 = vmul.f32 %v8634, %v9100
      %v9112 = vmul.f32 %v8635, %v9100
      %v9113 = vmul.f32 %v8636, %v9100
      %v9114 = vmul.f32 %v8637, %v9100
      %v9115 = vmul.f32 %v8638, %v9100
      %v9116 = vmul.f32 %v8639, %v9100
      %v9117 = vmul.f32 %v8640, %v9100
      %v9118 = vmul.f32 %v8641, %v9101
      %v9119 = vmul.f32 %v8642, %v9101
      %v9120 = vmul.f32 %v8643, %v9101
      %v9121 = vmul.f32 %v8644, %v9101
      %v9122 = vmul.f32 %v8645, %v9101
      %v9123 = vmul.f32 %v8646, %v9101
      %v9124 = vmul.f32 %v8647, %v9101
      %v9125 = vmul.f32 %v8648, %v9101
      %v9126 = vmul.f32 %v8649, %v9101
      %v9127 = vmul.f32 %v8650, %v9101
      %v9128 = vmul.f32 %v8651, %v9101
      %v9129 = vmul.f32 %v8652, %v9101
      %v9130 = vmul.f32 %v8653, %v9101
      %v9131 = vmul.f32 %v8654, %v9101
      %v9132 = vmul.f32 %v8655, %v9101
      %v9133 = vmul.f32 %v8656, %v9101
      %v9134 = vmax.f32 %v9102, 0.0
      %v9135 = vmax.f32 %v9103, 0.0
      %v9136 = vmax.f32 %v9104, 0.0
      %v9137 = vmax.f32 %v9105, 0.0
      %v9138 = vmax.f32 %v9106, 0.0
      %v9139 = vmax.f32 %v9107, 0.0
      %v9140 = vmax.f32 %v9108, 0.0
      %v9141 = vmax.f32 %v9109, 0.0
      %v9142 = vmax.f32 %v9110, 0.0
      %v9143 = vmax.f32 %v9111, 0.0
      %v9144 = vmax.f32 %v9112, 0.0
      %v9145 = vmax.f32 %v9113, 0.0
      %v9146 = vmax.f32 %v9114, 0.0
      %v9147 = vmax.f32 %v9115, 0.0
      %v9148 = vmax.f32 %v9116, 0.0
      %v9149 = vmax.f32 %v9117, 0.0
      %v9150 = vmax.f32 %v9118, 0.0
      %v9151 = vmax.f32 %v9119, 0.0
      %v9152 = vmax.f32 %v9120, 0.0
      %v9153 = vmax.f32 %v9121, 0.0
      %v9154 = vmax.f32 %v9122, 0.0
      %v9155 = vmax.f32 %v9123, 0.0
      %v9156 = vmax.f32 %v9124, 0.0
      %v9157 = vmax.f32 %v9125, 0.0
      %v9158 = vmax.f32 %v9126, 0.0
      %v9159 = vmax.f32 %v9127, 0.0
      %v9160 = vmax.f32 %v9128, 0.0
      %v9161 = vmax.f32 %v9129, 0.0
      %v9162 = vmax.f32 %v9130, 0.0
      %v9163 = vmax.f32 %v9131, 0.0
      %v9164 = vmax.f32 %v9132, 0.0
      %v9165 = vmax.f32 %v9133, 0.0
      %9166 = vst.msk [vmem:[%s228] sm:$0xff] %vm733, %v9134
      %9167 = vst.msk [vmem:[%s228 + $0x8] sm:$0xff] %vm733, %v9135
      %9168 = vst.msk [vmem:[%s228 + $0x10] sm:$0xff] %vm733, %v9136
      %9169 = vst.msk [vmem:[%s228 + $0x18] sm:$0xff] %vm733, %v9137
      %9170 = vst.msk [vmem:[%s228 + $0x20] sm:$0xff] %vm733, %v9138
      %9171 = vst.msk [vmem:[%s228 + $0x28] sm:$0xff] %vm733, %v9139
      %9172 = vst.msk [vmem:[%s228 + $0x30] sm:$0xff] %vm733, %v9140
      %9173 = vst.msk [vmem:[%s228 + $0x38] sm:$0xff] %vm733, %v9141
      %9174 = vst.msk [vmem:[%s228 + $0x40] sm:$0xff] %vm733, %v9142
      %9175 = vst.msk [vmem:[%s228 + $0x48] sm:$0xff] %vm733, %v9143
      %9176 = vst.msk [vmem:[%s228 + $0x50] sm:$0xff] %vm733, %v9144
      %9177 = vst.msk [vmem:[%s228 + $0x58] sm:$0xff] %vm733, %v9145
      %9178 = vst.msk [vmem:[%s228 + $0x60] sm:$0xff] %vm733, %v9146
      %9179 = vst.msk [vmem:[%s228 + $0x68] sm:$0xff] %vm733, %v9147
      %9180 = vst.msk [vmem:[%s228 + $0x70] sm:$0xff] %vm733, %v9148
      %9181 = vst.msk [vmem:[%s228 + $0x78] sm:$0xff] %vm733, %v9149
      %9182 = vst.msk [vmem:[%s228 + $0x80] sm:$0xff] %vm733, %v9150
      %9183 = vst.msk [vmem:[%s228 + $0x88] sm:$0xff] %vm733, %v9151
      %9184 = vst.msk [vmem:[%s228 + $0x90] sm:$0xff] %vm733, %v9152
      %9185 = vst.msk [vmem:[%s228 + $0x98] sm:$0xff] %vm733, %v9153
      %9186 = vst.msk [vmem:[%s228 + $0xa0] sm:$0xff] %vm733, %v9154
      %9187 = vst.msk [vmem:[%s228 + $0xa8] sm:$0xff] %vm733, %v9155
      %9188 = vst.msk [vmem:[%s228 + $0xb0] sm:$0xff] %vm733, %v9156
      %9189 = vst.msk [vmem:[%s228 + $0xb8] sm:$0xff] %vm733, %v9157
      %9190 = vst.msk [vmem:[%s228 + $0xc0] sm:$0xff] %vm733, %v9158
      %9191 = vst.msk [vmem:[%s228 + $0xc8] sm:$0xff] %vm733, %v9159
      %9192 = vst.msk [vmem:[%s228 + $0xd0] sm:$0xff] %vm733, %v9160
      %9193 = vst.msk [vmem:[%s228 + $0xd8] sm:$0xff] %vm733, %v9161
      %9194 = vst.msk [vmem:[%s228 + $0xe0] sm:$0xff] %vm733, %v9162
      %9195 = vst.msk [vmem:[%s228 + $0xe8] sm:$0xff] %vm733, %v9163
      %9196 = vst.msk [vmem:[%s228 + $0xf0] sm:$0xff] %vm733, %v9164
      %9197 = vst.msk [vmem:[%s228 + $0xf8] sm:$0xff] %vm733, %v9165
      %s9198 = smul.u32 2, %s16
      %p9199 = scmp.lt.s32.totalorder %s9198, 7
      %s9200 = scalar_select %p9199, %s9198, 7
      %s9201 = smul.addr %s9200, 16
      %s9202 = smul.addr %s9201, 8
      %s9203 = scalar_lea.vmem %s5, %s9202
      // Predicated region
      $region41: #{encoder_cnsn_forward.1} parent=39 // pred_check
        %p9204 = pneg %p144
      $region42: #{encoder_cnsn_forward.1} parent=39 // pred_check_branch
        %9206 = sbr.rel (%p9204) target = $region44
      $region43: #{encoder_cnsn_forward.1} parent=39 // pred_region
        %s9207 = smul.u32 2, %s16
      $region44: #{encoder_cnsn_forward.1} parent=39 // pred_fallthru
        _
    $region40: #{encoder_cnsn_forward.1} parent=5 // pred_fallthru
      _
    %p9208 = scmp.le.s32.totalorder 2, %s11
    // Predicated region
    $region45: #{encoder_cnsn_forward.1} parent=5 // pred_check
      %p9209 = pneg %p9208
    $region46: #{encoder_cnsn_forward.1} parent=5 // pred_check_branch
      %9211 = sbr.rel (%p9209) target = $region48
    $region47: #{encoder_cnsn_forward.1} parent=5 // pred_region
      %s9212 = ssub.s32 %s11, 2
      // Predicated region
      $region49: #{encoder_cnsn_forward.1} parent=47 // pred_check
        %p9213 = pneg %p150
      $region50: #{encoder_cnsn_forward.1} parent=47 // pred_check_branch
        %9215 = sbr.rel (%p9213) target = $region52
      $region51: #{encoder_cnsn_forward.1} parent=47 // pred_region
        %s9216 = smul.u32 2, %s17
        %p9217 = scmp.lt.s32.totalorder %s9216, 7
        %s9218 = scalar_select %p9217, %s9216, 7
        %s9219 = smul.addr %s9218, 16
        %s9220 = smul.addr %s9219, 8
        %s9221 = scalar_lea.vmem %s5, %s9220
      $region52: #{encoder_cnsn_forward.1} parent=47 // pred_fallthru
        _
    $region48: #{encoder_cnsn_forward.1} parent=5 // pred_fallthru
      _
  $region6: #{encoder_cnsn_forward.1} parent=0 // loop_footer
    %s15 = sadd.s32 1, %s11
  $region7: #{encoder_cnsn_forward.1} parent=0 // loop_footer_branch
    %10 = sbr.rel target = $region3
  $region8: #{encoder_cnsn_forward.1} parent=0 // loop_exit
    _

</llo_original>
